<compile_context>
chip_gen: v7x
topology: tpu7x:2x2x1
jax: 0.10.0
libtpu: 0.0.40
codegen_flags: <defaults>
</compile_context>

<pallas_src>
import functools

import jax
import jax.numpy as jnp
from jax.experimental import pallas as pl
from jax.experimental.pallas import tpu as pltpu

F = 2                      # features per hash level (module default)
PI1 = 1
PI2 = 2654435761
PI3 = 805459861


# ----------------------------------------------------------------------------
# Pallas kernel: trilinear interp + positional encoding + density/color MLPs
# ----------------------------------------------------------------------------
def ngp_kernel(corners_ref, aux_ref, scale_ref, freq_ref,
               w1d_ref, b1d_ref, w2d_ref, b2d_ref,
               w1c_h_ref, w_d_ref, w_sin_ref, w_cos_ref, b1c_ref,
               w2c_ref, b2c_ref, w3c_ref, b3c_ref,
               out_ref, *, num_levels, L):
    nlf = num_levels * F
    f32 = jnp.float32
    bf16 = jnp.bfloat16

    aux = aux_ref[...]                      # (TN, 8) f32: [dx,dy,dz, px,py,pz, mask, 0]
    scale = scale_ref[...]                  # (1, nlf)   : [N0,N0, N1,N1, ...]

    # per-level fractional coordinate, lane layout level*F + chan (matches corners)
    def frac_axis(k):
        s = aux[:, 3 + k:4 + k] * scale     # (TN, nlf)
        return s - jnp.floor(s)
    fx, fy, fz = frac_axis(0), frac_axis(1), frac_axis(2)

    # grid_sample on the 2x2x2 corner volume with align_corners=False and grid
    # value (frac - 0.5) == trilinear interpolation; factored into 7 lerps.
    # Vertex v -> (D,H,W) bits (v//4, (v//2)%2, v%2); W weight uses frac_x,
    # H uses frac_y, D uses frac_z.
    corners = corners_ref[...].astype(f32)  # (TN, 8*nlf)

    def corner(v):
        return corners[:, v * nlf:(v + 1) * nlf]

    def lerp(a, b, t):
        return a + t * (b - a)

    c00 = lerp(corner(0), corner(1), fx)
    c01 = lerp(corner(2), corner(3), fx)
    c10 = lerp(corner(4), corner(5), fx)
    c11 = lerp(corner(6), corner(7), fx)
    feats = lerp(lerp(c00, c01, fy), lerp(c10, c11, fy), fz)     # (TN, nlf)

    # density MLP: Linear(nlf, 64) -> ReLU -> Linear(64, 16)
    h1 = jnp.dot(feats.astype(bf16), w1d_ref[...],
                 preferred_element_type=f32) + b1d_ref[...]
    h1 = jnp.maximum(h1, 0.0)
    h = jnp.dot(h1.astype(bf16), w2d_ref[...],
                preferred_element_type=f32) + b2d_ref[...]       # (TN, 16)

    # color MLP layer 1.  torch computes cat((h, PE(d))) @ W1c; here the concat
    # is replaced by split weights, and PE(d) is evaluated lane-dense: one tiled
    # copy of aux scaled by per-lane frequencies, then a single sin and cos.
    # The PE weights are zero-padded on the non-direction lanes so the whole
    # aux block (and its tiled copies) can be fed to the MXU directly.
    aux_t = jnp.concatenate([aux] * L, axis=1) * freq_ref[...]   # (TN, 8*L)
    c = jnp.dot(h.astype(bf16), w1c_h_ref[...], preferred_element_type=f32) + b1c_ref[...]
    c = c + jnp.dot(aux.astype(bf16), w_d_ref[...], preferred_element_type=f32)
    c = c + jnp.dot(jnp.sin(aux_t).astype(bf16), w_sin_ref[...], preferred_element_type=f32)
    c = c + jnp.dot(jnp.cos(aux_t).astype(bf16), w_cos_ref[...], preferred_element_type=f32)
    c = jnp.maximum(c, 0.0)
    c = jnp.dot(c.astype(bf16), w2c_ref[...], preferred_element_type=f32) + b2c_ref[...]
    c = jnp.maximum(c, 0.0)
    c = jnp.dot(c.astype(bf16), w3c_ref[...], preferred_element_type=f32) + b3c_ref[...]  # (TN,4)

    maskb = aux[:, 6:7] > 0.5                                    # (TN, 1)
    col = jnp.where(maskb, jax.nn.sigmoid(c), 0.0)               # (TN, 4); lane 3 = pad
    sig = jnp.exp(jnp.where(maskb, h[:, 0:1], -10000.0))         # (TN, 1)
    lane = jax.lax.broadcasted_iota(jnp.int32, col.shape, 1)
    out_ref[...] = jnp.where(lane == 3, sig, col)                # lanes: [r, g, b, sigma]


# ----------------------------------------------------------------------------
# Plain-JAX glue: hashing + table gather (data-dependent gather stays outside)
# ----------------------------------------------------------------------------
def _hash_gather(x01, Ni, table, T):
    """x01: (N,3) in grid space.  Returns (corners (N,8,F), frac (N,3))."""
    xn = x01 * Ni
    fl = jnp.floor(xn)
    cl = jnp.ceil(xn)
    frac = xn - fl
    fli = fl.astype(jnp.int32)
    cli = cl.astype(jnp.int32)
    fxi, fyi, fzi = fli[:, 0], fli[:, 1], fli[:, 2]
    cxi, cyi, czi = cli[:, 0], cli[:, 1], cli[:, 2]
    z = jnp.zeros_like(fxi)
    # exact vertex list of the reference module (vertex 3 overwritten with
    # (cx, cy, fz); vertex 6 never written -> stays (0,0,0)):
    vx = jnp.stack([fxi, cxi, fxi, cxi, fxi, cxi, z, cxi], axis=1)
    vy = jnp.stack([fyi, fyi, cyi, cyi, cyi, fyi, z, cyi], axis=1)
    vz = jnp.stack([fzi, fzi, fzi, fzi, czi, czi, z, czi], axis=1)
    a = vx.astype(jnp.uint32) * jnp.uint32(PI1)
    b = vy.astype(jnp.uint32) * jnp.uint32(PI2)
    c = vz.astype(jnp.uint32) * jnp.uint32(PI3)
    # T is a power of two, so the low-bit mask matches torch's remainder for the
    # in-mask (non-negative) points; out-of-mask points are zeroed downstream.
    h = ((a ^ b ^ c) & jnp.uint32(T - 1)).astype(jnp.int32)      # (N, 8)
    corners = jnp.take(table, h, axis=0)                         # (N, 8, F)
    return corners, frac


def init_params(key, T, num_levels, L):
    assert 3 + 6 * L == 27, "module hardcodes color MLP input = 27 + 16"
    ks = jax.random.split(key, 6)
    tables = (jax.random.uniform(ks[0], (num_levels, T, F), dtype=jnp.float32) * 2 - 1) * 1e-4

    def lin(k, fan_in, fan_out):
        kw, kb = jax.random.split(k)
        bound = 1.0 / float(fan_in) ** 0.5
        w = jax.random.uniform(kw, (fan_in, fan_out), minval=-bound, maxval=bound, dtype=jnp.float32)
        b = jax.random.uniform(kb, (1, fan_out), minval=-bound, maxval=bound, dtype=jnp.float32)
        return w, b

    w1d, b1d = lin(ks[1], F * num_levels, 64)
    w2d, b2d = lin(ks[2], 64, 16)
    w1c, b1c = lin(ks[3], 27 + 16, 64)
    w2c, b2c = lin(ks[4], 64, 64)
    w3c, b3c = lin(ks[5], 64, 3)
    return dict(tables=tables, w1d=w1d, b1d=b1d, w2d=w2d, b2d=b2d,
                w1c=w1c, b1c=b1c, w2c=w2c, b2c=b2c, w3c=w3c, b3c=b3c)


def _round_up(a, b):
    return ((a + b - 1) // b) * b


def _prep_weights(params, L):
    """Split/pad the color-MLP layer-1 weight and cast matmul weights to bf16."""
    bf = jnp.bfloat16
    w1c = params["w1c"]                                   # (16 + 3 + 6L, 64)
    w_d = jnp.zeros((8, 64), jnp.float32).at[0:3, :].set(w1c[16:19])
    w_sin = jnp.zeros((8 * L, 64), jnp.float32)
    w_cos = jnp.zeros((8 * L, 64), jnp.float32)
    for i in range(L):
        w_sin = w_sin.at[8 * i:8 * i + 3, :].set(w1c[19 + 6 * i:22 + 6 * i])
        w_cos = w_cos.at[8 * i:8 * i + 3, :].set(w1c[22 + 6 * i:25 + 6 * i])
    freq = jnp.repeat(2.0 ** jnp.arange(L, dtype=jnp.float32), 8)[None, :]   # (1, 8L)
    w3c_p = jnp.pad(params["w3c"], ((0, 0), (0, 1)))      # (64, 4), lane 3 = pad
    b3c_p = jnp.pad(params["b3c"], ((0, 0), (0, 1)))      # (1, 4)
    return dict(
        w1d=params["w1d"].astype(bf), b1d=params["b1d"],
        w2d=params["w2d"].astype(bf), b2d=params["b2d"],
        w1c_h=w1c[:16].astype(bf), w_d=w_d.astype(bf),
        w_sin=w_sin.astype(bf), w_cos=w_cos.astype(bf), b1c=params["b1c"],
        w2c=params["w2c"].astype(bf), b2c=params["b2c"],
        w3c=w3c_p.astype(bf), b3c=b3c_p, freq=freq)


def ngp_forward(params, x, d, Nl, T, aabb_scale, L=4, tile_n=1024):
    assert tile_n % 128 == 0
    x = x / aabb_scale
    mask = (jnp.abs(x[:, 0]) < 0.5) & (jnp.abs(x[:, 1]) < 0.5) & (jnp.abs(x[:, 2]) < 0.5)
    x01 = x + 0.5
    N = x.shape[0]
    num_levels = len(Nl)
    nlf = num_levels * F

    # TODO(synk): the data-dependent hash-table gather has no clean Pallas/TPU
    # equivalent; it stays in XLA (jnp.take) and only the bf16 corner features
    # are streamed into the kernel.
    corners = jnp.stack([_hash_gather(x01, Ni, params["tables"][i], T)[0]
                         for i, Ni in enumerate(Nl)], axis=2)     # (N, 8, NL, F)
    corners = corners.reshape(N, 8 * nlf).astype(jnp.bfloat16)    # lane = v*NL*F + lvl*F + ch

    # packed per-point auxiliary block: [d(3), x01(3), mask(1), pad(1)]
    aux = jnp.concatenate(
        [d, x01, mask.astype(jnp.float32)[:, None], jnp.zeros((N, 1), jnp.float32)],
        axis=1)                                                   # (N, 8) f32

    scale = jnp.repeat(jnp.asarray(Nl, jnp.float32), F)[None, :]  # (1, nlf)
    w = _prep_weights(params, L)

    # tiling: big row tiles (multiple of 128); keep >= 2 grid steps when there is
    # enough work so dual-TensorCore chips (v7x) use both cores.
    n128 = _round_up(N, 128)
    tile = min(tile_n, n128)
    if tile >= 256 and tile == n128:
        tile //= 2
    n_pad = _round_up(N, tile)
    if n_pad != N:
        corners = jnp.pad(corners, ((0, n_pad - N), (0, 0)))
        aux = jnp.pad(aux, ((0, n_pad - N), (0, 0)))
    grid = (n_pad // tile,)

    def rows(width):
        return pl.BlockSpec((tile, width), lambda i: (i, 0))

    def full(arr):
        return pl.BlockSpec(arr.shape, lambda i: (0,) * arr.ndim)

    kern = functools.partial(ngp_kernel, num_levels=num_levels, L=L)
    out = pl.pallas_call(
        kern,
        out_shape=jax.ShapeDtypeStruct((n_pad, 4), jnp.float32),
        grid=grid,
        in_specs=[rows(8 * nlf), rows(8), full(scale), full(w["freq"]),
                  full(w["w1d"]), full(w["b1d"]), full(w["w2d"]), full(w["b2d"]),
                  full(w["w1c_h"]), full(w["w_d"]), full(w["w_sin"]), full(w["w_cos"]),
                  full(w["b1c"]), full(w["w2c"]), full(w["b2c"]),
                  full(w["w3c"]), full(w["b3c"])],
        out_specs=pl.BlockSpec((tile, 4), lambda i: (i, 0)),
        compiler_params=pltpu.CompilerParams(dimension_semantics=("parallel",)),
    )(corners, aux, scale, w["freq"],
      w["w1d"], w["b1d"], w["w2d"], w["b2d"],
      w["w1c_h"], w["w_d"], w["w_sin"], w["w_cos"],
      w["b1c"], w["w2c"], w["b2c"], w["w3c"], w["b3c"])

    return out[:N, :3], out[:N, 3]


# ----------------------------------------------------------------------------
# Pure-JAX reference (mirrors the PyTorch module) for a sanity check
# ----------------------------------------------------------------------------
def ngp_reference(params, x, d, Nl, T, aabb_scale, L=4):
    x = x / aabb_scale
    mask = (jnp.abs(x[:, 0]) < 0.5) & (jnp.abs(x[:, 1]) < 0.5) & (jnp.abs(x[:, 2]) < 0.5)
    x = x + 0.5
    feats = []
    v = jnp.arange(8)
    for i, Ni in enumerate(Nl):
        corners, frac = _hash_gather(x, Ni, params["tables"][i], T)   # (N,8,F), (N,3)
        wz = jnp.where((v // 4) == 1, frac[:, 2:3], 1.0 - frac[:, 2:3])
        wy = jnp.where(((v // 2) % 2) == 1, frac[:, 1:2], 1.0 - frac[:, 1:2])
        wx = jnp.where((v % 2) == 1, frac[:, 0:1], 1.0 - frac[:, 0:1])
        w = (wz * wy * wx)[..., None]                                  # (N,8,1)
        feats.append(jnp.sum(corners * w, axis=1))                     # (N,F)
    feats = jnp.concatenate(feats, axis=1)
    h1 = jnp.maximum(feats @ params["w1d"] + params["b1d"], 0.0)
    h = h1 @ params["w2d"] + params["b2d"]
    pe = [d]
    for i in range(L):
        pe += [jnp.sin((2.0 ** i) * d), jnp.cos((2.0 ** i) * d)]
    xi = jnp.concatenate(pe, axis=1)
    cin = jnp.concatenate([h, xi], axis=1)
    c = jnp.maximum(cin @ params["w1c"] + params["b1c"], 0.0)
    c = jnp.maximum(c @ params["w2c"] + params["b2c"], 0.0)
    c = jax.nn.sigmoid(c @ params["w3c"] + params["b3c"])
    color = jnp.where(mask[:, None], c, 0.0)
    log_sigma = jnp.where(mask, h[:, 0], -10000.0)
    return color, jnp.exp(log_sigma)


if __name__ == "__main__":
    T = 2 ** 14
    Nl = [16, 32, 64, 128]
    L = 4
    aabb_scale = 1.0
    N = 256

    key = jax.random.PRNGKey(0)
    kp, kx, kd = jax.random.split(key, 3)
    params = init_params(kp, T, len(Nl), L)
    x = jax.random.uniform(kx, (N, 3), minval=-1.0, maxval=1.0, dtype=jnp.float32)
    d = jax.random.normal(kd, (N, 3), dtype=jnp.float32)
    d = d / jnp.linalg.norm(d, axis=1, keepdims=True)

    color, sigma = ngp_forward(params, x, d, Nl, T, aabb_scale, L=L)
    jax.block_until_ready((color, sigma))

    color_ref, sigma_ref = ngp_reference(params, x, d, Nl, T, aabb_scale, L=L)
    assert color.shape == (N, 3) and sigma.shape == (N,)
    # bf16 matmul operands inside the kernel -> allow a slightly looser tolerance
    assert float(jnp.max(jnp.abs(color - color_ref))) < 2e-2
    assert float(jnp.max(jnp.abs(sigma - sigma_ref))) < 2e-2
    print("KERNEL_OK")
</pallas_src>

<mosaic_0001>
module attributes {stable_mosaic.version = 11 : i64} {
  func.func @ngp_kernel(%arg0: i32, %arg1: memref<128x64xbf16, #tpu.memory_space<vmem>>, %arg2: memref<128x8xf32, #tpu.memory_space<vmem>>, %arg3: memref<1x8xf32, #tpu.memory_space<vmem>>, %arg4: memref<1x32xf32, #tpu.memory_space<vmem>>, %arg5: memref<8x64xbf16, #tpu.memory_space<vmem>>, %arg6: memref<1x64xf32, #tpu.memory_space<vmem>>, %arg7: memref<64x16xbf16, #tpu.memory_space<vmem>>, %arg8: memref<1x16xf32, #tpu.memory_space<vmem>>, %arg9: memref<16x64xbf16, #tpu.memory_space<vmem>>, %arg10: memref<8x64xbf16, #tpu.memory_space<vmem>>, %arg11: memref<32x64xbf16, #tpu.memory_space<vmem>>, %arg12: memref<32x64xbf16, #tpu.memory_space<vmem>>, %arg13: memref<1x64xf32, #tpu.memory_space<vmem>>, %arg14: memref<64x64xbf16, #tpu.memory_space<vmem>>, %arg15: memref<1x64xf32, #tpu.memory_space<vmem>>, %arg16: memref<64x4xbf16, #tpu.memory_space<vmem>>, %arg17: memref<1x4xf32, #tpu.memory_space<vmem>>, %arg18: memref<128x4xf32, #tpu.memory_space<vmem>>) attributes {dimension_semantics = [#tpu.dimension_semantics<parallel>], iteration_bounds = array<i64: 2>, scalar_prefetch = 0 : i64, scratch_operands = 0 : i64, tpu.core_type = #tpu.core_type<tc>, window_params = [{transform_indices = @transform_0, window_bounds = array<i64: 128, 64>}, {transform_indices = @transform_1, window_bounds = array<i64: 128, 8>}, {pipeline_mode = #tpu.pipeline_mode<synchronous>, transform_indices = @transform_2, window_bounds = array<i64: 1, 8>}, {pipeline_mode = #tpu.pipeline_mode<synchronous>, transform_indices = @transform_3, window_bounds = array<i64: 1, 32>}, {pipeline_mode = #tpu.pipeline_mode<synchronous>, transform_indices = @transform_4, window_bounds = array<i64: 8, 64>}, {pipeline_mode = #tpu.pipeline_mode<synchronous>, transform_indices = @transform_5, window_bounds = array<i64: 1, 64>}, {pipeline_mode = #tpu.pipeline_mode<synchronous>, transform_indices = @transform_6, window_bounds = array<i64: 64, 16>}, {pipeline_mode = #tpu.pipeline_mode<synchronous>, transform_indices = @transform_7, window_bounds = array<i64: 1, 16>}, {pipeline_mode = #tpu.pipeline_mode<synchronous>, transform_indices = @transform_8, window_bounds = array<i64: 16, 64>}, {pipeline_mode = #tpu.pipeline_mode<synchronous>, transform_indices = @transform_9, window_bounds = array<i64: 8, 64>}, {pipeline_mode = #tpu.pipeline_mode<synchronous>, transform_indices = @transform_10, window_bounds = array<i64: 32, 64>}, {pipeline_mode = #tpu.pipeline_mode<synchronous>, transform_indices = @transform_11, window_bounds = array<i64: 32, 64>}, {pipeline_mode = #tpu.pipeline_mode<synchronous>, transform_indices = @transform_12, window_bounds = array<i64: 1, 64>}, {pipeline_mode = #tpu.pipeline_mode<synchronous>, transform_indices = @transform_13, window_bounds = array<i64: 64, 64>}, {pipeline_mode = #tpu.pipeline_mode<synchronous>, transform_indices = @transform_14, window_bounds = array<i64: 1, 64>}, {pipeline_mode = #tpu.pipeline_mode<synchronous>, transform_indices = @transform_15, window_bounds = array<i64: 64, 4>}, {pipeline_mode = #tpu.pipeline_mode<synchronous>, transform_indices = @transform_16, window_bounds = array<i64: 1, 4>}, {transform_indices = @transform_17, window_bounds = array<i64: 128, 4>}]} {
    %c0 = arith.constant 0 : index
    %c0_0 = arith.constant 0 : index
    %0 = vector.load %arg2[%c0, %c0_0] : memref<128x8xf32, #tpu.memory_space<vmem>>, vector<128x8xf32>
    %c0_1 = arith.constant 0 : index
    %c0_2 = arith.constant 0 : index
    %1 = vector.load %arg3[%c0_1, %c0_2] : memref<1x8xf32, #tpu.memory_space<vmem>>, vector<1x8xf32>
    %2 = vector.extract_strided_slice %0 {offsets = [0, 3], sizes = [128, 1], strides = [1, 1]} : vector<128x8xf32> to vector<128x1xf32>
    %3 = vector.broadcast %2 : vector<128x1xf32> to vector<128x8xf32>
    %4 = vector.broadcast %1 : vector<1x8xf32> to vector<128x8xf32>
    %5 = arith.mulf %3, %4 : vector<128x8xf32>
    %6 = math.floor %5 : vector<128x8xf32>
    %7 = arith.subf %5, %6 : vector<128x8xf32>
    %8 = vector.extract_strided_slice %0 {offsets = [0, 4], sizes = [128, 1], strides = [1, 1]} : vector<128x8xf32> to vector<128x1xf32>
    %9 = vector.broadcast %8 : vector<128x1xf32> to vector<128x8xf32>
    %10 = vector.broadcast %1 : vector<1x8xf32> to vector<128x8xf32>
    %11 = arith.mulf %9, %10 : vector<128x8xf32>
    %12 = math.floor %11 : vector<128x8xf32>
    %13 = arith.subf %11, %12 : vector<128x8xf32>
    %14 = vector.extract_strided_slice %0 {offsets = [0, 5], sizes = [128, 1], strides = [1, 1]} : vector<128x8xf32> to vector<128x1xf32>
    %15 = vector.broadcast %14 : vector<128x1xf32> to vector<128x8xf32>
    %16 = vector.broadcast %1 : vector<1x8xf32> to vector<128x8xf32>
    %17 = arith.mulf %15, %16 : vector<128x8xf32>
    %18 = math.floor %17 : vector<128x8xf32>
    %19 = arith.subf %17, %18 : vector<128x8xf32>
    %c0_3 = arith.constant 0 : index
    %c0_4 = arith.constant 0 : index
    %20 = vector.load %arg1[%c0_3, %c0_4] : memref<128x64xbf16, #tpu.memory_space<vmem>>, vector<128x64xbf16>
    %21 = arith.extf %20 : vector<128x64xbf16> to vector<128x64xf32>
    %22 = vector.extract_strided_slice %21 {offsets = [0, 0], sizes = [128, 8], strides = [1, 1]} : vector<128x64xf32> to vector<128x8xf32>
    %23 = vector.extract_strided_slice %21 {offsets = [0, 8], sizes = [128, 8], strides = [1, 1]} : vector<128x64xf32> to vector<128x8xf32>
    %24 = arith.subf %23, %22 : vector<128x8xf32>
    %25 = arith.mulf %7, %24 : vector<128x8xf32>
    %26 = arith.addf %22, %25 : vector<128x8xf32>
    %27 = vector.extract_strided_slice %21 {offsets = [0, 16], sizes = [128, 8], strides = [1, 1]} : vector<128x64xf32> to vector<128x8xf32>
    %28 = vector.extract_strided_slice %21 {offsets = [0, 24], sizes = [128, 8], strides = [1, 1]} : vector<128x64xf32> to vector<128x8xf32>
    %29 = arith.subf %28, %27 : vector<128x8xf32>
    %30 = arith.mulf %7, %29 : vector<128x8xf32>
    %31 = arith.addf %27, %30 : vector<128x8xf32>
    %32 = vector.extract_strided_slice %21 {offsets = [0, 32], sizes = [128, 8], strides = [1, 1]} : vector<128x64xf32> to vector<128x8xf32>
    %33 = vector.extract_strided_slice %21 {offsets = [0, 40], sizes = [128, 8], strides = [1, 1]} : vector<128x64xf32> to vector<128x8xf32>
    %34 = arith.subf %33, %32 : vector<128x8xf32>
    %35 = arith.mulf %7, %34 : vector<128x8xf32>
    %36 = arith.addf %32, %35 : vector<128x8xf32>
    %37 = vector.extract_strided_slice %21 {offsets = [0, 48], sizes = [128, 8], strides = [1, 1]} : vector<128x64xf32> to vector<128x8xf32>
    %38 = vector.extract_strided_slice %21 {offsets = [0, 56], sizes = [128, 8], strides = [1, 1]} : vector<128x64xf32> to vector<128x8xf32>
    %39 = arith.subf %38, %37 : vector<128x8xf32>
    %40 = arith.mulf %7, %39 : vector<128x8xf32>
    %41 = arith.addf %37, %40 : vector<128x8xf32>
    %42 = arith.subf %31, %26 : vector<128x8xf32>
    %43 = arith.mulf %13, %42 : vector<128x8xf32>
    %44 = arith.addf %26, %43 : vector<128x8xf32>
    %45 = arith.subf %41, %36 : vector<128x8xf32>
    %46 = arith.mulf %13, %45 : vector<128x8xf32>
    %47 = arith.addf %36, %46 : vector<128x8xf32>
    %48 = arith.subf %47, %44 : vector<128x8xf32>
    %49 = arith.mulf %19, %48 : vector<128x8xf32>
    %50 = arith.addf %44, %49 : vector<128x8xf32>
    %51 = arith.truncf %50 : vector<128x8xf32> to vector<128x8xbf16>
    %c0_5 = arith.constant 0 : index
    %c0_6 = arith.constant 0 : index
    %52 = vector.load %arg5[%c0_5, %c0_6] : memref<8x64xbf16, #tpu.memory_space<vmem>>, vector<8x64xbf16>
    %cst = arith.constant dense<0.000000e+00> : vector<128x64xf32>
    %53 = tpu.matmul %51, %52, %cst {dimension_numbers = #tpu.dot_dimension_numbers<[1], [0], [0], [1], [0, 0, 1, 1], [], []>} : vector<128x8xbf16>, vector<8x64xbf16>, vector<128x64xf32> -> vector<128x64xf32>
    %c0_7 = arith.constant 0 : index
    %c0_8 = arith.constant 0 : index
    %54 = vector.load %arg6[%c0_7, %c0_8] : memref<1x64xf32, #tpu.memory_space<vmem>>, vector<1x64xf32>
    %55 = vector.broadcast %54 : vector<1x64xf32> to vector<128x64xf32>
    %56 = arith.addf %53, %55 : vector<128x64xf32>
    %cst_9 = arith.constant 0.000000e+00 : f32
    %57 = vector.broadcast %cst_9 : f32 to vector<128x64xf32>
    %58 = arith.maximumf %56, %57 : vector<128x64xf32>
    %59 = arith.truncf %58 : vector<128x64xf32> to vector<128x64xbf16>
    %c0_10 = arith.constant 0 : index
    %c0_11 = arith.constant 0 : index
    %60 = vector.load %arg7[%c0_10, %c0_11] : memref<64x16xbf16, #tpu.memory_space<vmem>>, vector<64x16xbf16>
    %cst_12 = arith.constant dense<0.000000e+00> : vector<128x16xf32>
    %61 = tpu.matmul %59, %60, %cst_12 {dimension_numbers = #tpu.dot_dimension_numbers<[1], [0], [0], [1], [0, 0, 1, 1], [], []>} : vector<128x64xbf16>, vector<64x16xbf16>, vector<128x16xf32> -> vector<128x16xf32>
    %c0_13 = arith.constant 0 : index
    %c0_14 = arith.constant 0 : index
    %62 = vector.load %arg8[%c0_13, %c0_14] : memref<1x16xf32, #tpu.memory_space<vmem>>, vector<1x16xf32>
    %63 = vector.broadcast %62 : vector<1x16xf32> to vector<128x16xf32>
    %64 = arith.addf %61, %63 : vector<128x16xf32>
    %65 = tpu.concatenate %0, %0, %0, %0 in 1 : vector<128x8xf32>, vector<128x8xf32>, vector<128x8xf32>, vector<128x8xf32> -> vector<128x32xf32>
    %c0_15 = arith.constant 0 : index
    %c0_16 = arith.constant 0 : index
    %66 = vector.load %arg4[%c0_15, %c0_16] : memref<1x32xf32, #tpu.memory_space<vmem>>, vector<1x32xf32>
    %67 = vector.broadcast %66 : vector<1x32xf32> to vector<128x32xf32>
    %68 = arith.mulf %65, %67 : vector<128x32xf32>
    %69 = arith.truncf %64 : vector<128x16xf32> to vector<128x16xbf16>
    %c0_17 = arith.constant 0 : index
    %c0_18 = arith.constant 0 : index
    %70 = vector.load %arg9[%c0_17, %c0_18] : memref<16x64xbf16, #tpu.memory_space<vmem>>, vector<16x64xbf16>
    %cst_19 = arith.constant dense<0.000000e+00> : vector<128x64xf32>
    %71 = tpu.matmul %69, %70, %cst_19 {dimension_numbers = #tpu.dot_dimension_numbers<[1], [0], [0], [1], [0, 0, 1, 1], [], []>} : vector<128x16xbf16>, vector<16x64xbf16>, vector<128x64xf32> -> vector<128x64xf32>
    %c0_20 = arith.constant 0 : index
    %c0_21 = arith.constant 0 : index
    %72 = vector.load %arg13[%c0_20, %c0_21] : memref<1x64xf32, #tpu.memory_space<vmem>>, vector<1x64xf32>
    %73 = vector.broadcast %72 : vector<1x64xf32> to vector<128x64xf32>
    %74 = arith.addf %71, %73 : vector<128x64xf32>
    %75 = arith.truncf %0 : vector<128x8xf32> to vector<128x8xbf16>
    %c0_22 = arith.constant 0 : index
    %c0_23 = arith.constant 0 : index
    %76 = vector.load %arg10[%c0_22, %c0_23] : memref<8x64xbf16, #tpu.memory_space<vmem>>, vector<8x64xbf16>
    %cst_24 = arith.constant dense<0.000000e+00> : vector<128x64xf32>
    %77 = tpu.matmul %75, %76, %cst_24 {dimension_numbers = #tpu.dot_dimension_numbers<[1], [0], [0], [1], [0, 0, 1, 1], [], []>} : vector<128x8xbf16>, vector<8x64xbf16>, vector<128x64xf32> -> vector<128x64xf32>
    %78 = arith.addf %74, %77 : vector<128x64xf32>
    %79 = math.sin %68 : vector<128x32xf32>
    %80 = arith.truncf %79 : vector<128x32xf32> to vector<128x32xbf16>
    %c0_25 = arith.constant 0 : index
    %c0_26 = arith.constant 0 : index
    %81 = vector.load %arg11[%c0_25, %c0_26] : memref<32x64xbf16, #tpu.memory_space<vmem>>, vector<32x64xbf16>
    %cst_27 = arith.constant dense<0.000000e+00> : vector<128x64xf32>
    %82 = tpu.matmul %80, %81, %cst_27 {dimension_numbers = #tpu.dot_dimension_numbers<[1], [0], [0], [1], [0, 0, 1, 1], [], []>} : vector<128x32xbf16>, vector<32x64xbf16>, vector<128x64xf32> -> vector<128x64xf32>
    %83 = arith.addf %78, %82 : vector<128x64xf32>
    %84 = math.cos %68 : vector<128x32xf32>
    %85 = arith.truncf %84 : vector<128x32xf32> to vector<128x32xbf16>
    %c0_28 = arith.constant 0 : index
    %c0_29 = arith.constant 0 : index
    %86 = vector.load %arg12[%c0_28, %c0_29] : memref<32x64xbf16, #tpu.memory_space<vmem>>, vector<32x64xbf16>
    %cst_30 = arith.constant dense<0.000000e+00> : vector<128x64xf32>
    %87 = tpu.matmul %85, %86, %cst_30 {dimension_numbers = #tpu.dot_dimension_numbers<[1], [0], [0], [1], [0, 0, 1, 1], [], []>} : vector<128x32xbf16>, vector<32x64xbf16>, vector<128x64xf32> -> vector<128x64xf32>
    %88 = arith.addf %83, %87 : vector<128x64xf32>
    %cst_31 = arith.constant 0.000000e+00 : f32
    %89 = vector.broadcast %cst_31 : f32 to vector<128x64xf32>
    %90 = arith.maximumf %88, %89 : vector<128x64xf32>
    %91 = arith.truncf %90 : vector<128x64xf32> to vector<128x64xbf16>
    %c0_32 = arith.constant 0 : index
    %c0_33 = arith.constant 0 : index
    %92 = vector.load %arg14[%c0_32, %c0_33] : memref<64x64xbf16, #tpu.memory_space<vmem>>, vector<64x64xbf16>
    %cst_34 = arith.constant dense<0.000000e+00> : vector<128x64xf32>
    %93 = tpu.matmul %91, %92, %cst_34 {dimension_numbers = #tpu.dot_dimension_numbers<[1], [0], [0], [1], [0, 0, 1, 1], [], []>} : vector<128x64xbf16>, vector<64x64xbf16>, vector<128x64xf32> -> vector<128x64xf32>
    %c0_35 = arith.constant 0 : index
    %c0_36 = arith.constant 0 : index
    %94 = vector.load %arg15[%c0_35, %c0_36] : memref<1x64xf32, #tpu.memory_space<vmem>>, vector<1x64xf32>
    %95 = vector.broadcast %94 : vector<1x64xf32> to vector<128x64xf32>
    %96 = arith.addf %93, %95 : vector<128x64xf32>
    %cst_37 = arith.constant 0.000000e+00 : f32
    %97 = vector.broadcast %cst_37 : f32 to vector<128x64xf32>
    %98 = arith.maximumf %96, %97 : vector<128x64xf32>
    %99 = arith.truncf %98 : vector<128x64xf32> to vector<128x64xbf16>
    %c0_38 = arith.constant 0 : index
    %c0_39 = arith.constant 0 : index
    %100 = vector.load %arg16[%c0_38, %c0_39] : memref<64x4xbf16, #tpu.memory_space<vmem>>, vector<64x4xbf16>
    %cst_40 = arith.constant dense<0.000000e+00> : vector<128x4xf32>
    %101 = tpu.matmul %99, %100, %cst_40 {dimension_numbers = #tpu.dot_dimension_numbers<[1], [0], [0], [1], [0, 0, 1, 1], [], []>} : vector<128x64xbf16>, vector<64x4xbf16>, vector<128x4xf32> -> vector<128x4xf32>
    %c0_41 = arith.constant 0 : index
    %c0_42 = arith.constant 0 : index
    %102 = vector.load %arg17[%c0_41, %c0_42] : memref<1x4xf32, #tpu.memory_space<vmem>>, vector<1x4xf32>
    %103 = vector.broadcast %102 : vector<1x4xf32> to vector<128x4xf32>
    %104 = arith.addf %101, %103 : vector<128x4xf32>
    %105 = vector.extract_strided_slice %0 {offsets = [0, 6], sizes = [128, 1], strides = [1, 1]} : vector<128x8xf32> to vector<128x1xf32>
    %cst_43 = arith.constant 5.000000e-01 : f32
    %106 = vector.broadcast %cst_43 : f32 to vector<128x1xf32>
    %107 = arith.cmpf ogt, %105, %106 : vector<128x1xf32>
    %108 = arith.negf %104 : vector<128x4xf32>
    %109 = math.exp %108 : vector<128x4xf32>
    %cst_44 = arith.constant 1.000000e+00 : f32
    %110 = vector.broadcast %cst_44 : f32 to vector<128x4xf32>
    %111 = arith.addf %110, %109 : vector<128x4xf32>
    %112 = arith.divf %110, %111 : vector<128x4xf32>
    %cst_45 = arith.constant 0.000000e+00 : f32
    %113 = vector.shape_cast %107 : vector<128x1xi1> to vector<128x1xi1>
    %114 = vector.broadcast %113 : vector<128x1xi1> to vector<128x4xi1>
    %115 = vector.broadcast %cst_45 : f32 to vector<128x4xf32>
    %116 = arith.select %114, %112, %115 : vector<128x4xi1>, vector<128x4xf32>
    %117 = vector.extract_strided_slice %64 {offsets = [0, 0], sizes = [128, 1], strides = [1, 1]} : vector<128x16xf32> to vector<128x1xf32>
    %cst_46 = arith.constant -1.000000e+04 : f32
    %118 = vector.broadcast %cst_46 : f32 to vector<128x1xf32>
    %119 = arith.select %107, %117, %118 : vector<128x1xi1>, vector<128x1xf32>
    %120 = math.exp %119 : vector<128x1xf32>
    %121 = tpu.iota {dimensions = array<i32: 1>} : vector<128x4xi32>
    %c3_i32 = arith.constant 3 : i32
    %122 = vector.broadcast %c3_i32 : i32 to vector<128x4xi32>
    %123 = arith.cmpi eq, %121, %122 : vector<128x4xi32>
    %124 = vector.shape_cast %120 : vector<128x1xf32> to vector<128x1xf32>
    %125 = vector.broadcast %124 : vector<128x1xf32> to vector<128x4xf32>
    %126 = arith.select %123, %125, %116 : vector<128x4xi1>, vector<128x4xf32>
    %c0_47 = arith.constant 0 : index
    %c0_48 = arith.constant 0 : index
    %127 = vector.load %arg18[%c0_47, %c0_48] : memref<128x4xf32, #tpu.memory_space<vmem>>, vector<128x4xf32>
    tpu.vector_store %arg18[%c0_47, %c0_48], %126 {strides = array<i32>} : memref<128x4xf32, #tpu.memory_space<vmem>>, vector<128x4xf32>,
    return
  }
  func.func @transform_0(%arg0: i32) -> (i32, i32) {
    %c0_i32 = arith.constant 0 : i32
    %c0_i32_0 = arith.constant 0 : i32
    return %arg0, %c0_i32 : i32, i32
  }
  func.func @transform_1(%arg0: i32) -> (i32, i32) {
    %c0_i32 = arith.constant 0 : i32
    %c0_i32_0 = arith.constant 0 : i32
    return %arg0, %c0_i32 : i32, i32
  }
  func.func @transform_2(%arg0: i32) -> (i32, i32) {
    %c0_i32 = arith.constant 0 : i32
    %c0_i32_0 = arith.constant 0 : i32
    %c0_i32_1 = arith.constant 0 : i32
    return %c0_i32, %c0_i32_0 : i32, i32
  }
  func.func @transform_3(%arg0: i32) -> (i32, i32) {
    %c0_i32 = arith.constant 0 : i32
    %c0_i32_0 = arith.constant 0 : i32
    %c0_i32_1 = arith.constant 0 : i32
    return %c0_i32, %c0_i32_0 : i32, i32
  }
  func.func @transform_4(%arg0: i32) -> (i32, i32) {
    %c0_i32 = arith.constant 0 : i32
    %c0_i32_0 = arith.constant 0 : i32
    %c0_i32_1 = arith.constant 0 : i32
    return %c0_i32, %c0_i32_0 : i32, i32
  }
  func.func @transform_5(%arg0: i32) -> (i32, i32) {
    %c0_i32 = arith.constant 0 : i32
    %c0_i32_0 = arith.constant 0 : i32
    %c0_i32_1 = arith.constant 0 : i32
    return %c0_i32, %c0_i32_0 : i32, i32
  }
  func.func @transform_6(%arg0: i32) -> (i32, i32) {
    %c0_i32 = arith.constant 0 : i32
    %c0_i32_0 = arith.constant 0 : i32
    %c0_i32_1 = arith.constant 0 : i32
    return %c0_i32, %c0_i32_0 : i32, i32
  }
  func.func @transform_7(%arg0: i32) -> (i32, i32) {
    %c0_i32 = arith.constant 0 : i32
    %c0_i32_0 = arith.constant 0 : i32
    %c0_i32_1 = arith.constant 0 : i32
    return %c0_i32, %c0_i32_0 : i32, i32
  }
  func.func @transform_8(%arg0: i32) -> (i32, i32) {
    %c0_i32 = arith.constant 0 : i32
    %c0_i32_0 = arith.constant 0 : i32
    %c0_i32_1 = arith.constant 0 : i32
    return %c0_i32, %c0_i32_0 : i32, i32
  }
  func.func @transform_9(%arg0: i32) -> (i32, i32) {
    %c0_i32 = arith.constant 0 : i32
    %c0_i32_0 = arith.constant 0 : i32
    %c0_i32_1 = arith.constant 0 : i32
    return %c0_i32, %c0_i32_0 : i32, i32
  }
  func.func @transform_10(%arg0: i32) -> (i32, i32) {
    %c0_i32 = arith.constant 0 : i32
    %c0_i32_0 = arith.constant 0 : i32
    %c0_i32_1 = arith.constant 0 : i32
    return %c0_i32, %c0_i32_0 : i32, i32
  }
  func.func @transform_11(%arg0: i32) -> (i32, i32) {
    %c0_i32 = arith.constant 0 : i32
    %c0_i32_0 = arith.constant 0 : i32
    %c0_i32_1 = arith.constant 0 : i32
    return %c0_i32, %c0_i32_0 : i32, i32
  }
  func.func @transform_12(%arg0: i32) -> (i32, i32) {
    %c0_i32 = arith.constant 0 : i32
    %c0_i32_0 = arith.constant 0 : i32
    %c0_i32_1 = arith.constant 0 : i32
    return %c0_i32, %c0_i32_0 : i32, i32
  }
  func.func @transform_13(%arg0: i32) -> (i32, i32) {
    %c0_i32 = arith.constant 0 : i32
    %c0_i32_0 = arith.constant 0 : i32
    %c0_i32_1 = arith.constant 0 : i32
    return %c0_i32, %c0_i32_0 : i32, i32
  }
  func.func @transform_14(%arg0: i32) -> (i32, i32) {
    %c0_i32 = arith.constant 0 : i32
    %c0_i32_0 = arith.constant 0 : i32
    %c0_i32_1 = arith.constant 0 : i32
    return %c0_i32, %c0_i32_0 : i32, i32
  }
  func.func @transform_15(%arg0: i32) -> (i32, i32) {
    %c0_i32 = arith.constant 0 : i32
    %c0_i32_0 = arith.constant 0 : i32
    %c0_i32_1 = arith.constant 0 : i32
    return %c0_i32, %c0_i32_0 : i32, i32
  }
  func.func @transform_16(%arg0: i32) -> (i32, i32) {
    %c0_i32 = arith.constant 0 : i32
    %c0_i32_0 = arith.constant 0 : i32
    %c0_i32_1 = arith.constant 0 : i32
    return %c0_i32, %c0_i32_0 : i32, i32
  }
  func.func @transform_17(%arg0: i32) -> (i32, i32) {
    %c0_i32 = arith.constant 0 : i32
    %c0_i32_0 = arith.constant 0 : i32
    return %arg0, %c0_i32 : i32, i32
  }
}

</mosaic_0001>

<llo_original>
// kernel: tpu_custom_call.1
$region0: #{tpu_custom_call.1}
  #allocation0 [shape = 'u32[]', space=smem, size = 0x4, offset = 0x4, fixed_abs, tag = 'smem constant byte address 0x4 - core index']
  #allocation1 [shape = 'u32[144,128]{1,0:T(1,128)}', space=vmem, size = 0x12000, scoped, tag = 'internal scratch']
  %s0 = inlined_call_operand.vmem [shape: bf16[256,64], index: 0, kind: input, shape index: {}]
  %s1 = inlined_call_operand.vmem [shape: f32[256,8], index: 1, kind: input, shape index: {}]
  %s2 = inlined_call_operand.vmem [shape: f32[1,8], index: 2, kind: input, shape index: {}]
  %s3 = inlined_call_operand.vmem [shape: f32[1,32], index: 3, kind: input, shape index: {}]
  %s4 = inlined_call_operand.vmem [shape: bf16[8,64], index: 4, kind: input, shape index: {}]
  %s5 = inlined_call_operand.vmem [shape: f32[1,64], index: 5, kind: input, shape index: {}]
  %s6 = inlined_call_operand.vmem [shape: bf16[64,16], index: 6, kind: input, shape index: {}]
  %s7 = inlined_call_operand.vmem [shape: f32[1,16], index: 7, kind: input, shape index: {}]
  %s8 = inlined_call_operand.vmem [shape: bf16[16,64], index: 8, kind: input, shape index: {}]
  %s9 = inlined_call_operand.vmem [shape: bf16[8,64], index: 9, kind: input, shape index: {}]
  %s10 = inlined_call_operand.vmem [shape: bf16[32,64], index: 10, kind: input, shape index: {}]
  %s11 = inlined_call_operand.vmem [shape: bf16[32,64], index: 11, kind: input, shape index: {}]
  %s12 = inlined_call_operand.vmem [shape: f32[1,64], index: 12, kind: input, shape index: {}]
  %s13 = inlined_call_operand.vmem [shape: bf16[64,64], index: 13, kind: input, shape index: {}]
  %s14 = inlined_call_operand.vmem [shape: f32[1,64], index: 14, kind: input, shape index: {}]
  %s15 = inlined_call_operand.vmem [shape: bf16[64,4], index: 15, kind: input, shape index: {}]
  %s16 = inlined_call_operand.vmem [shape: f32[1,4], index: 16, kind: input, shape index: {}]
  %s17 = inlined_call_operand.vmem [shape: f32[256,4], index: 17, kind: output, shape index: {}]
  %s18 = sld [smem:[#allocation0]]
  $region101: #{tpu_custom_call.1} parent=0
    _
  %s20 = ssub.s32 1, %s18
  %s21 = scalar_select 0, %s20, %s18
  loop: start=0, step=1, limit=4
  $region2: #{tpu_custom_call.1} parent=0 // loop_pre_header
    _
  $region3: #{tpu_custom_call.1} parent=0 // loop_header
    %s23 = sphi 0, %s27
    %p24 = scmp.ge.s32.totalorder %s23, 4
    %s33 = sphi 0, %s35
    %s36 = sphi 0, %s33
    %s37 = sphi 0, %s36
    %s53 = sphi 0, %s37
    %s59 = sphi 0, %s61
    %s62 = sphi 0, %s59
    %s63 = sphi 0, %s62
    %s79 = sphi 0, %s63
    %s83 = sphi 0, %s83
    %s85 = sphi 0, %s83
    %s86 = sphi 0, %s85
    %s100 = sphi 0, %s86
    %s104 = sphi 0, %s104
    %s106 = sphi 0, %s104
    %s107 = sphi 0, %s106
    %s121 = sphi 0, %s107
    %s125 = sphi 0, %s125
    %s127 = sphi 0, %s125
    %s128 = sphi 0, %s127
    %s142 = sphi 0, %s128
    %s146 = sphi 0, %s146
    %s148 = sphi 0, %s146
    %s149 = sphi 0, %s148
    %s163 = sphi 0, %s149
    %s167 = sphi 0, %s167
    %s169 = sphi 0, %s167
    %s170 = sphi 0, %s169
    %s184 = sphi 0, %s170
    %s188 = sphi 0, %s188
    %s190 = sphi 0, %s188
    %s191 = sphi 0, %s190
    %s205 = sphi 0, %s191
    %s209 = sphi 0, %s209
    %s211 = sphi 0, %s209
    %s212 = sphi 0, %s211
    %s226 = sphi 0, %s212
    %s230 = sphi 0, %s230
    %s232 = sphi 0, %s230
    %s233 = sphi 0, %s232
    %s247 = sphi 0, %s233
    %s251 = sphi 0, %s251
    %s253 = sphi 0, %s251
    %s254 = sphi 0, %s253
    %s268 = sphi 0, %s254
    %s272 = sphi 0, %s272
    %s274 = sphi 0, %s272
    %s275 = sphi 0, %s274
    %s289 = sphi 0, %s275
    %s293 = sphi 0, %s293
    %s295 = sphi 0, %s293
    %s296 = sphi 0, %s295
    %s310 = sphi 0, %s296
    %s314 = sphi 0, %s314
    %s316 = sphi 0, %s314
    %s317 = sphi 0, %s316
    %s331 = sphi 0, %s317
    %s335 = sphi 0, %s335
    %s337 = sphi 0, %s335
    %s338 = sphi 0, %s337
    %s352 = sphi 0, %s338
    %s356 = sphi 0, %s356
    %s358 = sphi 0, %s356
    %s359 = sphi 0, %s358
    %s373 = sphi 0, %s359
    %s377 = sphi 0, %s377
    %s379 = sphi 0, %s377
    %s380 = sphi 0, %s379
    %s394 = sphi 0, %s380
    %s400 = sphi 0, %s402
    %s403 = sphi 0, %s400
    %s404 = sphi 0, %s403
    %s420 = sphi 0, %s404
  $region4: #{tpu_custom_call.1} parent=0 // loop_header_branch
    %26 = sbr.rel (%p24) target = $region8
  $region5: #{tpu_custom_call.1} parent=0 // loop_body
    %s28 = ssub.s32 %s23, 1
    %s29 = ssub.s32 %s23, 2
    %s30 = sadd.s32 %s23, 1
    %s31 = ssub.s32 %s23, %s30
    %p32 = scmp.eq.s32.totalorder %s31, 0
    %s34 = sadd.s32 %s33, 1
    %s35 = scalar_select %p32, %s33, %s34
    %p38 = pneg %p32
    %p39 = scmp.eq.s32.totalorder %s23, 1
    %p40 = por %p38, %p39
    %p41 = scmp.ne.s32.totalorder %s33, %s36
    %p42 = scmp.eq.s32.totalorder %s23, 0
    %p43 = por %p41, %p42
    %p44 = scmp.ne.s32.totalorder %s33, %s36
    %p45 = scmp.eq.s32.totalorder %s28, 1
    %p46 = por %p44, %p45
    %p47 = scmp.ne.s32.totalorder %s36, %s37
    %p48 = scmp.eq.s32.totalorder %s28, 0
    %p49 = por %p47, %p48
    %p50 = scmp.ne.s32.totalorder %s36, %s37
    %p51 = scmp.eq.s32.totalorder %s29, 1
    %p52 = por %p50, %p51
    %p54 = scmp.ne.s32.totalorder %s37, %s53
    %p55 = scmp.eq.s32.totalorder %s29, 0
    %p56 = por %p54, %p55
    %s57 = ssub.s32 %s23, %s30
    %p58 = scmp.eq.s32.totalorder %s57, 0
    %s60 = sadd.s32 %s59, 1
    %s61 = scalar_select %p58, %s59, %s60
    %p64 = pneg %p58
    %p65 = scmp.eq.s32.totalorder %s23, 1
    %p66 = por %p64, %p65
    %p67 = scmp.ne.s32.totalorder %s59, %s62
    %p68 = scmp.eq.s32.totalorder %s23, 0
    %p69 = por %p67, %p68
    %p70 = scmp.ne.s32.totalorder %s59, %s62
    %p71 = scmp.eq.s32.totalorder %s28, 1
    %p72 = por %p70, %p71
    %p73 = scmp.ne.s32.totalorder %s62, %s63
    %p74 = scmp.eq.s32.totalorder %s28, 0
    %p75 = por %p73, %p74
    %p76 = scmp.ne.s32.totalorder %s62, %s63
    %p77 = scmp.eq.s32.totalorder %s29, 1
    %p78 = por %p76, %p77
    %p80 = scmp.ne.s32.totalorder %s63, %s79
    %p81 = scmp.eq.s32.totalorder %s29, 0
    %p82 = por %p80, %p81
    %s84 = sadd.s32 %s83, 1
    %p87 = scmp.eq.s32.totalorder %s23, 1
    %p88 = scmp.ne.s32.totalorder %s83, %s85
    %p89 = scmp.eq.s32.totalorder %s23, 0
    %p90 = por %p88, %p89
    %p91 = scmp.ne.s32.totalorder %s83, %s85
    %p92 = scmp.eq.s32.totalorder %s28, 1
    %p93 = por %p91, %p92
    %p94 = scmp.ne.s32.totalorder %s85, %s86
    %p95 = scmp.eq.s32.totalorder %s28, 0
    %p96 = por %p94, %p95
    %p97 = scmp.ne.s32.totalorder %s85, %s86
    %p98 = scmp.eq.s32.totalorder %s29, 1
    %p99 = por %p97, %p98
    %p101 = scmp.ne.s32.totalorder %s86, %s100
    %p102 = scmp.eq.s32.totalorder %s29, 0
    %p103 = por %p101, %p102
    %s105 = sadd.s32 %s104, 1
    %p108 = scmp.eq.s32.totalorder %s23, 1
    %p109 = scmp.ne.s32.totalorder %s104, %s106
    %p110 = scmp.eq.s32.totalorder %s23, 0
    %p111 = por %p109, %p110
    %p112 = scmp.ne.s32.totalorder %s104, %s106
    %p113 = scmp.eq.s32.totalorder %s28, 1
    %p114 = por %p112, %p113
    %p115 = scmp.ne.s32.totalorder %s106, %s107
    %p116 = scmp.eq.s32.totalorder %s28, 0
    %p117 = por %p115, %p116
    %p118 = scmp.ne.s32.totalorder %s106, %s107
    %p119 = scmp.eq.s32.totalorder %s29, 1
    %p120 = por %p118, %p119
    %p122 = scmp.ne.s32.totalorder %s107, %s121
    %p123 = scmp.eq.s32.totalorder %s29, 0
    %p124 = por %p122, %p123
    %s126 = sadd.s32 %s125, 1
    %p129 = scmp.eq.s32.totalorder %s23, 1
    %p130 = scmp.ne.s32.totalorder %s125, %s127
    %p131 = scmp.eq.s32.totalorder %s23, 0
    %p132 = por %p130, %p131
    %p133 = scmp.ne.s32.totalorder %s125, %s127
    %p134 = scmp.eq.s32.totalorder %s28, 1
    %p135 = por %p133, %p134
    %p136 = scmp.ne.s32.totalorder %s127, %s128
    %p137 = scmp.eq.s32.totalorder %s28, 0
    %p138 = por %p136, %p137
    %p139 = scmp.ne.s32.totalorder %s127, %s128
    %p140 = scmp.eq.s32.totalorder %s29, 1
    %p141 = por %p139, %p140
    %p143 = scmp.ne.s32.totalorder %s128, %s142
    %p144 = scmp.eq.s32.totalorder %s29, 0
    %p145 = por %p143, %p144
    %s147 = sadd.s32 %s146, 1
    %p150 = scmp.eq.s32.totalorder %s23, 1
    %p151 = scmp.ne.s32.totalorder %s146, %s148
    %p152 = scmp.eq.s32.totalorder %s23, 0
    %p153 = por %p151, %p152
    %p154 = scmp.ne.s32.totalorder %s146, %s148
    %p155 = scmp.eq.s32.totalorder %s28, 1
    %p156 = por %p154, %p155
    %p157 = scmp.ne.s32.totalorder %s148, %s149
    %p158 = scmp.eq.s32.totalorder %s28, 0
    %p159 = por %p157, %p158
    %p160 = scmp.ne.s32.totalorder %s148, %s149
    %p161 = scmp.eq.s32.totalorder %s29, 1
    %p162 = por %p160, %p161
    %p164 = scmp.ne.s32.totalorder %s149, %s163
    %p165 = scmp.eq.s32.totalorder %s29, 0
    %p166 = por %p164, %p165
    %s168 = sadd.s32 %s167, 1
    %p171 = scmp.eq.s32.totalorder %s23, 1
    %p172 = scmp.ne.s32.totalorder %s167, %s169
    %p173 = scmp.eq.s32.totalorder %s23, 0
    %p174 = por %p172, %p173
    %p175 = scmp.ne.s32.totalorder %s167, %s169
    %p176 = scmp.eq.s32.totalorder %s28, 1
    %p177 = por %p175, %p176
    %p178 = scmp.ne.s32.totalorder %s169, %s170
    %p179 = scmp.eq.s32.totalorder %s28, 0
    %p180 = por %p178, %p179
    %p181 = scmp.ne.s32.totalorder %s169, %s170
    %p182 = scmp.eq.s32.totalorder %s29, 1
    %p183 = por %p181, %p182
    %p185 = scmp.ne.s32.totalorder %s170, %s184
    %p186 = scmp.eq.s32.totalorder %s29, 0
    %p187 = por %p185, %p186
    %s189 = sadd.s32 %s188, 1
    %p192 = scmp.eq.s32.totalorder %s23, 1
    %p193 = scmp.ne.s32.totalorder %s188, %s190
    %p194 = scmp.eq.s32.totalorder %s23, 0
    %p195 = por %p193, %p194
    %p196 = scmp.ne.s32.totalorder %s188, %s190
    %p197 = scmp.eq.s32.totalorder %s28, 1
    %p198 = por %p196, %p197
    %p199 = scmp.ne.s32.totalorder %s190, %s191
    %p200 = scmp.eq.s32.totalorder %s28, 0
    %p201 = por %p199, %p200
    %p202 = scmp.ne.s32.totalorder %s190, %s191
    %p203 = scmp.eq.s32.totalorder %s29, 1
    %p204 = por %p202, %p203
    %p206 = scmp.ne.s32.totalorder %s191, %s205
    %p207 = scmp.eq.s32.totalorder %s29, 0
    %p208 = por %p206, %p207
    %s210 = sadd.s32 %s209, 1
    %p213 = scmp.eq.s32.totalorder %s23, 1
    %p214 = scmp.ne.s32.totalorder %s209, %s211
    %p215 = scmp.eq.s32.totalorder %s23, 0
    %p216 = por %p214, %p215
    %p217 = scmp.ne.s32.totalorder %s209, %s211
    %p218 = scmp.eq.s32.totalorder %s28, 1
    %p219 = por %p217, %p218
    %p220 = scmp.ne.s32.totalorder %s211, %s212
    %p221 = scmp.eq.s32.totalorder %s28, 0
    %p222 = por %p220, %p221
    %p223 = scmp.ne.s32.totalorder %s211, %s212
    %p224 = scmp.eq.s32.totalorder %s29, 1
    %p225 = por %p223, %p224
    %p227 = scmp.ne.s32.totalorder %s212, %s226
    %p228 = scmp.eq.s32.totalorder %s29, 0
    %p229 = por %p227, %p228
    %s231 = sadd.s32 %s230, 1
    %p234 = scmp.eq.s32.totalorder %s23, 1
    %p235 = scmp.ne.s32.totalorder %s230, %s232
    %p236 = scmp.eq.s32.totalorder %s23, 0
    %p237 = por %p235, %p236
    %p238 = scmp.ne.s32.totalorder %s230, %s232
    %p239 = scmp.eq.s32.totalorder %s28, 1
    %p240 = por %p238, %p239
    %p241 = scmp.ne.s32.totalorder %s232, %s233
    %p242 = scmp.eq.s32.totalorder %s28, 0
    %p243 = por %p241, %p242
    %p244 = scmp.ne.s32.totalorder %s232, %s233
    %p245 = scmp.eq.s32.totalorder %s29, 1
    %p246 = por %p244, %p245
    %p248 = scmp.ne.s32.totalorder %s233, %s247
    %p249 = scmp.eq.s32.totalorder %s29, 0
    %p250 = por %p248, %p249
    %s252 = sadd.s32 %s251, 1
    %p255 = scmp.eq.s32.totalorder %s23, 1
    %p256 = scmp.ne.s32.totalorder %s251, %s253
    %p257 = scmp.eq.s32.totalorder %s23, 0
    %p258 = por %p256, %p257
    %p259 = scmp.ne.s32.totalorder %s251, %s253
    %p260 = scmp.eq.s32.totalorder %s28, 1
    %p261 = por %p259, %p260
    %p262 = scmp.ne.s32.totalorder %s253, %s254
    %p263 = scmp.eq.s32.totalorder %s28, 0
    %p264 = por %p262, %p263
    %p265 = scmp.ne.s32.totalorder %s253, %s254
    %p266 = scmp.eq.s32.totalorder %s29, 1
    %p267 = por %p265, %p266
    %p269 = scmp.ne.s32.totalorder %s254, %s268
    %p270 = scmp.eq.s32.totalorder %s29, 0
    %p271 = por %p269, %p270
    %s273 = sadd.s32 %s272, 1
    %p276 = scmp.eq.s32.totalorder %s23, 1
    %p277 = scmp.ne.s32.totalorder %s272, %s274
    %p278 = scmp.eq.s32.totalorder %s23, 0
    %p279 = por %p277, %p278
    %p280 = scmp.ne.s32.totalorder %s272, %s274
    %p281 = scmp.eq.s32.totalorder %s28, 1
    %p282 = por %p280, %p281
    %p283 = scmp.ne.s32.totalorder %s274, %s275
    %p284 = scmp.eq.s32.totalorder %s28, 0
    %p285 = por %p283, %p284
    %p286 = scmp.ne.s32.totalorder %s274, %s275
    %p287 = scmp.eq.s32.totalorder %s29, 1
    %p288 = por %p286, %p287
    %p290 = scmp.ne.s32.totalorder %s275, %s289
    %p291 = scmp.eq.s32.totalorder %s29, 0
    %p292 = por %p290, %p291
    %s294 = sadd.s32 %s293, 1
    %p297 = scmp.eq.s32.totalorder %s23, 1
    %p298 = scmp.ne.s32.totalorder %s293, %s295
    %p299 = scmp.eq.s32.totalorder %s23, 0
    %p300 = por %p298, %p299
    %p301 = scmp.ne.s32.totalorder %s293, %s295
    %p302 = scmp.eq.s32.totalorder %s28, 1
    %p303 = por %p301, %p302
    %p304 = scmp.ne.s32.totalorder %s295, %s296
    %p305 = scmp.eq.s32.totalorder %s28, 0
    %p306 = por %p304, %p305
    %p307 = scmp.ne.s32.totalorder %s295, %s296
    %p308 = scmp.eq.s32.totalorder %s29, 1
    %p309 = por %p307, %p308
    %p311 = scmp.ne.s32.totalorder %s296, %s310
    %p312 = scmp.eq.s32.totalorder %s29, 0
    %p313 = por %p311, %p312
    %s315 = sadd.s32 %s314, 1
    %p318 = scmp.eq.s32.totalorder %s23, 1
    %p319 = scmp.ne.s32.totalorder %s314, %s316
    %p320 = scmp.eq.s32.totalorder %s23, 0
    %p321 = por %p319, %p320
    %p322 = scmp.ne.s32.totalorder %s314, %s316
    %p323 = scmp.eq.s32.totalorder %s28, 1
    %p324 = por %p322, %p323
    %p325 = scmp.ne.s32.totalorder %s316, %s317
    %p326 = scmp.eq.s32.totalorder %s28, 0
    %p327 = por %p325, %p326
    %p328 = scmp.ne.s32.totalorder %s316, %s317
    %p329 = scmp.eq.s32.totalorder %s29, 1
    %p330 = por %p328, %p329
    %p332 = scmp.ne.s32.totalorder %s317, %s331
    %p333 = scmp.eq.s32.totalorder %s29, 0
    %p334 = por %p332, %p333
    %s336 = sadd.s32 %s335, 1
    %p339 = scmp.eq.s32.totalorder %s23, 1
    %p340 = scmp.ne.s32.totalorder %s335, %s337
    %p341 = scmp.eq.s32.totalorder %s23, 0
    %p342 = por %p340, %p341
    %p343 = scmp.ne.s32.totalorder %s335, %s337
    %p344 = scmp.eq.s32.totalorder %s28, 1
    %p345 = por %p343, %p344
    %p346 = scmp.ne.s32.totalorder %s337, %s338
    %p347 = scmp.eq.s32.totalorder %s28, 0
    %p348 = por %p346, %p347
    %p349 = scmp.ne.s32.totalorder %s337, %s338
    %p350 = scmp.eq.s32.totalorder %s29, 1
    %p351 = por %p349, %p350
    %p353 = scmp.ne.s32.totalorder %s338, %s352
    %p354 = scmp.eq.s32.totalorder %s29, 0
    %p355 = por %p353, %p354
    %s357 = sadd.s32 %s356, 1
    %p360 = scmp.eq.s32.totalorder %s23, 1
    %p361 = scmp.ne.s32.totalorder %s356, %s358
    %p362 = scmp.eq.s32.totalorder %s23, 0
    %p363 = por %p361, %p362
    %p364 = scmp.ne.s32.totalorder %s356, %s358
    %p365 = scmp.eq.s32.totalorder %s28, 1
    %p366 = por %p364, %p365
    %p367 = scmp.ne.s32.totalorder %s358, %s359
    %p368 = scmp.eq.s32.totalorder %s28, 0
    %p369 = por %p367, %p368
    %p370 = scmp.ne.s32.totalorder %s358, %s359
    %p371 = scmp.eq.s32.totalorder %s29, 1
    %p372 = por %p370, %p371
    %p374 = scmp.ne.s32.totalorder %s359, %s373
    %p375 = scmp.eq.s32.totalorder %s29, 0
    %p376 = por %p374, %p375
    %s378 = sadd.s32 %s377, 1
    %p381 = scmp.eq.s32.totalorder %s23, 1
    %p382 = scmp.ne.s32.totalorder %s377, %s379
    %p383 = scmp.eq.s32.totalorder %s23, 0
    %p384 = por %p382, %p383
    %p385 = scmp.ne.s32.totalorder %s377, %s379
    %p386 = scmp.eq.s32.totalorder %s28, 1
    %p387 = por %p385, %p386
    %p388 = scmp.ne.s32.totalorder %s379, %s380
    %p389 = scmp.eq.s32.totalorder %s28, 0
    %p390 = por %p388, %p389
    %p391 = scmp.ne.s32.totalorder %s379, %s380
    %p392 = scmp.eq.s32.totalorder %s29, 1
    %p393 = por %p391, %p392
    %p395 = scmp.ne.s32.totalorder %s380, %s394
    %p396 = scmp.eq.s32.totalorder %s29, 0
    %p397 = por %p395, %p396
    %s398 = ssub.s32 %s23, %s30
    %p399 = scmp.eq.s32.totalorder %s398, 0
    %s401 = sadd.s32 %s400, 1
    %s402 = scalar_select %p399, %s400, %s401
    %p405 = pneg %p399
    %p406 = scmp.eq.s32.totalorder %s23, 1
    %p407 = por %p405, %p406
    %p408 = scmp.ne.s32.totalorder %s400, %s403
    %p409 = scmp.eq.s32.totalorder %s23, 0
    %p410 = por %p408, %p409
    %p411 = scmp.ne.s32.totalorder %s400, %s403
    %p412 = scmp.eq.s32.totalorder %s28, 1
    %p413 = por %p411, %p412
    %p414 = scmp.ne.s32.totalorder %s403, %s404
    %p415 = scmp.eq.s32.totalorder %s28, 0
    %p416 = por %p414, %p415
    %p417 = scmp.ne.s32.totalorder %s403, %s404
    %p418 = scmp.eq.s32.totalorder %s29, 1
    %p419 = por %p417, %p418
    %p421 = scmp.ne.s32.totalorder %s404, %s420
    %p422 = scmp.eq.s32.totalorder %s29, 0
    %p423 = por %p421, %p422
    %p424 = scmp.le.s32.totalorder 1, %s23
    %p425 = scmp.lt.s32.totalorder %s23, 3
    %p426 = pnand %p424, %p425
    %p427 = pneg %p426
    // Predicated region
    $region9: #{tpu_custom_call.1} parent=5 // pred_check
      _
    $region10: #{tpu_custom_call.1} parent=5 // pred_check_branch
      %429 = sbr.rel (%p426) target = $region12
    $region11: #{tpu_custom_call.1} parent=5 // pred_region
      %s430 = ssub.s32 %s23, 1
      // Predicated region
      $region13: #{tpu_custom_call.1} parent=11 // pred_check
        %p431 = pneg %p96
      $region14: #{tpu_custom_call.1} parent=11 // pred_check_branch
        %433 = sbr.rel (%p431) target = $region16
      $region15: #{tpu_custom_call.1} parent=11 // pred_region
        _
      $region16: #{tpu_custom_call.1} parent=11 // pred_fallthru
        _
      // Predicated region
      $region17: #{tpu_custom_call.1} parent=11 // pred_check
        %p434 = pneg %p117
      $region18: #{tpu_custom_call.1} parent=11 // pred_check_branch
        %436 = sbr.rel (%p434) target = $region20
      $region19: #{tpu_custom_call.1} parent=11 // pred_region
        _
      $region20: #{tpu_custom_call.1} parent=11 // pred_fallthru
        _
      // Predicated region
      $region21: #{tpu_custom_call.1} parent=11 // pred_check
        %p437 = pneg %p138
      $region22: #{tpu_custom_call.1} parent=11 // pred_check_branch
        %439 = sbr.rel (%p437) target = $region24
      $region23: #{tpu_custom_call.1} parent=11 // pred_region
        _
      $region24: #{tpu_custom_call.1} parent=11 // pred_fallthru
        _
      // Predicated region
      $region25: #{tpu_custom_call.1} parent=11 // pred_check
        %p440 = pneg %p159
      $region26: #{tpu_custom_call.1} parent=11 // pred_check_branch
        %442 = sbr.rel (%p440) target = $region28
      $region27: #{tpu_custom_call.1} parent=11 // pred_region
        _
      $region28: #{tpu_custom_call.1} parent=11 // pred_fallthru
        _
      // Predicated region
      $region29: #{tpu_custom_call.1} parent=11 // pred_check
        %p443 = pneg %p180
      $region30: #{tpu_custom_call.1} parent=11 // pred_check_branch
        %445 = sbr.rel (%p443) target = $region32
      $region31: #{tpu_custom_call.1} parent=11 // pred_region
        _
      $region32: #{tpu_custom_call.1} parent=11 // pred_fallthru
        _
      // Predicated region
      $region33: #{tpu_custom_call.1} parent=11 // pred_check
        %p446 = pneg %p201
      $region34: #{tpu_custom_call.1} parent=11 // pred_check_branch
        %448 = sbr.rel (%p446) target = $region36
      $region35: #{tpu_custom_call.1} parent=11 // pred_region
        _
      $region36: #{tpu_custom_call.1} parent=11 // pred_fallthru
        _
      // Predicated region
      $region37: #{tpu_custom_call.1} parent=11 // pred_check
        %p449 = pneg %p222
      $region38: #{tpu_custom_call.1} parent=11 // pred_check_branch
        %451 = sbr.rel (%p449) target = $region40
      $region39: #{tpu_custom_call.1} parent=11 // pred_region
        _
      $region40: #{tpu_custom_call.1} parent=11 // pred_fallthru
        _
      // Predicated region
      $region41: #{tpu_custom_call.1} parent=11 // pred_check
        %p452 = pneg %p243
      $region42: #{tpu_custom_call.1} parent=11 // pred_check_branch
        %454 = sbr.rel (%p452) target = $region44
      $region43: #{tpu_custom_call.1} parent=11 // pred_region
        _
      $region44: #{tpu_custom_call.1} parent=11 // pred_fallthru
        _
      // Predicated region
      $region45: #{tpu_custom_call.1} parent=11 // pred_check
        %p455 = pneg %p264
      $region46: #{tpu_custom_call.1} parent=11 // pred_check_branch
        %457 = sbr.rel (%p455) target = $region48
      $region47: #{tpu_custom_call.1} parent=11 // pred_region
        _
      $region48: #{tpu_custom_call.1} parent=11 // pred_fallthru
        _
      // Predicated region
      $region49: #{tpu_custom_call.1} parent=11 // pred_check
        %p458 = pneg %p285
      $region50: #{tpu_custom_call.1} parent=11 // pred_check_branch
        %460 = sbr.rel (%p458) target = $region52
      $region51: #{tpu_custom_call.1} parent=11 // pred_region
        _
      $region52: #{tpu_custom_call.1} parent=11 // pred_fallthru
        _
      // Predicated region
      $region53: #{tpu_custom_call.1} parent=11 // pred_check
        %p461 = pneg %p306
      $region54: #{tpu_custom_call.1} parent=11 // pred_check_branch
        %463 = sbr.rel (%p461) target = $region56
      $region55: #{tpu_custom_call.1} parent=11 // pred_region
        _
      $region56: #{tpu_custom_call.1} parent=11 // pred_fallthru
        _
      // Predicated region
      $region57: #{tpu_custom_call.1} parent=11 // pred_check
        %p464 = pneg %p327
      $region58: #{tpu_custom_call.1} parent=11 // pred_check_branch
        %466 = sbr.rel (%p464) target = $region60
      $region59: #{tpu_custom_call.1} parent=11 // pred_region
        _
      $region60: #{tpu_custom_call.1} parent=11 // pred_fallthru
        _
      // Predicated region
      $region61: #{tpu_custom_call.1} parent=11 // pred_check
        %p467 = pneg %p348
      $region62: #{tpu_custom_call.1} parent=11 // pred_check_branch
        %469 = sbr.rel (%p467) target = $region64
      $region63: #{tpu_custom_call.1} parent=11 // pred_region
        _
      $region64: #{tpu_custom_call.1} parent=11 // pred_fallthru
        _
      // Predicated region
      $region65: #{tpu_custom_call.1} parent=11 // pred_check
        %p470 = pneg %p369
      $region66: #{tpu_custom_call.1} parent=11 // pred_check_branch
        %472 = sbr.rel (%p470) target = $region68
      $region67: #{tpu_custom_call.1} parent=11 // pred_region
        _
      $region68: #{tpu_custom_call.1} parent=11 // pred_fallthru
        _
      // Predicated region
      $region69: #{tpu_custom_call.1} parent=11 // pred_check
        %p473 = pneg %p390
      $region70: #{tpu_custom_call.1} parent=11 // pred_check_branch
        %475 = sbr.rel (%p473) target = $region72
      $region71: #{tpu_custom_call.1} parent=11 // pred_region
        _
      $region72: #{tpu_custom_call.1} parent=11 // pred_fallthru
        _
    $region12: #{tpu_custom_call.1} parent=5 // pred_fallthru
      _
    %p476 = scmp.lt.s32.totalorder %s23, 2
    // Predicated region
    $region73: #{tpu_custom_call.1} parent=5 // pred_check
      %p477 = pneg %p476
    $region74: #{tpu_custom_call.1} parent=5 // pred_check_branch
      %479 = sbr.rel (%p477) target = $region76
    $region75: #{tpu_custom_call.1} parent=5 // pred_region
      // Predicated region
      $region77: #{tpu_custom_call.1} parent=75 // pred_check
        %p480 = pneg %p43
      $region78: #{tpu_custom_call.1} parent=75 // pred_check_branch
        %482 = sbr.rel (%p480) target = $region80
      $region79: #{tpu_custom_call.1} parent=75 // pred_region
        %s483 = smul.u32 16, %s23
        %p484 = scmp.lt.s32.totalorder %s483, 31
        %s485 = scalar_select %p484, %s483, 31
        %s486 = smul.addr %s485, 4
        %s487 = scalar_lea.vmem %s0, %s486
        %s488 = smul.u32 16, %s23
      $region80: #{tpu_custom_call.1} parent=75 // pred_fallthru
        _
      // Predicated region
      $region81: #{tpu_custom_call.1} parent=75 // pred_check
        %p489 = pneg %p69
      $region82: #{tpu_custom_call.1} parent=75 // pred_check_branch
        %491 = sbr.rel (%p489) target = $region84
      $region83: #{tpu_custom_call.1} parent=75 // pred_region
        %s492 = smul.u32 16, %s23
        %p493 = scmp.lt.s32.totalorder %s492, 31
        %s494 = scalar_select %p493, %s492, 31
        %s495 = smul.addr %s494, 8
        %s496 = scalar_lea.vmem %s1, %s495
        %s497 = smul.u32 16, %s23
      $region84: #{tpu_custom_call.1} parent=75 // pred_fallthru
        _
    $region76: #{tpu_custom_call.1} parent=5 // pred_fallthru
      _
    %p498 = scmp.le.s32.totalorder 1, %s23
    %p499 = scmp.lt.s32.totalorder %s23, 3
    %p500 = pnand %p498, %p499
    %p501 = pneg %p500
    // Predicated region
    $region85: #{tpu_custom_call.1} parent=5 // pred_check
      _
    $region86: #{tpu_custom_call.1} parent=5 // pred_check_branch
      %503 = sbr.rel (%p500) target = $region88
    $region87: #{tpu_custom_call.1} parent=5 // pred_region
      %s504 = ssub.s32 %s23, 1
      %s505 = smul.u32 16, %s28
      %p506 = scmp.lt.s32.totalorder %s505, 31
      %s507 = scalar_select %p506, %s505, 31
      %s508 = smul.addr %s507, 4
      %s509 = scalar_lea.vmem %s0, %s508
      %p510 = pneg %p49
      %p511 = pneg %p46
      %s512 = smul.u32 16, %s28
      %p513 = scmp.lt.s32.totalorder %s512, 31
      %s514 = scalar_select %p513, %s512, 31
      %s515 = smul.addr %s514, 8
      %s516 = scalar_lea.vmem %s1, %s515
      %p517 = pneg %p75
      %p518 = pneg %p72
      %p519 = pneg %p96
      %p520 = pneg %p93
      %p521 = pneg %p117
      %p522 = pneg %p114
      %p523 = pneg %p138
      %p524 = pneg %p135
      %p525 = pneg %p159
      %p526 = pneg %p156
      %p527 = pneg %p180
      %p528 = pneg %p177
      %p529 = pneg %p201
      %p530 = pneg %p198
      %p531 = pneg %p222
      %p532 = pneg %p219
      %p533 = pneg %p243
      %p534 = pneg %p240
      %p535 = pneg %p264
      %p536 = pneg %p261
      %p537 = pneg %p285
      %p538 = pneg %p282
      %p539 = pneg %p306
      %p540 = pneg %p303
      %p541 = pneg %p327
      %p542 = pneg %p324
      %p543 = pneg %p348
      %p544 = pneg %p345
      %p545 = pneg %p369
      %p546 = pneg %p366
      %p547 = pneg %p390
      %p548 = pneg %p387
      %p549 = pneg %p416
      %p550 = pneg %p413
      %s551 = smul.u32 16, %s28
      %p552 = scmp.lt.s32.totalorder %s551, 31
      %s553 = scalar_select %p552, %s551, 31
      %s554 = smul.addr %s553, 8
      %s555 = scalar_lea.vmem %s17, %s554
      %s556 = smul.u32 16, %s28
      %p557 = scmp.lt.s32.totalorder %s556, 31
      %s558 = scalar_select %p557, %s556, 31
      %s559 = smul.addr %s558, 4
      %s560 = scalar_lea.vmem %s0, %s559
      %s561 = smul.u32 16, %s28
      %s562 = smul.u32 16, %s28
      %p563 = scmp.lt.s32.totalorder %s562, 31
      %s564 = scalar_select %p563, %s562, 31
      %s565 = smul.addr %s564, 8
      %s566 = scalar_lea.vmem %s1, %s565
      %s567 = smul.u32 16, %s28
      %s568 = smul.u32 16, %s28
      %p569 = scmp.lt.s32.totalorder %s568, 31
      %s570 = scalar_select %p569, %s568, 31
      %s571 = smul.addr %s570, 8
      %s572 = scalar_lea.vmem %s17, %s571
      %s573 = smul.u32 16, %s28
      %v575 = vld [vmem:[%s566] sm:$0xff]
      %v576 = vld [vmem:[%s566 + $0x8] sm:$0xff]
      %v577 = vld [vmem:[%s566 + $0x10] sm:$0xff]
      %v578 = vld [vmem:[%s566 + $0x18] sm:$0xff]
      %v579 = vld [vmem:[%s566 + $0x20] sm:$0xff]
      %v580 = vld [vmem:[%s566 + $0x28] sm:$0xff]
      %v581 = vld [vmem:[%s566 + $0x30] sm:$0xff]
      %v582 = vld [vmem:[%s566 + $0x38] sm:$0xff]
      %v583 = vld [vmem:[%s566 + $0x40] sm:$0xff]
      %v584 = vld [vmem:[%s566 + $0x48] sm:$0xff]
      %v585 = vld [vmem:[%s566 + $0x50] sm:$0xff]
      %v586 = vld [vmem:[%s566 + $0x58] sm:$0xff]
      %v587 = vld [vmem:[%s566 + $0x60] sm:$0xff]
      %v588 = vld [vmem:[%s566 + $0x68] sm:$0xff]
      %v589 = vld [vmem:[%s566 + $0x70] sm:$0xff]
      %v590 = vld [vmem:[%s566 + $0x78] sm:$0xff]
      %v591 = vld [vmem:[%s2] sm:$0x1]
      %593 = vset.pattern.permute.xlu0 3
      %594 = vperm.xlu0 %593, %v575
      %v595 = vpop.permute.xlu0 %594
      %598 = vset.pattern.permute.xlu0 3
      %599 = vperm.xlu0 %598, %v576
      %v600 = vpop.permute.xlu0 %599
      %603 = vset.pattern.permute.xlu0 3
      %604 = vperm.xlu0 %603, %v577
      %v605 = vpop.permute.xlu0 %604
      %608 = vset.pattern.permute.xlu0 3
      %609 = vperm.xlu0 %608, %v578
      %v610 = vpop.permute.xlu0 %609
      %613 = vset.pattern.permute.xlu0 3
      %614 = vperm.xlu0 %613, %v579
      %v615 = vpop.permute.xlu0 %614
      %618 = vset.pattern.permute.xlu0 3
      %619 = vperm.xlu0 %618, %v580
      %v620 = vpop.permute.xlu0 %619
      %623 = vset.pattern.permute.xlu0 3
      %624 = vperm.xlu0 %623, %v581
      %v625 = vpop.permute.xlu0 %624
      %628 = vset.pattern.permute.xlu0 3
      %629 = vperm.xlu0 %628, %v582
      %v630 = vpop.permute.xlu0 %629
      %633 = vset.pattern.permute.xlu0 3
      %634 = vperm.xlu0 %633, %v583
      %v635 = vpop.permute.xlu0 %634
      %638 = vset.pattern.permute.xlu0 3
      %639 = vperm.xlu0 %638, %v584
      %v640 = vpop.permute.xlu0 %639
      %643 = vset.pattern.permute.xlu0 3
      %644 = vperm.xlu0 %643, %v585
      %v645 = vpop.permute.xlu0 %644
      %648 = vset.pattern.permute.xlu0 3
      %649 = vperm.xlu0 %648, %v586
      %v650 = vpop.permute.xlu0 %649
      %653 = vset.pattern.permute.xlu0 3
      %654 = vperm.xlu0 %653, %v587
      %v655 = vpop.permute.xlu0 %654
      %658 = vset.pattern.permute.xlu0 3
      %659 = vperm.xlu0 %658, %v588
      %v660 = vpop.permute.xlu0 %659
      %663 = vset.pattern.permute.xlu0 3
      %664 = vperm.xlu0 %663, %v589
      %v665 = vpop.permute.xlu0 %664
      %668 = vset.pattern.permute.xlu0 3
      %669 = vperm.xlu0 %668, %v590
      %v670 = vpop.permute.xlu0 %669
      %v673 = vlaneseq
      %v674 = vshrl.u32 %v673, 7
      %v675 = vsub.s32 0, %v674
      %v676 = vrot.slane %v591, %v675
      %v678 = vmul.f32 %v595, %v676
      %v679 = vmul.f32 %v600, %v676
      %v680 = vmul.f32 %v605, %v676
      %v681 = vmul.f32 %v610, %v676
      %v682 = vmul.f32 %v615, %v676
      %v683 = vmul.f32 %v620, %v676
      %v684 = vmul.f32 %v625, %v676
      %v685 = vmul.f32 %v630, %v676
      %v686 = vmul.f32 %v635, %v676
      %v687 = vmul.f32 %v640, %v676
      %v688 = vmul.f32 %v645, %v676
      %v689 = vmul.f32 %v650, %v676
      %v690 = vmul.f32 %v655, %v676
      %v691 = vmul.f32 %v660, %v676
      %v692 = vmul.f32 %v665, %v676
      %v693 = vmul.f32 %v670, %v676
      %v694 = vfloor.f32 %v678
      %v695 = vfloor.f32 %v679
      %v696 = vfloor.f32 %v680
      %v697 = vfloor.f32 %v681
      %v698 = vfloor.f32 %v682
      %v699 = vfloor.f32 %v683
      %v700 = vfloor.f32 %v684
      %v701 = vfloor.f32 %v685
      %v702 = vfloor.f32 %v686
      %v703 = vfloor.f32 %v687
      %v704 = vfloor.f32 %v688
      %v705 = vfloor.f32 %v689
      %v706 = vfloor.f32 %v690
      %v707 = vfloor.f32 %v691
      %v708 = vfloor.f32 %v692
      %v709 = vfloor.f32 %v693
      %v710 = vsub.f32 %v678, %v694
      %v711 = vsub.f32 %v679, %v695
      %v712 = vsub.f32 %v680, %v696
      %v713 = vsub.f32 %v681, %v697
      %v714 = vsub.f32 %v682, %v698
      %v715 = vsub.f32 %v683, %v699
      %v716 = vsub.f32 %v684, %v700
      %v717 = vsub.f32 %v685, %v701
      %v718 = vsub.f32 %v686, %v702
      %v719 = vsub.f32 %v687, %v703
      %v720 = vsub.f32 %v688, %v704
      %v721 = vsub.f32 %v689, %v705
      %v722 = vsub.f32 %v690, %v706
      %v723 = vsub.f32 %v691, %v707
      %v724 = vsub.f32 %v692, %v708
      %v725 = vsub.f32 %v693, %v709
      %726 = vset.pattern.permute.xlu0 4
      %727 = vperm.xlu0 %726, %v575
      %v728 = vpop.permute.xlu0 %727
      %730 = vset.pattern.permute.xlu0 4
      %731 = vperm.xlu0 %730, %v576
      %v732 = vpop.permute.xlu0 %731
      %734 = vset.pattern.permute.xlu0 4
      %735 = vperm.xlu0 %734, %v577
      %v736 = vpop.permute.xlu0 %735
      %738 = vset.pattern.permute.xlu0 4
      %739 = vperm.xlu0 %738, %v578
      %v740 = vpop.permute.xlu0 %739
      %742 = vset.pattern.permute.xlu0 4
      %743 = vperm.xlu0 %742, %v579
      %v744 = vpop.permute.xlu0 %743
      %746 = vset.pattern.permute.xlu0 4
      %747 = vperm.xlu0 %746, %v580
      %v748 = vpop.permute.xlu0 %747
      %750 = vset.pattern.permute.xlu0 4
      %751 = vperm.xlu0 %750, %v581
      %v752 = vpop.permute.xlu0 %751
      %754 = vset.pattern.permute.xlu0 4
      %755 = vperm.xlu0 %754, %v582
      %v756 = vpop.permute.xlu0 %755
      %758 = vset.pattern.permute.xlu0 4
      %759 = vperm.xlu0 %758, %v583
      %v760 = vpop.permute.xlu0 %759
      %762 = vset.pattern.permute.xlu0 4
      %763 = vperm.xlu0 %762, %v584
      %v764 = vpop.permute.xlu0 %763
      %766 = vset.pattern.permute.xlu0 4
      %767 = vperm.xlu0 %766, %v585
      %v768 = vpop.permute.xlu0 %767
      %770 = vset.pattern.permute.xlu0 4
      %771 = vperm.xlu0 %770, %v586
      %v772 = vpop.permute.xlu0 %771
      %774 = vset.pattern.permute.xlu0 4
      %775 = vperm.xlu0 %774, %v587
      %v776 = vpop.permute.xlu0 %775
      %778 = vset.pattern.permute.xlu0 4
      %779 = vperm.xlu0 %778, %v588
      %v780 = vpop.permute.xlu0 %779
      %782 = vset.pattern.permute.xlu0 4
      %783 = vperm.xlu0 %782, %v589
      %v784 = vpop.permute.xlu0 %783
      %786 = vset.pattern.permute.xlu0 4
      %787 = vperm.xlu0 %786, %v590
      %v788 = vpop.permute.xlu0 %787
      %v790 = vmul.f32 %v728, %v676
      %v791 = vmul.f32 %v732, %v676
      %v792 = vmul.f32 %v736, %v676
      %v793 = vmul.f32 %v740, %v676
      %v794 = vmul.f32 %v744, %v676
      %v795 = vmul.f32 %v748, %v676
      %v796 = vmul.f32 %v752, %v676
      %v797 = vmul.f32 %v756, %v676
      %v798 = vmul.f32 %v760, %v676
      %v799 = vmul.f32 %v764, %v676
      %v800 = vmul.f32 %v768, %v676
      %v801 = vmul.f32 %v772, %v676
      %v802 = vmul.f32 %v776, %v676
      %v803 = vmul.f32 %v780, %v676
      %v804 = vmul.f32 %v784, %v676
      %v805 = vmul.f32 %v788, %v676
      %v806 = vfloor.f32 %v790
      %v807 = vfloor.f32 %v791
      %v808 = vfloor.f32 %v792
      %v809 = vfloor.f32 %v793
      %v810 = vfloor.f32 %v794
      %v811 = vfloor.f32 %v795
      %v812 = vfloor.f32 %v796
      %v813 = vfloor.f32 %v797
      %v814 = vfloor.f32 %v798
      %v815 = vfloor.f32 %v799
      %v816 = vfloor.f32 %v800
      %v817 = vfloor.f32 %v801
      %v818 = vfloor.f32 %v802
      %v819 = vfloor.f32 %v803
      %v820 = vfloor.f32 %v804
      %v821 = vfloor.f32 %v805
      %v822 = vsub.f32 %v790, %v806
      %v823 = vsub.f32 %v791, %v807
      %v824 = vsub.f32 %v792, %v808
      %v825 = vsub.f32 %v793, %v809
      %v826 = vsub.f32 %v794, %v810
      %v827 = vsub.f32 %v795, %v811
      %v828 = vsub.f32 %v796, %v812
      %v829 = vsub.f32 %v797, %v813
      %v830 = vsub.f32 %v798, %v814
      %v831 = vsub.f32 %v799, %v815
      %v832 = vsub.f32 %v800, %v816
      %v833 = vsub.f32 %v801, %v817
      %v834 = vsub.f32 %v802, %v818
      %v835 = vsub.f32 %v803, %v819
      %v836 = vsub.f32 %v804, %v820
      %v837 = vsub.f32 %v805, %v821
      %838 = vset.pattern.permute.xlu0 5
      %839 = vperm.xlu0 %838, %v575
      %v840 = vpop.permute.xlu0 %839
      %842 = vset.pattern.permute.xlu0 5
      %843 = vperm.xlu0 %842, %v576
      %v844 = vpop.permute.xlu0 %843
      %846 = vset.pattern.permute.xlu0 5
      %847 = vperm.xlu0 %846, %v577
      %v848 = vpop.permute.xlu0 %847
      %850 = vset.pattern.permute.xlu0 5
      %851 = vperm.xlu0 %850, %v578
      %v852 = vpop.permute.xlu0 %851
      %854 = vset.pattern.permute.xlu0 5
      %855 = vperm.xlu0 %854, %v579
      %v856 = vpop.permute.xlu0 %855
      %858 = vset.pattern.permute.xlu0 5
      %859 = vperm.xlu0 %858, %v580
      %v860 = vpop.permute.xlu0 %859
      %862 = vset.pattern.permute.xlu0 5
      %863 = vperm.xlu0 %862, %v581
      %v864 = vpop.permute.xlu0 %863
      %866 = vset.pattern.permute.xlu0 5
      %867 = vperm.xlu0 %866, %v582
      %v868 = vpop.permute.xlu0 %867
      %870 = vset.pattern.permute.xlu0 5
      %871 = vperm.xlu0 %870, %v583
      %v872 = vpop.permute.xlu0 %871
      %874 = vset.pattern.permute.xlu0 5
      %875 = vperm.xlu0 %874, %v584
      %v876 = vpop.permute.xlu0 %875
      %878 = vset.pattern.permute.xlu0 5
      %879 = vperm.xlu0 %878, %v585
      %v880 = vpop.permute.xlu0 %879
      %882 = vset.pattern.permute.xlu0 5
      %883 = vperm.xlu0 %882, %v586
      %v884 = vpop.permute.xlu0 %883
      %886 = vset.pattern.permute.xlu0 5
      %887 = vperm.xlu0 %886, %v587
      %v888 = vpop.permute.xlu0 %887
      %890 = vset.pattern.permute.xlu0 5
      %891 = vperm.xlu0 %890, %v588
      %v892 = vpop.permute.xlu0 %891
      %894 = vset.pattern.permute.xlu0 5
      %895 = vperm.xlu0 %894, %v589
      %v896 = vpop.permute.xlu0 %895
      %898 = vset.pattern.permute.xlu0 5
      %899 = vperm.xlu0 %898, %v590
      %v900 = vpop.permute.xlu0 %899
      %v902 = vmul.f32 %v840, %v676
      %v903 = vmul.f32 %v844, %v676
      %v904 = vmul.f32 %v848, %v676
      %v905 = vmul.f32 %v852, %v676
      %v906 = vmul.f32 %v856, %v676
      %v907 = vmul.f32 %v860, %v676
      %v908 = vmul.f32 %v864, %v676
      %v909 = vmul.f32 %v868, %v676
      %v910 = vmul.f32 %v872, %v676
      %v911 = vmul.f32 %v876, %v676
      %v912 = vmul.f32 %v880, %v676
      %v913 = vmul.f32 %v884, %v676
      %v914 = vmul.f32 %v888, %v676
      %v915 = vmul.f32 %v892, %v676
      %v916 = vmul.f32 %v896, %v676
      %v917 = vmul.f32 %v900, %v676
      %v918 = vfloor.f32 %v902
      %v919 = vfloor.f32 %v903
      %v920 = vfloor.f32 %v904
      %v921 = vfloor.f32 %v905
      %v922 = vfloor.f32 %v906
      %v923 = vfloor.f32 %v907
      %v924 = vfloor.f32 %v908
      %v925 = vfloor.f32 %v909
      %v926 = vfloor.f32 %v910
      %v927 = vfloor.f32 %v911
      %v928 = vfloor.f32 %v912
      %v929 = vfloor.f32 %v913
      %v930 = vfloor.f32 %v914
      %v931 = vfloor.f32 %v915
      %v932 = vfloor.f32 %v916
      %v933 = vfloor.f32 %v917
      %v934 = vsub.f32 %v902, %v918
      %v935 = vsub.f32 %v903, %v919
      %v936 = vsub.f32 %v904, %v920
      %v937 = vsub.f32 %v905, %v921
      %v938 = vsub.f32 %v906, %v922
      %v939 = vsub.f32 %v907, %v923
      %v940 = vsub.f32 %v908, %v924
      %v941 = vsub.f32 %v909, %v925
      %v942 = vsub.f32 %v910, %v926
      %v943 = vsub.f32 %v911, %v927
      %v944 = vsub.f32 %v912, %v928
      %v945 = vsub.f32 %v913, %v929
      %v946 = vsub.f32 %v914, %v930
      %v947 = vsub.f32 %v915, %v931
      %v948 = vsub.f32 %v916, %v932
      %v949 = vsub.f32 %v917, %v933
      %v950 = vld [vmem:[%s560] sm:$0xf]
      %v951 = vld [vmem:[%s560 + $0x4] sm:$0xf]
      %v952 = vld [vmem:[%s560 + $0x8] sm:$0xf]
      %v953 = vld [vmem:[%s560 + $0xc] sm:$0xf]
      %v954 = vld [vmem:[%s560 + $0x10] sm:$0xf]
      %v955 = vld [vmem:[%s560 + $0x14] sm:$0xf]
      %v956 = vld [vmem:[%s560 + $0x18] sm:$0xf]
      %v957 = vld [vmem:[%s560 + $0x1c] sm:$0xf]
      %v958 = vld [vmem:[%s560 + $0x20] sm:$0xf]
      %v959 = vld [vmem:[%s560 + $0x24] sm:$0xf]
      %v960 = vld [vmem:[%s560 + $0x28] sm:$0xf]
      %v961 = vld [vmem:[%s560 + $0x2c] sm:$0xf]
      %v962 = vld [vmem:[%s560 + $0x30] sm:$0xf]
      %v963 = vld [vmem:[%s560 + $0x34] sm:$0xf]
      %v964 = vld [vmem:[%s560 + $0x38] sm:$0xf]
      %v965 = vld [vmem:[%s560 + $0x3c] sm:$0xf]
      %v966 = vunpack.c.l.bf16 %v950
      %v967 = vunpack.c.l.bf16 %v951
      %v968 = vunpack.c.l.bf16 %v952
      %v969 = vunpack.c.l.bf16 %v953
      %v970 = vunpack.c.l.bf16 %v954
      %v971 = vunpack.c.l.bf16 %v955
      %v972 = vunpack.c.l.bf16 %v956
      %v973 = vunpack.c.l.bf16 %v957
      %v974 = vunpack.c.l.bf16 %v958
      %v975 = vunpack.c.l.bf16 %v959
      %v976 = vunpack.c.l.bf16 %v960
      %v977 = vunpack.c.l.bf16 %v961
      %v978 = vunpack.c.l.bf16 %v962
      %v979 = vunpack.c.l.bf16 %v963
      %v980 = vunpack.c.l.bf16 %v964
      %v981 = vunpack.c.l.bf16 %v965
      %998 = vrot.lane.b32.xlu0 %v966, 8
      %v999 = vpop.permute.xlu0 %998
      %1000 = vrot.lane.b32.xlu0 %v967, 8
      %v1001 = vpop.permute.xlu0 %1000
      %1002 = vrot.lane.b32.xlu0 %v968, 8
      %v1003 = vpop.permute.xlu0 %1002
      %1004 = vrot.lane.b32.xlu0 %v969, 8
      %v1005 = vpop.permute.xlu0 %1004
      %1006 = vrot.lane.b32.xlu0 %v970, 8
      %v1007 = vpop.permute.xlu0 %1006
      %1008 = vrot.lane.b32.xlu0 %v971, 8
      %v1009 = vpop.permute.xlu0 %1008
      %1010 = vrot.lane.b32.xlu0 %v972, 8
      %v1011 = vpop.permute.xlu0 %1010
      %1012 = vrot.lane.b32.xlu0 %v973, 8
      %v1013 = vpop.permute.xlu0 %1012
      %1014 = vrot.lane.b32.xlu0 %v974, 8
      %v1015 = vpop.permute.xlu0 %1014
      %1016 = vrot.lane.b32.xlu0 %v975, 8
      %v1017 = vpop.permute.xlu0 %1016
      %1018 = vrot.lane.b32.xlu0 %v976, 8
      %v1019 = vpop.permute.xlu0 %1018
      %1020 = vrot.lane.b32.xlu0 %v977, 8
      %v1021 = vpop.permute.xlu0 %1020
      %1022 = vrot.lane.b32.xlu0 %v978, 8
      %v1023 = vpop.permute.xlu0 %1022
      %1024 = vrot.lane.b32.xlu0 %v979, 8
      %v1025 = vpop.permute.xlu0 %1024
      %1026 = vrot.lane.b32.xlu0 %v980, 8
      %v1027 = vpop.permute.xlu0 %1026
      %1028 = vrot.lane.b32.xlu0 %v981, 8
      %v1029 = vpop.permute.xlu0 %1028
      %v1046 = vsub.f32 %v966, %v999
      %v1047 = vsub.f32 %v967, %v1001
      %v1048 = vsub.f32 %v968, %v1003
      %v1049 = vsub.f32 %v969, %v1005
      %v1050 = vsub.f32 %v970, %v1007
      %v1051 = vsub.f32 %v971, %v1009
      %v1052 = vsub.f32 %v972, %v1011
      %v1053 = vsub.f32 %v973, %v1013
      %v1054 = vsub.f32 %v974, %v1015
      %v1055 = vsub.f32 %v975, %v1017
      %v1056 = vsub.f32 %v976, %v1019
      %v1057 = vsub.f32 %v977, %v1021
      %v1058 = vsub.f32 %v978, %v1023
      %v1059 = vsub.f32 %v979, %v1025
      %v1060 = vsub.f32 %v980, %v1027
      %v1061 = vsub.f32 %v981, %v1029
      %1078 = vrot.lane.b32.xlu0 %v1046, 120
      %v1079 = vpop.permute.xlu0 %1078
      %1080 = vrot.lane.b32.xlu0 %v1047, 120
      %v1081 = vpop.permute.xlu0 %1080
      %1082 = vrot.lane.b32.xlu0 %v1048, 120
      %v1083 = vpop.permute.xlu0 %1082
      %1084 = vrot.lane.b32.xlu0 %v1049, 120
      %v1085 = vpop.permute.xlu0 %1084
      %1086 = vrot.lane.b32.xlu0 %v1050, 120
      %v1087 = vpop.permute.xlu0 %1086
      %1088 = vrot.lane.b32.xlu0 %v1051, 120
      %v1089 = vpop.permute.xlu0 %1088
      %1090 = vrot.lane.b32.xlu0 %v1052, 120
      %v1091 = vpop.permute.xlu0 %1090
      %1092 = vrot.lane.b32.xlu0 %v1053, 120
      %v1093 = vpop.permute.xlu0 %1092
      %1094 = vrot.lane.b32.xlu0 %v1054, 120
      %v1095 = vpop.permute.xlu0 %1094
      %1096 = vrot.lane.b32.xlu0 %v1055, 120
      %v1097 = vpop.permute.xlu0 %1096
      %1098 = vrot.lane.b32.xlu0 %v1056, 120
      %v1099 = vpop.permute.xlu0 %1098
      %1100 = vrot.lane.b32.xlu0 %v1057, 120
      %v1101 = vpop.permute.xlu0 %1100
      %1102 = vrot.lane.b32.xlu0 %v1058, 120
      %v1103 = vpop.permute.xlu0 %1102
      %1104 = vrot.lane.b32.xlu0 %v1059, 120
      %v1105 = vpop.permute.xlu0 %1104
      %1106 = vrot.lane.b32.xlu0 %v1060, 120
      %v1107 = vpop.permute.xlu0 %1106
      %1108 = vrot.lane.b32.xlu0 %v1061, 120
      %v1109 = vpop.permute.xlu0 %1108
      %v1126 = vmul.f32 %v710, %v1079
      %v1127 = vmul.f32 %v711, %v1081
      %v1128 = vmul.f32 %v712, %v1083
      %v1129 = vmul.f32 %v713, %v1085
      %v1130 = vmul.f32 %v714, %v1087
      %v1131 = vmul.f32 %v715, %v1089
      %v1132 = vmul.f32 %v716, %v1091
      %v1133 = vmul.f32 %v717, %v1093
      %v1134 = vmul.f32 %v718, %v1095
      %v1135 = vmul.f32 %v719, %v1097
      %v1136 = vmul.f32 %v720, %v1099
      %v1137 = vmul.f32 %v721, %v1101
      %v1138 = vmul.f32 %v722, %v1103
      %v1139 = vmul.f32 %v723, %v1105
      %v1140 = vmul.f32 %v724, %v1107
      %v1141 = vmul.f32 %v725, %v1109
      %v1142 = vadd.f32 %v966, %v1126
      %v1143 = vadd.f32 %v967, %v1127
      %v1144 = vadd.f32 %v968, %v1128
      %v1145 = vadd.f32 %v969, %v1129
      %v1146 = vadd.f32 %v970, %v1130
      %v1147 = vadd.f32 %v971, %v1131
      %v1148 = vadd.f32 %v972, %v1132
      %v1149 = vadd.f32 %v973, %v1133
      %v1150 = vadd.f32 %v974, %v1134
      %v1151 = vadd.f32 %v975, %v1135
      %v1152 = vadd.f32 %v976, %v1136
      %v1153 = vadd.f32 %v977, %v1137
      %v1154 = vadd.f32 %v978, %v1138
      %v1155 = vadd.f32 %v979, %v1139
      %v1156 = vadd.f32 %v980, %v1140
      %v1157 = vadd.f32 %v981, %v1141
      %1158 = vrot.lane.b32.xlu0 %v1046, 104
      %v1159 = vpop.permute.xlu0 %1158
      %1160 = vrot.lane.b32.xlu0 %v1047, 104
      %v1161 = vpop.permute.xlu0 %1160
      %1162 = vrot.lane.b32.xlu0 %v1048, 104
      %v1163 = vpop.permute.xlu0 %1162
      %1164 = vrot.lane.b32.xlu0 %v1049, 104
      %v1165 = vpop.permute.xlu0 %1164
      %1166 = vrot.lane.b32.xlu0 %v1050, 104
      %v1167 = vpop.permute.xlu0 %1166
      %1168 = vrot.lane.b32.xlu0 %v1051, 104
      %v1169 = vpop.permute.xlu0 %1168
      %1170 = vrot.lane.b32.xlu0 %v1052, 104
      %v1171 = vpop.permute.xlu0 %1170
      %1172 = vrot.lane.b32.xlu0 %v1053, 104
      %v1173 = vpop.permute.xlu0 %1172
      %1174 = vrot.lane.b32.xlu0 %v1054, 104
      %v1175 = vpop.permute.xlu0 %1174
      %1176 = vrot.lane.b32.xlu0 %v1055, 104
      %v1177 = vpop.permute.xlu0 %1176
      %1178 = vrot.lane.b32.xlu0 %v1056, 104
      %v1179 = vpop.permute.xlu0 %1178
      %1180 = vrot.lane.b32.xlu0 %v1057, 104
      %v1181 = vpop.permute.xlu0 %1180
      %1182 = vrot.lane.b32.xlu0 %v1058, 104
      %v1183 = vpop.permute.xlu0 %1182
      %1184 = vrot.lane.b32.xlu0 %v1059, 104
      %v1185 = vpop.permute.xlu0 %1184
      %1186 = vrot.lane.b32.xlu0 %v1060, 104
      %v1187 = vpop.permute.xlu0 %1186
      %1188 = vrot.lane.b32.xlu0 %v1061, 104
      %v1189 = vpop.permute.xlu0 %1188
      %v1206 = vmul.f32 %v710, %v1159
      %v1207 = vmul.f32 %v711, %v1161
      %v1208 = vmul.f32 %v712, %v1163
      %v1209 = vmul.f32 %v713, %v1165
      %v1210 = vmul.f32 %v714, %v1167
      %v1211 = vmul.f32 %v715, %v1169
      %v1212 = vmul.f32 %v716, %v1171
      %v1213 = vmul.f32 %v717, %v1173
      %v1214 = vmul.f32 %v718, %v1175
      %v1215 = vmul.f32 %v719, %v1177
      %v1216 = vmul.f32 %v720, %v1179
      %v1217 = vmul.f32 %v721, %v1181
      %v1218 = vmul.f32 %v722, %v1183
      %v1219 = vmul.f32 %v723, %v1185
      %v1220 = vmul.f32 %v724, %v1187
      %v1221 = vmul.f32 %v725, %v1189
      %1238 = vrot.lane.b32.xlu0 %v1206, 16
      %v1239 = vpop.permute.xlu0 %1238
      %1240 = vrot.lane.b32.xlu0 %v1207, 16
      %v1241 = vpop.permute.xlu0 %1240
      %1242 = vrot.lane.b32.xlu0 %v1208, 16
      %v1243 = vpop.permute.xlu0 %1242
      %1244 = vrot.lane.b32.xlu0 %v1209, 16
      %v1245 = vpop.permute.xlu0 %1244
      %1246 = vrot.lane.b32.xlu0 %v1210, 16
      %v1247 = vpop.permute.xlu0 %1246
      %1248 = vrot.lane.b32.xlu0 %v1211, 16
      %v1249 = vpop.permute.xlu0 %1248
      %1250 = vrot.lane.b32.xlu0 %v1212, 16
      %v1251 = vpop.permute.xlu0 %1250
      %1252 = vrot.lane.b32.xlu0 %v1213, 16
      %v1253 = vpop.permute.xlu0 %1252
      %1254 = vrot.lane.b32.xlu0 %v1214, 16
      %v1255 = vpop.permute.xlu0 %1254
      %1256 = vrot.lane.b32.xlu0 %v1215, 16
      %v1257 = vpop.permute.xlu0 %1256
      %1258 = vrot.lane.b32.xlu0 %v1216, 16
      %v1259 = vpop.permute.xlu0 %1258
      %1260 = vrot.lane.b32.xlu0 %v1217, 16
      %v1261 = vpop.permute.xlu0 %1260
      %1262 = vrot.lane.b32.xlu0 %v1218, 16
      %v1263 = vpop.permute.xlu0 %1262
      %1264 = vrot.lane.b32.xlu0 %v1219, 16
      %v1265 = vpop.permute.xlu0 %1264
      %1266 = vrot.lane.b32.xlu0 %v1220, 16
      %v1267 = vpop.permute.xlu0 %1266
      %1268 = vrot.lane.b32.xlu0 %v1221, 16
      %v1269 = vpop.permute.xlu0 %1268
      %v1286 = vadd.f32 %v966, %v1239
      %v1287 = vadd.f32 %v967, %v1241
      %v1288 = vadd.f32 %v968, %v1243
      %v1289 = vadd.f32 %v969, %v1245
      %v1290 = vadd.f32 %v970, %v1247
      %v1291 = vadd.f32 %v971, %v1249
      %v1292 = vadd.f32 %v972, %v1251
      %v1293 = vadd.f32 %v973, %v1253
      %v1294 = vadd.f32 %v974, %v1255
      %v1295 = vadd.f32 %v975, %v1257
      %v1296 = vadd.f32 %v976, %v1259
      %v1297 = vadd.f32 %v977, %v1261
      %v1298 = vadd.f32 %v978, %v1263
      %v1299 = vadd.f32 %v979, %v1265
      %v1300 = vadd.f32 %v980, %v1267
      %v1301 = vadd.f32 %v981, %v1269
      %1302 = vrot.lane.b32.xlu0 %v1046, 88
      %v1303 = vpop.permute.xlu0 %1302
      %1304 = vrot.lane.b32.xlu0 %v1047, 88
      %v1305 = vpop.permute.xlu0 %1304
      %1306 = vrot.lane.b32.xlu0 %v1048, 88
      %v1307 = vpop.permute.xlu0 %1306
      %1308 = vrot.lane.b32.xlu0 %v1049, 88
      %v1309 = vpop.permute.xlu0 %1308
      %1310 = vrot.lane.b32.xlu0 %v1050, 88
      %v1311 = vpop.permute.xlu0 %1310
      %1312 = vrot.lane.b32.xlu0 %v1051, 88
      %v1313 = vpop.permute.xlu0 %1312
      %1314 = vrot.lane.b32.xlu0 %v1052, 88
      %v1315 = vpop.permute.xlu0 %1314
      %1316 = vrot.lane.b32.xlu0 %v1053, 88
      %v1317 = vpop.permute.xlu0 %1316
      %1318 = vrot.lane.b32.xlu0 %v1054, 88
      %v1319 = vpop.permute.xlu0 %1318
      %1320 = vrot.lane.b32.xlu0 %v1055, 88
      %v1321 = vpop.permute.xlu0 %1320
      %1322 = vrot.lane.b32.xlu0 %v1056, 88
      %v1323 = vpop.permute.xlu0 %1322
      %1324 = vrot.lane.b32.xlu0 %v1057, 88
      %v1325 = vpop.permute.xlu0 %1324
      %1326 = vrot.lane.b32.xlu0 %v1058, 88
      %v1327 = vpop.permute.xlu0 %1326
      %1328 = vrot.lane.b32.xlu0 %v1059, 88
      %v1329 = vpop.permute.xlu0 %1328
      %1330 = vrot.lane.b32.xlu0 %v1060, 88
      %v1331 = vpop.permute.xlu0 %1330
      %1332 = vrot.lane.b32.xlu0 %v1061, 88
      %v1333 = vpop.permute.xlu0 %1332
      %v1350 = vmul.f32 %v710, %v1303
      %v1351 = vmul.f32 %v711, %v1305
      %v1352 = vmul.f32 %v712, %v1307
      %v1353 = vmul.f32 %v713, %v1309
      %v1354 = vmul.f32 %v714, %v1311
      %v1355 = vmul.f32 %v715, %v1313
      %v1356 = vmul.f32 %v716, %v1315
      %v1357 = vmul.f32 %v717, %v1317
      %v1358 = vmul.f32 %v718, %v1319
      %v1359 = vmul.f32 %v719, %v1321
      %v1360 = vmul.f32 %v720, %v1323
      %v1361 = vmul.f32 %v721, %v1325
      %v1362 = vmul.f32 %v722, %v1327
      %v1363 = vmul.f32 %v723, %v1329
      %v1364 = vmul.f32 %v724, %v1331
      %v1365 = vmul.f32 %v725, %v1333
      %1382 = vrot.lane.b32.xlu0 %v1350, 32
      %v1383 = vpop.permute.xlu0 %1382
      %1384 = vrot.lane.b32.xlu0 %v1351, 32
      %v1385 = vpop.permute.xlu0 %1384
      %1386 = vrot.lane.b32.xlu0 %v1352, 32
      %v1387 = vpop.permute.xlu0 %1386
      %1388 = vrot.lane.b32.xlu0 %v1353, 32
      %v1389 = vpop.permute.xlu0 %1388
      %1390 = vrot.lane.b32.xlu0 %v1354, 32
      %v1391 = vpop.permute.xlu0 %1390
      %1392 = vrot.lane.b32.xlu0 %v1355, 32
      %v1393 = vpop.permute.xlu0 %1392
      %1394 = vrot.lane.b32.xlu0 %v1356, 32
      %v1395 = vpop.permute.xlu0 %1394
      %1396 = vrot.lane.b32.xlu0 %v1357, 32
      %v1397 = vpop.permute.xlu0 %1396
      %1398 = vrot.lane.b32.xlu0 %v1358, 32
      %v1399 = vpop.permute.xlu0 %1398
      %1400 = vrot.lane.b32.xlu0 %v1359, 32
      %v1401 = vpop.permute.xlu0 %1400
      %1402 = vrot.lane.b32.xlu0 %v1360, 32
      %v1403 = vpop.permute.xlu0 %1402
      %1404 = vrot.lane.b32.xlu0 %v1361, 32
      %v1405 = vpop.permute.xlu0 %1404
      %1406 = vrot.lane.b32.xlu0 %v1362, 32
      %v1407 = vpop.permute.xlu0 %1406
      %1408 = vrot.lane.b32.xlu0 %v1363, 32
      %v1409 = vpop.permute.xlu0 %1408
      %1410 = vrot.lane.b32.xlu0 %v1364, 32
      %v1411 = vpop.permute.xlu0 %1410
      %1412 = vrot.lane.b32.xlu0 %v1365, 32
      %v1413 = vpop.permute.xlu0 %1412
      %v1430 = vadd.f32 %v966, %v1383
      %v1431 = vadd.f32 %v967, %v1385
      %v1432 = vadd.f32 %v968, %v1387
      %v1433 = vadd.f32 %v969, %v1389
      %v1434 = vadd.f32 %v970, %v1391
      %v1435 = vadd.f32 %v971, %v1393
      %v1436 = vadd.f32 %v972, %v1395
      %v1437 = vadd.f32 %v973, %v1397
      %v1438 = vadd.f32 %v974, %v1399
      %v1439 = vadd.f32 %v975, %v1401
      %v1440 = vadd.f32 %v976, %v1403
      %v1441 = vadd.f32 %v977, %v1405
      %v1442 = vadd.f32 %v978, %v1407
      %v1443 = vadd.f32 %v979, %v1409
      %v1444 = vadd.f32 %v980, %v1411
      %v1445 = vadd.f32 %v981, %v1413
      %1446 = vrot.lane.b32.xlu0 %v1046, 72
      %v1447 = vpop.permute.xlu0 %1446
      %1448 = vrot.lane.b32.xlu0 %v1047, 72
      %v1449 = vpop.permute.xlu0 %1448
      %1450 = vrot.lane.b32.xlu0 %v1048, 72
      %v1451 = vpop.permute.xlu0 %1450
      %1452 = vrot.lane.b32.xlu0 %v1049, 72
      %v1453 = vpop.permute.xlu0 %1452
      %1454 = vrot.lane.b32.xlu0 %v1050, 72
      %v1455 = vpop.permute.xlu0 %1454
      %1456 = vrot.lane.b32.xlu0 %v1051, 72
      %v1457 = vpop.permute.xlu0 %1456
      %1458 = vrot.lane.b32.xlu0 %v1052, 72
      %v1459 = vpop.permute.xlu0 %1458
      %1460 = vrot.lane.b32.xlu0 %v1053, 72
      %v1461 = vpop.permute.xlu0 %1460
      %1462 = vrot.lane.b32.xlu0 %v1054, 72
      %v1463 = vpop.permute.xlu0 %1462
      %1464 = vrot.lane.b32.xlu0 %v1055, 72
      %v1465 = vpop.permute.xlu0 %1464
      %1466 = vrot.lane.b32.xlu0 %v1056, 72
      %v1467 = vpop.permute.xlu0 %1466
      %1468 = vrot.lane.b32.xlu0 %v1057, 72
      %v1469 = vpop.permute.xlu0 %1468
      %1470 = vrot.lane.b32.xlu0 %v1058, 72
      %v1471 = vpop.permute.xlu0 %1470
      %1472 = vrot.lane.b32.xlu0 %v1059, 72
      %v1473 = vpop.permute.xlu0 %1472
      %1474 = vrot.lane.b32.xlu0 %v1060, 72
      %v1475 = vpop.permute.xlu0 %1474
      %1476 = vrot.lane.b32.xlu0 %v1061, 72
      %v1477 = vpop.permute.xlu0 %1476
      %v1494 = vmul.f32 %v710, %v1447
      %v1495 = vmul.f32 %v711, %v1449
      %v1496 = vmul.f32 %v712, %v1451
      %v1497 = vmul.f32 %v713, %v1453
      %v1498 = vmul.f32 %v714, %v1455
      %v1499 = vmul.f32 %v715, %v1457
      %v1500 = vmul.f32 %v716, %v1459
      %v1501 = vmul.f32 %v717, %v1461
      %v1502 = vmul.f32 %v718, %v1463
      %v1503 = vmul.f32 %v719, %v1465
      %v1504 = vmul.f32 %v720, %v1467
      %v1505 = vmul.f32 %v721, %v1469
      %v1506 = vmul.f32 %v722, %v1471
      %v1507 = vmul.f32 %v723, %v1473
      %v1508 = vmul.f32 %v724, %v1475
      %v1509 = vmul.f32 %v725, %v1477
      %1526 = vrot.lane.b32.xlu0 %v1494, 48
      %v1527 = vpop.permute.xlu0 %1526
      %1528 = vrot.lane.b32.xlu0 %v1495, 48
      %v1529 = vpop.permute.xlu0 %1528
      %1530 = vrot.lane.b32.xlu0 %v1496, 48
      %v1531 = vpop.permute.xlu0 %1530
      %1532 = vrot.lane.b32.xlu0 %v1497, 48
      %v1533 = vpop.permute.xlu0 %1532
      %1534 = vrot.lane.b32.xlu0 %v1498, 48
      %v1535 = vpop.permute.xlu0 %1534
      %1536 = vrot.lane.b32.xlu0 %v1499, 48
      %v1537 = vpop.permute.xlu0 %1536
      %1538 = vrot.lane.b32.xlu0 %v1500, 48
      %v1539 = vpop.permute.xlu0 %1538
      %1540 = vrot.lane.b32.xlu0 %v1501, 48
      %v1541 = vpop.permute.xlu0 %1540
      %1542 = vrot.lane.b32.xlu0 %v1502, 48
      %v1543 = vpop.permute.xlu0 %1542
      %1544 = vrot.lane.b32.xlu0 %v1503, 48
      %v1545 = vpop.permute.xlu0 %1544
      %1546 = vrot.lane.b32.xlu0 %v1504, 48
      %v1547 = vpop.permute.xlu0 %1546
      %1548 = vrot.lane.b32.xlu0 %v1505, 48
      %v1549 = vpop.permute.xlu0 %1548
      %1550 = vrot.lane.b32.xlu0 %v1506, 48
      %v1551 = vpop.permute.xlu0 %1550
      %1552 = vrot.lane.b32.xlu0 %v1507, 48
      %v1553 = vpop.permute.xlu0 %1552
      %1554 = vrot.lane.b32.xlu0 %v1508, 48
      %v1555 = vpop.permute.xlu0 %1554
      %1556 = vrot.lane.b32.xlu0 %v1509, 48
      %v1557 = vpop.permute.xlu0 %1556
      %v1574 = vadd.f32 %v966, %v1527
      %v1575 = vadd.f32 %v967, %v1529
      %v1576 = vadd.f32 %v968, %v1531
      %v1577 = vadd.f32 %v969, %v1533
      %v1578 = vadd.f32 %v970, %v1535
      %v1579 = vadd.f32 %v971, %v1537
      %v1580 = vadd.f32 %v972, %v1539
      %v1581 = vadd.f32 %v973, %v1541
      %v1582 = vadd.f32 %v974, %v1543
      %v1583 = vadd.f32 %v975, %v1545
      %v1584 = vadd.f32 %v976, %v1547
      %v1585 = vadd.f32 %v977, %v1549
      %v1586 = vadd.f32 %v978, %v1551
      %v1587 = vadd.f32 %v979, %v1553
      %v1588 = vadd.f32 %v980, %v1555
      %v1589 = vadd.f32 %v981, %v1557
      %1606 = vrot.lane.b32.xlu0 %v1142, 16
      %v1607 = vpop.permute.xlu0 %1606
      %1608 = vrot.lane.b32.xlu0 %v1143, 16
      %v1609 = vpop.permute.xlu0 %1608
      %1610 = vrot.lane.b32.xlu0 %v1144, 16
      %v1611 = vpop.permute.xlu0 %1610
      %1612 = vrot.lane.b32.xlu0 %v1145, 16
      %v1613 = vpop.permute.xlu0 %1612
      %1614 = vrot.lane.b32.xlu0 %v1146, 16
      %v1615 = vpop.permute.xlu0 %1614
      %1616 = vrot.lane.b32.xlu0 %v1147, 16
      %v1617 = vpop.permute.xlu0 %1616
      %1618 = vrot.lane.b32.xlu0 %v1148, 16
      %v1619 = vpop.permute.xlu0 %1618
      %1620 = vrot.lane.b32.xlu0 %v1149, 16
      %v1621 = vpop.permute.xlu0 %1620
      %1622 = vrot.lane.b32.xlu0 %v1150, 16
      %v1623 = vpop.permute.xlu0 %1622
      %1624 = vrot.lane.b32.xlu0 %v1151, 16
      %v1625 = vpop.permute.xlu0 %1624
      %1626 = vrot.lane.b32.xlu0 %v1152, 16
      %v1627 = vpop.permute.xlu0 %1626
      %1628 = vrot.lane.b32.xlu0 %v1153, 16
      %v1629 = vpop.permute.xlu0 %1628
      %1630 = vrot.lane.b32.xlu0 %v1154, 16
      %v1631 = vpop.permute.xlu0 %1630
      %1632 = vrot.lane.b32.xlu0 %v1155, 16
      %v1633 = vpop.permute.xlu0 %1632
      %1634 = vrot.lane.b32.xlu0 %v1156, 16
      %v1635 = vpop.permute.xlu0 %1634
      %1636 = vrot.lane.b32.xlu0 %v1157, 16
      %v1637 = vpop.permute.xlu0 %1636
      %v1654 = vsub.f32 %v1286, %v1607
      %v1655 = vsub.f32 %v1287, %v1609
      %v1656 = vsub.f32 %v1288, %v1611
      %v1657 = vsub.f32 %v1289, %v1613
      %v1658 = vsub.f32 %v1290, %v1615
      %v1659 = vsub.f32 %v1291, %v1617
      %v1660 = vsub.f32 %v1292, %v1619
      %v1661 = vsub.f32 %v1293, %v1621
      %v1662 = vsub.f32 %v1294, %v1623
      %v1663 = vsub.f32 %v1295, %v1625
      %v1664 = vsub.f32 %v1296, %v1627
      %v1665 = vsub.f32 %v1297, %v1629
      %v1666 = vsub.f32 %v1298, %v1631
      %v1667 = vsub.f32 %v1299, %v1633
      %v1668 = vsub.f32 %v1300, %v1635
      %v1669 = vsub.f32 %v1301, %v1637
      %1686 = vrot.lane.b32.xlu0 %v1654, 112
      %v1687 = vpop.permute.xlu0 %1686
      %1688 = vrot.lane.b32.xlu0 %v1655, 112
      %v1689 = vpop.permute.xlu0 %1688
      %1690 = vrot.lane.b32.xlu0 %v1656, 112
      %v1691 = vpop.permute.xlu0 %1690
      %1692 = vrot.lane.b32.xlu0 %v1657, 112
      %v1693 = vpop.permute.xlu0 %1692
      %1694 = vrot.lane.b32.xlu0 %v1658, 112
      %v1695 = vpop.permute.xlu0 %1694
      %1696 = vrot.lane.b32.xlu0 %v1659, 112
      %v1697 = vpop.permute.xlu0 %1696
      %1698 = vrot.lane.b32.xlu0 %v1660, 112
      %v1699 = vpop.permute.xlu0 %1698
      %1700 = vrot.lane.b32.xlu0 %v1661, 112
      %v1701 = vpop.permute.xlu0 %1700
      %1702 = vrot.lane.b32.xlu0 %v1662, 112
      %v1703 = vpop.permute.xlu0 %1702
      %1704 = vrot.lane.b32.xlu0 %v1663, 112
      %v1705 = vpop.permute.xlu0 %1704
      %1706 = vrot.lane.b32.xlu0 %v1664, 112
      %v1707 = vpop.permute.xlu0 %1706
      %1708 = vrot.lane.b32.xlu0 %v1665, 112
      %v1709 = vpop.permute.xlu0 %1708
      %1710 = vrot.lane.b32.xlu0 %v1666, 112
      %v1711 = vpop.permute.xlu0 %1710
      %1712 = vrot.lane.b32.xlu0 %v1667, 112
      %v1713 = vpop.permute.xlu0 %1712
      %1714 = vrot.lane.b32.xlu0 %v1668, 112
      %v1715 = vpop.permute.xlu0 %1714
      %1716 = vrot.lane.b32.xlu0 %v1669, 112
      %v1717 = vpop.permute.xlu0 %1716
      %v1734 = vmul.f32 %v822, %v1687
      %v1735 = vmul.f32 %v823, %v1689
      %v1736 = vmul.f32 %v824, %v1691
      %v1737 = vmul.f32 %v825, %v1693
      %v1738 = vmul.f32 %v826, %v1695
      %v1739 = vmul.f32 %v827, %v1697
      %v1740 = vmul.f32 %v828, %v1699
      %v1741 = vmul.f32 %v829, %v1701
      %v1742 = vmul.f32 %v830, %v1703
      %v1743 = vmul.f32 %v831, %v1705
      %v1744 = vmul.f32 %v832, %v1707
      %v1745 = vmul.f32 %v833, %v1709
      %v1746 = vmul.f32 %v834, %v1711
      %v1747 = vmul.f32 %v835, %v1713
      %v1748 = vmul.f32 %v836, %v1715
      %v1749 = vmul.f32 %v837, %v1717
      %v1750 = vadd.f32 %v1142, %v1734
      %v1751 = vadd.f32 %v1143, %v1735
      %v1752 = vadd.f32 %v1144, %v1736
      %v1753 = vadd.f32 %v1145, %v1737
      %v1754 = vadd.f32 %v1146, %v1738
      %v1755 = vadd.f32 %v1147, %v1739
      %v1756 = vadd.f32 %v1148, %v1740
      %v1757 = vadd.f32 %v1149, %v1741
      %v1758 = vadd.f32 %v1150, %v1742
      %v1759 = vadd.f32 %v1151, %v1743
      %v1760 = vadd.f32 %v1152, %v1744
      %v1761 = vadd.f32 %v1153, %v1745
      %v1762 = vadd.f32 %v1154, %v1746
      %v1763 = vadd.f32 %v1155, %v1747
      %v1764 = vadd.f32 %v1156, %v1748
      %v1765 = vadd.f32 %v1157, %v1749
      %1782 = vrot.lane.b32.xlu0 %v1430, 16
      %v1783 = vpop.permute.xlu0 %1782
      %1784 = vrot.lane.b32.xlu0 %v1431, 16
      %v1785 = vpop.permute.xlu0 %1784
      %1786 = vrot.lane.b32.xlu0 %v1432, 16
      %v1787 = vpop.permute.xlu0 %1786
      %1788 = vrot.lane.b32.xlu0 %v1433, 16
      %v1789 = vpop.permute.xlu0 %1788
      %1790 = vrot.lane.b32.xlu0 %v1434, 16
      %v1791 = vpop.permute.xlu0 %1790
      %1792 = vrot.lane.b32.xlu0 %v1435, 16
      %v1793 = vpop.permute.xlu0 %1792
      %1794 = vrot.lane.b32.xlu0 %v1436, 16
      %v1795 = vpop.permute.xlu0 %1794
      %1796 = vrot.lane.b32.xlu0 %v1437, 16
      %v1797 = vpop.permute.xlu0 %1796
      %1798 = vrot.lane.b32.xlu0 %v1438, 16
      %v1799 = vpop.permute.xlu0 %1798
      %1800 = vrot.lane.b32.xlu0 %v1439, 16
      %v1801 = vpop.permute.xlu0 %1800
      %1802 = vrot.lane.b32.xlu0 %v1440, 16
      %v1803 = vpop.permute.xlu0 %1802
      %1804 = vrot.lane.b32.xlu0 %v1441, 16
      %v1805 = vpop.permute.xlu0 %1804
      %1806 = vrot.lane.b32.xlu0 %v1442, 16
      %v1807 = vpop.permute.xlu0 %1806
      %1808 = vrot.lane.b32.xlu0 %v1443, 16
      %v1809 = vpop.permute.xlu0 %1808
      %1810 = vrot.lane.b32.xlu0 %v1444, 16
      %v1811 = vpop.permute.xlu0 %1810
      %1812 = vrot.lane.b32.xlu0 %v1445, 16
      %v1813 = vpop.permute.xlu0 %1812
      %v1830 = vsub.f32 %v1574, %v1783
      %v1831 = vsub.f32 %v1575, %v1785
      %v1832 = vsub.f32 %v1576, %v1787
      %v1833 = vsub.f32 %v1577, %v1789
      %v1834 = vsub.f32 %v1578, %v1791
      %v1835 = vsub.f32 %v1579, %v1793
      %v1836 = vsub.f32 %v1580, %v1795
      %v1837 = vsub.f32 %v1581, %v1797
      %v1838 = vsub.f32 %v1582, %v1799
      %v1839 = vsub.f32 %v1583, %v1801
      %v1840 = vsub.f32 %v1584, %v1803
      %v1841 = vsub.f32 %v1585, %v1805
      %v1842 = vsub.f32 %v1586, %v1807
      %v1843 = vsub.f32 %v1587, %v1809
      %v1844 = vsub.f32 %v1588, %v1811
      %v1845 = vsub.f32 %v1589, %v1813
      %1862 = vrot.lane.b32.xlu0 %v1830, 80
      %v1863 = vpop.permute.xlu0 %1862
      %1864 = vrot.lane.b32.xlu0 %v1831, 80
      %v1865 = vpop.permute.xlu0 %1864
      %1866 = vrot.lane.b32.xlu0 %v1832, 80
      %v1867 = vpop.permute.xlu0 %1866
      %1868 = vrot.lane.b32.xlu0 %v1833, 80
      %v1869 = vpop.permute.xlu0 %1868
      %1870 = vrot.lane.b32.xlu0 %v1834, 80
      %v1871 = vpop.permute.xlu0 %1870
      %1872 = vrot.lane.b32.xlu0 %v1835, 80
      %v1873 = vpop.permute.xlu0 %1872
      %1874 = vrot.lane.b32.xlu0 %v1836, 80
      %v1875 = vpop.permute.xlu0 %1874
      %1876 = vrot.lane.b32.xlu0 %v1837, 80
      %v1877 = vpop.permute.xlu0 %1876
      %1878 = vrot.lane.b32.xlu0 %v1838, 80
      %v1879 = vpop.permute.xlu0 %1878
      %1880 = vrot.lane.b32.xlu0 %v1839, 80
      %v1881 = vpop.permute.xlu0 %1880
      %1882 = vrot.lane.b32.xlu0 %v1840, 80
      %v1883 = vpop.permute.xlu0 %1882
      %1884 = vrot.lane.b32.xlu0 %v1841, 80
      %v1885 = vpop.permute.xlu0 %1884
      %1886 = vrot.lane.b32.xlu0 %v1842, 80
      %v1887 = vpop.permute.xlu0 %1886
      %1888 = vrot.lane.b32.xlu0 %v1843, 80
      %v1889 = vpop.permute.xlu0 %1888
      %1890 = vrot.lane.b32.xlu0 %v1844, 80
      %v1891 = vpop.permute.xlu0 %1890
      %1892 = vrot.lane.b32.xlu0 %v1845, 80
      %v1893 = vpop.permute.xlu0 %1892
      %v1910 = vmul.f32 %v822, %v1863
      %v1911 = vmul.f32 %v823, %v1865
      %v1912 = vmul.f32 %v824, %v1867
      %v1913 = vmul.f32 %v825, %v1869
      %v1914 = vmul.f32 %v826, %v1871
      %v1915 = vmul.f32 %v827, %v1873
      %v1916 = vmul.f32 %v828, %v1875
      %v1917 = vmul.f32 %v829, %v1877
      %v1918 = vmul.f32 %v830, %v1879
      %v1919 = vmul.f32 %v831, %v1881
      %v1920 = vmul.f32 %v832, %v1883
      %v1921 = vmul.f32 %v833, %v1885
      %v1922 = vmul.f32 %v834, %v1887
      %v1923 = vmul.f32 %v835, %v1889
      %v1924 = vmul.f32 %v836, %v1891
      %v1925 = vmul.f32 %v837, %v1893
      %1942 = vrot.lane.b32.xlu0 %v1910, 32
      %v1943 = vpop.permute.xlu0 %1942
      %1944 = vrot.lane.b32.xlu0 %v1911, 32
      %v1945 = vpop.permute.xlu0 %1944
      %1946 = vrot.lane.b32.xlu0 %v1912, 32
      %v1947 = vpop.permute.xlu0 %1946
      %1948 = vrot.lane.b32.xlu0 %v1913, 32
      %v1949 = vpop.permute.xlu0 %1948
      %1950 = vrot.lane.b32.xlu0 %v1914, 32
      %v1951 = vpop.permute.xlu0 %1950
      %1952 = vrot.lane.b32.xlu0 %v1915, 32
      %v1953 = vpop.permute.xlu0 %1952
      %1954 = vrot.lane.b32.xlu0 %v1916, 32
      %v1955 = vpop.permute.xlu0 %1954
      %1956 = vrot.lane.b32.xlu0 %v1917, 32
      %v1957 = vpop.permute.xlu0 %1956
      %1958 = vrot.lane.b32.xlu0 %v1918, 32
      %v1959 = vpop.permute.xlu0 %1958
      %1960 = vrot.lane.b32.xlu0 %v1919, 32
      %v1961 = vpop.permute.xlu0 %1960
      %1962 = vrot.lane.b32.xlu0 %v1920, 32
      %v1963 = vpop.permute.xlu0 %1962
      %1964 = vrot.lane.b32.xlu0 %v1921, 32
      %v1965 = vpop.permute.xlu0 %1964
      %1966 = vrot.lane.b32.xlu0 %v1922, 32
      %v1967 = vpop.permute.xlu0 %1966
      %1968 = vrot.lane.b32.xlu0 %v1923, 32
      %v1969 = vpop.permute.xlu0 %1968
      %1970 = vrot.lane.b32.xlu0 %v1924, 32
      %v1971 = vpop.permute.xlu0 %1970
      %1972 = vrot.lane.b32.xlu0 %v1925, 32
      %v1973 = vpop.permute.xlu0 %1972
      %v1990 = vadd.f32 %v1430, %v1943
      %v1991 = vadd.f32 %v1431, %v1945
      %v1992 = vadd.f32 %v1432, %v1947
      %v1993 = vadd.f32 %v1433, %v1949
      %v1994 = vadd.f32 %v1434, %v1951
      %v1995 = vadd.f32 %v1435, %v1953
      %v1996 = vadd.f32 %v1436, %v1955
      %v1997 = vadd.f32 %v1437, %v1957
      %v1998 = vadd.f32 %v1438, %v1959
      %v1999 = vadd.f32 %v1439, %v1961
      %v2000 = vadd.f32 %v1440, %v1963
      %v2001 = vadd.f32 %v1441, %v1965
      %v2002 = vadd.f32 %v1442, %v1967
      %v2003 = vadd.f32 %v1443, %v1969
      %v2004 = vadd.f32 %v1444, %v1971
      %v2005 = vadd.f32 %v1445, %v1973
      %2022 = vrot.lane.b32.xlu0 %v1750, 32
      %v2023 = vpop.permute.xlu0 %2022
      %2024 = vrot.lane.b32.xlu0 %v1751, 32
      %v2025 = vpop.permute.xlu0 %2024
      %2026 = vrot.lane.b32.xlu0 %v1752, 32
      %v2027 = vpop.permute.xlu0 %2026
      %2028 = vrot.lane.b32.xlu0 %v1753, 32
      %v2029 = vpop.permute.xlu0 %2028
      %2030 = vrot.lane.b32.xlu0 %v1754, 32
      %v2031 = vpop.permute.xlu0 %2030
      %2032 = vrot.lane.b32.xlu0 %v1755, 32
      %v2033 = vpop.permute.xlu0 %2032
      %2034 = vrot.lane.b32.xlu0 %v1756, 32
      %v2035 = vpop.permute.xlu0 %2034
      %2036 = vrot.lane.b32.xlu0 %v1757, 32
      %v2037 = vpop.permute.xlu0 %2036
      %2038 = vrot.lane.b32.xlu0 %v1758, 32
      %v2039 = vpop.permute.xlu0 %2038
      %2040 = vrot.lane.b32.xlu0 %v1759, 32
      %v2041 = vpop.permute.xlu0 %2040
      %2042 = vrot.lane.b32.xlu0 %v1760, 32
      %v2043 = vpop.permute.xlu0 %2042
      %2044 = vrot.lane.b32.xlu0 %v1761, 32
      %v2045 = vpop.permute.xlu0 %2044
      %2046 = vrot.lane.b32.xlu0 %v1762, 32
      %v2047 = vpop.permute.xlu0 %2046
      %2048 = vrot.lane.b32.xlu0 %v1763, 32
      %v2049 = vpop.permute.xlu0 %2048
      %2050 = vrot.lane.b32.xlu0 %v1764, 32
      %v2051 = vpop.permute.xlu0 %2050
      %2052 = vrot.lane.b32.xlu0 %v1765, 32
      %v2053 = vpop.permute.xlu0 %2052
      %v2070 = vsub.f32 %v1990, %v2023
      %v2071 = vsub.f32 %v1991, %v2025
      %v2072 = vsub.f32 %v1992, %v2027
      %v2073 = vsub.f32 %v1993, %v2029
      %v2074 = vsub.f32 %v1994, %v2031
      %v2075 = vsub.f32 %v1995, %v2033
      %v2076 = vsub.f32 %v1996, %v2035
      %v2077 = vsub.f32 %v1997, %v2037
      %v2078 = vsub.f32 %v1998, %v2039
      %v2079 = vsub.f32 %v1999, %v2041
      %v2080 = vsub.f32 %v2000, %v2043
      %v2081 = vsub.f32 %v2001, %v2045
      %v2082 = vsub.f32 %v2002, %v2047
      %v2083 = vsub.f32 %v2003, %v2049
      %v2084 = vsub.f32 %v2004, %v2051
      %v2085 = vsub.f32 %v2005, %v2053
      %2102 = vrot.lane.b32.xlu0 %v2070, 96
      %v2103 = vpop.permute.xlu0 %2102
      %2104 = vrot.lane.b32.xlu0 %v2071, 96
      %v2105 = vpop.permute.xlu0 %2104
      %2106 = vrot.lane.b32.xlu0 %v2072, 96
      %v2107 = vpop.permute.xlu0 %2106
      %2108 = vrot.lane.b32.xlu0 %v2073, 96
      %v2109 = vpop.permute.xlu0 %2108
      %2110 = vrot.lane.b32.xlu0 %v2074, 96
      %v2111 = vpop.permute.xlu0 %2110
      %2112 = vrot.lane.b32.xlu0 %v2075, 96
      %v2113 = vpop.permute.xlu0 %2112
      %2114 = vrot.lane.b32.xlu0 %v2076, 96
      %v2115 = vpop.permute.xlu0 %2114
      %2116 = vrot.lane.b32.xlu0 %v2077, 96
      %v2117 = vpop.permute.xlu0 %2116
      %2118 = vrot.lane.b32.xlu0 %v2078, 96
      %v2119 = vpop.permute.xlu0 %2118
      %2120 = vrot.lane.b32.xlu0 %v2079, 96
      %v2121 = vpop.permute.xlu0 %2120
      %2122 = vrot.lane.b32.xlu0 %v2080, 96
      %v2123 = vpop.permute.xlu0 %2122
      %2124 = vrot.lane.b32.xlu0 %v2081, 96
      %v2125 = vpop.permute.xlu0 %2124
      %2126 = vrot.lane.b32.xlu0 %v2082, 96
      %v2127 = vpop.permute.xlu0 %2126
      %2128 = vrot.lane.b32.xlu0 %v2083, 96
      %v2129 = vpop.permute.xlu0 %2128
      %2130 = vrot.lane.b32.xlu0 %v2084, 96
      %v2131 = vpop.permute.xlu0 %2130
      %2132 = vrot.lane.b32.xlu0 %v2085, 96
      %v2133 = vpop.permute.xlu0 %2132
      %v2150 = vmul.f32 %v934, %v2103
      %v2151 = vmul.f32 %v935, %v2105
      %v2152 = vmul.f32 %v936, %v2107
      %v2153 = vmul.f32 %v937, %v2109
      %v2154 = vmul.f32 %v938, %v2111
      %v2155 = vmul.f32 %v939, %v2113
      %v2156 = vmul.f32 %v940, %v2115
      %v2157 = vmul.f32 %v941, %v2117
      %v2158 = vmul.f32 %v942, %v2119
      %v2159 = vmul.f32 %v943, %v2121
      %v2160 = vmul.f32 %v944, %v2123
      %v2161 = vmul.f32 %v945, %v2125
      %v2162 = vmul.f32 %v946, %v2127
      %v2163 = vmul.f32 %v947, %v2129
      %v2164 = vmul.f32 %v948, %v2131
      %v2165 = vmul.f32 %v949, %v2133
      %v2166 = vadd.f32 %v1750, %v2150
      %v2167 = vadd.f32 %v1751, %v2151
      %v2168 = vadd.f32 %v1752, %v2152
      %v2169 = vadd.f32 %v1753, %v2153
      %v2170 = vadd.f32 %v1754, %v2154
      %v2171 = vadd.f32 %v1755, %v2155
      %v2172 = vadd.f32 %v1756, %v2156
      %v2173 = vadd.f32 %v1757, %v2157
      %v2174 = vadd.f32 %v1758, %v2158
      %v2175 = vadd.f32 %v1759, %v2159
      %v2176 = vadd.f32 %v1760, %v2160
      %v2177 = vadd.f32 %v1761, %v2161
      %v2178 = vadd.f32 %v1762, %v2162
      %v2179 = vadd.f32 %v1763, %v2163
      %v2180 = vadd.f32 %v1764, %v2164
      %v2181 = vadd.f32 %v1765, %v2165
      %v2182 = vpack.c.bf16 %v2167, %v2166
      %v2183 = vpack.c.bf16 %v2169, %v2168
      %v2184 = vpack.c.bf16 %v2171, %v2170
      %v2185 = vpack.c.bf16 %v2173, %v2172
      %v2186 = vpack.c.bf16 %v2175, %v2174
      %v2187 = vpack.c.bf16 %v2177, %v2176
      %v2188 = vpack.c.bf16 %v2179, %v2178
      %v2189 = vpack.c.bf16 %v2181, %v2180
      %v2190 = vld [vmem:[%s4] sm:$0xf]
      %v2191 = vld [vmem:[%s5] sm:$0x1]
      %v2193 = vlaneseq
      %v2194 = vshrl.u32 %v2193, 7
      %v2195 = vsub.s32 0, %v2194
      %v2196 = vrot.slane %v2191, %v2195
      %vm2198 = vcmask 64512
      %v2200 = vsel %vm2198, %v2182, 0
      %v2203 = vsel %vm2198, %v2183, 0
      %v2206 = vsel %vm2198, %v2184, 0
      %v2209 = vsel %vm2198, %v2185, 0
      %v2212 = vsel %vm2198, %v2186, 0
      %v2215 = vsel %vm2198, %v2187, 0
      %v2218 = vsel %vm2198, %v2188, 0
      %v2221 = vsel %vm2198, %v2189, 0
      %vm2223 = vcmask 1043456
      %v2225 = vsel %vm2223, %v2190, 0
      %2227 = vmatprep.subr.bf16.mxu0 0
      %2228 = vmatpush1.bf16.msra.mxu0 %v2225
      %2229 = vmatprep.subr.bf16.mxu0 0
      %2230 = vmatpush1.bf16.msra.mxu0 0
      %2231 = vmatprep.subr.bf16.mxu0 0
      %2232 = vmatpush1.bf16.msra.mxu0 0
      %2233 = vmatprep.subr.bf16.mxu0 0
      %2234 = vmatpush1.bf16.msra.mxu0 0
      %2235 = vmatprep.subr.bf16.mxu0 0
      %2236 = vmatpush1.bf16.msra.mxu0 0
      %2237 = vmatprep.subr.bf16.mxu0 0
      %2238 = vmatpush1.bf16.msra.mxu0 0
      %2239 = vmatprep.subr.bf16.mxu0 0
      %2240 = vmatpush1.bf16.msra.mxu0 0
      %2241 = vmatprep.subr.bf16.mxu0 0
      %2242 = vmatpush1.bf16.msra.mxu0 0
      %2243 = vmatprep.subr.bf16.mxu0 0
      %2244 = vmatpush1.bf16.msra.mxu0 0
      %2245 = vmatprep.subr.bf16.mxu0 0
      %2246 = vmatpush1.bf16.msra.mxu0 0
      %2247 = vmatprep.subr.bf16.mxu0 0
      %2248 = vmatpush1.bf16.msra.mxu0 0
      %2249 = vmatprep.subr.bf16.mxu0 0
      %2250 = vmatpush1.bf16.msra.mxu0 0
      %2251 = vmatprep.subr.bf16.mxu0 0
      %2252 = vmatpush1.bf16.msra.mxu0 0
      %2253 = vmatprep.subr.bf16.mxu0 0
      %2254 = vmatpush1.bf16.msra.mxu0 0
      %2255 = vmatprep.subr.bf16.mxu0 0
      %2256 = vmatpush1.bf16.msra.mxu0 0
      %2257 = vmatprep.subr.bf16.mxu0 0
      %2258 = vmatpush1.bf16.msra.mxu0 0
      %2259 = vmatprep.mubr.bf16.mxu0 0
      %2260 = vmatmul.mubr.bf16.gmra.mrb[0].mxu0 %v2200
      %v2261 = vpop.f32.mrb[0].mxu0
      %v2262 = vadd.f32 %v2196, %v2261
      %v2263 = vpop.f32.mrb[0].mxu0
      %v2264 = vpop.f32.mrb[0].mxu0
      %v2265 = vadd.f32 %v2196, %v2264
      %v2266 = vpop.f32.mrb[0].mxu0
      %2267 = vmatprep.mubr.bf16.mxu0 0
      %2268 = vmatmul.mubr.bf16.gmra.mrb[0].mxu0 %v2203
      %v2269 = vpop.f32.mrb[0].mxu0
      %v2270 = vadd.f32 %v2196, %v2269
      %v2271 = vpop.f32.mrb[0].mxu0
      %v2272 = vpop.f32.mrb[0].mxu0
      %v2273 = vadd.f32 %v2196, %v2272
      %v2274 = vpop.f32.mrb[0].mxu0
      %2275 = vmatprep.mubr.bf16.mxu0 0
      %2276 = vmatmul.mubr.bf16.gmra.mrb[0].mxu0 %v2206
      %v2277 = vpop.f32.mrb[0].mxu0
      %v2278 = vadd.f32 %v2196, %v2277
      %v2279 = vpop.f32.mrb[0].mxu0
      %v2280 = vpop.f32.mrb[0].mxu0
      %v2281 = vadd.f32 %v2196, %v2280
      %v2282 = vpop.f32.mrb[0].mxu0
      %2283 = vmatprep.mubr.bf16.mxu0 0
      %2284 = vmatmul.mubr.bf16.gmra.mrb[0].mxu0 %v2209
      %v2285 = vpop.f32.mrb[0].mxu0
      %v2286 = vadd.f32 %v2196, %v2285
      %v2287 = vpop.f32.mrb[0].mxu0
      %v2288 = vpop.f32.mrb[0].mxu0
      %v2289 = vadd.f32 %v2196, %v2288
      %v2290 = vpop.f32.mrb[0].mxu0
      %2291 = vmatprep.mubr.bf16.mxu0 0
      %2292 = vmatmul.mubr.bf16.gmra.mrb[0].mxu0 %v2212
      %v2293 = vpop.f32.mrb[0].mxu0
      %v2294 = vadd.f32 %v2196, %v2293
      %v2295 = vpop.f32.mrb[0].mxu0
      %v2296 = vpop.f32.mrb[0].mxu0
      %v2297 = vadd.f32 %v2196, %v2296
      %v2298 = vpop.f32.mrb[0].mxu0
      %2299 = vmatprep.mubr.bf16.mxu0 0
      %2300 = vmatmul.mubr.bf16.gmra.mrb[0].mxu0 %v2215
      %v2301 = vpop.f32.mrb[0].mxu0
      %v2302 = vadd.f32 %v2196, %v2301
      %v2303 = vpop.f32.mrb[0].mxu0
      %v2304 = vpop.f32.mrb[0].mxu0
      %v2305 = vadd.f32 %v2196, %v2304
      %v2306 = vpop.f32.mrb[0].mxu0
      %2307 = vmatprep.mubr.bf16.mxu0 0
      %2308 = vmatmul.mubr.bf16.gmra.mrb[0].mxu0 %v2218
      %v2309 = vpop.f32.mrb[0].mxu0
      %v2310 = vadd.f32 %v2196, %v2309
      %v2311 = vpop.f32.mrb[0].mxu0
      %v2312 = vpop.f32.mrb[0].mxu0
      %v2313 = vadd.f32 %v2196, %v2312
      %v2314 = vpop.f32.mrb[0].mxu0
      %2315 = vmatprep.mubr.bf16.mxu0 0
      %2316 = vmatmul.mubr.bf16.gmra.mrb[0].mxu0 %v2221
      %v2317 = vpop.f32.mrb[0].mxu0
      %v2318 = vadd.f32 %v2196, %v2317
      %v2319 = vpop.f32.mrb[0].mxu0
      %v2320 = vpop.f32.mrb[0].mxu0
      %v2321 = vadd.f32 %v2196, %v2320
      %v2322 = vpop.f32.mrb[0].mxu0
      %2323 = vdwg.mxu0
      %v2324 = vmax.f32 %v2262, 0.0
      %v2325 = vmax.f32 %v2265, 0.0
      %v2326 = vmax.f32 %v2270, 0.0
      %v2327 = vmax.f32 %v2273, 0.0
      %v2328 = vmax.f32 %v2278, 0.0
      %v2329 = vmax.f32 %v2281, 0.0
      %v2330 = vmax.f32 %v2286, 0.0
      %v2331 = vmax.f32 %v2289, 0.0
      %v2332 = vmax.f32 %v2294, 0.0
      %v2333 = vmax.f32 %v2297, 0.0
      %v2334 = vmax.f32 %v2302, 0.0
      %v2335 = vmax.f32 %v2305, 0.0
      %v2336 = vmax.f32 %v2310, 0.0
      %v2337 = vmax.f32 %v2313, 0.0
      %v2338 = vmax.f32 %v2318, 0.0
      %v2339 = vmax.f32 %v2321, 0.0
      %v2340 = vpack.c.bf16 %v2325, %v2324
      %v2341 = vpack.c.bf16 %v2327, %v2326
      %v2342 = vpack.c.bf16 %v2329, %v2328
      %v2343 = vpack.c.bf16 %v2331, %v2330
      %v2344 = vpack.c.bf16 %v2333, %v2332
      %v2345 = vpack.c.bf16 %v2335, %v2334
      %v2346 = vpack.c.bf16 %v2337, %v2336
      %v2347 = vpack.c.bf16 %v2339, %v2338
      %v2348 = vld [vmem:[%s6] sm:$0xf]
      %v2349 = vld [vmem:[%s6 + $0x4] sm:$0xf]
      %v2350 = vld [vmem:[%s6 + $0x8] sm:$0xf]
      %v2351 = vld [vmem:[%s6 + $0xc] sm:$0xf]
      %v2352 = vld [vmem:[%s6 + $0x10] sm:$0xf]
      %v2353 = vld [vmem:[%s6 + $0x14] sm:$0xf]
      %v2354 = vld [vmem:[%s6 + $0x18] sm:$0xf]
      %v2355 = vld [vmem:[%s6 + $0x1c] sm:$0xf]
      %v2356 = vld [vmem:[%s7] sm:$0x1]
      %v2358 = vlaneseq
      %v2359 = vshrl.u32 %v2358, 7
      %v2360 = vsub.s32 0, %v2359
      %v2361 = vrot.slane %v2356, %v2360
      %v2371 = vunpack.c.l.b16 %v2348
      %v2372 = vunpack.c.l.b16 %v2349
      %v2373 = vunpack.c.l.b16 %v2350
      %v2374 = vunpack.c.l.b16 %v2351
      %v2375 = vunpack.c.l.b16 %v2352
      %v2376 = vunpack.c.l.b16 %v2353
      %v2377 = vunpack.c.l.b16 %v2354
      %v2378 = vunpack.c.l.b16 %v2355
      %v2379 = vpack.c.b16 %v2372, %v2371
      %v2380 = vpack.c.b16 %v2374, %v2373
      %v2381 = vpack.c.b16 %v2376, %v2375
      %v2382 = vpack.c.b16 %v2378, %v2377
      %vm2387 = vcmask 523264
      %v2389 = vsel %vm2387, %v2340, 0
      %v2392 = vsel %vm2387, %v2341, 0
      %v2395 = vsel %vm2387, %v2342, 0
      %v2398 = vsel %vm2387, %v2343, 0
      %v2401 = vsel %vm2387, %v2344, 0
      %v2404 = vsel %vm2387, %v2345, 0
      %v2407 = vsel %vm2387, %v2346, 0
      %v2410 = vsel %vm2387, %v2347, 0
      %2412 = vmatprep.subr.bf16.mxu0 0
      %2413 = vmatpush1.bf16.msra.mxu0 %v2379
      %2414 = vmatprep.subr.bf16.mxu0 0
      %2415 = vmatpush1.bf16.msra.mxu0 %v2380
      %2416 = vmatprep.subr.bf16.mxu0 0
      %2417 = vmatpush1.bf16.msra.mxu0 %v2381
      %2418 = vmatprep.subr.bf16.mxu0 0
      %2419 = vmatpush1.bf16.msra.mxu0 %v2382
      %2420 = vmatprep.subr.bf16.mxu0 0
      %2421 = vmatpush1.bf16.msra.mxu0 0
      %2422 = vmatprep.subr.bf16.mxu0 0
      %2423 = vmatpush1.bf16.msra.mxu0 0
      %2424 = vmatprep.subr.bf16.mxu0 0
      %2425 = vmatpush1.bf16.msra.mxu0 0
      %2426 = vmatprep.subr.bf16.mxu0 0
      %2427 = vmatpush1.bf16.msra.mxu0 0
      %2428 = vmatprep.subr.bf16.mxu0 0
      %2429 = vmatpush1.bf16.msra.mxu0 0
      %2430 = vmatprep.subr.bf16.mxu0 0
      %2431 = vmatpush1.bf16.msra.mxu0 0
      %2432 = vmatprep.subr.bf16.mxu0 0
      %2433 = vmatpush1.bf16.msra.mxu0 0
      %2434 = vmatprep.subr.bf16.mxu0 0
      %2435 = vmatpush1.bf16.msra.mxu0 0
      %2436 = vmatprep.subr.bf16.mxu0 0
      %2437 = vmatpush1.bf16.msra.mxu0 0
      %2438 = vmatprep.subr.bf16.mxu0 0
      %2439 = vmatpush1.bf16.msra.mxu0 0
      %2440 = vmatprep.subr.bf16.mxu0 0
      %2441 = vmatpush1.bf16.msra.mxu0 0
      %2442 = vmatprep.subr.bf16.mxu0 0
      %2443 = vmatpush1.bf16.msra.mxu0 0
      %2444 = vmatprep.mubr.bf16.mxu0 0
      %2445 = vmatmul.mubr.bf16.gmra.mrb[0].mxu0 %v2389
      %v2446 = vpop.f32.mrb[0].mxu0
      %v2447 = vadd.f32 %v2361, %v2446
      %v2448 = vpop.f32.mrb[0].mxu0
      %v2449 = vpop.f32.mrb[0].mxu0
      %v2450 = vadd.f32 %v2361, %v2449
      %v2451 = vpop.f32.mrb[0].mxu0
      %2452 = vmatprep.mubr.bf16.mxu0 0
      %2453 = vmatmul.mubr.bf16.gmra.mrb[0].mxu0 %v2392
      %v2454 = vpop.f32.mrb[0].mxu0
      %v2455 = vadd.f32 %v2361, %v2454
      %v2456 = vpop.f32.mrb[0].mxu0
      %v2457 = vpop.f32.mrb[0].mxu0
      %v2458 = vadd.f32 %v2361, %v2457
      %v2459 = vpop.f32.mrb[0].mxu0
      %2460 = vmatprep.mubr.bf16.mxu0 0
      %2461 = vmatmul.mubr.bf16.gmra.mrb[0].mxu0 %v2395
      %v2462 = vpop.f32.mrb[0].mxu0
      %v2463 = vadd.f32 %v2361, %v2462
      %v2464 = vpop.f32.mrb[0].mxu0
      %v2465 = vpop.f32.mrb[0].mxu0
      %v2466 = vadd.f32 %v2361, %v2465
      %v2467 = vpop.f32.mrb[0].mxu0
      %2468 = vmatprep.mubr.bf16.mxu0 0
      %2469 = vmatmul.mubr.bf16.gmra.mrb[0].mxu0 %v2398
      %v2470 = vpop.f32.mrb[0].mxu0
      %v2471 = vadd.f32 %v2361, %v2470
      %v2472 = vpop.f32.mrb[0].mxu0
      %v2473 = vpop.f32.mrb[0].mxu0
      %v2474 = vadd.f32 %v2361, %v2473
      %v2475 = vpop.f32.mrb[0].mxu0
      %2476 = vmatprep.mubr.bf16.mxu0 0
      %2477 = vmatmul.mubr.bf16.gmra.mrb[0].mxu0 %v2401
      %v2478 = vpop.f32.mrb[0].mxu0
      %v2479 = vadd.f32 %v2361, %v2478
      %v2480 = vpop.f32.mrb[0].mxu0
      %v2481 = vpop.f32.mrb[0].mxu0
      %v2482 = vadd.f32 %v2361, %v2481
      %v2483 = vpop.f32.mrb[0].mxu0
      %2484 = vmatprep.mubr.bf16.mxu0 0
      %2485 = vmatmul.mubr.bf16.gmra.mrb[0].mxu0 %v2404
      %v2486 = vpop.f32.mrb[0].mxu0
      %v2487 = vadd.f32 %v2361, %v2486
      %v2488 = vpop.f32.mrb[0].mxu0
      %v2489 = vpop.f32.mrb[0].mxu0
      %v2490 = vadd.f32 %v2361, %v2489
      %v2491 = vpop.f32.mrb[0].mxu0
      %2492 = vmatprep.mubr.bf16.mxu0 0
      %2493 = vmatmul.mubr.bf16.gmra.mrb[0].mxu0 %v2407
      %v2494 = vpop.f32.mrb[0].mxu0
      %v2495 = vadd.f32 %v2361, %v2494
      %v2496 = vpop.f32.mrb[0].mxu0
      %v2497 = vpop.f32.mrb[0].mxu0
      %v2498 = vadd.f32 %v2361, %v2497
      %v2499 = vpop.f32.mrb[0].mxu0
      %2500 = vmatprep.mubr.bf16.mxu0 0
      %2501 = vmatmul.mubr.bf16.gmra.mrb[0].mxu0 %v2410
      %v2502 = vpop.f32.mrb[0].mxu0
      %v2503 = vadd.f32 %v2361, %v2502
      %v2504 = vpop.f32.mrb[0].mxu0
      %v2505 = vpop.f32.mrb[0].mxu0
      %v2506 = vadd.f32 %v2361, %v2505
      %v2507 = vpop.f32.mrb[0].mxu0
      %2508 = vdwg.mxu0
      %2509 = vrot.lane.b32.xlu0 %v575, 8
      %v2510 = vpop.permute.xlu0 %2509
      %2511 = vrot.lane.b32.xlu0 %v576, 8
      %v2512 = vpop.permute.xlu0 %2511
      %2513 = vrot.lane.b32.xlu0 %v577, 8
      %v2514 = vpop.permute.xlu0 %2513
      %2515 = vrot.lane.b32.xlu0 %v578, 8
      %v2516 = vpop.permute.xlu0 %2515
      %2517 = vrot.lane.b32.xlu0 %v579, 8
      %v2518 = vpop.permute.xlu0 %2517
      %2519 = vrot.lane.b32.xlu0 %v580, 8
      %v2520 = vpop.permute.xlu0 %2519
      %2521 = vrot.lane.b32.xlu0 %v581, 8
      %v2522 = vpop.permute.xlu0 %2521
      %2523 = vrot.lane.b32.xlu0 %v582, 8
      %v2524 = vpop.permute.xlu0 %2523
      %2525 = vrot.lane.b32.xlu0 %v583, 8
      %v2526 = vpop.permute.xlu0 %2525
      %2527 = vrot.lane.b32.xlu0 %v584, 8
      %v2528 = vpop.permute.xlu0 %2527
      %2529 = vrot.lane.b32.xlu0 %v585, 8
      %v2530 = vpop.permute.xlu0 %2529
      %2531 = vrot.lane.b32.xlu0 %v586, 8
      %v2532 = vpop.permute.xlu0 %2531
      %2533 = vrot.lane.b32.xlu0 %v587, 8
      %v2534 = vpop.permute.xlu0 %2533
      %2535 = vrot.lane.b32.xlu0 %v588, 8
      %v2536 = vpop.permute.xlu0 %2535
      %2537 = vrot.lane.b32.xlu0 %v589, 8
      %v2538 = vpop.permute.xlu0 %2537
      %2539 = vrot.lane.b32.xlu0 %v590, 8
      %v2540 = vpop.permute.xlu0 %2539
      %2557 = vrot.lane.b32.xlu0 %v575, 16
      %v2558 = vpop.permute.xlu0 %2557
      %2559 = vrot.lane.b32.xlu0 %v576, 16
      %v2560 = vpop.permute.xlu0 %2559
      %2561 = vrot.lane.b32.xlu0 %v577, 16
      %v2562 = vpop.permute.xlu0 %2561
      %2563 = vrot.lane.b32.xlu0 %v578, 16
      %v2564 = vpop.permute.xlu0 %2563
      %2565 = vrot.lane.b32.xlu0 %v579, 16
      %v2566 = vpop.permute.xlu0 %2565
      %2567 = vrot.lane.b32.xlu0 %v580, 16
      %v2568 = vpop.permute.xlu0 %2567
      %2569 = vrot.lane.b32.xlu0 %v581, 16
      %v2570 = vpop.permute.xlu0 %2569
      %2571 = vrot.lane.b32.xlu0 %v582, 16
      %v2572 = vpop.permute.xlu0 %2571
      %2573 = vrot.lane.b32.xlu0 %v583, 16
      %v2574 = vpop.permute.xlu0 %2573
      %2575 = vrot.lane.b32.xlu0 %v584, 16
      %v2576 = vpop.permute.xlu0 %2575
      %2577 = vrot.lane.b32.xlu0 %v585, 16
      %v2578 = vpop.permute.xlu0 %2577
      %2579 = vrot.lane.b32.xlu0 %v586, 16
      %v2580 = vpop.permute.xlu0 %2579
      %2581 = vrot.lane.b32.xlu0 %v587, 16
      %v2582 = vpop.permute.xlu0 %2581
      %2583 = vrot.lane.b32.xlu0 %v588, 16
      %v2584 = vpop.permute.xlu0 %2583
      %2585 = vrot.lane.b32.xlu0 %v589, 16
      %v2586 = vpop.permute.xlu0 %2585
      %2587 = vrot.lane.b32.xlu0 %v590, 16
      %v2588 = vpop.permute.xlu0 %2587
      %2605 = vrot.lane.b32.xlu0 %v575, 24
      %v2606 = vpop.permute.xlu0 %2605
      %2607 = vrot.lane.b32.xlu0 %v576, 24
      %v2608 = vpop.permute.xlu0 %2607
      %2609 = vrot.lane.b32.xlu0 %v577, 24
      %v2610 = vpop.permute.xlu0 %2609
      %2611 = vrot.lane.b32.xlu0 %v578, 24
      %v2612 = vpop.permute.xlu0 %2611
      %2613 = vrot.lane.b32.xlu0 %v579, 24
      %v2614 = vpop.permute.xlu0 %2613
      %2615 = vrot.lane.b32.xlu0 %v580, 24
      %v2616 = vpop.permute.xlu0 %2615
      %2617 = vrot.lane.b32.xlu0 %v581, 24
      %v2618 = vpop.permute.xlu0 %2617
      %2619 = vrot.lane.b32.xlu0 %v582, 24
      %v2620 = vpop.permute.xlu0 %2619
      %2621 = vrot.lane.b32.xlu0 %v583, 24
      %v2622 = vpop.permute.xlu0 %2621
      %2623 = vrot.lane.b32.xlu0 %v584, 24
      %v2624 = vpop.permute.xlu0 %2623
      %2625 = vrot.lane.b32.xlu0 %v585, 24
      %v2626 = vpop.permute.xlu0 %2625
      %2627 = vrot.lane.b32.xlu0 %v586, 24
      %v2628 = vpop.permute.xlu0 %2627
      %2629 = vrot.lane.b32.xlu0 %v587, 24
      %v2630 = vpop.permute.xlu0 %2629
      %2631 = vrot.lane.b32.xlu0 %v588, 24
      %v2632 = vpop.permute.xlu0 %2631
      %2633 = vrot.lane.b32.xlu0 %v589, 24
      %v2634 = vpop.permute.xlu0 %2633
      %2635 = vrot.lane.b32.xlu0 %v590, 24
      %v2636 = vpop.permute.xlu0 %2635
      %v2653 = vsel %vm2198, %v575, %v2510
      %v2654 = vsel %vm2198, %v576, %v2512
      %v2655 = vsel %vm2198, %v577, %v2514
      %v2656 = vsel %vm2198, %v578, %v2516
      %v2657 = vsel %vm2198, %v579, %v2518
      %v2658 = vsel %vm2198, %v580, %v2520
      %v2659 = vsel %vm2198, %v581, %v2522
      %v2660 = vsel %vm2198, %v582, %v2524
      %v2661 = vsel %vm2198, %v583, %v2526
      %v2662 = vsel %vm2198, %v584, %v2528
      %v2663 = vsel %vm2198, %v585, %v2530
      %v2664 = vsel %vm2198, %v586, %v2532
      %v2665 = vsel %vm2198, %v587, %v2534
      %v2666 = vsel %vm2198, %v588, %v2536
      %v2667 = vsel %vm2198, %v589, %v2538
      %v2668 = vsel %vm2198, %v590, %v2540
      %vm2669 = vcmask 130048
      %v2670 = vsel %vm2669, %v2653, %v2558
      %v2671 = vsel %vm2669, %v2654, %v2560
      %v2672 = vsel %vm2669, %v2655, %v2562
      %v2673 = vsel %vm2669, %v2656, %v2564
      %v2674 = vsel %vm2669, %v2657, %v2566
      %v2675 = vsel %vm2669, %v2658, %v2568
      %v2676 = vsel %vm2669, %v2659, %v2570
      %v2677 = vsel %vm2669, %v2660, %v2572
      %v2678 = vsel %vm2669, %v2661, %v2574
      %v2679 = vsel %vm2669, %v2662, %v2576
      %v2680 = vsel %vm2669, %v2663, %v2578
      %v2681 = vsel %vm2669, %v2664, %v2580
      %v2682 = vsel %vm2669, %v2665, %v2582
      %v2683 = vsel %vm2669, %v2666, %v2584
      %v2684 = vsel %vm2669, %v2667, %v2586
      %v2685 = vsel %vm2669, %v2668, %v2588
      %vm2686 = vcmask 195584
      %v2687 = vsel %vm2686, %v2670, %v2606
      %v2688 = vsel %vm2686, %v2671, %v2608
      %v2689 = vsel %vm2686, %v2672, %v2610
      %v2690 = vsel %vm2686, %v2673, %v2612
      %v2691 = vsel %vm2686, %v2674, %v2614
      %v2692 = vsel %vm2686, %v2675, %v2616
      %v2693 = vsel %vm2686, %v2676, %v2618
      %v2694 = vsel %vm2686, %v2677, %v2620
      %v2695 = vsel %vm2686, %v2678, %v2622
      %v2696 = vsel %vm2686, %v2679, %v2624
      %v2697 = vsel %vm2686, %v2680, %v2626
      %v2698 = vsel %vm2686, %v2681, %v2628
      %v2699 = vsel %vm2686, %v2682, %v2630
      %v2700 = vsel %vm2686, %v2683, %v2632
      %v2701 = vsel %vm2686, %v2684, %v2634
      %v2702 = vsel %vm2686, %v2685, %v2636
      %v2703 = vld [vmem:[%s3] sm:$0x1]
      %v2705 = vlaneseq
      %v2706 = vshrl.u32 %v2705, 7
      %v2707 = vsub.s32 0, %v2706
      %v2708 = vrot.slane %v2703, %v2707
      %v2710 = vmul.f32 %v2687, %v2708
      %v2711 = vmul.f32 %v2688, %v2708
      %v2712 = vmul.f32 %v2689, %v2708
      %v2713 = vmul.f32 %v2690, %v2708
      %v2714 = vmul.f32 %v2691, %v2708
      %v2715 = vmul.f32 %v2692, %v2708
      %v2716 = vmul.f32 %v2693, %v2708
      %v2717 = vmul.f32 %v2694, %v2708
      %v2718 = vmul.f32 %v2695, %v2708
      %v2719 = vmul.f32 %v2696, %v2708
      %v2720 = vmul.f32 %v2697, %v2708
      %v2721 = vmul.f32 %v2698, %v2708
      %v2722 = vmul.f32 %v2699, %v2708
      %v2723 = vmul.f32 %v2700, %v2708
      %v2724 = vmul.f32 %v2701, %v2708
      %v2725 = vmul.f32 %v2702, %v2708
      %v2726 = vpack.c.bf16 %v2450, %v2447
      %v2727 = vpack.c.bf16 %v2458, %v2455
      %v2728 = vpack.c.bf16 %v2466, %v2463
      %v2729 = vpack.c.bf16 %v2474, %v2471
      %v2730 = vpack.c.bf16 %v2482, %v2479
      %v2731 = vpack.c.bf16 %v2490, %v2487
      %v2732 = vpack.c.bf16 %v2498, %v2495
      %v2733 = vpack.c.bf16 %v2506, %v2503
      %v2734 = vld [vmem:[%s8] sm:$0xf]
      %v2735 = vld [vmem:[%s8 + $0x4] sm:$0xf]
      %v2736 = vld [vmem:[%s12] sm:$0x1]
      %v2738 = vlaneseq
      %v2739 = vshrl.u32 %v2738, 7
      %v2740 = vsub.s32 0, %v2739
      %v2741 = vrot.slane %v2736, %v2740
      %v2745 = vunpack.c.l.b16 %v2734
      %v2746 = vunpack.c.l.b16 %v2735
      %v2747 = vpack.c.b16 %v2746, %v2745
      %v2750 = vsel %vm2669, %v2726, 0
      %v2753 = vsel %vm2669, %v2727, 0
      %v2756 = vsel %vm2669, %v2728, 0
      %v2759 = vsel %vm2669, %v2729, 0
      %v2762 = vsel %vm2669, %v2730, 0
      %v2765 = vsel %vm2669, %v2731, 0
      %v2768 = vsel %vm2669, %v2732, 0
      %v2771 = vsel %vm2669, %v2733, 0
      %2773 = vmatprep.subr.bf16.mxu0 0
      %2774 = vmatpush1.bf16.msra.mxu0 %v2747
      %2775 = vmatprep.subr.bf16.mxu0 0
      %2776 = vmatpush1.bf16.msra.mxu0 0
      %2777 = vmatprep.subr.bf16.mxu0 0
      %2778 = vmatpush1.bf16.msra.mxu0 0
      %2779 = vmatprep.subr.bf16.mxu0 0
      %2780 = vmatpush1.bf16.msra.mxu0 0
      %2781 = vmatprep.subr.bf16.mxu0 0
      %2782 = vmatpush1.bf16.msra.mxu0 0
      %2783 = vmatprep.subr.bf16.mxu0 0
      %2784 = vmatpush1.bf16.msra.mxu0 0
      %2785 = vmatprep.subr.bf16.mxu0 0
      %2786 = vmatpush1.bf16.msra.mxu0 0
      %2787 = vmatprep.subr.bf16.mxu0 0
      %2788 = vmatpush1.bf16.msra.mxu0 0
      %2789 = vmatprep.subr.bf16.mxu0 0
      %2790 = vmatpush1.bf16.msra.mxu0 0
      %2791 = vmatprep.subr.bf16.mxu0 0
      %2792 = vmatpush1.bf16.msra.mxu0 0
      %2793 = vmatprep.subr.bf16.mxu0 0
      %2794 = vmatpush1.bf16.msra.mxu0 0
      %2795 = vmatprep.subr.bf16.mxu0 0
      %2796 = vmatpush1.bf16.msra.mxu0 0
      %2797 = vmatprep.subr.bf16.mxu0 0
      %2798 = vmatpush1.bf16.msra.mxu0 0
      %2799 = vmatprep.subr.bf16.mxu0 0
      %2800 = vmatpush1.bf16.msra.mxu0 0
      %2801 = vmatprep.subr.bf16.mxu0 0
      %2802 = vmatpush1.bf16.msra.mxu0 0
      %2803 = vmatprep.subr.bf16.mxu0 0
      %2804 = vmatpush1.bf16.msra.mxu0 0
      %2805 = vmatprep.mubr.bf16.mxu0 0
      %2806 = vmatmul.mubr.bf16.gmra.mrb[0].mxu0 %v2750
      %v2807 = vpop.f32.mrb[0].mxu0
      %v2808 = vadd.f32 %v2741, %v2807
      %v2809 = vpop.f32.mrb[0].mxu0
      %v2810 = vpop.f32.mrb[0].mxu0
      %v2811 = vadd.f32 %v2741, %v2810
      %v2812 = vpop.f32.mrb[0].mxu0
      %2813 = vmatprep.mubr.bf16.mxu0 0
      %2814 = vmatmul.mubr.bf16.gmra.mrb[0].mxu0 %v2753
      %v2815 = vpop.f32.mrb[0].mxu0
      %v2816 = vadd.f32 %v2741, %v2815
      %v2817 = vpop.f32.mrb[0].mxu0
      %v2818 = vpop.f32.mrb[0].mxu0
      %v2819 = vadd.f32 %v2741, %v2818
      %v2820 = vpop.f32.mrb[0].mxu0
      %2821 = vmatprep.mubr.bf16.mxu0 0
      %2822 = vmatmul.mubr.bf16.gmra.mrb[0].mxu0 %v2756
      %v2823 = vpop.f32.mrb[0].mxu0
      %v2824 = vadd.f32 %v2741, %v2823
      %v2825 = vpop.f32.mrb[0].mxu0
      %v2826 = vpop.f32.mrb[0].mxu0
      %v2827 = vadd.f32 %v2741, %v2826
      %v2828 = vpop.f32.mrb[0].mxu0
      %2829 = vmatprep.mubr.bf16.mxu0 0
      %2830 = vmatmul.mubr.bf16.gmra.mrb[0].mxu0 %v2759
      %v2831 = vpop.f32.mrb[0].mxu0
      %v2832 = vadd.f32 %v2741, %v2831
      %v2833 = vpop.f32.mrb[0].mxu0
      %v2834 = vpop.f32.mrb[0].mxu0
      %v2835 = vadd.f32 %v2741, %v2834
      %v2836 = vpop.f32.mrb[0].mxu0
      %2837 = vmatprep.mubr.bf16.mxu0 0
      %2838 = vmatmul.mubr.bf16.gmra.mrb[0].mxu0 %v2762
      %v2839 = vpop.f32.mrb[0].mxu0
      %v2840 = vadd.f32 %v2741, %v2839
      %v2841 = vpop.f32.mrb[0].mxu0
      %v2842 = vpop.f32.mrb[0].mxu0
      %v2843 = vadd.f32 %v2741, %v2842
      %v2844 = vpop.f32.mrb[0].mxu0
      %2845 = vmatprep.mubr.bf16.mxu0 0
      %2846 = vmatmul.mubr.bf16.gmra.mrb[0].mxu0 %v2765
      %v2847 = vpop.f32.mrb[0].mxu0
      %v2848 = vadd.f32 %v2741, %v2847
      %v2849 = vpop.f32.mrb[0].mxu0
      %v2850 = vpop.f32.mrb[0].mxu0
      %v2851 = vadd.f32 %v2741, %v2850
      %v2852 = vpop.f32.mrb[0].mxu0
      %2853 = vmatprep.mubr.bf16.mxu0 0
      %2854 = vmatmul.mubr.bf16.gmra.mrb[0].mxu0 %v2768
      %v2855 = vpop.f32.mrb[0].mxu0
      %v2856 = vadd.f32 %v2741, %v2855
      %v2857 = vpop.f32.mrb[0].mxu0
      %v2858 = vpop.f32.mrb[0].mxu0
      %v2859 = vadd.f32 %v2741, %v2858
      %v2860 = vpop.f32.mrb[0].mxu0
      %2861 = vmatprep.mubr.bf16.mxu0 0
      %2862 = vmatmul.mubr.bf16.gmra.mrb[0].mxu0 %v2771
      %v2863 = vpop.f32.mrb[0].mxu0
      %v2864 = vadd.f32 %v2741, %v2863
      %v2865 = vpop.f32.mrb[0].mxu0
      %v2866 = vpop.f32.mrb[0].mxu0
      %v2867 = vadd.f32 %v2741, %v2866
      %v2868 = vpop.f32.mrb[0].mxu0
      %2869 = vdwg.mxu0
      %v2870 = vpack.c.bf16 %v576, %v575
      %v2871 = vpack.c.bf16 %v578, %v577
      %v2872 = vpack.c.bf16 %v580, %v579
      %v2873 = vpack.c.bf16 %v582, %v581
      %v2874 = vpack.c.bf16 %v584, %v583
      %v2875 = vpack.c.bf16 %v586, %v585
      %v2876 = vpack.c.bf16 %v588, %v587
      %v2877 = vpack.c.bf16 %v590, %v589
      %v2878 = vld [vmem:[%s9] sm:$0xf]
      %v2880 = vsel %vm2198, %v2870, 0
      %v2883 = vsel %vm2198, %v2871, 0
      %v2886 = vsel %vm2198, %v2872, 0
      %v2889 = vsel %vm2198, %v2873, 0
      %v2892 = vsel %vm2198, %v2874, 0
      %v2895 = vsel %vm2198, %v2875, 0
      %v2898 = vsel %vm2198, %v2876, 0
      %v2901 = vsel %vm2198, %v2877, 0
      %v2904 = vsel %vm2223, %v2878, 0
      %2906 = vmatprep.subr.bf16.mxu0 0
      %2907 = vmatpush1.bf16.msra.mxu0 %v2904
      %2908 = vmatprep.subr.bf16.mxu0 0
      %2909 = vmatpush1.bf16.msra.mxu0 0
      %2910 = vmatprep.subr.bf16.mxu0 0
      %2911 = vmatpush1.bf16.msra.mxu0 0
      %2912 = vmatprep.subr.bf16.mxu0 0
      %2913 = vmatpush1.bf16.msra.mxu0 0
      %2914 = vmatprep.subr.bf16.mxu0 0
      %2915 = vmatpush1.bf16.msra.mxu0 0
      %2916 = vmatprep.subr.bf16.mxu0 0
      %2917 = vmatpush1.bf16.msra.mxu0 0
      %2918 = vmatprep.subr.bf16.mxu0 0
      %2919 = vmatpush1.bf16.msra.mxu0 0
      %2920 = vmatprep.subr.bf16.mxu0 0
      %2921 = vmatpush1.bf16.msra.mxu0 0
      %2922 = vmatprep.subr.bf16.mxu0 0
      %2923 = vmatpush1.bf16.msra.mxu0 0
      %2924 = vmatprep.subr.bf16.mxu0 0
      %2925 = vmatpush1.bf16.msra.mxu0 0
      %2926 = vmatprep.subr.bf16.mxu0 0
      %2927 = vmatpush1.bf16.msra.mxu0 0
      %2928 = vmatprep.subr.bf16.mxu0 0
      %2929 = vmatpush1.bf16.msra.mxu0 0
      %2930 = vmatprep.subr.bf16.mxu0 0
      %2931 = vmatpush1.bf16.msra.mxu0 0
      %2932 = vmatprep.subr.bf16.mxu0 0
      %2933 = vmatpush1.bf16.msra.mxu0 0
      %2934 = vmatprep.subr.bf16.mxu0 0
      %2935 = vmatpush1.bf16.msra.mxu0 0
      %2936 = vmatprep.subr.bf16.mxu0 0
      %2937 = vmatpush1.bf16.msra.mxu0 0
      %2938 = vmatprep.mubr.bf16.mxu0 0
      %2939 = vmatmul.mubr.bf16.gmra.mrb[0].mxu0 %v2880
      %v2940 = vpop.f32.mrb[0].mxu0
      %v2941 = vadd.f32 0.0, %v2940
      %v2942 = vpop.f32.mrb[0].mxu0
      %v2943 = vpop.f32.mrb[0].mxu0
      %v2944 = vadd.f32 0.0, %v2943
      %v2945 = vpop.f32.mrb[0].mxu0
      %2946 = vmatprep.mubr.bf16.mxu0 0
      %2947 = vmatmul.mubr.bf16.gmra.mrb[0].mxu0 %v2883
      %v2948 = vpop.f32.mrb[0].mxu0
      %v2949 = vadd.f32 0.0, %v2948
      %v2950 = vpop.f32.mrb[0].mxu0
      %v2951 = vpop.f32.mrb[0].mxu0
      %v2952 = vadd.f32 0.0, %v2951
      %v2953 = vpop.f32.mrb[0].mxu0
      %2954 = vmatprep.mubr.bf16.mxu0 0
      %2955 = vmatmul.mubr.bf16.gmra.mrb[0].mxu0 %v2886
      %v2956 = vpop.f32.mrb[0].mxu0
      %v2957 = vadd.f32 0.0, %v2956
      %v2958 = vpop.f32.mrb[0].mxu0
      %v2959 = vpop.f32.mrb[0].mxu0
      %v2960 = vadd.f32 0.0, %v2959
      %v2961 = vpop.f32.mrb[0].mxu0
      %2962 = vmatprep.mubr.bf16.mxu0 0
      %2963 = vmatmul.mubr.bf16.gmra.mrb[0].mxu0 %v2889
      %v2964 = vpop.f32.mrb[0].mxu0
      %v2965 = vadd.f32 0.0, %v2964
      %v2966 = vpop.f32.mrb[0].mxu0
      %v2967 = vpop.f32.mrb[0].mxu0
      %v2968 = vadd.f32 0.0, %v2967
      %v2969 = vpop.f32.mrb[0].mxu0
      %2970 = vmatprep.mubr.bf16.mxu0 0
      %2971 = vmatmul.mubr.bf16.gmra.mrb[0].mxu0 %v2892
      %v2972 = vpop.f32.mrb[0].mxu0
      %v2973 = vadd.f32 0.0, %v2972
      %v2974 = vpop.f32.mrb[0].mxu0
      %v2975 = vpop.f32.mrb[0].mxu0
      %v2976 = vadd.f32 0.0, %v2975
      %v2977 = vpop.f32.mrb[0].mxu0
      %2978 = vmatprep.mubr.bf16.mxu0 0
      %2979 = vmatmul.mubr.bf16.gmra.mrb[0].mxu0 %v2895
      %v2980 = vpop.f32.mrb[0].mxu0
      %v2981 = vadd.f32 0.0, %v2980
      %v2982 = vpop.f32.mrb[0].mxu0
      %v2983 = vpop.f32.mrb[0].mxu0
      %v2984 = vadd.f32 0.0, %v2983
      %v2985 = vpop.f32.mrb[0].mxu0
      %2986 = vmatprep.mubr.bf16.mxu0 0
      %2987 = vmatmul.mubr.bf16.gmra.mrb[0].mxu0 %v2898
      %v2988 = vpop.f32.mrb[0].mxu0
      %v2989 = vadd.f32 0.0, %v2988
      %v2990 = vpop.f32.mrb[0].mxu0
      %v2991 = vpop.f32.mrb[0].mxu0
      %v2992 = vadd.f32 0.0, %v2991
      %v2993 = vpop.f32.mrb[0].mxu0
      %2994 = vmatprep.mubr.bf16.mxu0 0
      %2995 = vmatmul.mubr.bf16.gmra.mrb[0].mxu0 %v2901
      %v2996 = vpop.f32.mrb[0].mxu0
      %v2997 = vadd.f32 0.0, %v2996
      %v2998 = vpop.f32.mrb[0].mxu0
      %v2999 = vpop.f32.mrb[0].mxu0
      %v3000 = vadd.f32 0.0, %v2999
      %v3001 = vpop.f32.mrb[0].mxu0
      %3002 = vdwg.mxu0
      %v3003 = vadd.f32 %v2808, %v2941
      %v3004 = vadd.f32 %v2811, %v2944
      %v3005 = vadd.f32 %v2816, %v2949
      %v3006 = vadd.f32 %v2819, %v2952
      %v3007 = vadd.f32 %v2824, %v2957
      %v3008 = vadd.f32 %v2827, %v2960
      %v3009 = vadd.f32 %v2832, %v2965
      %v3010 = vadd.f32 %v2835, %v2968
      %v3011 = vadd.f32 %v2840, %v2973
      %v3012 = vadd.f32 %v2843, %v2976
      %v3013 = vadd.f32 %v2848, %v2981
      %v3014 = vadd.f32 %v2851, %v2984
      %v3015 = vadd.f32 %v2856, %v2989
      %v3016 = vadd.f32 %v2859, %v2992
      %v3017 = vadd.f32 %v2864, %v2997
      %v3018 = vadd.f32 %v2867, %v3000
      %v3019 = vand.u32 2147483647, %v2710
      %vm3020 = vcmp.le.f32.partialorder %v3019, 0.7853982
      %vm3021 = vcmp.lt.s32.totalorder %v2710, 0
      %v3022 = vand.u32 %v2710, 2139095040
      %v3023 = vshrl.u32 %v3022, 23
      %v3024 = vsub.s32 %v3023, 127
      %v3025 = vand.u32 2147483647, %v2710
      %v3026 = vand.u32 %v3025, 8388607
      %v3027 = vor.u32 %v3026, 8388608
      %v3028 = vsub.s32 0, %v3027
      %v3029 = vadd.s32 %v3024, 1
      %vm3030 = vcmp.gt.s32.totalorder %v3029, 0
      %v3031 = vsel %vm3030, %v3029, 0
      %v3032 = vshrl.u32 %v3031, 5
      %v3033 = vand.u32 %v3031, 31
      %v3034 = vsub.s32 32, %v3033
      %v3035 = vshrl.u32 683565275, %v3034
      %v3036 = vshll.u32 683565275, %v3033
      %v3037 = vshrl.u32 2475754826, %v3034
      %v3038 = vor.u32 %v3036, %v3037
      %v3039 = vshll.u32 2475754826, %v3033
      %v3040 = vshrl.u32 2131351028, %v3034
      %v3041 = vor.u32 %v3039, %v3040
      %v3042 = vshll.u32 2131351028, %v3033
      %v3043 = vshrl.u32 2102212464, %v3034
      %v3044 = vor.u32 %v3042, %v3043
      %v3045 = vshll.u32 2102212464, %v3033
      %v3046 = vshrl.u32 920167782, %v3034
      %v3047 = vor.u32 %v3045, %v3046
      %v3048 = vshll.u32 920167782, %v3033
      %v3049 = vshrl.u32 1326507024, %v3034
      %v3050 = vor.u32 %v3048, %v3049
      %vm3051 = vcmp.lt.s32.totalorder %v3032, 1
      %vm3052 = vcmp.lt.s32.totalorder %v3032, 2
      %vm3053 = vcmp.lt.s32.totalorder %v3032, 3
      %vm3054 = vcmp.lt.s32.totalorder %v3032, 4
      %v3055 = vsel %vm3051, %v3035, %v3038
      %v3056 = vsel %vm3054, %v3044, 2102212464
      %v3057 = vsel %vm3053, %v3041, %v3056
      %v3058 = vsel %vm3052, %v3055, %v3057
      %v3059 = vsel %vm3051, %v3038, %v3041
      %v3060 = vsel %vm3054, %v3047, 920167782
      %v3061 = vsel %vm3053, %v3044, %v3060
      %v3062 = vsel %vm3052, %v3059, %v3061
      %v3063 = vsel %vm3051, %v3041, %v3044
      %v3064 = vsel %vm3054, %v3050, 1326507024
      %v3065 = vsel %vm3053, %v3047, %v3064
      %v3066 = vsel %vm3052, %v3063, %v3065
      %v3067 = vshll.u32 %v3027, 8
      %v3068 = vmul.u32.u64.compose %v3067, %v3066
      %v3069 = vextract.low.u32 %v3068
      %v3070 = vextract.high.u32 %v3068
      %v3071 = vmul.u32.u64.compose %v3067, %v3062
      %v3072 = vextract.low.u32 %v3071
      %v3073 = vextract.high.u32 %v3071
      %v3074 = vmul.u32 %v3067, %v3058
      %v3075 = vadd.s32 %v3070, %v3072
      %vm3076 = vc.u32 %v3070, %v3072
      %v3077 = vadd.s32 %v3073, 1
      %v3078 = vsel %vm3076, %v3077, %v3073
      %v3079 = vadd.s32 %v3074, %v3078
      %v3080 = vadd.s32 %v3079, 536870912
      %v3081 = vshrl.u32 %v3080, 30
      %v3082 = vshll.u32 %v3081, 30
      %v3083 = vsub.s32 %v3079, %v3082
      %vm3084 = vcmp.lt.s32.totalorder %v3083, 0
      %v3085 = vsub.s32 0, %v3083
      %v3086 = vsel %vm3084, %v3085, %v3083
      %v3087 = vclz %v3086
      %v3088 = vsub.s32 %v3087, 2
      %vm3089 = vcmp.gt.s32.totalorder 0, %v3088
      %v3090 = vsel %vm3089, 0, %v3088
      %v3091 = vsub.s32 32, %v3090
      %v3092 = vshll.u32 %v3083, %v3090
      %v3093 = vshrl.u32 %v3075, %v3091
      %v3094 = vor.u32 %v3092, %v3093
      %v3095 = vsub.s32 4294967266, %v3090
      %v3096 = vadd.s32 %v3095, 127
      %v3097 = vshll.u32 %v3096, 23
      %v3098 = vor.u32 4788187, %v3097
      %v3099 = vand.u32 2147483647, %v3098
      %v3101 = vcvt.s32.f32 %v3094
      %v3102 = vmul.f32 %v3101, %v3099
      %v3103 = vxor.u32 %v3102, 2147483648
      %v3104 = vsel %vm3021, %v3103, %v3102
      %v3105 = vsub.s32 4, %v3081
      %v3106 = vsel %vm3021, %v3105, %v3081
      %v3107 = vsel %vm3020, %v2710, %v3104
      %v3108 = vsel %vm3020, 0, %v3106
      %v3109 = vcosq.f32.pop %v3107
      %v3110 = vsinq.f32.pop %v3107
      %vm3111 = vweird.f32 %v2710
      %v3112 = vadd.s32 %v3108, 3
      %v3113 = vand.u32 %v3112, 3
      %vm3114 = vcmp.lt.s32.totalorder %v3113, 2
      %vm3115 = vcmp.eq.s32.totalorder %v3113, 0
      %v3116 = vxor.u32 %v3110, 2147483648
      %v3117 = vsel %vm3115, %v3109, %v3116
      %vm3118 = vcmp.eq.s32.totalorder %v3113, 2
      %v3119 = vxor.u32 %v3109, 2147483648
      %v3120 = vsel %vm3118, %v3119, %v3110
      %v3121 = vsel %vm3114, %v3117, %v3120
      %v3122 = vsel %vm3111, nan, %v3121
      %v3123 = vand.u32 2147483647, %v2711
      %vm3124 = vcmp.le.f32.partialorder %v3123, 0.7853982
      %vm3125 = vcmp.lt.s32.totalorder %v2711, 0
      %v3126 = vand.u32 %v2711, 2139095040
      %v3127 = vshrl.u32 %v3126, 23
      %v3128 = vsub.s32 %v3127, 127
      %v3129 = vand.u32 2147483647, %v2711
      %v3130 = vand.u32 %v3129, 8388607
      %v3131 = vor.u32 %v3130, 8388608
      %v3132 = vsub.s32 0, %v3131
      %v3133 = vadd.s32 %v3128, 1
      %vm3134 = vcmp.gt.s32.totalorder %v3133, 0
      %v3135 = vsel %vm3134, %v3133, 0
      %v3136 = vshrl.u32 %v3135, 5
      %v3137 = vand.u32 %v3135, 31
      %v3138 = vsub.s32 32, %v3137
      %v3139 = vshrl.u32 683565275, %v3138
      %v3140 = vshll.u32 683565275, %v3137
      %v3141 = vshrl.u32 2475754826, %v3138
      %v3142 = vor.u32 %v3140, %v3141
      %v3143 = vshll.u32 2475754826, %v3137
      %v3144 = vshrl.u32 2131351028, %v3138
      %v3145 = vor.u32 %v3143, %v3144
      %v3146 = vshll.u32 2131351028, %v3137
      %v3147 = vshrl.u32 2102212464, %v3138
      %v3148 = vor.u32 %v3146, %v3147
      %v3149 = vshll.u32 2102212464, %v3137
      %v3150 = vshrl.u32 920167782, %v3138
      %v3151 = vor.u32 %v3149, %v3150
      %v3152 = vshll.u32 920167782, %v3137
      %v3153 = vshrl.u32 1326507024, %v3138
      %v3154 = vor.u32 %v3152, %v3153
      %vm3155 = vcmp.lt.s32.totalorder %v3136, 1
      %vm3156 = vcmp.lt.s32.totalorder %v3136, 2
      %vm3157 = vcmp.lt.s32.totalorder %v3136, 3
      %vm3158 = vcmp.lt.s32.totalorder %v3136, 4
      %v3159 = vsel %vm3155, %v3139, %v3142
      %v3160 = vsel %vm3158, %v3148, 2102212464
      %v3161 = vsel %vm3157, %v3145, %v3160
      %v3162 = vsel %vm3156, %v3159, %v3161
      %v3163 = vsel %vm3155, %v3142, %v3145
      %v3164 = vsel %vm3158, %v3151, 920167782
      %v3165 = vsel %vm3157, %v3148, %v3164
      %v3166 = vsel %vm3156, %v3163, %v3165
      %v3167 = vsel %vm3155, %v3145, %v3148
      %v3168 = vsel %vm3158, %v3154, 1326507024
      %v3169 = vsel %vm3157, %v3151, %v3168
      %v3170 = vsel %vm3156, %v3167, %v3169
      %v3171 = vshll.u32 %v3131, 8
      %v3172 = vmul.u32.u64.compose %v3171, %v3170
      %v3173 = vextract.low.u32 %v3172
      %v3174 = vextract.high.u32 %v3172
      %v3175 = vmul.u32.u64.compose %v3171, %v3166
      %v3176 = vextract.low.u32 %v3175
      %v3177 = vextract.high.u32 %v3175
      %v3178 = vmul.u32 %v3171, %v3162
      %v3179 = vadd.s32 %v3174, %v3176
      %vm3180 = vc.u32 %v3174, %v3176
      %v3181 = vadd.s32 %v3177, 1
      %v3182 = vsel %vm3180, %v3181, %v3177
      %v3183 = vadd.s32 %v3178, %v3182
      %v3184 = vadd.s32 %v3183, 536870912
      %v3185 = vshrl.u32 %v3184, 30
      %v3186 = vshll.u32 %v3185, 30
      %v3187 = vsub.s32 %v3183, %v3186
      %vm3188 = vcmp.lt.s32.totalorder %v3187, 0
      %v3189 = vsub.s32 0, %v3187
      %v3190 = vsel %vm3188, %v3189, %v3187
      %v3191 = vclz %v3190
      %v3192 = vsub.s32 %v3191, 2
      %vm3193 = vcmp.gt.s32.totalorder 0, %v3192
      %v3194 = vsel %vm3193, 0, %v3192
      %v3195 = vsub.s32 32, %v3194
      %v3196 = vshll.u32 %v3187, %v3194
      %v3197 = vshrl.u32 %v3179, %v3195
      %v3198 = vor.u32 %v3196, %v3197
      %v3199 = vsub.s32 4294967266, %v3194
      %v3200 = vadd.s32 %v3199, 127
      %v3201 = vshll.u32 %v3200, 23
      %v3202 = vor.u32 4788187, %v3201
      %v3203 = vand.u32 2147483647, %v3202
      %v3205 = vcvt.s32.f32 %v3198
      %v3206 = vmul.f32 %v3205, %v3203
      %v3207 = vxor.u32 %v3206, 2147483648
      %v3208 = vsel %vm3125, %v3207, %v3206
      %v3209 = vsub.s32 4, %v3185
      %v3210 = vsel %vm3125, %v3209, %v3185
      %v3211 = vsel %vm3124, %v2711, %v3208
      %v3212 = vsel %vm3124, 0, %v3210
      %v3213 = vcosq.f32.pop %v3211
      %v3214 = vsinq.f32.pop %v3211
      %vm3215 = vweird.f32 %v2711
      %v3216 = vadd.s32 %v3212, 3
      %v3217 = vand.u32 %v3216, 3
      %vm3218 = vcmp.lt.s32.totalorder %v3217, 2
      %vm3219 = vcmp.eq.s32.totalorder %v3217, 0
      %v3220 = vxor.u32 %v3214, 2147483648
      %v3221 = vsel %vm3219, %v3213, %v3220
      %vm3222 = vcmp.eq.s32.totalorder %v3217, 2
      %v3223 = vxor.u32 %v3213, 2147483648
      %v3224 = vsel %vm3222, %v3223, %v3214
      %v3225 = vsel %vm3218, %v3221, %v3224
      %v3226 = vsel %vm3215, nan, %v3225
      %v3227 = vand.u32 2147483647, %v2712
      %vm3228 = vcmp.le.f32.partialorder %v3227, 0.7853982
      %vm3229 = vcmp.lt.s32.totalorder %v2712, 0
      %v3230 = vand.u32 %v2712, 2139095040
      %v3231 = vshrl.u32 %v3230, 23
      %v3232 = vsub.s32 %v3231, 127
      %v3233 = vand.u32 2147483647, %v2712
      %v3234 = vand.u32 %v3233, 8388607
      %v3235 = vor.u32 %v3234, 8388608
      %v3236 = vsub.s32 0, %v3235
      %v3237 = vadd.s32 %v3232, 1
      %vm3238 = vcmp.gt.s32.totalorder %v3237, 0
      %v3239 = vsel %vm3238, %v3237, 0
      %v3240 = vshrl.u32 %v3239, 5
      %v3241 = vand.u32 %v3239, 31
      %v3242 = vsub.s32 32, %v3241
      %v3243 = vshrl.u32 683565275, %v3242
      %v3244 = vshll.u32 683565275, %v3241
      %v3245 = vshrl.u32 2475754826, %v3242
      %v3246 = vor.u32 %v3244, %v3245
      %v3247 = vshll.u32 2475754826, %v3241
      %v3248 = vshrl.u32 2131351028, %v3242
      %v3249 = vor.u32 %v3247, %v3248
      %v3250 = vshll.u32 2131351028, %v3241
      %v3251 = vshrl.u32 2102212464, %v3242
      %v3252 = vor.u32 %v3250, %v3251
      %v3253 = vshll.u32 2102212464, %v3241
      %v3254 = vshrl.u32 920167782, %v3242
      %v3255 = vor.u32 %v3253, %v3254
      %v3256 = vshll.u32 920167782, %v3241
      %v3257 = vshrl.u32 1326507024, %v3242
      %v3258 = vor.u32 %v3256, %v3257
      %vm3259 = vcmp.lt.s32.totalorder %v3240, 1
      %vm3260 = vcmp.lt.s32.totalorder %v3240, 2
      %vm3261 = vcmp.lt.s32.totalorder %v3240, 3
      %vm3262 = vcmp.lt.s32.totalorder %v3240, 4
      %v3263 = vsel %vm3259, %v3243, %v3246
      %v3264 = vsel %vm3262, %v3252, 2102212464
      %v3265 = vsel %vm3261, %v3249, %v3264
      %v3266 = vsel %vm3260, %v3263, %v3265
      %v3267 = vsel %vm3259, %v3246, %v3249
      %v3268 = vsel %vm3262, %v3255, 920167782
      %v3269 = vsel %vm3261, %v3252, %v3268
      %v3270 = vsel %vm3260, %v3267, %v3269
      %v3271 = vsel %vm3259, %v3249, %v3252
      %v3272 = vsel %vm3262, %v3258, 1326507024
      %v3273 = vsel %vm3261, %v3255, %v3272
      %v3274 = vsel %vm3260, %v3271, %v3273
      %v3275 = vshll.u32 %v3235, 8
      %v3276 = vmul.u32.u64.compose %v3275, %v3274
      %v3277 = vextract.low.u32 %v3276
      %v3278 = vextract.high.u32 %v3276
      %v3279 = vmul.u32.u64.compose %v3275, %v3270
      %v3280 = vextract.low.u32 %v3279
      %v3281 = vextract.high.u32 %v3279
      %v3282 = vmul.u32 %v3275, %v3266
      %v3283 = vadd.s32 %v3278, %v3280
      %vm3284 = vc.u32 %v3278, %v3280
      %v3285 = vadd.s32 %v3281, 1
      %v3286 = vsel %vm3284, %v3285, %v3281
      %v3287 = vadd.s32 %v3282, %v3286
      %v3288 = vadd.s32 %v3287, 536870912
      %v3289 = vshrl.u32 %v3288, 30
      %v3290 = vshll.u32 %v3289, 30
      %v3291 = vsub.s32 %v3287, %v3290
      %vm3292 = vcmp.lt.s32.totalorder %v3291, 0
      %v3293 = vsub.s32 0, %v3291
      %v3294 = vsel %vm3292, %v3293, %v3291
      %v3295 = vclz %v3294
      %v3296 = vsub.s32 %v3295, 2
      %vm3297 = vcmp.gt.s32.totalorder 0, %v3296
      %v3298 = vsel %vm3297, 0, %v3296
      %v3299 = vsub.s32 32, %v3298
      %v3300 = vshll.u32 %v3291, %v3298
      %v3301 = vshrl.u32 %v3283, %v3299
      %v3302 = vor.u32 %v3300, %v3301
      %v3303 = vsub.s32 4294967266, %v3298
      %v3304 = vadd.s32 %v3303, 127
      %v3305 = vshll.u32 %v3304, 23
      %v3306 = vor.u32 4788187, %v3305
      %v3307 = vand.u32 2147483647, %v3306
      %v3309 = vcvt.s32.f32 %v3302
      %v3310 = vmul.f32 %v3309, %v3307
      %v3311 = vxor.u32 %v3310, 2147483648
      %v3312 = vsel %vm3229, %v3311, %v3310
      %v3313 = vsub.s32 4, %v3289
      %v3314 = vsel %vm3229, %v3313, %v3289
      %v3315 = vsel %vm3228, %v2712, %v3312
      %v3316 = vsel %vm3228, 0, %v3314
      %v3317 = vcosq.f32.pop %v3315
      %v3318 = vsinq.f32.pop %v3315
      %vm3319 = vweird.f32 %v2712
      %v3320 = vadd.s32 %v3316, 3
      %v3321 = vand.u32 %v3320, 3
      %vm3322 = vcmp.lt.s32.totalorder %v3321, 2
      %vm3323 = vcmp.eq.s32.totalorder %v3321, 0
      %v3324 = vxor.u32 %v3318, 2147483648
      %v3325 = vsel %vm3323, %v3317, %v3324
      %vm3326 = vcmp.eq.s32.totalorder %v3321, 2
      %v3327 = vxor.u32 %v3317, 2147483648
      %v3328 = vsel %vm3326, %v3327, %v3318
      %v3329 = vsel %vm3322, %v3325, %v3328
      %v3330 = vsel %vm3319, nan, %v3329
      %v3331 = vand.u32 2147483647, %v2713
      %vm3332 = vcmp.le.f32.partialorder %v3331, 0.7853982
      %vm3333 = vcmp.lt.s32.totalorder %v2713, 0
      %v3334 = vand.u32 %v2713, 2139095040
      %v3335 = vshrl.u32 %v3334, 23
      %v3336 = vsub.s32 %v3335, 127
      %v3337 = vand.u32 2147483647, %v2713
      %v3338 = vand.u32 %v3337, 8388607
      %v3339 = vor.u32 %v3338, 8388608
      %v3340 = vsub.s32 0, %v3339
      %v3341 = vadd.s32 %v3336, 1
      %vm3342 = vcmp.gt.s32.totalorder %v3341, 0
      %v3343 = vsel %vm3342, %v3341, 0
      %v3344 = vshrl.u32 %v3343, 5
      %v3345 = vand.u32 %v3343, 31
      %v3346 = vsub.s32 32, %v3345
      %v3347 = vshrl.u32 683565275, %v3346
      %v3348 = vshll.u32 683565275, %v3345
      %v3349 = vshrl.u32 2475754826, %v3346
      %v3350 = vor.u32 %v3348, %v3349
      %v3351 = vshll.u32 2475754826, %v3345
      %v3352 = vshrl.u32 2131351028, %v3346
      %v3353 = vor.u32 %v3351, %v3352
      %v3354 = vshll.u32 2131351028, %v3345
      %v3355 = vshrl.u32 2102212464, %v3346
      %v3356 = vor.u32 %v3354, %v3355
      %v3357 = vshll.u32 2102212464, %v3345
      %v3358 = vshrl.u32 920167782, %v3346
      %v3359 = vor.u32 %v3357, %v3358
      %v3360 = vshll.u32 920167782, %v3345
      %v3361 = vshrl.u32 1326507024, %v3346
      %v3362 = vor.u32 %v3360, %v3361
      %vm3363 = vcmp.lt.s32.totalorder %v3344, 1
      %vm3364 = vcmp.lt.s32.totalorder %v3344, 2
      %vm3365 = vcmp.lt.s32.totalorder %v3344, 3
      %vm3366 = vcmp.lt.s32.totalorder %v3344, 4
      %v3367 = vsel %vm3363, %v3347, %v3350
      %v3368 = vsel %vm3366, %v3356, 2102212464
      %v3369 = vsel %vm3365, %v3353, %v3368
      %v3370 = vsel %vm3364, %v3367, %v3369
      %v3371 = vsel %vm3363, %v3350, %v3353
      %v3372 = vsel %vm3366, %v3359, 920167782
      %v3373 = vsel %vm3365, %v3356, %v3372
      %v3374 = vsel %vm3364, %v3371, %v3373
      %v3375 = vsel %vm3363, %v3353, %v3356
      %v3376 = vsel %vm3366, %v3362, 1326507024
      %v3377 = vsel %vm3365, %v3359, %v3376
      %v3378 = vsel %vm3364, %v3375, %v3377
      %v3379 = vshll.u32 %v3339, 8
      %v3380 = vmul.u32.u64.compose %v3379, %v3378
      %v3381 = vextract.low.u32 %v3380
      %v3382 = vextract.high.u32 %v3380
      %v3383 = vmul.u32.u64.compose %v3379, %v3374
      %v3384 = vextract.low.u32 %v3383
      %v3385 = vextract.high.u32 %v3383
      %v3386 = vmul.u32 %v3379, %v3370
      %v3387 = vadd.s32 %v3382, %v3384
      %vm3388 = vc.u32 %v3382, %v3384
      %v3389 = vadd.s32 %v3385, 1
      %v3390 = vsel %vm3388, %v3389, %v3385
      %v3391 = vadd.s32 %v3386, %v3390
      %v3392 = vadd.s32 %v3391, 536870912
      %v3393 = vshrl.u32 %v3392, 30
      %v3394 = vshll.u32 %v3393, 30
      %v3395 = vsub.s32 %v3391, %v3394
      %vm3396 = vcmp.lt.s32.totalorder %v3395, 0
      %v3397 = vsub.s32 0, %v3395
      %v3398 = vsel %vm3396, %v3397, %v3395
      %v3399 = vclz %v3398
      %v3400 = vsub.s32 %v3399, 2
      %vm3401 = vcmp.gt.s32.totalorder 0, %v3400
      %v3402 = vsel %vm3401, 0, %v3400
      %v3403 = vsub.s32 32, %v3402
      %v3404 = vshll.u32 %v3395, %v3402
      %v3405 = vshrl.u32 %v3387, %v3403
      %v3406 = vor.u32 %v3404, %v3405
      %v3407 = vsub.s32 4294967266, %v3402
      %v3408 = vadd.s32 %v3407, 127
      %v3409 = vshll.u32 %v3408, 23
      %v3410 = vor.u32 4788187, %v3409
      %v3411 = vand.u32 2147483647, %v3410
      %v3413 = vcvt.s32.f32 %v3406
      %v3414 = vmul.f32 %v3413, %v3411
      %v3415 = vxor.u32 %v3414, 2147483648
      %v3416 = vsel %vm3333, %v3415, %v3414
      %v3417 = vsub.s32 4, %v3393
      %v3418 = vsel %vm3333, %v3417, %v3393
      %v3419 = vsel %vm3332, %v2713, %v3416
      %v3420 = vsel %vm3332, 0, %v3418
      %v3421 = vcosq.f32.pop %v3419
      %v3422 = vsinq.f32.pop %v3419
      %vm3423 = vweird.f32 %v2713
      %v3424 = vadd.s32 %v3420, 3
      %v3425 = vand.u32 %v3424, 3
      %vm3426 = vcmp.lt.s32.totalorder %v3425, 2
      %vm3427 = vcmp.eq.s32.totalorder %v3425, 0
      %v3428 = vxor.u32 %v3422, 2147483648
      %v3429 = vsel %vm3427, %v3421, %v3428
      %vm3430 = vcmp.eq.s32.totalorder %v3425, 2
      %v3431 = vxor.u32 %v3421, 2147483648
      %v3432 = vsel %vm3430, %v3431, %v3422
      %v3433 = vsel %vm3426, %v3429, %v3432
      %v3434 = vsel %vm3423, nan, %v3433
      %v3435 = vand.u32 2147483647, %v2714
      %vm3436 = vcmp.le.f32.partialorder %v3435, 0.7853982
      %vm3437 = vcmp.lt.s32.totalorder %v2714, 0
      %v3438 = vand.u32 %v2714, 2139095040
      %v3439 = vshrl.u32 %v3438, 23
      %v3440 = vsub.s32 %v3439, 127
      %v3441 = vand.u32 2147483647, %v2714
      %v3442 = vand.u32 %v3441, 8388607
      %v3443 = vor.u32 %v3442, 8388608
      %v3444 = vsub.s32 0, %v3443
      %v3445 = vadd.s32 %v3440, 1
      %vm3446 = vcmp.gt.s32.totalorder %v3445, 0
      %v3447 = vsel %vm3446, %v3445, 0
      %v3448 = vshrl.u32 %v3447, 5
      %v3449 = vand.u32 %v3447, 31
      %v3450 = vsub.s32 32, %v3449
      %v3451 = vshrl.u32 683565275, %v3450
      %v3452 = vshll.u32 683565275, %v3449
      %v3453 = vshrl.u32 2475754826, %v3450
      %v3454 = vor.u32 %v3452, %v3453
      %v3455 = vshll.u32 2475754826, %v3449
      %v3456 = vshrl.u32 2131351028, %v3450
      %v3457 = vor.u32 %v3455, %v3456
      %v3458 = vshll.u32 2131351028, %v3449
      %v3459 = vshrl.u32 2102212464, %v3450
      %v3460 = vor.u32 %v3458, %v3459
      %v3461 = vshll.u32 2102212464, %v3449
      %v3462 = vshrl.u32 920167782, %v3450
      %v3463 = vor.u32 %v3461, %v3462
      %v3464 = vshll.u32 920167782, %v3449
      %v3465 = vshrl.u32 1326507024, %v3450
      %v3466 = vor.u32 %v3464, %v3465
      %vm3467 = vcmp.lt.s32.totalorder %v3448, 1
      %vm3468 = vcmp.lt.s32.totalorder %v3448, 2
      %vm3469 = vcmp.lt.s32.totalorder %v3448, 3
      %vm3470 = vcmp.lt.s32.totalorder %v3448, 4
      %v3471 = vsel %vm3467, %v3451, %v3454
      %v3472 = vsel %vm3470, %v3460, 2102212464
      %v3473 = vsel %vm3469, %v3457, %v3472
      %v3474 = vsel %vm3468, %v3471, %v3473
      %v3475 = vsel %vm3467, %v3454, %v3457
      %v3476 = vsel %vm3470, %v3463, 920167782
      %v3477 = vsel %vm3469, %v3460, %v3476
      %v3478 = vsel %vm3468, %v3475, %v3477
      %v3479 = vsel %vm3467, %v3457, %v3460
      %v3480 = vsel %vm3470, %v3466, 1326507024
      %v3481 = vsel %vm3469, %v3463, %v3480
      %v3482 = vsel %vm3468, %v3479, %v3481
      %v3483 = vshll.u32 %v3443, 8
      %v3484 = vmul.u32.u64.compose %v3483, %v3482
      %v3485 = vextract.low.u32 %v3484
      %v3486 = vextract.high.u32 %v3484
      %v3487 = vmul.u32.u64.compose %v3483, %v3478
      %v3488 = vextract.low.u32 %v3487
      %v3489 = vextract.high.u32 %v3487
      %v3490 = vmul.u32 %v3483, %v3474
      %v3491 = vadd.s32 %v3486, %v3488
      %vm3492 = vc.u32 %v3486, %v3488
      %v3493 = vadd.s32 %v3489, 1
      %v3494 = vsel %vm3492, %v3493, %v3489
      %v3495 = vadd.s32 %v3490, %v3494
      %v3496 = vadd.s32 %v3495, 536870912
      %v3497 = vshrl.u32 %v3496, 30
      %v3498 = vshll.u32 %v3497, 30
      %v3499 = vsub.s32 %v3495, %v3498
      %vm3500 = vcmp.lt.s32.totalorder %v3499, 0
      %v3501 = vsub.s32 0, %v3499
      %v3502 = vsel %vm3500, %v3501, %v3499
      %v3503 = vclz %v3502
      %v3504 = vsub.s32 %v3503, 2
      %vm3505 = vcmp.gt.s32.totalorder 0, %v3504
      %v3506 = vsel %vm3505, 0, %v3504
      %v3507 = vsub.s32 32, %v3506
      %v3508 = vshll.u32 %v3499, %v3506
      %v3509 = vshrl.u32 %v3491, %v3507
      %v3510 = vor.u32 %v3508, %v3509
      %v3511 = vsub.s32 4294967266, %v3506
      %v3512 = vadd.s32 %v3511, 127
      %v3513 = vshll.u32 %v3512, 23
      %v3514 = vor.u32 4788187, %v3513
      %v3515 = vand.u32 2147483647, %v3514
      %v3517 = vcvt.s32.f32 %v3510
      %v3518 = vmul.f32 %v3517, %v3515
      %v3519 = vxor.u32 %v3518, 2147483648
      %v3520 = vsel %vm3437, %v3519, %v3518
      %v3521 = vsub.s32 4, %v3497
      %v3522 = vsel %vm3437, %v3521, %v3497
      %v3523 = vsel %vm3436, %v2714, %v3520
      %v3524 = vsel %vm3436, 0, %v3522
      %v3525 = vcosq.f32.pop %v3523
      %v3526 = vsinq.f32.pop %v3523
      %vm3527 = vweird.f32 %v2714
      %v3528 = vadd.s32 %v3524, 3
      %v3529 = vand.u32 %v3528, 3
      %vm3530 = vcmp.lt.s32.totalorder %v3529, 2
      %vm3531 = vcmp.eq.s32.totalorder %v3529, 0
      %v3532 = vxor.u32 %v3526, 2147483648
      %v3533 = vsel %vm3531, %v3525, %v3532
      %vm3534 = vcmp.eq.s32.totalorder %v3529, 2
      %v3535 = vxor.u32 %v3525, 2147483648
      %v3536 = vsel %vm3534, %v3535, %v3526
      %v3537 = vsel %vm3530, %v3533, %v3536
      %v3538 = vsel %vm3527, nan, %v3537
      %v3539 = vand.u32 2147483647, %v2715
      %vm3540 = vcmp.le.f32.partialorder %v3539, 0.7853982
      %vm3541 = vcmp.lt.s32.totalorder %v2715, 0
      %v3542 = vand.u32 %v2715, 2139095040
      %v3543 = vshrl.u32 %v3542, 23
      %v3544 = vsub.s32 %v3543, 127
      %v3545 = vand.u32 2147483647, %v2715
      %v3546 = vand.u32 %v3545, 8388607
      %v3547 = vor.u32 %v3546, 8388608
      %v3548 = vsub.s32 0, %v3547
      %v3549 = vadd.s32 %v3544, 1
      %vm3550 = vcmp.gt.s32.totalorder %v3549, 0
      %v3551 = vsel %vm3550, %v3549, 0
      %v3552 = vshrl.u32 %v3551, 5
      %v3553 = vand.u32 %v3551, 31
      %v3554 = vsub.s32 32, %v3553
      %v3555 = vshrl.u32 683565275, %v3554
      %v3556 = vshll.u32 683565275, %v3553
      %v3557 = vshrl.u32 2475754826, %v3554
      %v3558 = vor.u32 %v3556, %v3557
      %v3559 = vshll.u32 2475754826, %v3553
      %v3560 = vshrl.u32 2131351028, %v3554
      %v3561 = vor.u32 %v3559, %v3560
      %v3562 = vshll.u32 2131351028, %v3553
      %v3563 = vshrl.u32 2102212464, %v3554
      %v3564 = vor.u32 %v3562, %v3563
      %v3565 = vshll.u32 2102212464, %v3553
      %v3566 = vshrl.u32 920167782, %v3554
      %v3567 = vor.u32 %v3565, %v3566
      %v3568 = vshll.u32 920167782, %v3553
      %v3569 = vshrl.u32 1326507024, %v3554
      %v3570 = vor.u32 %v3568, %v3569
      %vm3571 = vcmp.lt.s32.totalorder %v3552, 1
      %vm3572 = vcmp.lt.s32.totalorder %v3552, 2
      %vm3573 = vcmp.lt.s32.totalorder %v3552, 3
      %vm3574 = vcmp.lt.s32.totalorder %v3552, 4
      %v3575 = vsel %vm3571, %v3555, %v3558
      %v3576 = vsel %vm3574, %v3564, 2102212464
      %v3577 = vsel %vm3573, %v3561, %v3576
      %v3578 = vsel %vm3572, %v3575, %v3577
      %v3579 = vsel %vm3571, %v3558, %v3561
      %v3580 = vsel %vm3574, %v3567, 920167782
      %v3581 = vsel %vm3573, %v3564, %v3580
      %v3582 = vsel %vm3572, %v3579, %v3581
      %v3583 = vsel %vm3571, %v3561, %v3564
      %v3584 = vsel %vm3574, %v3570, 1326507024
      %v3585 = vsel %vm3573, %v3567, %v3584
      %v3586 = vsel %vm3572, %v3583, %v3585
      %v3587 = vshll.u32 %v3547, 8
      %v3588 = vmul.u32.u64.compose %v3587, %v3586
      %v3589 = vextract.low.u32 %v3588
      %v3590 = vextract.high.u32 %v3588
      %v3591 = vmul.u32.u64.compose %v3587, %v3582
      %v3592 = vextract.low.u32 %v3591
      %v3593 = vextract.high.u32 %v3591
      %v3594 = vmul.u32 %v3587, %v3578
      %v3595 = vadd.s32 %v3590, %v3592
      %vm3596 = vc.u32 %v3590, %v3592
      %v3597 = vadd.s32 %v3593, 1
      %v3598 = vsel %vm3596, %v3597, %v3593
      %v3599 = vadd.s32 %v3594, %v3598
      %v3600 = vadd.s32 %v3599, 536870912
      %v3601 = vshrl.u32 %v3600, 30
      %v3602 = vshll.u32 %v3601, 30
      %v3603 = vsub.s32 %v3599, %v3602
      %vm3604 = vcmp.lt.s32.totalorder %v3603, 0
      %v3605 = vsub.s32 0, %v3603
      %v3606 = vsel %vm3604, %v3605, %v3603
      %v3607 = vclz %v3606
      %v3608 = vsub.s32 %v3607, 2
      %vm3609 = vcmp.gt.s32.totalorder 0, %v3608
      %v3610 = vsel %vm3609, 0, %v3608
      %v3611 = vsub.s32 32, %v3610
      %v3612 = vshll.u32 %v3603, %v3610
      %v3613 = vshrl.u32 %v3595, %v3611
      %v3614 = vor.u32 %v3612, %v3613
      %v3615 = vsub.s32 4294967266, %v3610
      %v3616 = vadd.s32 %v3615, 127
      %v3617 = vshll.u32 %v3616, 23
      %v3618 = vor.u32 4788187, %v3617
      %v3619 = vand.u32 2147483647, %v3618
      %v3621 = vcvt.s32.f32 %v3614
      %v3622 = vmul.f32 %v3621, %v3619
      %v3623 = vxor.u32 %v3622, 2147483648
      %v3624 = vsel %vm3541, %v3623, %v3622
      %v3625 = vsub.s32 4, %v3601
      %v3626 = vsel %vm3541, %v3625, %v3601
      %v3627 = vsel %vm3540, %v2715, %v3624
      %v3628 = vsel %vm3540, 0, %v3626
      %v3629 = vcosq.f32.pop %v3627
      %v3630 = vsinq.f32.pop %v3627
      %vm3631 = vweird.f32 %v2715
      %v3632 = vadd.s32 %v3628, 3
      %v3633 = vand.u32 %v3632, 3
      %vm3634 = vcmp.lt.s32.totalorder %v3633, 2
      %vm3635 = vcmp.eq.s32.totalorder %v3633, 0
      %v3636 = vxor.u32 %v3630, 2147483648
      %v3637 = vsel %vm3635, %v3629, %v3636
      %vm3638 = vcmp.eq.s32.totalorder %v3633, 2
      %v3639 = vxor.u32 %v3629, 2147483648
      %v3640 = vsel %vm3638, %v3639, %v3630
      %v3641 = vsel %vm3634, %v3637, %v3640
      %v3642 = vsel %vm3631, nan, %v3641
      %v3643 = vand.u32 2147483647, %v2716
      %vm3644 = vcmp.le.f32.partialorder %v3643, 0.7853982
      %vm3645 = vcmp.lt.s32.totalorder %v2716, 0
      %v3646 = vand.u32 %v2716, 2139095040
      %v3647 = vshrl.u32 %v3646, 23
      %v3648 = vsub.s32 %v3647, 127
      %v3649 = vand.u32 2147483647, %v2716
      %v3650 = vand.u32 %v3649, 8388607
      %v3651 = vor.u32 %v3650, 8388608
      %v3652 = vsub.s32 0, %v3651
      %v3653 = vadd.s32 %v3648, 1
      %vm3654 = vcmp.gt.s32.totalorder %v3653, 0
      %v3655 = vsel %vm3654, %v3653, 0
      %v3656 = vshrl.u32 %v3655, 5
      %v3657 = vand.u32 %v3655, 31
      %v3658 = vsub.s32 32, %v3657
      %v3659 = vshrl.u32 683565275, %v3658
      %v3660 = vshll.u32 683565275, %v3657
      %v3661 = vshrl.u32 2475754826, %v3658
      %v3662 = vor.u32 %v3660, %v3661
      %v3663 = vshll.u32 2475754826, %v3657
      %v3664 = vshrl.u32 2131351028, %v3658
      %v3665 = vor.u32 %v3663, %v3664
      %v3666 = vshll.u32 2131351028, %v3657
      %v3667 = vshrl.u32 2102212464, %v3658
      %v3668 = vor.u32 %v3666, %v3667
      %v3669 = vshll.u32 2102212464, %v3657
      %v3670 = vshrl.u32 920167782, %v3658
      %v3671 = vor.u32 %v3669, %v3670
      %v3672 = vshll.u32 920167782, %v3657
      %v3673 = vshrl.u32 1326507024, %v3658
      %v3674 = vor.u32 %v3672, %v3673
      %vm3675 = vcmp.lt.s32.totalorder %v3656, 1
      %vm3676 = vcmp.lt.s32.totalorder %v3656, 2
      %vm3677 = vcmp.lt.s32.totalorder %v3656, 3
      %vm3678 = vcmp.lt.s32.totalorder %v3656, 4
      %v3679 = vsel %vm3675, %v3659, %v3662
      %v3680 = vsel %vm3678, %v3668, 2102212464
      %v3681 = vsel %vm3677, %v3665, %v3680
      %v3682 = vsel %vm3676, %v3679, %v3681
      %v3683 = vsel %vm3675, %v3662, %v3665
      %v3684 = vsel %vm3678, %v3671, 920167782
      %v3685 = vsel %vm3677, %v3668, %v3684
      %v3686 = vsel %vm3676, %v3683, %v3685
      %v3687 = vsel %vm3675, %v3665, %v3668
      %v3688 = vsel %vm3678, %v3674, 1326507024
      %v3689 = vsel %vm3677, %v3671, %v3688
      %v3690 = vsel %vm3676, %v3687, %v3689
      %v3691 = vshll.u32 %v3651, 8
      %v3692 = vmul.u32.u64.compose %v3691, %v3690
      %v3693 = vextract.low.u32 %v3692
      %v3694 = vextract.high.u32 %v3692
      %v3695 = vmul.u32.u64.compose %v3691, %v3686
      %v3696 = vextract.low.u32 %v3695
      %v3697 = vextract.high.u32 %v3695
      %v3698 = vmul.u32 %v3691, %v3682
      %v3699 = vadd.s32 %v3694, %v3696
      %vm3700 = vc.u32 %v3694, %v3696
      %v3701 = vadd.s32 %v3697, 1
      %v3702 = vsel %vm3700, %v3701, %v3697
      %v3703 = vadd.s32 %v3698, %v3702
      %v3704 = vadd.s32 %v3703, 536870912
      %v3705 = vshrl.u32 %v3704, 30
      %v3706 = vshll.u32 %v3705, 30
      %v3707 = vsub.s32 %v3703, %v3706
      %vm3708 = vcmp.lt.s32.totalorder %v3707, 0
      %v3709 = vsub.s32 0, %v3707
      %v3710 = vsel %vm3708, %v3709, %v3707
      %v3711 = vclz %v3710
      %v3712 = vsub.s32 %v3711, 2
      %vm3713 = vcmp.gt.s32.totalorder 0, %v3712
      %v3714 = vsel %vm3713, 0, %v3712
      %v3715 = vsub.s32 32, %v3714
      %v3716 = vshll.u32 %v3707, %v3714
      %v3717 = vshrl.u32 %v3699, %v3715
      %v3718 = vor.u32 %v3716, %v3717
      %v3719 = vsub.s32 4294967266, %v3714
      %v3720 = vadd.s32 %v3719, 127
      %v3721 = vshll.u32 %v3720, 23
      %v3722 = vor.u32 4788187, %v3721
      %v3723 = vand.u32 2147483647, %v3722
      %v3725 = vcvt.s32.f32 %v3718
      %v3726 = vmul.f32 %v3725, %v3723
      %v3727 = vxor.u32 %v3726, 2147483648
      %v3728 = vsel %vm3645, %v3727, %v3726
      %v3729 = vsub.s32 4, %v3705
      %v3730 = vsel %vm3645, %v3729, %v3705
      %v3731 = vsel %vm3644, %v2716, %v3728
      %v3732 = vsel %vm3644, 0, %v3730
      %v3733 = vcosq.f32.pop %v3731
      %v3734 = vsinq.f32.pop %v3731
      %vm3735 = vweird.f32 %v2716
      %v3736 = vadd.s32 %v3732, 3
      %v3737 = vand.u32 %v3736, 3
      %vm3738 = vcmp.lt.s32.totalorder %v3737, 2
      %vm3739 = vcmp.eq.s32.totalorder %v3737, 0
      %v3740 = vxor.u32 %v3734, 2147483648
      %v3741 = vsel %vm3739, %v3733, %v3740
      %vm3742 = vcmp.eq.s32.totalorder %v3737, 2
      %v3743 = vxor.u32 %v3733, 2147483648
      %v3744 = vsel %vm3742, %v3743, %v3734
      %v3745 = vsel %vm3738, %v3741, %v3744
      %v3746 = vsel %vm3735, nan, %v3745
      %v3747 = vand.u32 2147483647, %v2717
      %vm3748 = vcmp.le.f32.partialorder %v3747, 0.7853982
      %vm3749 = vcmp.lt.s32.totalorder %v2717, 0
      %v3750 = vand.u32 %v2717, 2139095040
      %v3751 = vshrl.u32 %v3750, 23
      %v3752 = vsub.s32 %v3751, 127
      %v3753 = vand.u32 2147483647, %v2717
      %v3754 = vand.u32 %v3753, 8388607
      %v3755 = vor.u32 %v3754, 8388608
      %v3756 = vsub.s32 0, %v3755
      %v3757 = vadd.s32 %v3752, 1
      %vm3758 = vcmp.gt.s32.totalorder %v3757, 0
      %v3759 = vsel %vm3758, %v3757, 0
      %v3760 = vshrl.u32 %v3759, 5
      %v3761 = vand.u32 %v3759, 31
      %v3762 = vsub.s32 32, %v3761
      %v3763 = vshrl.u32 683565275, %v3762
      %v3764 = vshll.u32 683565275, %v3761
      %v3765 = vshrl.u32 2475754826, %v3762
      %v3766 = vor.u32 %v3764, %v3765
      %v3767 = vshll.u32 2475754826, %v3761
      %v3768 = vshrl.u32 2131351028, %v3762
      %v3769 = vor.u32 %v3767, %v3768
      %v3770 = vshll.u32 2131351028, %v3761
      %v3771 = vshrl.u32 2102212464, %v3762
      %v3772 = vor.u32 %v3770, %v3771
      %v3773 = vshll.u32 2102212464, %v3761
      %v3774 = vshrl.u32 920167782, %v3762
      %v3775 = vor.u32 %v3773, %v3774
      %v3776 = vshll.u32 920167782, %v3761
      %v3777 = vshrl.u32 1326507024, %v3762
      %v3778 = vor.u32 %v3776, %v3777
      %vm3779 = vcmp.lt.s32.totalorder %v3760, 1
      %vm3780 = vcmp.lt.s32.totalorder %v3760, 2
      %vm3781 = vcmp.lt.s32.totalorder %v3760, 3
      %vm3782 = vcmp.lt.s32.totalorder %v3760, 4
      %v3783 = vsel %vm3779, %v3763, %v3766
      %v3784 = vsel %vm3782, %v3772, 2102212464
      %v3785 = vsel %vm3781, %v3769, %v3784
      %v3786 = vsel %vm3780, %v3783, %v3785
      %v3787 = vsel %vm3779, %v3766, %v3769
      %v3788 = vsel %vm3782, %v3775, 920167782
      %v3789 = vsel %vm3781, %v3772, %v3788
      %v3790 = vsel %vm3780, %v3787, %v3789
      %v3791 = vsel %vm3779, %v3769, %v3772
      %v3792 = vsel %vm3782, %v3778, 1326507024
      %v3793 = vsel %vm3781, %v3775, %v3792
      %v3794 = vsel %vm3780, %v3791, %v3793
      %v3795 = vshll.u32 %v3755, 8
      %v3796 = vmul.u32.u64.compose %v3795, %v3794
      %v3797 = vextract.low.u32 %v3796
      %v3798 = vextract.high.u32 %v3796
      %v3799 = vmul.u32.u64.compose %v3795, %v3790
      %v3800 = vextract.low.u32 %v3799
      %v3801 = vextract.high.u32 %v3799
      %v3802 = vmul.u32 %v3795, %v3786
      %v3803 = vadd.s32 %v3798, %v3800
      %vm3804 = vc.u32 %v3798, %v3800
      %v3805 = vadd.s32 %v3801, 1
      %v3806 = vsel %vm3804, %v3805, %v3801
      %v3807 = vadd.s32 %v3802, %v3806
      %v3808 = vadd.s32 %v3807, 536870912
      %v3809 = vshrl.u32 %v3808, 30
      %v3810 = vshll.u32 %v3809, 30
      %v3811 = vsub.s32 %v3807, %v3810
      %vm3812 = vcmp.lt.s32.totalorder %v3811, 0
      %v3813 = vsub.s32 0, %v3811
      %v3814 = vsel %vm3812, %v3813, %v3811
      %v3815 = vclz %v3814
      %v3816 = vsub.s32 %v3815, 2
      %vm3817 = vcmp.gt.s32.totalorder 0, %v3816
      %v3818 = vsel %vm3817, 0, %v3816
      %v3819 = vsub.s32 32, %v3818
      %v3820 = vshll.u32 %v3811, %v3818
      %v3821 = vshrl.u32 %v3803, %v3819
      %v3822 = vor.u32 %v3820, %v3821
      %v3823 = vsub.s32 4294967266, %v3818
      %v3824 = vadd.s32 %v3823, 127
      %v3825 = vshll.u32 %v3824, 23
      %v3826 = vor.u32 4788187, %v3825
      %v3827 = vand.u32 2147483647, %v3826
      %v3829 = vcvt.s32.f32 %v3822
      %v3830 = vmul.f32 %v3829, %v3827
      %v3831 = vxor.u32 %v3830, 2147483648
      %v3832 = vsel %vm3749, %v3831, %v3830
      %v3833 = vsub.s32 4, %v3809
      %v3834 = vsel %vm3749, %v3833, %v3809
      %v3835 = vsel %vm3748, %v2717, %v3832
      %v3836 = vsel %vm3748, 0, %v3834
      %v3837 = vcosq.f32.pop %v3835
      %v3838 = vsinq.f32.pop %v3835
      %vm3839 = vweird.f32 %v2717
      %v3840 = vadd.s32 %v3836, 3
      %v3841 = vand.u32 %v3840, 3
      %vm3842 = vcmp.lt.s32.totalorder %v3841, 2
      %vm3843 = vcmp.eq.s32.totalorder %v3841, 0
      %v3844 = vxor.u32 %v3838, 2147483648
      %v3845 = vsel %vm3843, %v3837, %v3844
      %vm3846 = vcmp.eq.s32.totalorder %v3841, 2
      %v3847 = vxor.u32 %v3837, 2147483648
      %v3848 = vsel %vm3846, %v3847, %v3838
      %v3849 = vsel %vm3842, %v3845, %v3848
      %v3850 = vsel %vm3839, nan, %v3849
      %v3851 = vand.u32 2147483647, %v2718
      %vm3852 = vcmp.le.f32.partialorder %v3851, 0.7853982
      %vm3853 = vcmp.lt.s32.totalorder %v2718, 0
      %v3854 = vand.u32 %v2718, 2139095040
      %v3855 = vshrl.u32 %v3854, 23
      %v3856 = vsub.s32 %v3855, 127
      %v3857 = vand.u32 2147483647, %v2718
      %v3858 = vand.u32 %v3857, 8388607
      %v3859 = vor.u32 %v3858, 8388608
      %v3860 = vsub.s32 0, %v3859
      %v3861 = vadd.s32 %v3856, 1
      %vm3862 = vcmp.gt.s32.totalorder %v3861, 0
      %v3863 = vsel %vm3862, %v3861, 0
      %v3864 = vshrl.u32 %v3863, 5
      %v3865 = vand.u32 %v3863, 31
      %v3866 = vsub.s32 32, %v3865
      %v3867 = vshrl.u32 683565275, %v3866
      %v3868 = vshll.u32 683565275, %v3865
      %v3869 = vshrl.u32 2475754826, %v3866
      %v3870 = vor.u32 %v3868, %v3869
      %v3871 = vshll.u32 2475754826, %v3865
      %v3872 = vshrl.u32 2131351028, %v3866
      %v3873 = vor.u32 %v3871, %v3872
      %v3874 = vshll.u32 2131351028, %v3865
      %v3875 = vshrl.u32 2102212464, %v3866
      %v3876 = vor.u32 %v3874, %v3875
      %v3877 = vshll.u32 2102212464, %v3865
      %v3878 = vshrl.u32 920167782, %v3866
      %v3879 = vor.u32 %v3877, %v3878
      %v3880 = vshll.u32 920167782, %v3865
      %v3881 = vshrl.u32 1326507024, %v3866
      %v3882 = vor.u32 %v3880, %v3881
      %vm3883 = vcmp.lt.s32.totalorder %v3864, 1
      %vm3884 = vcmp.lt.s32.totalorder %v3864, 2
      %vm3885 = vcmp.lt.s32.totalorder %v3864, 3
      %vm3886 = vcmp.lt.s32.totalorder %v3864, 4
      %v3887 = vsel %vm3883, %v3867, %v3870
      %v3888 = vsel %vm3886, %v3876, 2102212464
      %v3889 = vsel %vm3885, %v3873, %v3888
      %v3890 = vsel %vm3884, %v3887, %v3889
      %v3891 = vsel %vm3883, %v3870, %v3873
      %v3892 = vsel %vm3886, %v3879, 920167782
      %v3893 = vsel %vm3885, %v3876, %v3892
      %v3894 = vsel %vm3884, %v3891, %v3893
      %v3895 = vsel %vm3883, %v3873, %v3876
      %v3896 = vsel %vm3886, %v3882, 1326507024
      %v3897 = vsel %vm3885, %v3879, %v3896
      %v3898 = vsel %vm3884, %v3895, %v3897
      %v3899 = vshll.u32 %v3859, 8
      %v3900 = vmul.u32.u64.compose %v3899, %v3898
      %v3901 = vextract.low.u32 %v3900
      %v3902 = vextract.high.u32 %v3900
      %v3903 = vmul.u32.u64.compose %v3899, %v3894
      %v3904 = vextract.low.u32 %v3903
      %v3905 = vextract.high.u32 %v3903
      %v3906 = vmul.u32 %v3899, %v3890
      %v3907 = vadd.s32 %v3902, %v3904
      %vm3908 = vc.u32 %v3902, %v3904
      %v3909 = vadd.s32 %v3905, 1
      %v3910 = vsel %vm3908, %v3909, %v3905
      %v3911 = vadd.s32 %v3906, %v3910
      %v3912 = vadd.s32 %v3911, 536870912
      %v3913 = vshrl.u32 %v3912, 30
      %v3914 = vshll.u32 %v3913, 30
      %v3915 = vsub.s32 %v3911, %v3914
      %vm3916 = vcmp.lt.s32.totalorder %v3915, 0
      %v3917 = vsub.s32 0, %v3915
      %v3918 = vsel %vm3916, %v3917, %v3915
      %v3919 = vclz %v3918
      %v3920 = vsub.s32 %v3919, 2
      %vm3921 = vcmp.gt.s32.totalorder 0, %v3920
      %v3922 = vsel %vm3921, 0, %v3920
      %v3923 = vsub.s32 32, %v3922
      %v3924 = vshll.u32 %v3915, %v3922
      %v3925 = vshrl.u32 %v3907, %v3923
      %v3926 = vor.u32 %v3924, %v3925
      %v3927 = vsub.s32 4294967266, %v3922
      %v3928 = vadd.s32 %v3927, 127
      %v3929 = vshll.u32 %v3928, 23
      %v3930 = vor.u32 4788187, %v3929
      %v3931 = vand.u32 2147483647, %v3930
      %v3933 = vcvt.s32.f32 %v3926
      %v3934 = vmul.f32 %v3933, %v3931
      %v3935 = vxor.u32 %v3934, 2147483648
      %v3936 = vsel %vm3853, %v3935, %v3934
      %v3937 = vsub.s32 4, %v3913
      %v3938 = vsel %vm3853, %v3937, %v3913
      %v3939 = vsel %vm3852, %v2718, %v3936
      %v3940 = vsel %vm3852, 0, %v3938
      %v3941 = vcosq.f32.pop %v3939
      %v3942 = vsinq.f32.pop %v3939
      %vm3943 = vweird.f32 %v2718
      %v3944 = vadd.s32 %v3940, 3
      %v3945 = vand.u32 %v3944, 3
      %vm3946 = vcmp.lt.s32.totalorder %v3945, 2
      %vm3947 = vcmp.eq.s32.totalorder %v3945, 0
      %v3948 = vxor.u32 %v3942, 2147483648
      %v3949 = vsel %vm3947, %v3941, %v3948
      %vm3950 = vcmp.eq.s32.totalorder %v3945, 2
      %v3951 = vxor.u32 %v3941, 2147483648
      %v3952 = vsel %vm3950, %v3951, %v3942
      %v3953 = vsel %vm3946, %v3949, %v3952
      %v3954 = vsel %vm3943, nan, %v3953
      %v3955 = vand.u32 2147483647, %v2719
      %vm3956 = vcmp.le.f32.partialorder %v3955, 0.7853982
      %vm3957 = vcmp.lt.s32.totalorder %v2719, 0
      %v3958 = vand.u32 %v2719, 2139095040
      %v3959 = vshrl.u32 %v3958, 23
      %v3960 = vsub.s32 %v3959, 127
      %v3961 = vand.u32 2147483647, %v2719
      %v3962 = vand.u32 %v3961, 8388607
      %v3963 = vor.u32 %v3962, 8388608
      %v3964 = vsub.s32 0, %v3963
      %v3965 = vadd.s32 %v3960, 1
      %vm3966 = vcmp.gt.s32.totalorder %v3965, 0
      %v3967 = vsel %vm3966, %v3965, 0
      %v3968 = vshrl.u32 %v3967, 5
      %v3969 = vand.u32 %v3967, 31
      %v3970 = vsub.s32 32, %v3969
      %v3971 = vshrl.u32 683565275, %v3970
      %v3972 = vshll.u32 683565275, %v3969
      %v3973 = vshrl.u32 2475754826, %v3970
      %v3974 = vor.u32 %v3972, %v3973
      %v3975 = vshll.u32 2475754826, %v3969
      %v3976 = vshrl.u32 2131351028, %v3970
      %v3977 = vor.u32 %v3975, %v3976
      %v3978 = vshll.u32 2131351028, %v3969
      %v3979 = vshrl.u32 2102212464, %v3970
      %v3980 = vor.u32 %v3978, %v3979
      %v3981 = vshll.u32 2102212464, %v3969
      %v3982 = vshrl.u32 920167782, %v3970
      %v3983 = vor.u32 %v3981, %v3982
      %v3984 = vshll.u32 920167782, %v3969
      %v3985 = vshrl.u32 1326507024, %v3970
      %v3986 = vor.u32 %v3984, %v3985
      %vm3987 = vcmp.lt.s32.totalorder %v3968, 1
      %vm3988 = vcmp.lt.s32.totalorder %v3968, 2
      %vm3989 = vcmp.lt.s32.totalorder %v3968, 3
      %vm3990 = vcmp.lt.s32.totalorder %v3968, 4
      %v3991 = vsel %vm3987, %v3971, %v3974
      %v3992 = vsel %vm3990, %v3980, 2102212464
      %v3993 = vsel %vm3989, %v3977, %v3992
      %v3994 = vsel %vm3988, %v3991, %v3993
      %v3995 = vsel %vm3987, %v3974, %v3977
      %v3996 = vsel %vm3990, %v3983, 920167782
      %v3997 = vsel %vm3989, %v3980, %v3996
      %v3998 = vsel %vm3988, %v3995, %v3997
      %v3999 = vsel %vm3987, %v3977, %v3980
      %v4000 = vsel %vm3990, %v3986, 1326507024
      %v4001 = vsel %vm3989, %v3983, %v4000
      %v4002 = vsel %vm3988, %v3999, %v4001
      %v4003 = vshll.u32 %v3963, 8
      %v4004 = vmul.u32.u64.compose %v4003, %v4002
      %v4005 = vextract.low.u32 %v4004
      %v4006 = vextract.high.u32 %v4004
      %v4007 = vmul.u32.u64.compose %v4003, %v3998
      %v4008 = vextract.low.u32 %v4007
      %v4009 = vextract.high.u32 %v4007
      %v4010 = vmul.u32 %v4003, %v3994
      %v4011 = vadd.s32 %v4006, %v4008
      %vm4012 = vc.u32 %v4006, %v4008
      %v4013 = vadd.s32 %v4009, 1
      %v4014 = vsel %vm4012, %v4013, %v4009
      %v4015 = vadd.s32 %v4010, %v4014
      %v4016 = vadd.s32 %v4015, 536870912
      %v4017 = vshrl.u32 %v4016, 30
      %v4018 = vshll.u32 %v4017, 30
      %v4019 = vsub.s32 %v4015, %v4018
      %vm4020 = vcmp.lt.s32.totalorder %v4019, 0
      %v4021 = vsub.s32 0, %v4019
      %v4022 = vsel %vm4020, %v4021, %v4019
      %v4023 = vclz %v4022
      %v4024 = vsub.s32 %v4023, 2
      %vm4025 = vcmp.gt.s32.totalorder 0, %v4024
      %v4026 = vsel %vm4025, 0, %v4024
      %v4027 = vsub.s32 32, %v4026
      %v4028 = vshll.u32 %v4019, %v4026
      %v4029 = vshrl.u32 %v4011, %v4027
      %v4030 = vor.u32 %v4028, %v4029
      %v4031 = vsub.s32 4294967266, %v4026
      %v4032 = vadd.s32 %v4031, 127
      %v4033 = vshll.u32 %v4032, 23
      %v4034 = vor.u32 4788187, %v4033
      %v4035 = vand.u32 2147483647, %v4034
      %v4037 = vcvt.s32.f32 %v4030
      %v4038 = vmul.f32 %v4037, %v4035
      %v4039 = vxor.u32 %v4038, 2147483648
      %v4040 = vsel %vm3957, %v4039, %v4038
      %v4041 = vsub.s32 4, %v4017
      %v4042 = vsel %vm3957, %v4041, %v4017
      %v4043 = vsel %vm3956, %v2719, %v4040
      %v4044 = vsel %vm3956, 0, %v4042
      %v4045 = vcosq.f32.pop %v4043
      %v4046 = vsinq.f32.pop %v4043
      %vm4047 = vweird.f32 %v2719
      %v4048 = vadd.s32 %v4044, 3
      %v4049 = vand.u32 %v4048, 3
      %vm4050 = vcmp.lt.s32.totalorder %v4049, 2
      %vm4051 = vcmp.eq.s32.totalorder %v4049, 0
      %v4052 = vxor.u32 %v4046, 2147483648
      %v4053 = vsel %vm4051, %v4045, %v4052
      %vm4054 = vcmp.eq.s32.totalorder %v4049, 2
      %v4055 = vxor.u32 %v4045, 2147483648
      %v4056 = vsel %vm4054, %v4055, %v4046
      %v4057 = vsel %vm4050, %v4053, %v4056
      %v4058 = vsel %vm4047, nan, %v4057
      %v4059 = vand.u32 2147483647, %v2720
      %vm4060 = vcmp.le.f32.partialorder %v4059, 0.7853982
      %vm4061 = vcmp.lt.s32.totalorder %v2720, 0
      %v4062 = vand.u32 %v2720, 2139095040
      %v4063 = vshrl.u32 %v4062, 23
      %v4064 = vsub.s32 %v4063, 127
      %v4065 = vand.u32 2147483647, %v2720
      %v4066 = vand.u32 %v4065, 8388607
      %v4067 = vor.u32 %v4066, 8388608
      %v4068 = vsub.s32 0, %v4067
      %v4069 = vadd.s32 %v4064, 1
      %vm4070 = vcmp.gt.s32.totalorder %v4069, 0
      %v4071 = vsel %vm4070, %v4069, 0
      %v4072 = vshrl.u32 %v4071, 5
      %v4073 = vand.u32 %v4071, 31
      %v4074 = vsub.s32 32, %v4073
      %v4075 = vshrl.u32 683565275, %v4074
      %v4076 = vshll.u32 683565275, %v4073
      %v4077 = vshrl.u32 2475754826, %v4074
      %v4078 = vor.u32 %v4076, %v4077
      %v4079 = vshll.u32 2475754826, %v4073
      %v4080 = vshrl.u32 2131351028, %v4074
      %v4081 = vor.u32 %v4079, %v4080
      %v4082 = vshll.u32 2131351028, %v4073
      %v4083 = vshrl.u32 2102212464, %v4074
      %v4084 = vor.u32 %v4082, %v4083
      %v4085 = vshll.u32 2102212464, %v4073
      %v4086 = vshrl.u32 920167782, %v4074
      %v4087 = vor.u32 %v4085, %v4086
      %v4088 = vshll.u32 920167782, %v4073
      %v4089 = vshrl.u32 1326507024, %v4074
      %v4090 = vor.u32 %v4088, %v4089
      %vm4091 = vcmp.lt.s32.totalorder %v4072, 1
      %vm4092 = vcmp.lt.s32.totalorder %v4072, 2
      %vm4093 = vcmp.lt.s32.totalorder %v4072, 3
      %vm4094 = vcmp.lt.s32.totalorder %v4072, 4
      %v4095 = vsel %vm4091, %v4075, %v4078
      %v4096 = vsel %vm4094, %v4084, 2102212464
      %v4097 = vsel %vm4093, %v4081, %v4096
      %v4098 = vsel %vm4092, %v4095, %v4097
      %v4099 = vsel %vm4091, %v4078, %v4081
      %v4100 = vsel %vm4094, %v4087, 920167782
      %v4101 = vsel %vm4093, %v4084, %v4100
      %v4102 = vsel %vm4092, %v4099, %v4101
      %v4103 = vsel %vm4091, %v4081, %v4084
      %v4104 = vsel %vm4094, %v4090, 1326507024
      %v4105 = vsel %vm4093, %v4087, %v4104
      %v4106 = vsel %vm4092, %v4103, %v4105
      %v4107 = vshll.u32 %v4067, 8
      %v4108 = vmul.u32.u64.compose %v4107, %v4106
      %v4109 = vextract.low.u32 %v4108
      %v4110 = vextract.high.u32 %v4108
      %v4111 = vmul.u32.u64.compose %v4107, %v4102
      %v4112 = vextract.low.u32 %v4111
      %v4113 = vextract.high.u32 %v4111
      %v4114 = vmul.u32 %v4107, %v4098
      %v4115 = vadd.s32 %v4110, %v4112
      %vm4116 = vc.u32 %v4110, %v4112
      %v4117 = vadd.s32 %v4113, 1
      %v4118 = vsel %vm4116, %v4117, %v4113
      %v4119 = vadd.s32 %v4114, %v4118
      %v4120 = vadd.s32 %v4119, 536870912
      %v4121 = vshrl.u32 %v4120, 30
      %v4122 = vshll.u32 %v4121, 30
      %v4123 = vsub.s32 %v4119, %v4122
      %vm4124 = vcmp.lt.s32.totalorder %v4123, 0
      %v4125 = vsub.s32 0, %v4123
      %v4126 = vsel %vm4124, %v4125, %v4123
      %v4127 = vclz %v4126
      %v4128 = vsub.s32 %v4127, 2
      %vm4129 = vcmp.gt.s32.totalorder 0, %v4128
      %v4130 = vsel %vm4129, 0, %v4128
      %v4131 = vsub.s32 32, %v4130
      %v4132 = vshll.u32 %v4123, %v4130
      %v4133 = vshrl.u32 %v4115, %v4131
      %v4134 = vor.u32 %v4132, %v4133
      %v4135 = vsub.s32 4294967266, %v4130
      %v4136 = vadd.s32 %v4135, 127
      %v4137 = vshll.u32 %v4136, 23
      %v4138 = vor.u32 4788187, %v4137
      %v4139 = vand.u32 2147483647, %v4138
      %v4141 = vcvt.s32.f32 %v4134
      %v4142 = vmul.f32 %v4141, %v4139
      %v4143 = vxor.u32 %v4142, 2147483648
      %v4144 = vsel %vm4061, %v4143, %v4142
      %v4145 = vsub.s32 4, %v4121
      %v4146 = vsel %vm4061, %v4145, %v4121
      %v4147 = vsel %vm4060, %v2720, %v4144
      %v4148 = vsel %vm4060, 0, %v4146
      %v4149 = vcosq.f32.pop %v4147
      %v4150 = vsinq.f32.pop %v4147
      %vm4151 = vweird.f32 %v2720
      %v4152 = vadd.s32 %v4148, 3
      %v4153 = vand.u32 %v4152, 3
      %vm4154 = vcmp.lt.s32.totalorder %v4153, 2
      %vm4155 = vcmp.eq.s32.totalorder %v4153, 0
      %v4156 = vxor.u32 %v4150, 2147483648
      %v4157 = vsel %vm4155, %v4149, %v4156
      %vm4158 = vcmp.eq.s32.totalorder %v4153, 2
      %v4159 = vxor.u32 %v4149, 2147483648
      %v4160 = vsel %vm4158, %v4159, %v4150
      %v4161 = vsel %vm4154, %v4157, %v4160
      %v4162 = vsel %vm4151, nan, %v4161
      %v4163 = vand.u32 2147483647, %v2721
      %vm4164 = vcmp.le.f32.partialorder %v4163, 0.7853982
      %vm4165 = vcmp.lt.s32.totalorder %v2721, 0
      %v4166 = vand.u32 %v2721, 2139095040
      %v4167 = vshrl.u32 %v4166, 23
      %v4168 = vsub.s32 %v4167, 127
      %v4169 = vand.u32 2147483647, %v2721
      %v4170 = vand.u32 %v4169, 8388607
      %v4171 = vor.u32 %v4170, 8388608
      %v4172 = vsub.s32 0, %v4171
      %v4173 = vadd.s32 %v4168, 1
      %vm4174 = vcmp.gt.s32.totalorder %v4173, 0
      %v4175 = vsel %vm4174, %v4173, 0
      %v4176 = vshrl.u32 %v4175, 5
      %v4177 = vand.u32 %v4175, 31
      %v4178 = vsub.s32 32, %v4177
      %v4179 = vshrl.u32 683565275, %v4178
      %v4180 = vshll.u32 683565275, %v4177
      %v4181 = vshrl.u32 2475754826, %v4178
      %v4182 = vor.u32 %v4180, %v4181
      %v4183 = vshll.u32 2475754826, %v4177
      %v4184 = vshrl.u32 2131351028, %v4178
      %v4185 = vor.u32 %v4183, %v4184
      %v4186 = vshll.u32 2131351028, %v4177
      %v4187 = vshrl.u32 2102212464, %v4178
      %v4188 = vor.u32 %v4186, %v4187
      %v4189 = vshll.u32 2102212464, %v4177
      %v4190 = vshrl.u32 920167782, %v4178
      %v4191 = vor.u32 %v4189, %v4190
      %v4192 = vshll.u32 920167782, %v4177
      %v4193 = vshrl.u32 1326507024, %v4178
      %v4194 = vor.u32 %v4192, %v4193
      %vm4195 = vcmp.lt.s32.totalorder %v4176, 1
      %vm4196 = vcmp.lt.s32.totalorder %v4176, 2
      %vm4197 = vcmp.lt.s32.totalorder %v4176, 3
      %vm4198 = vcmp.lt.s32.totalorder %v4176, 4
      %v4199 = vsel %vm4195, %v4179, %v4182
      %v4200 = vsel %vm4198, %v4188, 2102212464
      %v4201 = vsel %vm4197, %v4185, %v4200
      %v4202 = vsel %vm4196, %v4199, %v4201
      %v4203 = vsel %vm4195, %v4182, %v4185
      %v4204 = vsel %vm4198, %v4191, 920167782
      %v4205 = vsel %vm4197, %v4188, %v4204
      %v4206 = vsel %vm4196, %v4203, %v4205
      %v4207 = vsel %vm4195, %v4185, %v4188
      %v4208 = vsel %vm4198, %v4194, 1326507024
      %v4209 = vsel %vm4197, %v4191, %v4208
      %v4210 = vsel %vm4196, %v4207, %v4209
      %v4211 = vshll.u32 %v4171, 8
      %v4212 = vmul.u32.u64.compose %v4211, %v4210
      %v4213 = vextract.low.u32 %v4212
      %v4214 = vextract.high.u32 %v4212
      %v4215 = vmul.u32.u64.compose %v4211, %v4206
      %v4216 = vextract.low.u32 %v4215
      %v4217 = vextract.high.u32 %v4215
      %v4218 = vmul.u32 %v4211, %v4202
      %v4219 = vadd.s32 %v4214, %v4216
      %vm4220 = vc.u32 %v4214, %v4216
      %v4221 = vadd.s32 %v4217, 1
      %v4222 = vsel %vm4220, %v4221, %v4217
      %v4223 = vadd.s32 %v4218, %v4222
      %v4224 = vadd.s32 %v4223, 536870912
      %v4225 = vshrl.u32 %v4224, 30
      %v4226 = vshll.u32 %v4225, 30
      %v4227 = vsub.s32 %v4223, %v4226
      %vm4228 = vcmp.lt.s32.totalorder %v4227, 0
      %v4229 = vsub.s32 0, %v4227
      %v4230 = vsel %vm4228, %v4229, %v4227
      %v4231 = vclz %v4230
      %v4232 = vsub.s32 %v4231, 2
      %vm4233 = vcmp.gt.s32.totalorder 0, %v4232
      %v4234 = vsel %vm4233, 0, %v4232
      %v4235 = vsub.s32 32, %v4234
      %v4236 = vshll.u32 %v4227, %v4234
      %v4237 = vshrl.u32 %v4219, %v4235
      %v4238 = vor.u32 %v4236, %v4237
      %v4239 = vsub.s32 4294967266, %v4234
      %v4240 = vadd.s32 %v4239, 127
      %v4241 = vshll.u32 %v4240, 23
      %v4242 = vor.u32 4788187, %v4241
      %v4243 = vand.u32 2147483647, %v4242
      %v4245 = vcvt.s32.f32 %v4238
      %v4246 = vmul.f32 %v4245, %v4243
      %v4247 = vxor.u32 %v4246, 2147483648
      %v4248 = vsel %vm4165, %v4247, %v4246
      %v4249 = vsub.s32 4, %v4225
      %v4250 = vsel %vm4165, %v4249, %v4225
      %v4251 = vsel %vm4164, %v2721, %v4248
      %v4252 = vsel %vm4164, 0, %v4250
      %v4253 = vcosq.f32.pop %v4251
      %v4254 = vsinq.f32.pop %v4251
      %vm4255 = vweird.f32 %v2721
      %v4256 = vadd.s32 %v4252, 3
      %v4257 = vand.u32 %v4256, 3
      %vm4258 = vcmp.lt.s32.totalorder %v4257, 2
      %vm4259 = vcmp.eq.s32.totalorder %v4257, 0
      %v4260 = vxor.u32 %v4254, 2147483648
      %v4261 = vsel %vm4259, %v4253, %v4260
      %vm4262 = vcmp.eq.s32.totalorder %v4257, 2
      %v4263 = vxor.u32 %v4253, 2147483648
      %v4264 = vsel %vm4262, %v4263, %v4254
      %v4265 = vsel %vm4258, %v4261, %v4264
      %v4266 = vsel %vm4255, nan, %v4265
      %v4267 = vand.u32 2147483647, %v2722
      %vm4268 = vcmp.le.f32.partialorder %v4267, 0.7853982
      %vm4269 = vcmp.lt.s32.totalorder %v2722, 0
      %v4270 = vand.u32 %v2722, 2139095040
      %v4271 = vshrl.u32 %v4270, 23
      %v4272 = vsub.s32 %v4271, 127
      %v4273 = vand.u32 2147483647, %v2722
      %v4274 = vand.u32 %v4273, 8388607
      %v4275 = vor.u32 %v4274, 8388608
      %v4276 = vsub.s32 0, %v4275
      %v4277 = vadd.s32 %v4272, 1
      %vm4278 = vcmp.gt.s32.totalorder %v4277, 0
      %v4279 = vsel %vm4278, %v4277, 0
      %v4280 = vshrl.u32 %v4279, 5
      %v4281 = vand.u32 %v4279, 31
      %v4282 = vsub.s32 32, %v4281
      %v4283 = vshrl.u32 683565275, %v4282
      %v4284 = vshll.u32 683565275, %v4281
      %v4285 = vshrl.u32 2475754826, %v4282
      %v4286 = vor.u32 %v4284, %v4285
      %v4287 = vshll.u32 2475754826, %v4281
      %v4288 = vshrl.u32 2131351028, %v4282
      %v4289 = vor.u32 %v4287, %v4288
      %v4290 = vshll.u32 2131351028, %v4281
      %v4291 = vshrl.u32 2102212464, %v4282
      %v4292 = vor.u32 %v4290, %v4291
      %v4293 = vshll.u32 2102212464, %v4281
      %v4294 = vshrl.u32 920167782, %v4282
      %v4295 = vor.u32 %v4293, %v4294
      %v4296 = vshll.u32 920167782, %v4281
      %v4297 = vshrl.u32 1326507024, %v4282
      %v4298 = vor.u32 %v4296, %v4297
      %vm4299 = vcmp.lt.s32.totalorder %v4280, 1
      %vm4300 = vcmp.lt.s32.totalorder %v4280, 2
      %vm4301 = vcmp.lt.s32.totalorder %v4280, 3
      %vm4302 = vcmp.lt.s32.totalorder %v4280, 4
      %v4303 = vsel %vm4299, %v4283, %v4286
      %v4304 = vsel %vm4302, %v4292, 2102212464
      %v4305 = vsel %vm4301, %v4289, %v4304
      %v4306 = vsel %vm4300, %v4303, %v4305
      %v4307 = vsel %vm4299, %v4286, %v4289
      %v4308 = vsel %vm4302, %v4295, 920167782
      %v4309 = vsel %vm4301, %v4292, %v4308
      %v4310 = vsel %vm4300, %v4307, %v4309
      %v4311 = vsel %vm4299, %v4289, %v4292
      %v4312 = vsel %vm4302, %v4298, 1326507024
      %v4313 = vsel %vm4301, %v4295, %v4312
      %v4314 = vsel %vm4300, %v4311, %v4313
      %v4315 = vshll.u32 %v4275, 8
      %v4316 = vmul.u32.u64.compose %v4315, %v4314
      %v4317 = vextract.low.u32 %v4316
      %v4318 = vextract.high.u32 %v4316
      %v4319 = vmul.u32.u64.compose %v4315, %v4310
      %v4320 = vextract.low.u32 %v4319
      %v4321 = vextract.high.u32 %v4319
      %v4322 = vmul.u32 %v4315, %v4306
      %v4323 = vadd.s32 %v4318, %v4320
      %vm4324 = vc.u32 %v4318, %v4320
      %v4325 = vadd.s32 %v4321, 1
      %v4326 = vsel %vm4324, %v4325, %v4321
      %v4327 = vadd.s32 %v4322, %v4326
      %v4328 = vadd.s32 %v4327, 536870912
      %v4329 = vshrl.u32 %v4328, 30
      %v4330 = vshll.u32 %v4329, 30
      %v4331 = vsub.s32 %v4327, %v4330
      %vm4332 = vcmp.lt.s32.totalorder %v4331, 0
      %v4333 = vsub.s32 0, %v4331
      %v4334 = vsel %vm4332, %v4333, %v4331
      %v4335 = vclz %v4334
      %v4336 = vsub.s32 %v4335, 2
      %vm4337 = vcmp.gt.s32.totalorder 0, %v4336
      %v4338 = vsel %vm4337, 0, %v4336
      %v4339 = vsub.s32 32, %v4338
      %v4340 = vshll.u32 %v4331, %v4338
      %v4341 = vshrl.u32 %v4323, %v4339
      %v4342 = vor.u32 %v4340, %v4341
      %v4343 = vsub.s32 4294967266, %v4338
      %v4344 = vadd.s32 %v4343, 127
      %v4345 = vshll.u32 %v4344, 23
      %v4346 = vor.u32 4788187, %v4345
      %v4347 = vand.u32 2147483647, %v4346
      %v4349 = vcvt.s32.f32 %v4342
      %v4350 = vmul.f32 %v4349, %v4347
      %v4351 = vxor.u32 %v4350, 2147483648
      %v4352 = vsel %vm4269, %v4351, %v4350
      %v4353 = vsub.s32 4, %v4329
      %v4354 = vsel %vm4269, %v4353, %v4329
      %v4355 = vsel %vm4268, %v2722, %v4352
      %v4356 = vsel %vm4268, 0, %v4354
      %v4357 = vcosq.f32.pop %v4355
      %v4358 = vsinq.f32.pop %v4355
      %vm4359 = vweird.f32 %v2722
      %v4360 = vadd.s32 %v4356, 3
      %v4361 = vand.u32 %v4360, 3
      %vm4362 = vcmp.lt.s32.totalorder %v4361, 2
      %vm4363 = vcmp.eq.s32.totalorder %v4361, 0
      %v4364 = vxor.u32 %v4358, 2147483648
      %v4365 = vsel %vm4363, %v4357, %v4364
      %vm4366 = vcmp.eq.s32.totalorder %v4361, 2
      %v4367 = vxor.u32 %v4357, 2147483648
      %v4368 = vsel %vm4366, %v4367, %v4358
      %v4369 = vsel %vm4362, %v4365, %v4368
      %v4370 = vsel %vm4359, nan, %v4369
      %v4371 = vand.u32 2147483647, %v2723
      %vm4372 = vcmp.le.f32.partialorder %v4371, 0.7853982
      %vm4373 = vcmp.lt.s32.totalorder %v2723, 0
      %v4374 = vand.u32 %v2723, 2139095040
      %v4375 = vshrl.u32 %v4374, 23
      %v4376 = vsub.s32 %v4375, 127
      %v4377 = vand.u32 2147483647, %v2723
      %v4378 = vand.u32 %v4377, 8388607
      %v4379 = vor.u32 %v4378, 8388608
      %v4380 = vsub.s32 0, %v4379
      %v4381 = vadd.s32 %v4376, 1
      %vm4382 = vcmp.gt.s32.totalorder %v4381, 0
      %v4383 = vsel %vm4382, %v4381, 0
      %v4384 = vshrl.u32 %v4383, 5
      %v4385 = vand.u32 %v4383, 31
      %v4386 = vsub.s32 32, %v4385
      %v4387 = vshrl.u32 683565275, %v4386
      %v4388 = vshll.u32 683565275, %v4385
      %v4389 = vshrl.u32 2475754826, %v4386
      %v4390 = vor.u32 %v4388, %v4389
      %v4391 = vshll.u32 2475754826, %v4385
      %v4392 = vshrl.u32 2131351028, %v4386
      %v4393 = vor.u32 %v4391, %v4392
      %v4394 = vshll.u32 2131351028, %v4385
      %v4395 = vshrl.u32 2102212464, %v4386
      %v4396 = vor.u32 %v4394, %v4395
      %v4397 = vshll.u32 2102212464, %v4385
      %v4398 = vshrl.u32 920167782, %v4386
      %v4399 = vor.u32 %v4397, %v4398
      %v4400 = vshll.u32 920167782, %v4385
      %v4401 = vshrl.u32 1326507024, %v4386
      %v4402 = vor.u32 %v4400, %v4401
      %vm4403 = vcmp.lt.s32.totalorder %v4384, 1
      %vm4404 = vcmp.lt.s32.totalorder %v4384, 2
      %vm4405 = vcmp.lt.s32.totalorder %v4384, 3
      %vm4406 = vcmp.lt.s32.totalorder %v4384, 4
      %v4407 = vsel %vm4403, %v4387, %v4390
      %v4408 = vsel %vm4406, %v4396, 2102212464
      %v4409 = vsel %vm4405, %v4393, %v4408
      %v4410 = vsel %vm4404, %v4407, %v4409
      %v4411 = vsel %vm4403, %v4390, %v4393
      %v4412 = vsel %vm4406, %v4399, 920167782
      %v4413 = vsel %vm4405, %v4396, %v4412
      %v4414 = vsel %vm4404, %v4411, %v4413
      %v4415 = vsel %vm4403, %v4393, %v4396
      %v4416 = vsel %vm4406, %v4402, 1326507024
      %v4417 = vsel %vm4405, %v4399, %v4416
      %v4418 = vsel %vm4404, %v4415, %v4417
      %v4419 = vshll.u32 %v4379, 8
      %v4420 = vmul.u32.u64.compose %v4419, %v4418
      %v4421 = vextract.low.u32 %v4420
      %v4422 = vextract.high.u32 %v4420
      %v4423 = vmul.u32.u64.compose %v4419, %v4414
      %v4424 = vextract.low.u32 %v4423
      %v4425 = vextract.high.u32 %v4423
      %v4426 = vmul.u32 %v4419, %v4410
      %v4427 = vadd.s32 %v4422, %v4424
      %vm4428 = vc.u32 %v4422, %v4424
      %v4429 = vadd.s32 %v4425, 1
      %v4430 = vsel %vm4428, %v4429, %v4425
      %v4431 = vadd.s32 %v4426, %v4430
      %v4432 = vadd.s32 %v4431, 536870912
      %v4433 = vshrl.u32 %v4432, 30
      %v4434 = vshll.u32 %v4433, 30
      %v4435 = vsub.s32 %v4431, %v4434
      %vm4436 = vcmp.lt.s32.totalorder %v4435, 0
      %v4437 = vsub.s32 0, %v4435
      %v4438 = vsel %vm4436, %v4437, %v4435
      %v4439 = vclz %v4438
      %v4440 = vsub.s32 %v4439, 2
      %vm4441 = vcmp.gt.s32.totalorder 0, %v4440
      %v4442 = vsel %vm4441, 0, %v4440
      %v4443 = vsub.s32 32, %v4442
      %v4444 = vshll.u32 %v4435, %v4442
      %v4445 = vshrl.u32 %v4427, %v4443
      %v4446 = vor.u32 %v4444, %v4445
      %v4447 = vsub.s32 4294967266, %v4442
      %v4448 = vadd.s32 %v4447, 127
      %v4449 = vshll.u32 %v4448, 23
      %v4450 = vor.u32 4788187, %v4449
      %v4451 = vand.u32 2147483647, %v4450
      %v4453 = vcvt.s32.f32 %v4446
      %v4454 = vmul.f32 %v4453, %v4451
      %v4455 = vxor.u32 %v4454, 2147483648
      %v4456 = vsel %vm4373, %v4455, %v4454
      %v4457 = vsub.s32 4, %v4433
      %v4458 = vsel %vm4373, %v4457, %v4433
      %v4459 = vsel %vm4372, %v2723, %v4456
      %v4460 = vsel %vm4372, 0, %v4458
      %v4461 = vcosq.f32.pop %v4459
      %v4462 = vsinq.f32.pop %v4459
      %vm4463 = vweird.f32 %v2723
      %v4464 = vadd.s32 %v4460, 3
      %v4465 = vand.u32 %v4464, 3
      %vm4466 = vcmp.lt.s32.totalorder %v4465, 2
      %vm4467 = vcmp.eq.s32.totalorder %v4465, 0
      %v4468 = vxor.u32 %v4462, 2147483648
      %v4469 = vsel %vm4467, %v4461, %v4468
      %vm4470 = vcmp.eq.s32.totalorder %v4465, 2
      %v4471 = vxor.u32 %v4461, 2147483648
      %v4472 = vsel %vm4470, %v4471, %v4462
      %v4473 = vsel %vm4466, %v4469, %v4472
      %v4474 = vsel %vm4463, nan, %v4473
      %v4475 = vand.u32 2147483647, %v2724
      %vm4476 = vcmp.le.f32.partialorder %v4475, 0.7853982
      %vm4477 = vcmp.lt.s32.totalorder %v2724, 0
      %v4478 = vand.u32 %v2724, 2139095040
      %v4479 = vshrl.u32 %v4478, 23
      %v4480 = vsub.s32 %v4479, 127
      %v4481 = vand.u32 2147483647, %v2724
      %v4482 = vand.u32 %v4481, 8388607
      %v4483 = vor.u32 %v4482, 8388608
      %v4484 = vsub.s32 0, %v4483
      %v4485 = vadd.s32 %v4480, 1
      %vm4486 = vcmp.gt.s32.totalorder %v4485, 0
      %v4487 = vsel %vm4486, %v4485, 0
      %v4488 = vshrl.u32 %v4487, 5
      %v4489 = vand.u32 %v4487, 31
      %v4490 = vsub.s32 32, %v4489
      %v4491 = vshrl.u32 683565275, %v4490
      %v4492 = vshll.u32 683565275, %v4489
      %v4493 = vshrl.u32 2475754826, %v4490
      %v4494 = vor.u32 %v4492, %v4493
      %v4495 = vshll.u32 2475754826, %v4489
      %v4496 = vshrl.u32 2131351028, %v4490
      %v4497 = vor.u32 %v4495, %v4496
      %v4498 = vshll.u32 2131351028, %v4489
      %v4499 = vshrl.u32 2102212464, %v4490
      %v4500 = vor.u32 %v4498, %v4499
      %v4501 = vshll.u32 2102212464, %v4489
      %v4502 = vshrl.u32 920167782, %v4490
      %v4503 = vor.u32 %v4501, %v4502
      %v4504 = vshll.u32 920167782, %v4489
      %v4505 = vshrl.u32 1326507024, %v4490
      %v4506 = vor.u32 %v4504, %v4505
      %vm4507 = vcmp.lt.s32.totalorder %v4488, 1
      %vm4508 = vcmp.lt.s32.totalorder %v4488, 2
      %vm4509 = vcmp.lt.s32.totalorder %v4488, 3
      %vm4510 = vcmp.lt.s32.totalorder %v4488, 4
      %v4511 = vsel %vm4507, %v4491, %v4494
      %v4512 = vsel %vm4510, %v4500, 2102212464
      %v4513 = vsel %vm4509, %v4497, %v4512
      %v4514 = vsel %vm4508, %v4511, %v4513
      %v4515 = vsel %vm4507, %v4494, %v4497
      %v4516 = vsel %vm4510, %v4503, 920167782
      %v4517 = vsel %vm4509, %v4500, %v4516
      %v4518 = vsel %vm4508, %v4515, %v4517
      %v4519 = vsel %vm4507, %v4497, %v4500
      %v4520 = vsel %vm4510, %v4506, 1326507024
      %v4521 = vsel %vm4509, %v4503, %v4520
      %v4522 = vsel %vm4508, %v4519, %v4521
      %v4523 = vshll.u32 %v4483, 8
      %v4524 = vmul.u32.u64.compose %v4523, %v4522
      %v4525 = vextract.low.u32 %v4524
      %v4526 = vextract.high.u32 %v4524
      %v4527 = vmul.u32.u64.compose %v4523, %v4518
      %v4528 = vextract.low.u32 %v4527
      %v4529 = vextract.high.u32 %v4527
      %v4530 = vmul.u32 %v4523, %v4514
      %v4531 = vadd.s32 %v4526, %v4528
      %vm4532 = vc.u32 %v4526, %v4528
      %v4533 = vadd.s32 %v4529, 1
      %v4534 = vsel %vm4532, %v4533, %v4529
      %v4535 = vadd.s32 %v4530, %v4534
      %v4536 = vadd.s32 %v4535, 536870912
      %v4537 = vshrl.u32 %v4536, 30
      %v4538 = vshll.u32 %v4537, 30
      %v4539 = vsub.s32 %v4535, %v4538
      %vm4540 = vcmp.lt.s32.totalorder %v4539, 0
      %v4541 = vsub.s32 0, %v4539
      %v4542 = vsel %vm4540, %v4541, %v4539
      %v4543 = vclz %v4542
      %v4544 = vsub.s32 %v4543, 2
      %vm4545 = vcmp.gt.s32.totalorder 0, %v4544
      %v4546 = vsel %vm4545, 0, %v4544
      %v4547 = vsub.s32 32, %v4546
      %v4548 = vshll.u32 %v4539, %v4546
      %v4549 = vshrl.u32 %v4531, %v4547
      %v4550 = vor.u32 %v4548, %v4549
      %v4551 = vsub.s32 4294967266, %v4546
      %v4552 = vadd.s32 %v4551, 127
      %v4553 = vshll.u32 %v4552, 23
      %v4554 = vor.u32 4788187, %v4553
      %v4555 = vand.u32 2147483647, %v4554
      %v4557 = vcvt.s32.f32 %v4550
      %v4558 = vmul.f32 %v4557, %v4555
      %v4559 = vxor.u32 %v4558, 2147483648
      %v4560 = vsel %vm4477, %v4559, %v4558
      %v4561 = vsub.s32 4, %v4537
      %v4562 = vsel %vm4477, %v4561, %v4537
      %v4563 = vsel %vm4476, %v2724, %v4560
      %v4564 = vsel %vm4476, 0, %v4562
      %v4565 = vcosq.f32.pop %v4563
      %v4566 = vsinq.f32.pop %v4563
      %vm4567 = vweird.f32 %v2724
      %v4568 = vadd.s32 %v4564, 3
      %v4569 = vand.u32 %v4568, 3
      %vm4570 = vcmp.lt.s32.totalorder %v4569, 2
      %vm4571 = vcmp.eq.s32.totalorder %v4569, 0
      %v4572 = vxor.u32 %v4566, 2147483648
      %v4573 = vsel %vm4571, %v4565, %v4572
      %vm4574 = vcmp.eq.s32.totalorder %v4569, 2
      %v4575 = vxor.u32 %v4565, 2147483648
      %v4576 = vsel %vm4574, %v4575, %v4566
      %v4577 = vsel %vm4570, %v4573, %v4576
      %v4578 = vsel %vm4567, nan, %v4577
      %v4579 = vand.u32 2147483647, %v2725
      %vm4580 = vcmp.le.f32.partialorder %v4579, 0.7853982
      %vm4581 = vcmp.lt.s32.totalorder %v2725, 0
      %v4582 = vand.u32 %v2725, 2139095040
      %v4583 = vshrl.u32 %v4582, 23
      %v4584 = vsub.s32 %v4583, 127
      %v4585 = vand.u32 2147483647, %v2725
      %v4586 = vand.u32 %v4585, 8388607
      %v4587 = vor.u32 %v4586, 8388608
      %v4588 = vsub.s32 0, %v4587
      %v4589 = vadd.s32 %v4584, 1
      %vm4590 = vcmp.gt.s32.totalorder %v4589, 0
      %v4591 = vsel %vm4590, %v4589, 0
      %v4592 = vshrl.u32 %v4591, 5
      %v4593 = vand.u32 %v4591, 31
      %v4594 = vsub.s32 32, %v4593
      %v4595 = vshrl.u32 683565275, %v4594
      %v4596 = vshll.u32 683565275, %v4593
      %v4597 = vshrl.u32 2475754826, %v4594
      %v4598 = vor.u32 %v4596, %v4597
      %v4599 = vshll.u32 2475754826, %v4593
      %v4600 = vshrl.u32 2131351028, %v4594
      %v4601 = vor.u32 %v4599, %v4600
      %v4602 = vshll.u32 2131351028, %v4593
      %v4603 = vshrl.u32 2102212464, %v4594
      %v4604 = vor.u32 %v4602, %v4603
      %v4605 = vshll.u32 2102212464, %v4593
      %v4606 = vshrl.u32 920167782, %v4594
      %v4607 = vor.u32 %v4605, %v4606
      %v4608 = vshll.u32 920167782, %v4593
      %v4609 = vshrl.u32 1326507024, %v4594
      %v4610 = vor.u32 %v4608, %v4609
      %vm4611 = vcmp.lt.s32.totalorder %v4592, 1
      %vm4612 = vcmp.lt.s32.totalorder %v4592, 2
      %vm4613 = vcmp.lt.s32.totalorder %v4592, 3
      %vm4614 = vcmp.lt.s32.totalorder %v4592, 4
      %v4615 = vsel %vm4611, %v4595, %v4598
      %v4616 = vsel %vm4614, %v4604, 2102212464
      %v4617 = vsel %vm4613, %v4601, %v4616
      %v4618 = vsel %vm4612, %v4615, %v4617
      %v4619 = vsel %vm4611, %v4598, %v4601
      %v4620 = vsel %vm4614, %v4607, 920167782
      %v4621 = vsel %vm4613, %v4604, %v4620
      %v4622 = vsel %vm4612, %v4619, %v4621
      %v4623 = vsel %vm4611, %v4601, %v4604
      %v4624 = vsel %vm4614, %v4610, 1326507024
      %v4625 = vsel %vm4613, %v4607, %v4624
      %v4626 = vsel %vm4612, %v4623, %v4625
      %v4627 = vshll.u32 %v4587, 8
      %v4628 = vmul.u32.u64.compose %v4627, %v4626
      %v4629 = vextract.low.u32 %v4628
      %v4630 = vextract.high.u32 %v4628
      %v4631 = vmul.u32.u64.compose %v4627, %v4622
      %v4632 = vextract.low.u32 %v4631
      %v4633 = vextract.high.u32 %v4631
      %v4634 = vmul.u32 %v4627, %v4618
      %v4635 = vadd.s32 %v4630, %v4632
      %vm4636 = vc.u32 %v4630, %v4632
      %v4637 = vadd.s32 %v4633, 1
      %v4638 = vsel %vm4636, %v4637, %v4633
      %v4639 = vadd.s32 %v4634, %v4638
      %v4640 = vadd.s32 %v4639, 536870912
      %v4641 = vshrl.u32 %v4640, 30
      %v4642 = vshll.u32 %v4641, 30
      %v4643 = vsub.s32 %v4639, %v4642
      %vm4644 = vcmp.lt.s32.totalorder %v4643, 0
      %v4645 = vsub.s32 0, %v4643
      %v4646 = vsel %vm4644, %v4645, %v4643
      %v4647 = vclz %v4646
      %v4648 = vsub.s32 %v4647, 2
      %vm4649 = vcmp.gt.s32.totalorder 0, %v4648
      %v4650 = vsel %vm4649, 0, %v4648
      %v4651 = vsub.s32 32, %v4650
      %v4652 = vshll.u32 %v4643, %v4650
      %v4653 = vshrl.u32 %v4635, %v4651
      %v4654 = vor.u32 %v4652, %v4653
      %v4655 = vsub.s32 4294967266, %v4650
      %v4656 = vadd.s32 %v4655, 127
      %v4657 = vshll.u32 %v4656, 23
      %v4658 = vor.u32 4788187, %v4657
      %v4659 = vand.u32 2147483647, %v4658
      %v4661 = vcvt.s32.f32 %v4654
      %v4662 = vmul.f32 %v4661, %v4659
      %v4663 = vxor.u32 %v4662, 2147483648
      %v4664 = vsel %vm4581, %v4663, %v4662
      %v4665 = vsub.s32 4, %v4641
      %v4666 = vsel %vm4581, %v4665, %v4641
      %v4667 = vsel %vm4580, %v2725, %v4664
      %v4668 = vsel %vm4580, 0, %v4666
      %v4669 = vcosq.f32.pop %v4667
      %v4670 = vsinq.f32.pop %v4667
      %vm4671 = vweird.f32 %v2725
      %v4672 = vadd.s32 %v4668, 3
      %v4673 = vand.u32 %v4672, 3
      %vm4674 = vcmp.lt.s32.totalorder %v4673, 2
      %vm4675 = vcmp.eq.s32.totalorder %v4673, 0
      %v4676 = vxor.u32 %v4670, 2147483648
      %v4677 = vsel %vm4675, %v4669, %v4676
      %vm4678 = vcmp.eq.s32.totalorder %v4673, 2
      %v4679 = vxor.u32 %v4669, 2147483648
      %v4680 = vsel %vm4678, %v4679, %v4670
      %v4681 = vsel %vm4674, %v4677, %v4680
      %v4682 = vsel %vm4671, nan, %v4681
      %v4683 = vpack.c.bf16 %v3226, %v3122
      %v4684 = vpack.c.bf16 %v3434, %v3330
      %v4685 = vpack.c.bf16 %v3642, %v3538
      %v4686 = vpack.c.bf16 %v3850, %v3746
      %v4687 = vpack.c.bf16 %v4058, %v3954
      %v4688 = vpack.c.bf16 %v4266, %v4162
      %v4689 = vpack.c.bf16 %v4474, %v4370
      %v4690 = vpack.c.bf16 %v4682, %v4578
      %v4691 = vld [vmem:[%s10] sm:$0xf]
      %v4692 = vld [vmem:[%s10 + $0x4] sm:$0xf]
      %v4693 = vld [vmem:[%s10 + $0x8] sm:$0xf]
      %v4694 = vld [vmem:[%s10 + $0xc] sm:$0xf]
      %v4699 = vunpack.c.l.b16 %v4691
      %v4700 = vunpack.c.l.b16 %v4692
      %v4701 = vunpack.c.l.b16 %v4693
      %v4702 = vunpack.c.l.b16 %v4694
      %v4703 = vpack.c.b16 %v4700, %v4699
      %v4704 = vpack.c.b16 %v4702, %v4701
      %vm4707 = vcmask 261120
      %v4709 = vsel %vm4707, %v4683, 0
      %v4712 = vsel %vm4707, %v4684, 0
      %v4715 = vsel %vm4707, %v4685, 0
      %v4718 = vsel %vm4707, %v4686, 0
      %v4721 = vsel %vm4707, %v4687, 0
      %v4724 = vsel %vm4707, %v4688, 0
      %v4727 = vsel %vm4707, %v4689, 0
      %v4730 = vsel %vm4707, %v4690, 0
      %4732 = vmatprep.subr.bf16.mxu0 0
      %4733 = vmatpush1.bf16.msra.mxu0 %v4703
      %4734 = vmatprep.subr.bf16.mxu0 0
      %4735 = vmatpush1.bf16.msra.mxu0 %v4704
      %4736 = vmatprep.subr.bf16.mxu0 0
      %4737 = vmatpush1.bf16.msra.mxu0 0
      %4738 = vmatprep.subr.bf16.mxu0 0
      %4739 = vmatpush1.bf16.msra.mxu0 0
      %4740 = vmatprep.subr.bf16.mxu0 0
      %4741 = vmatpush1.bf16.msra.mxu0 0
      %4742 = vmatprep.subr.bf16.mxu0 0
      %4743 = vmatpush1.bf16.msra.mxu0 0
      %4744 = vmatprep.subr.bf16.mxu0 0
      %4745 = vmatpush1.bf16.msra.mxu0 0
      %4746 = vmatprep.subr.bf16.mxu0 0
      %4747 = vmatpush1.bf16.msra.mxu0 0
      %4748 = vmatprep.subr.bf16.mxu0 0
      %4749 = vmatpush1.bf16.msra.mxu0 0
      %4750 = vmatprep.subr.bf16.mxu0 0
      %4751 = vmatpush1.bf16.msra.mxu0 0
      %4752 = vmatprep.subr.bf16.mxu0 0
      %4753 = vmatpush1.bf16.msra.mxu0 0
      %4754 = vmatprep.subr.bf16.mxu0 0
      %4755 = vmatpush1.bf16.msra.mxu0 0
      %4756 = vmatprep.subr.bf16.mxu0 0
      %4757 = vmatpush1.bf16.msra.mxu0 0
      %4758 = vmatprep.subr.bf16.mxu0 0
      %4759 = vmatpush1.bf16.msra.mxu0 0
      %4760 = vmatprep.subr.bf16.mxu0 0
      %4761 = vmatpush1.bf16.msra.mxu0 0
      %4762 = vmatprep.subr.bf16.mxu0 0
      %4763 = vmatpush1.bf16.msra.mxu0 0
      %4764 = vmatprep.mubr.bf16.mxu0 0
      %4765 = vmatmul.mubr.bf16.gmra.mrb[0].mxu0 %v4709
      %v4766 = vpop.f32.mrb[0].mxu0
      %v4767 = vadd.f32 0.0, %v4766
      %v4768 = vpop.f32.mrb[0].mxu0
      %v4769 = vpop.f32.mrb[0].mxu0
      %v4770 = vadd.f32 0.0, %v4769
      %v4771 = vpop.f32.mrb[0].mxu0
      %4772 = vmatprep.mubr.bf16.mxu0 0
      %4773 = vmatmul.mubr.bf16.gmra.mrb[0].mxu0 %v4712
      %v4774 = vpop.f32.mrb[0].mxu0
      %v4775 = vadd.f32 0.0, %v4774
      %v4776 = vpop.f32.mrb[0].mxu0
      %v4777 = vpop.f32.mrb[0].mxu0
      %v4778 = vadd.f32 0.0, %v4777
      %v4779 = vpop.f32.mrb[0].mxu0
      %4780 = vmatprep.mubr.bf16.mxu0 0
      %4781 = vmatmul.mubr.bf16.gmra.mrb[0].mxu0 %v4715
      %v4782 = vpop.f32.mrb[0].mxu0
      %v4783 = vadd.f32 0.0, %v4782
      %v4784 = vpop.f32.mrb[0].mxu0
      %v4785 = vpop.f32.mrb[0].mxu0
      %v4786 = vadd.f32 0.0, %v4785
      %v4787 = vpop.f32.mrb[0].mxu0
      %4788 = vmatprep.mubr.bf16.mxu0 0
      %4789 = vmatmul.mubr.bf16.gmra.mrb[0].mxu0 %v4718
      %v4790 = vpop.f32.mrb[0].mxu0
      %v4791 = vadd.f32 0.0, %v4790
      %v4792 = vpop.f32.mrb[0].mxu0
      %v4793 = vpop.f32.mrb[0].mxu0
      %v4794 = vadd.f32 0.0, %v4793
      %v4795 = vpop.f32.mrb[0].mxu0
      %4796 = vmatprep.mubr.bf16.mxu0 0
      %4797 = vmatmul.mubr.bf16.gmra.mrb[0].mxu0 %v4721
      %v4798 = vpop.f32.mrb[0].mxu0
      %v4799 = vadd.f32 0.0, %v4798
      %v4800 = vpop.f32.mrb[0].mxu0
      %v4801 = vpop.f32.mrb[0].mxu0
      %v4802 = vadd.f32 0.0, %v4801
      %v4803 = vpop.f32.mrb[0].mxu0
      %4804 = vmatprep.mubr.bf16.mxu0 0
      %4805 = vmatmul.mubr.bf16.gmra.mrb[0].mxu0 %v4724
      %v4806 = vpop.f32.mrb[0].mxu0
      %v4807 = vadd.f32 0.0, %v4806
      %v4808 = vpop.f32.mrb[0].mxu0
      %v4809 = vpop.f32.mrb[0].mxu0
      %v4810 = vadd.f32 0.0, %v4809
      %v4811 = vpop.f32.mrb[0].mxu0
      %4812 = vmatprep.mubr.bf16.mxu0 0
      %4813 = vmatmul.mubr.bf16.gmra.mrb[0].mxu0 %v4727
      %v4814 = vpop.f32.mrb[0].mxu0
      %v4815 = vadd.f32 0.0, %v4814
      %v4816 = vpop.f32.mrb[0].mxu0
      %v4817 = vpop.f32.mrb[0].mxu0
      %v4818 = vadd.f32 0.0, %v4817
      %v4819 = vpop.f32.mrb[0].mxu0
      %4820 = vmatprep.mubr.bf16.mxu0 0
      %4821 = vmatmul.mubr.bf16.gmra.mrb[0].mxu0 %v4730
      %v4822 = vpop.f32.mrb[0].mxu0
      %v4823 = vadd.f32 0.0, %v4822
      %v4824 = vpop.f32.mrb[0].mxu0
      %v4825 = vpop.f32.mrb[0].mxu0
      %v4826 = vadd.f32 0.0, %v4825
      %v4827 = vpop.f32.mrb[0].mxu0
      %4828 = vdwg.mxu0
      %v4829 = vadd.f32 %v3003, %v4767
      %v4830 = vadd.f32 %v3004, %v4770
      %v4831 = vadd.f32 %v3005, %v4775
      %v4832 = vadd.f32 %v3006, %v4778
      %v4833 = vadd.f32 %v3007, %v4783
      %v4834 = vadd.f32 %v3008, %v4786
      %v4835 = vadd.f32 %v3009, %v4791
      %v4836 = vadd.f32 %v3010, %v4794
      %v4837 = vadd.f32 %v3011, %v4799
      %v4838 = vadd.f32 %v3012, %v4802
      %v4839 = vadd.f32 %v3013, %v4807
      %v4840 = vadd.f32 %v3014, %v4810
      %v4841 = vadd.f32 %v3015, %v4815
      %v4842 = vadd.f32 %v3016, %v4818
      %v4843 = vadd.f32 %v3017, %v4823
      %v4844 = vadd.f32 %v3018, %v4826
      %v4845 = vand.u32 2147483647, %v2710
      %vm4846 = vcmp.le.f32.partialorder %v4845, 0.7853982
      %vm4847 = vcmp.lt.s32.totalorder %v2710, 0
      %v4848 = vand.u32 %v2710, 2139095040
      %v4849 = vshrl.u32 %v4848, 23
      %v4850 = vsub.s32 %v4849, 127
      %v4851 = vand.u32 2147483647, %v2710
      %v4852 = vand.u32 %v4851, 8388607
      %v4853 = vor.u32 %v4852, 8388608
      %v4854 = vsub.s32 0, %v4853
      %v4855 = vadd.s32 %v4850, 1
      %vm4856 = vcmp.gt.s32.totalorder %v4855, 0
      %v4857 = vsel %vm4856, %v4855, 0
      %v4858 = vshrl.u32 %v4857, 5
      %v4859 = vand.u32 %v4857, 31
      %v4860 = vsub.s32 32, %v4859
      %v4861 = vshrl.u32 683565275, %v4860
      %v4862 = vshll.u32 683565275, %v4859
      %v4863 = vshrl.u32 2475754826, %v4860
      %v4864 = vor.u32 %v4862, %v4863
      %v4865 = vshll.u32 2475754826, %v4859
      %v4866 = vshrl.u32 2131351028, %v4860
      %v4867 = vor.u32 %v4865, %v4866
      %v4868 = vshll.u32 2131351028, %v4859
      %v4869 = vshrl.u32 2102212464, %v4860
      %v4870 = vor.u32 %v4868, %v4869
      %v4871 = vshll.u32 2102212464, %v4859
      %v4872 = vshrl.u32 920167782, %v4860
      %v4873 = vor.u32 %v4871, %v4872
      %v4874 = vshll.u32 920167782, %v4859
      %v4875 = vshrl.u32 1326507024, %v4860
      %v4876 = vor.u32 %v4874, %v4875
      %vm4877 = vcmp.lt.s32.totalorder %v4858, 1
      %vm4878 = vcmp.lt.s32.totalorder %v4858, 2
      %vm4879 = vcmp.lt.s32.totalorder %v4858, 3
      %vm4880 = vcmp.lt.s32.totalorder %v4858, 4
      %v4881 = vsel %vm4877, %v4861, %v4864
      %v4882 = vsel %vm4880, %v4870, 2102212464
      %v4883 = vsel %vm4879, %v4867, %v4882
      %v4884 = vsel %vm4878, %v4881, %v4883
      %v4885 = vsel %vm4877, %v4864, %v4867
      %v4886 = vsel %vm4880, %v4873, 920167782
      %v4887 = vsel %vm4879, %v4870, %v4886
      %v4888 = vsel %vm4878, %v4885, %v4887
      %v4889 = vsel %vm4877, %v4867, %v4870
      %v4890 = vsel %vm4880, %v4876, 1326507024
      %v4891 = vsel %vm4879, %v4873, %v4890
      %v4892 = vsel %vm4878, %v4889, %v4891
      %v4893 = vshll.u32 %v4853, 8
      %v4894 = vmul.u32.u64.compose %v4893, %v4892
      %v4895 = vextract.low.u32 %v4894
      %v4896 = vextract.high.u32 %v4894
      %v4897 = vmul.u32.u64.compose %v4893, %v4888
      %v4898 = vextract.low.u32 %v4897
      %v4899 = vextract.high.u32 %v4897
      %v4900 = vmul.u32 %v4893, %v4884
      %v4901 = vadd.s32 %v4896, %v4898
      %vm4902 = vc.u32 %v4896, %v4898
      %v4903 = vadd.s32 %v4899, 1
      %v4904 = vsel %vm4902, %v4903, %v4899
      %v4905 = vadd.s32 %v4900, %v4904
      %v4906 = vadd.s32 %v4905, 536870912
      %v4907 = vshrl.u32 %v4906, 30
      %v4908 = vshll.u32 %v4907, 30
      %v4909 = vsub.s32 %v4905, %v4908
      %vm4910 = vcmp.lt.s32.totalorder %v4909, 0
      %v4911 = vsub.s32 0, %v4909
      %v4912 = vsel %vm4910, %v4911, %v4909
      %v4913 = vclz %v4912
      %v4914 = vsub.s32 %v4913, 2
      %vm4915 = vcmp.gt.s32.totalorder 0, %v4914
      %v4916 = vsel %vm4915, 0, %v4914
      %v4917 = vsub.s32 32, %v4916
      %v4918 = vshll.u32 %v4909, %v4916
      %v4919 = vshrl.u32 %v4901, %v4917
      %v4920 = vor.u32 %v4918, %v4919
      %v4921 = vsub.s32 4294967266, %v4916
      %v4922 = vadd.s32 %v4921, 127
      %v4923 = vshll.u32 %v4922, 23
      %v4924 = vor.u32 4788187, %v4923
      %v4925 = vand.u32 2147483647, %v4924
      %v4927 = vcvt.s32.f32 %v4920
      %v4928 = vmul.f32 %v4927, %v4925
      %v4929 = vxor.u32 %v4928, 2147483648
      %v4930 = vsel %vm4847, %v4929, %v4928
      %v4931 = vsub.s32 4, %v4907
      %v4932 = vsel %vm4847, %v4931, %v4907
      %v4933 = vsel %vm4846, %v2710, %v4930
      %v4934 = vsel %vm4846, 0, %v4932
      %v4935 = vcosq.f32.pop %v4933
      %v4936 = vsinq.f32.pop %v4933
      %vm4937 = vweird.f32 %v2710
      %v4938 = vand.u32 %v4934, 3
      %vm4939 = vcmp.lt.s32.totalorder %v4938, 2
      %vm4940 = vcmp.eq.s32.totalorder %v4938, 0
      %v4941 = vxor.u32 %v4936, 2147483648
      %v4942 = vsel %vm4940, %v4935, %v4941
      %vm4943 = vcmp.eq.s32.totalorder %v4938, 2
      %v4944 = vxor.u32 %v4935, 2147483648
      %v4945 = vsel %vm4943, %v4944, %v4936
      %v4946 = vsel %vm4939, %v4942, %v4945
      %v4947 = vsel %vm4937, nan, %v4946
      %v4948 = vand.u32 2147483647, %v2711
      %vm4949 = vcmp.le.f32.partialorder %v4948, 0.7853982
      %vm4950 = vcmp.lt.s32.totalorder %v2711, 0
      %v4951 = vand.u32 %v2711, 2139095040
      %v4952 = vshrl.u32 %v4951, 23
      %v4953 = vsub.s32 %v4952, 127
      %v4954 = vand.u32 2147483647, %v2711
      %v4955 = vand.u32 %v4954, 8388607
      %v4956 = vor.u32 %v4955, 8388608
      %v4957 = vsub.s32 0, %v4956
      %v4958 = vadd.s32 %v4953, 1
      %vm4959 = vcmp.gt.s32.totalorder %v4958, 0
      %v4960 = vsel %vm4959, %v4958, 0
      %v4961 = vshrl.u32 %v4960, 5
      %v4962 = vand.u32 %v4960, 31
      %v4963 = vsub.s32 32, %v4962
      %v4964 = vshrl.u32 683565275, %v4963
      %v4965 = vshll.u32 683565275, %v4962
      %v4966 = vshrl.u32 2475754826, %v4963
      %v4967 = vor.u32 %v4965, %v4966
      %v4968 = vshll.u32 2475754826, %v4962
      %v4969 = vshrl.u32 2131351028, %v4963
      %v4970 = vor.u32 %v4968, %v4969
      %v4971 = vshll.u32 2131351028, %v4962
      %v4972 = vshrl.u32 2102212464, %v4963
      %v4973 = vor.u32 %v4971, %v4972
      %v4974 = vshll.u32 2102212464, %v4962
      %v4975 = vshrl.u32 920167782, %v4963
      %v4976 = vor.u32 %v4974, %v4975
      %v4977 = vshll.u32 920167782, %v4962
      %v4978 = vshrl.u32 1326507024, %v4963
      %v4979 = vor.u32 %v4977, %v4978
      %vm4980 = vcmp.lt.s32.totalorder %v4961, 1
      %vm4981 = vcmp.lt.s32.totalorder %v4961, 2
      %vm4982 = vcmp.lt.s32.totalorder %v4961, 3
      %vm4983 = vcmp.lt.s32.totalorder %v4961, 4
      %v4984 = vsel %vm4980, %v4964, %v4967
      %v4985 = vsel %vm4983, %v4973, 2102212464
      %v4986 = vsel %vm4982, %v4970, %v4985
      %v4987 = vsel %vm4981, %v4984, %v4986
      %v4988 = vsel %vm4980, %v4967, %v4970
      %v4989 = vsel %vm4983, %v4976, 920167782
      %v4990 = vsel %vm4982, %v4973, %v4989
      %v4991 = vsel %vm4981, %v4988, %v4990
      %v4992 = vsel %vm4980, %v4970, %v4973
      %v4993 = vsel %vm4983, %v4979, 1326507024
      %v4994 = vsel %vm4982, %v4976, %v4993
      %v4995 = vsel %vm4981, %v4992, %v4994
      %v4996 = vshll.u32 %v4956, 8
      %v4997 = vmul.u32.u64.compose %v4996, %v4995
      %v4998 = vextract.low.u32 %v4997
      %v4999 = vextract.high.u32 %v4997
      %v5000 = vmul.u32.u64.compose %v4996, %v4991
      %v5001 = vextract.low.u32 %v5000
      %v5002 = vextract.high.u32 %v5000
      %v5003 = vmul.u32 %v4996, %v4987
      %v5004 = vadd.s32 %v4999, %v5001
      %vm5005 = vc.u32 %v4999, %v5001
      %v5006 = vadd.s32 %v5002, 1
      %v5007 = vsel %vm5005, %v5006, %v5002
      %v5008 = vadd.s32 %v5003, %v5007
      %v5009 = vadd.s32 %v5008, 536870912
      %v5010 = vshrl.u32 %v5009, 30
      %v5011 = vshll.u32 %v5010, 30
      %v5012 = vsub.s32 %v5008, %v5011
      %vm5013 = vcmp.lt.s32.totalorder %v5012, 0
      %v5014 = vsub.s32 0, %v5012
      %v5015 = vsel %vm5013, %v5014, %v5012
      %v5016 = vclz %v5015
      %v5017 = vsub.s32 %v5016, 2
      %vm5018 = vcmp.gt.s32.totalorder 0, %v5017
      %v5019 = vsel %vm5018, 0, %v5017
      %v5020 = vsub.s32 32, %v5019
      %v5021 = vshll.u32 %v5012, %v5019
      %v5022 = vshrl.u32 %v5004, %v5020
      %v5023 = vor.u32 %v5021, %v5022
      %v5024 = vsub.s32 4294967266, %v5019
      %v5025 = vadd.s32 %v5024, 127
      %v5026 = vshll.u32 %v5025, 23
      %v5027 = vor.u32 4788187, %v5026
      %v5028 = vand.u32 2147483647, %v5027
      %v5030 = vcvt.s32.f32 %v5023
      %v5031 = vmul.f32 %v5030, %v5028
      %v5032 = vxor.u32 %v5031, 2147483648
      %v5033 = vsel %vm4950, %v5032, %v5031
      %v5034 = vsub.s32 4, %v5010
      %v5035 = vsel %vm4950, %v5034, %v5010
      %v5036 = vsel %vm4949, %v2711, %v5033
      %v5037 = vsel %vm4949, 0, %v5035
      %v5038 = vcosq.f32.pop %v5036
      %v5039 = vsinq.f32.pop %v5036
      %vm5040 = vweird.f32 %v2711
      %v5041 = vand.u32 %v5037, 3
      %vm5042 = vcmp.lt.s32.totalorder %v5041, 2
      %vm5043 = vcmp.eq.s32.totalorder %v5041, 0
      %v5044 = vxor.u32 %v5039, 2147483648
      %v5045 = vsel %vm5043, %v5038, %v5044
      %vm5046 = vcmp.eq.s32.totalorder %v5041, 2
      %v5047 = vxor.u32 %v5038, 2147483648
      %v5048 = vsel %vm5046, %v5047, %v5039
      %v5049 = vsel %vm5042, %v5045, %v5048
      %v5050 = vsel %vm5040, nan, %v5049
      %v5051 = vand.u32 2147483647, %v2712
      %vm5052 = vcmp.le.f32.partialorder %v5051, 0.7853982
      %vm5053 = vcmp.lt.s32.totalorder %v2712, 0
      %v5054 = vand.u32 %v2712, 2139095040
      %v5055 = vshrl.u32 %v5054, 23
      %v5056 = vsub.s32 %v5055, 127
      %v5057 = vand.u32 2147483647, %v2712
      %v5058 = vand.u32 %v5057, 8388607
      %v5059 = vor.u32 %v5058, 8388608
      %v5060 = vsub.s32 0, %v5059
      %v5061 = vadd.s32 %v5056, 1
      %vm5062 = vcmp.gt.s32.totalorder %v5061, 0
      %v5063 = vsel %vm5062, %v5061, 0
      %v5064 = vshrl.u32 %v5063, 5
      %v5065 = vand.u32 %v5063, 31
      %v5066 = vsub.s32 32, %v5065
      %v5067 = vshrl.u32 683565275, %v5066
      %v5068 = vshll.u32 683565275, %v5065
      %v5069 = vshrl.u32 2475754826, %v5066
      %v5070 = vor.u32 %v5068, %v5069
      %v5071 = vshll.u32 2475754826, %v5065
      %v5072 = vshrl.u32 2131351028, %v5066
      %v5073 = vor.u32 %v5071, %v5072
      %v5074 = vshll.u32 2131351028, %v5065
      %v5075 = vshrl.u32 2102212464, %v5066
      %v5076 = vor.u32 %v5074, %v5075
      %v5077 = vshll.u32 2102212464, %v5065
      %v5078 = vshrl.u32 920167782, %v5066
      %v5079 = vor.u32 %v5077, %v5078
      %v5080 = vshll.u32 920167782, %v5065
      %v5081 = vshrl.u32 1326507024, %v5066
      %v5082 = vor.u32 %v5080, %v5081
      %vm5083 = vcmp.lt.s32.totalorder %v5064, 1
      %vm5084 = vcmp.lt.s32.totalorder %v5064, 2
      %vm5085 = vcmp.lt.s32.totalorder %v5064, 3
      %vm5086 = vcmp.lt.s32.totalorder %v5064, 4
      %v5087 = vsel %vm5083, %v5067, %v5070
      %v5088 = vsel %vm5086, %v5076, 2102212464
      %v5089 = vsel %vm5085, %v5073, %v5088
      %v5090 = vsel %vm5084, %v5087, %v5089
      %v5091 = vsel %vm5083, %v5070, %v5073
      %v5092 = vsel %vm5086, %v5079, 920167782
      %v5093 = vsel %vm5085, %v5076, %v5092
      %v5094 = vsel %vm5084, %v5091, %v5093
      %v5095 = vsel %vm5083, %v5073, %v5076
      %v5096 = vsel %vm5086, %v5082, 1326507024
      %v5097 = vsel %vm5085, %v5079, %v5096
      %v5098 = vsel %vm5084, %v5095, %v5097
      %v5099 = vshll.u32 %v5059, 8
      %v5100 = vmul.u32.u64.compose %v5099, %v5098
      %v5101 = vextract.low.u32 %v5100
      %v5102 = vextract.high.u32 %v5100
      %v5103 = vmul.u32.u64.compose %v5099, %v5094
      %v5104 = vextract.low.u32 %v5103
      %v5105 = vextract.high.u32 %v5103
      %v5106 = vmul.u32 %v5099, %v5090
      %v5107 = vadd.s32 %v5102, %v5104
      %vm5108 = vc.u32 %v5102, %v5104
      %v5109 = vadd.s32 %v5105, 1
      %v5110 = vsel %vm5108, %v5109, %v5105
      %v5111 = vadd.s32 %v5106, %v5110
      %v5112 = vadd.s32 %v5111, 536870912
      %v5113 = vshrl.u32 %v5112, 30
      %v5114 = vshll.u32 %v5113, 30
      %v5115 = vsub.s32 %v5111, %v5114
      %vm5116 = vcmp.lt.s32.totalorder %v5115, 0
      %v5117 = vsub.s32 0, %v5115
      %v5118 = vsel %vm5116, %v5117, %v5115
      %v5119 = vclz %v5118
      %v5120 = vsub.s32 %v5119, 2
      %vm5121 = vcmp.gt.s32.totalorder 0, %v5120
      %v5122 = vsel %vm5121, 0, %v5120
      %v5123 = vsub.s32 32, %v5122
      %v5124 = vshll.u32 %v5115, %v5122
      %v5125 = vshrl.u32 %v5107, %v5123
      %v5126 = vor.u32 %v5124, %v5125
      %v5127 = vsub.s32 4294967266, %v5122
      %v5128 = vadd.s32 %v5127, 127
      %v5129 = vshll.u32 %v5128, 23
      %v5130 = vor.u32 4788187, %v5129
      %v5131 = vand.u32 2147483647, %v5130
      %v5133 = vcvt.s32.f32 %v5126
      %v5134 = vmul.f32 %v5133, %v5131
      %v5135 = vxor.u32 %v5134, 2147483648
      %v5136 = vsel %vm5053, %v5135, %v5134
      %v5137 = vsub.s32 4, %v5113
      %v5138 = vsel %vm5053, %v5137, %v5113
      %v5139 = vsel %vm5052, %v2712, %v5136
      %v5140 = vsel %vm5052, 0, %v5138
      %v5141 = vcosq.f32.pop %v5139
      %v5142 = vsinq.f32.pop %v5139
      %vm5143 = vweird.f32 %v2712
      %v5144 = vand.u32 %v5140, 3
      %vm5145 = vcmp.lt.s32.totalorder %v5144, 2
      %vm5146 = vcmp.eq.s32.totalorder %v5144, 0
      %v5147 = vxor.u32 %v5142, 2147483648
      %v5148 = vsel %vm5146, %v5141, %v5147
      %vm5149 = vcmp.eq.s32.totalorder %v5144, 2
      %v5150 = vxor.u32 %v5141, 2147483648
      %v5151 = vsel %vm5149, %v5150, %v5142
      %v5152 = vsel %vm5145, %v5148, %v5151
      %v5153 = vsel %vm5143, nan, %v5152
      %v5154 = vand.u32 2147483647, %v2713
      %vm5155 = vcmp.le.f32.partialorder %v5154, 0.7853982
      %vm5156 = vcmp.lt.s32.totalorder %v2713, 0
      %v5157 = vand.u32 %v2713, 2139095040
      %v5158 = vshrl.u32 %v5157, 23
      %v5159 = vsub.s32 %v5158, 127
      %v5160 = vand.u32 2147483647, %v2713
      %v5161 = vand.u32 %v5160, 8388607
      %v5162 = vor.u32 %v5161, 8388608
      %v5163 = vsub.s32 0, %v5162
      %v5164 = vadd.s32 %v5159, 1
      %vm5165 = vcmp.gt.s32.totalorder %v5164, 0
      %v5166 = vsel %vm5165, %v5164, 0
      %v5167 = vshrl.u32 %v5166, 5
      %v5168 = vand.u32 %v5166, 31
      %v5169 = vsub.s32 32, %v5168
      %v5170 = vshrl.u32 683565275, %v5169
      %v5171 = vshll.u32 683565275, %v5168
      %v5172 = vshrl.u32 2475754826, %v5169
      %v5173 = vor.u32 %v5171, %v5172
      %v5174 = vshll.u32 2475754826, %v5168
      %v5175 = vshrl.u32 2131351028, %v5169
      %v5176 = vor.u32 %v5174, %v5175
      %v5177 = vshll.u32 2131351028, %v5168
      %v5178 = vshrl.u32 2102212464, %v5169
      %v5179 = vor.u32 %v5177, %v5178
      %v5180 = vshll.u32 2102212464, %v5168
      %v5181 = vshrl.u32 920167782, %v5169
      %v5182 = vor.u32 %v5180, %v5181
      %v5183 = vshll.u32 920167782, %v5168
      %v5184 = vshrl.u32 1326507024, %v5169
      %v5185 = vor.u32 %v5183, %v5184
      %vm5186 = vcmp.lt.s32.totalorder %v5167, 1
      %vm5187 = vcmp.lt.s32.totalorder %v5167, 2
      %vm5188 = vcmp.lt.s32.totalorder %v5167, 3
      %vm5189 = vcmp.lt.s32.totalorder %v5167, 4
      %v5190 = vsel %vm5186, %v5170, %v5173
      %v5191 = vsel %vm5189, %v5179, 2102212464
      %v5192 = vsel %vm5188, %v5176, %v5191
      %v5193 = vsel %vm5187, %v5190, %v5192
      %v5194 = vsel %vm5186, %v5173, %v5176
      %v5195 = vsel %vm5189, %v5182, 920167782
      %v5196 = vsel %vm5188, %v5179, %v5195
      %v5197 = vsel %vm5187, %v5194, %v5196
      %v5198 = vsel %vm5186, %v5176, %v5179
      %v5199 = vsel %vm5189, %v5185, 1326507024
      %v5200 = vsel %vm5188, %v5182, %v5199
      %v5201 = vsel %vm5187, %v5198, %v5200
      %v5202 = vshll.u32 %v5162, 8
      %v5203 = vmul.u32.u64.compose %v5202, %v5201
      %v5204 = vextract.low.u32 %v5203
      %v5205 = vextract.high.u32 %v5203
      %v5206 = vmul.u32.u64.compose %v5202, %v5197
      %v5207 = vextract.low.u32 %v5206
      %v5208 = vextract.high.u32 %v5206
      %v5209 = vmul.u32 %v5202, %v5193
      %v5210 = vadd.s32 %v5205, %v5207
      %vm5211 = vc.u32 %v5205, %v5207
      %v5212 = vadd.s32 %v5208, 1
      %v5213 = vsel %vm5211, %v5212, %v5208
      %v5214 = vadd.s32 %v5209, %v5213
      %v5215 = vadd.s32 %v5214, 536870912
      %v5216 = vshrl.u32 %v5215, 30
      %v5217 = vshll.u32 %v5216, 30
      %v5218 = vsub.s32 %v5214, %v5217
      %vm5219 = vcmp.lt.s32.totalorder %v5218, 0
      %v5220 = vsub.s32 0, %v5218
      %v5221 = vsel %vm5219, %v5220, %v5218
      %v5222 = vclz %v5221
      %v5223 = vsub.s32 %v5222, 2
      %vm5224 = vcmp.gt.s32.totalorder 0, %v5223
      %v5225 = vsel %vm5224, 0, %v5223
      %v5226 = vsub.s32 32, %v5225
      %v5227 = vshll.u32 %v5218, %v5225
      %v5228 = vshrl.u32 %v5210, %v5226
      %v5229 = vor.u32 %v5227, %v5228
      %v5230 = vsub.s32 4294967266, %v5225
      %v5231 = vadd.s32 %v5230, 127
      %v5232 = vshll.u32 %v5231, 23
      %v5233 = vor.u32 4788187, %v5232
      %v5234 = vand.u32 2147483647, %v5233
      %v5236 = vcvt.s32.f32 %v5229
      %v5237 = vmul.f32 %v5236, %v5234
      %v5238 = vxor.u32 %v5237, 2147483648
      %v5239 = vsel %vm5156, %v5238, %v5237
      %v5240 = vsub.s32 4, %v5216
      %v5241 = vsel %vm5156, %v5240, %v5216
      %v5242 = vsel %vm5155, %v2713, %v5239
      %v5243 = vsel %vm5155, 0, %v5241
      %v5244 = vcosq.f32.pop %v5242
      %v5245 = vsinq.f32.pop %v5242
      %vm5246 = vweird.f32 %v2713
      %v5247 = vand.u32 %v5243, 3
      %vm5248 = vcmp.lt.s32.totalorder %v5247, 2
      %vm5249 = vcmp.eq.s32.totalorder %v5247, 0
      %v5250 = vxor.u32 %v5245, 2147483648
      %v5251 = vsel %vm5249, %v5244, %v5250
      %vm5252 = vcmp.eq.s32.totalorder %v5247, 2
      %v5253 = vxor.u32 %v5244, 2147483648
      %v5254 = vsel %vm5252, %v5253, %v5245
      %v5255 = vsel %vm5248, %v5251, %v5254
      %v5256 = vsel %vm5246, nan, %v5255
      %v5257 = vand.u32 2147483647, %v2714
      %vm5258 = vcmp.le.f32.partialorder %v5257, 0.7853982
      %vm5259 = vcmp.lt.s32.totalorder %v2714, 0
      %v5260 = vand.u32 %v2714, 2139095040
      %v5261 = vshrl.u32 %v5260, 23
      %v5262 = vsub.s32 %v5261, 127
      %v5263 = vand.u32 2147483647, %v2714
      %v5264 = vand.u32 %v5263, 8388607
      %v5265 = vor.u32 %v5264, 8388608
      %v5266 = vsub.s32 0, %v5265
      %v5267 = vadd.s32 %v5262, 1
      %vm5268 = vcmp.gt.s32.totalorder %v5267, 0
      %v5269 = vsel %vm5268, %v5267, 0
      %v5270 = vshrl.u32 %v5269, 5
      %v5271 = vand.u32 %v5269, 31
      %v5272 = vsub.s32 32, %v5271
      %v5273 = vshrl.u32 683565275, %v5272
      %v5274 = vshll.u32 683565275, %v5271
      %v5275 = vshrl.u32 2475754826, %v5272
      %v5276 = vor.u32 %v5274, %v5275
      %v5277 = vshll.u32 2475754826, %v5271
      %v5278 = vshrl.u32 2131351028, %v5272
      %v5279 = vor.u32 %v5277, %v5278
      %v5280 = vshll.u32 2131351028, %v5271
      %v5281 = vshrl.u32 2102212464, %v5272
      %v5282 = vor.u32 %v5280, %v5281
      %v5283 = vshll.u32 2102212464, %v5271
      %v5284 = vshrl.u32 920167782, %v5272
      %v5285 = vor.u32 %v5283, %v5284
      %v5286 = vshll.u32 920167782, %v5271
      %v5287 = vshrl.u32 1326507024, %v5272
      %v5288 = vor.u32 %v5286, %v5287
      %vm5289 = vcmp.lt.s32.totalorder %v5270, 1
      %vm5290 = vcmp.lt.s32.totalorder %v5270, 2
      %vm5291 = vcmp.lt.s32.totalorder %v5270, 3
      %vm5292 = vcmp.lt.s32.totalorder %v5270, 4
      %v5293 = vsel %vm5289, %v5273, %v5276
      %v5294 = vsel %vm5292, %v5282, 2102212464
      %v5295 = vsel %vm5291, %v5279, %v5294
      %v5296 = vsel %vm5290, %v5293, %v5295
      %v5297 = vsel %vm5289, %v5276, %v5279
      %v5298 = vsel %vm5292, %v5285, 920167782
      %v5299 = vsel %vm5291, %v5282, %v5298
      %v5300 = vsel %vm5290, %v5297, %v5299
      %v5301 = vsel %vm5289, %v5279, %v5282
      %v5302 = vsel %vm5292, %v5288, 1326507024
      %v5303 = vsel %vm5291, %v5285, %v5302
      %v5304 = vsel %vm5290, %v5301, %v5303
      %v5305 = vshll.u32 %v5265, 8
      %v5306 = vmul.u32.u64.compose %v5305, %v5304
      %v5307 = vextract.low.u32 %v5306
      %v5308 = vextract.high.u32 %v5306
      %v5309 = vmul.u32.u64.compose %v5305, %v5300
      %v5310 = vextract.low.u32 %v5309
      %v5311 = vextract.high.u32 %v5309
      %v5312 = vmul.u32 %v5305, %v5296
      %v5313 = vadd.s32 %v5308, %v5310
      %vm5314 = vc.u32 %v5308, %v5310
      %v5315 = vadd.s32 %v5311, 1
      %v5316 = vsel %vm5314, %v5315, %v5311
      %v5317 = vadd.s32 %v5312, %v5316
      %v5318 = vadd.s32 %v5317, 536870912
      %v5319 = vshrl.u32 %v5318, 30
      %v5320 = vshll.u32 %v5319, 30
      %v5321 = vsub.s32 %v5317, %v5320
      %vm5322 = vcmp.lt.s32.totalorder %v5321, 0
      %v5323 = vsub.s32 0, %v5321
      %v5324 = vsel %vm5322, %v5323, %v5321
      %v5325 = vclz %v5324
      %v5326 = vsub.s32 %v5325, 2
      %vm5327 = vcmp.gt.s32.totalorder 0, %v5326
      %v5328 = vsel %vm5327, 0, %v5326
      %v5329 = vsub.s32 32, %v5328
      %v5330 = vshll.u32 %v5321, %v5328
      %v5331 = vshrl.u32 %v5313, %v5329
      %v5332 = vor.u32 %v5330, %v5331
      %v5333 = vsub.s32 4294967266, %v5328
      %v5334 = vadd.s32 %v5333, 127
      %v5335 = vshll.u32 %v5334, 23
      %v5336 = vor.u32 4788187, %v5335
      %v5337 = vand.u32 2147483647, %v5336
      %v5339 = vcvt.s32.f32 %v5332
      %v5340 = vmul.f32 %v5339, %v5337
      %v5341 = vxor.u32 %v5340, 2147483648
      %v5342 = vsel %vm5259, %v5341, %v5340
      %v5343 = vsub.s32 4, %v5319
      %v5344 = vsel %vm5259, %v5343, %v5319
      %v5345 = vsel %vm5258, %v2714, %v5342
      %v5346 = vsel %vm5258, 0, %v5344
      %v5347 = vcosq.f32.pop %v5345
      %v5348 = vsinq.f32.pop %v5345
      %vm5349 = vweird.f32 %v2714
      %v5350 = vand.u32 %v5346, 3
      %vm5351 = vcmp.lt.s32.totalorder %v5350, 2
      %vm5352 = vcmp.eq.s32.totalorder %v5350, 0
      %v5353 = vxor.u32 %v5348, 2147483648
      %v5354 = vsel %vm5352, %v5347, %v5353
      %vm5355 = vcmp.eq.s32.totalorder %v5350, 2
      %v5356 = vxor.u32 %v5347, 2147483648
      %v5357 = vsel %vm5355, %v5356, %v5348
      %v5358 = vsel %vm5351, %v5354, %v5357
      %v5359 = vsel %vm5349, nan, %v5358
      %v5360 = vand.u32 2147483647, %v2715
      %vm5361 = vcmp.le.f32.partialorder %v5360, 0.7853982
      %vm5362 = vcmp.lt.s32.totalorder %v2715, 0
      %v5363 = vand.u32 %v2715, 2139095040
      %v5364 = vshrl.u32 %v5363, 23
      %v5365 = vsub.s32 %v5364, 127
      %v5366 = vand.u32 2147483647, %v2715
      %v5367 = vand.u32 %v5366, 8388607
      %v5368 = vor.u32 %v5367, 8388608
      %v5369 = vsub.s32 0, %v5368
      %v5370 = vadd.s32 %v5365, 1
      %vm5371 = vcmp.gt.s32.totalorder %v5370, 0
      %v5372 = vsel %vm5371, %v5370, 0
      %v5373 = vshrl.u32 %v5372, 5
      %v5374 = vand.u32 %v5372, 31
      %v5375 = vsub.s32 32, %v5374
      %v5376 = vshrl.u32 683565275, %v5375
      %v5377 = vshll.u32 683565275, %v5374
      %v5378 = vshrl.u32 2475754826, %v5375
      %v5379 = vor.u32 %v5377, %v5378
      %v5380 = vshll.u32 2475754826, %v5374
      %v5381 = vshrl.u32 2131351028, %v5375
      %v5382 = vor.u32 %v5380, %v5381
      %v5383 = vshll.u32 2131351028, %v5374
      %v5384 = vshrl.u32 2102212464, %v5375
      %v5385 = vor.u32 %v5383, %v5384
      %v5386 = vshll.u32 2102212464, %v5374
      %v5387 = vshrl.u32 920167782, %v5375
      %v5388 = vor.u32 %v5386, %v5387
      %v5389 = vshll.u32 920167782, %v5374
      %v5390 = vshrl.u32 1326507024, %v5375
      %v5391 = vor.u32 %v5389, %v5390
      %vm5392 = vcmp.lt.s32.totalorder %v5373, 1
      %vm5393 = vcmp.lt.s32.totalorder %v5373, 2
      %vm5394 = vcmp.lt.s32.totalorder %v5373, 3
      %vm5395 = vcmp.lt.s32.totalorder %v5373, 4
      %v5396 = vsel %vm5392, %v5376, %v5379
      %v5397 = vsel %vm5395, %v5385, 2102212464
      %v5398 = vsel %vm5394, %v5382, %v5397
      %v5399 = vsel %vm5393, %v5396, %v5398
      %v5400 = vsel %vm5392, %v5379, %v5382
      %v5401 = vsel %vm5395, %v5388, 920167782
      %v5402 = vsel %vm5394, %v5385, %v5401
      %v5403 = vsel %vm5393, %v5400, %v5402
      %v5404 = vsel %vm5392, %v5382, %v5385
      %v5405 = vsel %vm5395, %v5391, 1326507024
      %v5406 = vsel %vm5394, %v5388, %v5405
      %v5407 = vsel %vm5393, %v5404, %v5406
      %v5408 = vshll.u32 %v5368, 8
      %v5409 = vmul.u32.u64.compose %v5408, %v5407
      %v5410 = vextract.low.u32 %v5409
      %v5411 = vextract.high.u32 %v5409
      %v5412 = vmul.u32.u64.compose %v5408, %v5403
      %v5413 = vextract.low.u32 %v5412
      %v5414 = vextract.high.u32 %v5412
      %v5415 = vmul.u32 %v5408, %v5399
      %v5416 = vadd.s32 %v5411, %v5413
      %vm5417 = vc.u32 %v5411, %v5413
      %v5418 = vadd.s32 %v5414, 1
      %v5419 = vsel %vm5417, %v5418, %v5414
      %v5420 = vadd.s32 %v5415, %v5419
      %v5421 = vadd.s32 %v5420, 536870912
      %v5422 = vshrl.u32 %v5421, 30
      %v5423 = vshll.u32 %v5422, 30
      %v5424 = vsub.s32 %v5420, %v5423
      %vm5425 = vcmp.lt.s32.totalorder %v5424, 0
      %v5426 = vsub.s32 0, %v5424
      %v5427 = vsel %vm5425, %v5426, %v5424
      %v5428 = vclz %v5427
      %v5429 = vsub.s32 %v5428, 2
      %vm5430 = vcmp.gt.s32.totalorder 0, %v5429
      %v5431 = vsel %vm5430, 0, %v5429
      %v5432 = vsub.s32 32, %v5431
      %v5433 = vshll.u32 %v5424, %v5431
      %v5434 = vshrl.u32 %v5416, %v5432
      %v5435 = vor.u32 %v5433, %v5434
      %v5436 = vsub.s32 4294967266, %v5431
      %v5437 = vadd.s32 %v5436, 127
      %v5438 = vshll.u32 %v5437, 23
      %v5439 = vor.u32 4788187, %v5438
      %v5440 = vand.u32 2147483647, %v5439
      %v5442 = vcvt.s32.f32 %v5435
      %v5443 = vmul.f32 %v5442, %v5440
      %v5444 = vxor.u32 %v5443, 2147483648
      %v5445 = vsel %vm5362, %v5444, %v5443
      %v5446 = vsub.s32 4, %v5422
      %v5447 = vsel %vm5362, %v5446, %v5422
      %v5448 = vsel %vm5361, %v2715, %v5445
      %v5449 = vsel %vm5361, 0, %v5447
      %v5450 = vcosq.f32.pop %v5448
      %v5451 = vsinq.f32.pop %v5448
      %vm5452 = vweird.f32 %v2715
      %v5453 = vand.u32 %v5449, 3
      %vm5454 = vcmp.lt.s32.totalorder %v5453, 2
      %vm5455 = vcmp.eq.s32.totalorder %v5453, 0
      %v5456 = vxor.u32 %v5451, 2147483648
      %v5457 = vsel %vm5455, %v5450, %v5456
      %vm5458 = vcmp.eq.s32.totalorder %v5453, 2
      %v5459 = vxor.u32 %v5450, 2147483648
      %v5460 = vsel %vm5458, %v5459, %v5451
      %v5461 = vsel %vm5454, %v5457, %v5460
      %v5462 = vsel %vm5452, nan, %v5461
      %v5463 = vand.u32 2147483647, %v2716
      %vm5464 = vcmp.le.f32.partialorder %v5463, 0.7853982
      %vm5465 = vcmp.lt.s32.totalorder %v2716, 0
      %v5466 = vand.u32 %v2716, 2139095040
      %v5467 = vshrl.u32 %v5466, 23
      %v5468 = vsub.s32 %v5467, 127
      %v5469 = vand.u32 2147483647, %v2716
      %v5470 = vand.u32 %v5469, 8388607
      %v5471 = vor.u32 %v5470, 8388608
      %v5472 = vsub.s32 0, %v5471
      %v5473 = vadd.s32 %v5468, 1
      %vm5474 = vcmp.gt.s32.totalorder %v5473, 0
      %v5475 = vsel %vm5474, %v5473, 0
      %v5476 = vshrl.u32 %v5475, 5
      %v5477 = vand.u32 %v5475, 31
      %v5478 = vsub.s32 32, %v5477
      %v5479 = vshrl.u32 683565275, %v5478
      %v5480 = vshll.u32 683565275, %v5477
      %v5481 = vshrl.u32 2475754826, %v5478
      %v5482 = vor.u32 %v5480, %v5481
      %v5483 = vshll.u32 2475754826, %v5477
      %v5484 = vshrl.u32 2131351028, %v5478
      %v5485 = vor.u32 %v5483, %v5484
      %v5486 = vshll.u32 2131351028, %v5477
      %v5487 = vshrl.u32 2102212464, %v5478
      %v5488 = vor.u32 %v5486, %v5487
      %v5489 = vshll.u32 2102212464, %v5477
      %v5490 = vshrl.u32 920167782, %v5478
      %v5491 = vor.u32 %v5489, %v5490
      %v5492 = vshll.u32 920167782, %v5477
      %v5493 = vshrl.u32 1326507024, %v5478
      %v5494 = vor.u32 %v5492, %v5493
      %vm5495 = vcmp.lt.s32.totalorder %v5476, 1
      %vm5496 = vcmp.lt.s32.totalorder %v5476, 2
      %vm5497 = vcmp.lt.s32.totalorder %v5476, 3
      %vm5498 = vcmp.lt.s32.totalorder %v5476, 4
      %v5499 = vsel %vm5495, %v5479, %v5482
      %v5500 = vsel %vm5498, %v5488, 2102212464
      %v5501 = vsel %vm5497, %v5485, %v5500
      %v5502 = vsel %vm5496, %v5499, %v5501
      %v5503 = vsel %vm5495, %v5482, %v5485
      %v5504 = vsel %vm5498, %v5491, 920167782
      %v5505 = vsel %vm5497, %v5488, %v5504
      %v5506 = vsel %vm5496, %v5503, %v5505
      %v5507 = vsel %vm5495, %v5485, %v5488
      %v5508 = vsel %vm5498, %v5494, 1326507024
      %v5509 = vsel %vm5497, %v5491, %v5508
      %v5510 = vsel %vm5496, %v5507, %v5509
      %v5511 = vshll.u32 %v5471, 8
      %v5512 = vmul.u32.u64.compose %v5511, %v5510
      %v5513 = vextract.low.u32 %v5512
      %v5514 = vextract.high.u32 %v5512
      %v5515 = vmul.u32.u64.compose %v5511, %v5506
      %v5516 = vextract.low.u32 %v5515
      %v5517 = vextract.high.u32 %v5515
      %v5518 = vmul.u32 %v5511, %v5502
      %v5519 = vadd.s32 %v5514, %v5516
      %vm5520 = vc.u32 %v5514, %v5516
      %v5521 = vadd.s32 %v5517, 1
      %v5522 = vsel %vm5520, %v5521, %v5517
      %v5523 = vadd.s32 %v5518, %v5522
      %v5524 = vadd.s32 %v5523, 536870912
      %v5525 = vshrl.u32 %v5524, 30
      %v5526 = vshll.u32 %v5525, 30
      %v5527 = vsub.s32 %v5523, %v5526
      %vm5528 = vcmp.lt.s32.totalorder %v5527, 0
      %v5529 = vsub.s32 0, %v5527
      %v5530 = vsel %vm5528, %v5529, %v5527
      %v5531 = vclz %v5530
      %v5532 = vsub.s32 %v5531, 2
      %vm5533 = vcmp.gt.s32.totalorder 0, %v5532
      %v5534 = vsel %vm5533, 0, %v5532
      %v5535 = vsub.s32 32, %v5534
      %v5536 = vshll.u32 %v5527, %v5534
      %v5537 = vshrl.u32 %v5519, %v5535
      %v5538 = vor.u32 %v5536, %v5537
      %v5539 = vsub.s32 4294967266, %v5534
      %v5540 = vadd.s32 %v5539, 127
      %v5541 = vshll.u32 %v5540, 23
      %v5542 = vor.u32 4788187, %v5541
      %v5543 = vand.u32 2147483647, %v5542
      %v5545 = vcvt.s32.f32 %v5538
      %v5546 = vmul.f32 %v5545, %v5543
      %v5547 = vxor.u32 %v5546, 2147483648
      %v5548 = vsel %vm5465, %v5547, %v5546
      %v5549 = vsub.s32 4, %v5525
      %v5550 = vsel %vm5465, %v5549, %v5525
      %v5551 = vsel %vm5464, %v2716, %v5548
      %v5552 = vsel %vm5464, 0, %v5550
      %v5553 = vcosq.f32.pop %v5551
      %v5554 = vsinq.f32.pop %v5551
      %vm5555 = vweird.f32 %v2716
      %v5556 = vand.u32 %v5552, 3
      %vm5557 = vcmp.lt.s32.totalorder %v5556, 2
      %vm5558 = vcmp.eq.s32.totalorder %v5556, 0
      %v5559 = vxor.u32 %v5554, 2147483648
      %v5560 = vsel %vm5558, %v5553, %v5559
      %vm5561 = vcmp.eq.s32.totalorder %v5556, 2
      %v5562 = vxor.u32 %v5553, 2147483648
      %v5563 = vsel %vm5561, %v5562, %v5554
      %v5564 = vsel %vm5557, %v5560, %v5563
      %v5565 = vsel %vm5555, nan, %v5564
      %v5566 = vand.u32 2147483647, %v2717
      %vm5567 = vcmp.le.f32.partialorder %v5566, 0.7853982
      %vm5568 = vcmp.lt.s32.totalorder %v2717, 0
      %v5569 = vand.u32 %v2717, 2139095040
      %v5570 = vshrl.u32 %v5569, 23
      %v5571 = vsub.s32 %v5570, 127
      %v5572 = vand.u32 2147483647, %v2717
      %v5573 = vand.u32 %v5572, 8388607
      %v5574 = vor.u32 %v5573, 8388608
      %v5575 = vsub.s32 0, %v5574
      %v5576 = vadd.s32 %v5571, 1
      %vm5577 = vcmp.gt.s32.totalorder %v5576, 0
      %v5578 = vsel %vm5577, %v5576, 0
      %v5579 = vshrl.u32 %v5578, 5
      %v5580 = vand.u32 %v5578, 31
      %v5581 = vsub.s32 32, %v5580
      %v5582 = vshrl.u32 683565275, %v5581
      %v5583 = vshll.u32 683565275, %v5580
      %v5584 = vshrl.u32 2475754826, %v5581
      %v5585 = vor.u32 %v5583, %v5584
      %v5586 = vshll.u32 2475754826, %v5580
      %v5587 = vshrl.u32 2131351028, %v5581
      %v5588 = vor.u32 %v5586, %v5587
      %v5589 = vshll.u32 2131351028, %v5580
      %v5590 = vshrl.u32 2102212464, %v5581
      %v5591 = vor.u32 %v5589, %v5590
      %v5592 = vshll.u32 2102212464, %v5580
      %v5593 = vshrl.u32 920167782, %v5581
      %v5594 = vor.u32 %v5592, %v5593
      %v5595 = vshll.u32 920167782, %v5580
      %v5596 = vshrl.u32 1326507024, %v5581
      %v5597 = vor.u32 %v5595, %v5596
      %vm5598 = vcmp.lt.s32.totalorder %v5579, 1
      %vm5599 = vcmp.lt.s32.totalorder %v5579, 2
      %vm5600 = vcmp.lt.s32.totalorder %v5579, 3
      %vm5601 = vcmp.lt.s32.totalorder %v5579, 4
      %v5602 = vsel %vm5598, %v5582, %v5585
      %v5603 = vsel %vm5601, %v5591, 2102212464
      %v5604 = vsel %vm5600, %v5588, %v5603
      %v5605 = vsel %vm5599, %v5602, %v5604
      %v5606 = vsel %vm5598, %v5585, %v5588
      %v5607 = vsel %vm5601, %v5594, 920167782
      %v5608 = vsel %vm5600, %v5591, %v5607
      %v5609 = vsel %vm5599, %v5606, %v5608
      %v5610 = vsel %vm5598, %v5588, %v5591
      %v5611 = vsel %vm5601, %v5597, 1326507024
      %v5612 = vsel %vm5600, %v5594, %v5611
      %v5613 = vsel %vm5599, %v5610, %v5612
      %v5614 = vshll.u32 %v5574, 8
      %v5615 = vmul.u32.u64.compose %v5614, %v5613
      %v5616 = vextract.low.u32 %v5615
      %v5617 = vextract.high.u32 %v5615
      %v5618 = vmul.u32.u64.compose %v5614, %v5609
      %v5619 = vextract.low.u32 %v5618
      %v5620 = vextract.high.u32 %v5618
      %v5621 = vmul.u32 %v5614, %v5605
      %v5622 = vadd.s32 %v5617, %v5619
      %vm5623 = vc.u32 %v5617, %v5619
      %v5624 = vadd.s32 %v5620, 1
      %v5625 = vsel %vm5623, %v5624, %v5620
      %v5626 = vadd.s32 %v5621, %v5625
      %v5627 = vadd.s32 %v5626, 536870912
      %v5628 = vshrl.u32 %v5627, 30
      %v5629 = vshll.u32 %v5628, 30
      %v5630 = vsub.s32 %v5626, %v5629
      %vm5631 = vcmp.lt.s32.totalorder %v5630, 0
      %v5632 = vsub.s32 0, %v5630
      %v5633 = vsel %vm5631, %v5632, %v5630
      %v5634 = vclz %v5633
      %v5635 = vsub.s32 %v5634, 2
      %vm5636 = vcmp.gt.s32.totalorder 0, %v5635
      %v5637 = vsel %vm5636, 0, %v5635
      %v5638 = vsub.s32 32, %v5637
      %v5639 = vshll.u32 %v5630, %v5637
      %v5640 = vshrl.u32 %v5622, %v5638
      %v5641 = vor.u32 %v5639, %v5640
      %v5642 = vsub.s32 4294967266, %v5637
      %v5643 = vadd.s32 %v5642, 127
      %v5644 = vshll.u32 %v5643, 23
      %v5645 = vor.u32 4788187, %v5644
      %v5646 = vand.u32 2147483647, %v5645
      %v5648 = vcvt.s32.f32 %v5641
      %v5649 = vmul.f32 %v5648, %v5646
      %v5650 = vxor.u32 %v5649, 2147483648
      %v5651 = vsel %vm5568, %v5650, %v5649
      %v5652 = vsub.s32 4, %v5628
      %v5653 = vsel %vm5568, %v5652, %v5628
      %v5654 = vsel %vm5567, %v2717, %v5651
      %v5655 = vsel %vm5567, 0, %v5653
      %v5656 = vcosq.f32.pop %v5654
      %v5657 = vsinq.f32.pop %v5654
      %vm5658 = vweird.f32 %v2717
      %v5659 = vand.u32 %v5655, 3
      %vm5660 = vcmp.lt.s32.totalorder %v5659, 2
      %vm5661 = vcmp.eq.s32.totalorder %v5659, 0
      %v5662 = vxor.u32 %v5657, 2147483648
      %v5663 = vsel %vm5661, %v5656, %v5662
      %vm5664 = vcmp.eq.s32.totalorder %v5659, 2
      %v5665 = vxor.u32 %v5656, 2147483648
      %v5666 = vsel %vm5664, %v5665, %v5657
      %v5667 = vsel %vm5660, %v5663, %v5666
      %v5668 = vsel %vm5658, nan, %v5667
      %v5669 = vand.u32 2147483647, %v2718
      %vm5670 = vcmp.le.f32.partialorder %v5669, 0.7853982
      %vm5671 = vcmp.lt.s32.totalorder %v2718, 0
      %v5672 = vand.u32 %v2718, 2139095040
      %v5673 = vshrl.u32 %v5672, 23
      %v5674 = vsub.s32 %v5673, 127
      %v5675 = vand.u32 2147483647, %v2718
      %v5676 = vand.u32 %v5675, 8388607
      %v5677 = vor.u32 %v5676, 8388608
      %v5678 = vsub.s32 0, %v5677
      %v5679 = vadd.s32 %v5674, 1
      %vm5680 = vcmp.gt.s32.totalorder %v5679, 0
      %v5681 = vsel %vm5680, %v5679, 0
      %v5682 = vshrl.u32 %v5681, 5
      %v5683 = vand.u32 %v5681, 31
      %v5684 = vsub.s32 32, %v5683
      %v5685 = vshrl.u32 683565275, %v5684
      %v5686 = vshll.u32 683565275, %v5683
      %v5687 = vshrl.u32 2475754826, %v5684
      %v5688 = vor.u32 %v5686, %v5687
      %v5689 = vshll.u32 2475754826, %v5683
      %v5690 = vshrl.u32 2131351028, %v5684
      %v5691 = vor.u32 %v5689, %v5690
      %v5692 = vshll.u32 2131351028, %v5683
      %v5693 = vshrl.u32 2102212464, %v5684
      %v5694 = vor.u32 %v5692, %v5693
      %v5695 = vshll.u32 2102212464, %v5683
      %v5696 = vshrl.u32 920167782, %v5684
      %v5697 = vor.u32 %v5695, %v5696
      %v5698 = vshll.u32 920167782, %v5683
      %v5699 = vshrl.u32 1326507024, %v5684
      %v5700 = vor.u32 %v5698, %v5699
      %vm5701 = vcmp.lt.s32.totalorder %v5682, 1
      %vm5702 = vcmp.lt.s32.totalorder %v5682, 2
      %vm5703 = vcmp.lt.s32.totalorder %v5682, 3
      %vm5704 = vcmp.lt.s32.totalorder %v5682, 4
      %v5705 = vsel %vm5701, %v5685, %v5688
      %v5706 = vsel %vm5704, %v5694, 2102212464
      %v5707 = vsel %vm5703, %v5691, %v5706
      %v5708 = vsel %vm5702, %v5705, %v5707
      %v5709 = vsel %vm5701, %v5688, %v5691
      %v5710 = vsel %vm5704, %v5697, 920167782
      %v5711 = vsel %vm5703, %v5694, %v5710
      %v5712 = vsel %vm5702, %v5709, %v5711
      %v5713 = vsel %vm5701, %v5691, %v5694
      %v5714 = vsel %vm5704, %v5700, 1326507024
      %v5715 = vsel %vm5703, %v5697, %v5714
      %v5716 = vsel %vm5702, %v5713, %v5715
      %v5717 = vshll.u32 %v5677, 8
      %v5718 = vmul.u32.u64.compose %v5717, %v5716
      %v5719 = vextract.low.u32 %v5718
      %v5720 = vextract.high.u32 %v5718
      %v5721 = vmul.u32.u64.compose %v5717, %v5712
      %v5722 = vextract.low.u32 %v5721
      %v5723 = vextract.high.u32 %v5721
      %v5724 = vmul.u32 %v5717, %v5708
      %v5725 = vadd.s32 %v5720, %v5722
      %vm5726 = vc.u32 %v5720, %v5722
      %v5727 = vadd.s32 %v5723, 1
      %v5728 = vsel %vm5726, %v5727, %v5723
      %v5729 = vadd.s32 %v5724, %v5728
      %v5730 = vadd.s32 %v5729, 536870912
      %v5731 = vshrl.u32 %v5730, 30
      %v5732 = vshll.u32 %v5731, 30
      %v5733 = vsub.s32 %v5729, %v5732
      %vm5734 = vcmp.lt.s32.totalorder %v5733, 0
      %v5735 = vsub.s32 0, %v5733
      %v5736 = vsel %vm5734, %v5735, %v5733
      %v5737 = vclz %v5736
      %v5738 = vsub.s32 %v5737, 2
      %vm5739 = vcmp.gt.s32.totalorder 0, %v5738
      %v5740 = vsel %vm5739, 0, %v5738
      %v5741 = vsub.s32 32, %v5740
      %v5742 = vshll.u32 %v5733, %v5740
      %v5743 = vshrl.u32 %v5725, %v5741
      %v5744 = vor.u32 %v5742, %v5743
      %v5745 = vsub.s32 4294967266, %v5740
      %v5746 = vadd.s32 %v5745, 127
      %v5747 = vshll.u32 %v5746, 23
      %v5748 = vor.u32 4788187, %v5747
      %v5749 = vand.u32 2147483647, %v5748
      %v5751 = vcvt.s32.f32 %v5744
      %v5752 = vmul.f32 %v5751, %v5749
      %v5753 = vxor.u32 %v5752, 2147483648
      %v5754 = vsel %vm5671, %v5753, %v5752
      %v5755 = vsub.s32 4, %v5731
      %v5756 = vsel %vm5671, %v5755, %v5731
      %v5757 = vsel %vm5670, %v2718, %v5754
      %v5758 = vsel %vm5670, 0, %v5756
      %v5759 = vcosq.f32.pop %v5757
      %v5760 = vsinq.f32.pop %v5757
      %vm5761 = vweird.f32 %v2718
      %v5762 = vand.u32 %v5758, 3
      %vm5763 = vcmp.lt.s32.totalorder %v5762, 2
      %vm5764 = vcmp.eq.s32.totalorder %v5762, 0
      %v5765 = vxor.u32 %v5760, 2147483648
      %v5766 = vsel %vm5764, %v5759, %v5765
      %vm5767 = vcmp.eq.s32.totalorder %v5762, 2
      %v5768 = vxor.u32 %v5759, 2147483648
      %v5769 = vsel %vm5767, %v5768, %v5760
      %v5770 = vsel %vm5763, %v5766, %v5769
      %v5771 = vsel %vm5761, nan, %v5770
      %v5772 = vand.u32 2147483647, %v2719
      %vm5773 = vcmp.le.f32.partialorder %v5772, 0.7853982
      %vm5774 = vcmp.lt.s32.totalorder %v2719, 0
      %v5775 = vand.u32 %v2719, 2139095040
      %v5776 = vshrl.u32 %v5775, 23
      %v5777 = vsub.s32 %v5776, 127
      %v5778 = vand.u32 2147483647, %v2719
      %v5779 = vand.u32 %v5778, 8388607
      %v5780 = vor.u32 %v5779, 8388608
      %v5781 = vsub.s32 0, %v5780
      %v5782 = vadd.s32 %v5777, 1
      %vm5783 = vcmp.gt.s32.totalorder %v5782, 0
      %v5784 = vsel %vm5783, %v5782, 0
      %v5785 = vshrl.u32 %v5784, 5
      %v5786 = vand.u32 %v5784, 31
      %v5787 = vsub.s32 32, %v5786
      %v5788 = vshrl.u32 683565275, %v5787
      %v5789 = vshll.u32 683565275, %v5786
      %v5790 = vshrl.u32 2475754826, %v5787
      %v5791 = vor.u32 %v5789, %v5790
      %v5792 = vshll.u32 2475754826, %v5786
      %v5793 = vshrl.u32 2131351028, %v5787
      %v5794 = vor.u32 %v5792, %v5793
      %v5795 = vshll.u32 2131351028, %v5786
      %v5796 = vshrl.u32 2102212464, %v5787
      %v5797 = vor.u32 %v5795, %v5796
      %v5798 = vshll.u32 2102212464, %v5786
      %v5799 = vshrl.u32 920167782, %v5787
      %v5800 = vor.u32 %v5798, %v5799
      %v5801 = vshll.u32 920167782, %v5786
      %v5802 = vshrl.u32 1326507024, %v5787
      %v5803 = vor.u32 %v5801, %v5802
      %vm5804 = vcmp.lt.s32.totalorder %v5785, 1
      %vm5805 = vcmp.lt.s32.totalorder %v5785, 2
      %vm5806 = vcmp.lt.s32.totalorder %v5785, 3
      %vm5807 = vcmp.lt.s32.totalorder %v5785, 4
      %v5808 = vsel %vm5804, %v5788, %v5791
      %v5809 = vsel %vm5807, %v5797, 2102212464
      %v5810 = vsel %vm5806, %v5794, %v5809
      %v5811 = vsel %vm5805, %v5808, %v5810
      %v5812 = vsel %vm5804, %v5791, %v5794
      %v5813 = vsel %vm5807, %v5800, 920167782
      %v5814 = vsel %vm5806, %v5797, %v5813
      %v5815 = vsel %vm5805, %v5812, %v5814
      %v5816 = vsel %vm5804, %v5794, %v5797
      %v5817 = vsel %vm5807, %v5803, 1326507024
      %v5818 = vsel %vm5806, %v5800, %v5817
      %v5819 = vsel %vm5805, %v5816, %v5818
      %v5820 = vshll.u32 %v5780, 8
      %v5821 = vmul.u32.u64.compose %v5820, %v5819
      %v5822 = vextract.low.u32 %v5821
      %v5823 = vextract.high.u32 %v5821
      %v5824 = vmul.u32.u64.compose %v5820, %v5815
      %v5825 = vextract.low.u32 %v5824
      %v5826 = vextract.high.u32 %v5824
      %v5827 = vmul.u32 %v5820, %v5811
      %v5828 = vadd.s32 %v5823, %v5825
      %vm5829 = vc.u32 %v5823, %v5825
      %v5830 = vadd.s32 %v5826, 1
      %v5831 = vsel %vm5829, %v5830, %v5826
      %v5832 = vadd.s32 %v5827, %v5831
      %v5833 = vadd.s32 %v5832, 536870912
      %v5834 = vshrl.u32 %v5833, 30
      %v5835 = vshll.u32 %v5834, 30
      %v5836 = vsub.s32 %v5832, %v5835
      %vm5837 = vcmp.lt.s32.totalorder %v5836, 0
      %v5838 = vsub.s32 0, %v5836
      %v5839 = vsel %vm5837, %v5838, %v5836
      %v5840 = vclz %v5839
      %v5841 = vsub.s32 %v5840, 2
      %vm5842 = vcmp.gt.s32.totalorder 0, %v5841
      %v5843 = vsel %vm5842, 0, %v5841
      %v5844 = vsub.s32 32, %v5843
      %v5845 = vshll.u32 %v5836, %v5843
      %v5846 = vshrl.u32 %v5828, %v5844
      %v5847 = vor.u32 %v5845, %v5846
      %v5848 = vsub.s32 4294967266, %v5843
      %v5849 = vadd.s32 %v5848, 127
      %v5850 = vshll.u32 %v5849, 23
      %v5851 = vor.u32 4788187, %v5850
      %v5852 = vand.u32 2147483647, %v5851
      %v5854 = vcvt.s32.f32 %v5847
      %v5855 = vmul.f32 %v5854, %v5852
      %v5856 = vxor.u32 %v5855, 2147483648
      %v5857 = vsel %vm5774, %v5856, %v5855
      %v5858 = vsub.s32 4, %v5834
      %v5859 = vsel %vm5774, %v5858, %v5834
      %v5860 = vsel %vm5773, %v2719, %v5857
      %v5861 = vsel %vm5773, 0, %v5859
      %v5862 = vcosq.f32.pop %v5860
      %v5863 = vsinq.f32.pop %v5860
      %vm5864 = vweird.f32 %v2719
      %v5865 = vand.u32 %v5861, 3
      %vm5866 = vcmp.lt.s32.totalorder %v5865, 2
      %vm5867 = vcmp.eq.s32.totalorder %v5865, 0
      %v5868 = vxor.u32 %v5863, 2147483648
      %v5869 = vsel %vm5867, %v5862, %v5868
      %vm5870 = vcmp.eq.s32.totalorder %v5865, 2
      %v5871 = vxor.u32 %v5862, 2147483648
      %v5872 = vsel %vm5870, %v5871, %v5863
      %v5873 = vsel %vm5866, %v5869, %v5872
      %v5874 = vsel %vm5864, nan, %v5873
      %v5875 = vand.u32 2147483647, %v2720
      %vm5876 = vcmp.le.f32.partialorder %v5875, 0.7853982
      %vm5877 = vcmp.lt.s32.totalorder %v2720, 0
      %v5878 = vand.u32 %v2720, 2139095040
      %v5879 = vshrl.u32 %v5878, 23
      %v5880 = vsub.s32 %v5879, 127
      %v5881 = vand.u32 2147483647, %v2720
      %v5882 = vand.u32 %v5881, 8388607
      %v5883 = vor.u32 %v5882, 8388608
      %v5884 = vsub.s32 0, %v5883
      %v5885 = vadd.s32 %v5880, 1
      %vm5886 = vcmp.gt.s32.totalorder %v5885, 0
      %v5887 = vsel %vm5886, %v5885, 0
      %v5888 = vshrl.u32 %v5887, 5
      %v5889 = vand.u32 %v5887, 31
      %v5890 = vsub.s32 32, %v5889
      %v5891 = vshrl.u32 683565275, %v5890
      %v5892 = vshll.u32 683565275, %v5889
      %v5893 = vshrl.u32 2475754826, %v5890
      %v5894 = vor.u32 %v5892, %v5893
      %v5895 = vshll.u32 2475754826, %v5889
      %v5896 = vshrl.u32 2131351028, %v5890
      %v5897 = vor.u32 %v5895, %v5896
      %v5898 = vshll.u32 2131351028, %v5889
      %v5899 = vshrl.u32 2102212464, %v5890
      %v5900 = vor.u32 %v5898, %v5899
      %v5901 = vshll.u32 2102212464, %v5889
      %v5902 = vshrl.u32 920167782, %v5890
      %v5903 = vor.u32 %v5901, %v5902
      %v5904 = vshll.u32 920167782, %v5889
      %v5905 = vshrl.u32 1326507024, %v5890
      %v5906 = vor.u32 %v5904, %v5905
      %vm5907 = vcmp.lt.s32.totalorder %v5888, 1
      %vm5908 = vcmp.lt.s32.totalorder %v5888, 2
      %vm5909 = vcmp.lt.s32.totalorder %v5888, 3
      %vm5910 = vcmp.lt.s32.totalorder %v5888, 4
      %v5911 = vsel %vm5907, %v5891, %v5894
      %v5912 = vsel %vm5910, %v5900, 2102212464
      %v5913 = vsel %vm5909, %v5897, %v5912
      %v5914 = vsel %vm5908, %v5911, %v5913
      %v5915 = vsel %vm5907, %v5894, %v5897
      %v5916 = vsel %vm5910, %v5903, 920167782
      %v5917 = vsel %vm5909, %v5900, %v5916
      %v5918 = vsel %vm5908, %v5915, %v5917
      %v5919 = vsel %vm5907, %v5897, %v5900
      %v5920 = vsel %vm5910, %v5906, 1326507024
      %v5921 = vsel %vm5909, %v5903, %v5920
      %v5922 = vsel %vm5908, %v5919, %v5921
      %v5923 = vshll.u32 %v5883, 8
      %v5924 = vmul.u32.u64.compose %v5923, %v5922
      %v5925 = vextract.low.u32 %v5924
      %v5926 = vextract.high.u32 %v5924
      %v5927 = vmul.u32.u64.compose %v5923, %v5918
      %v5928 = vextract.low.u32 %v5927
      %v5929 = vextract.high.u32 %v5927
      %v5930 = vmul.u32 %v5923, %v5914
      %v5931 = vadd.s32 %v5926, %v5928
      %vm5932 = vc.u32 %v5926, %v5928
      %v5933 = vadd.s32 %v5929, 1
      %v5934 = vsel %vm5932, %v5933, %v5929
      %v5935 = vadd.s32 %v5930, %v5934
      %v5936 = vadd.s32 %v5935, 536870912
      %v5937 = vshrl.u32 %v5936, 30
      %v5938 = vshll.u32 %v5937, 30
      %v5939 = vsub.s32 %v5935, %v5938
      %vm5940 = vcmp.lt.s32.totalorder %v5939, 0
      %v5941 = vsub.s32 0, %v5939
      %v5942 = vsel %vm5940, %v5941, %v5939
      %v5943 = vclz %v5942
      %v5944 = vsub.s32 %v5943, 2
      %vm5945 = vcmp.gt.s32.totalorder 0, %v5944
      %v5946 = vsel %vm5945, 0, %v5944
      %v5947 = vsub.s32 32, %v5946
      %v5948 = vshll.u32 %v5939, %v5946
      %v5949 = vshrl.u32 %v5931, %v5947
      %v5950 = vor.u32 %v5948, %v5949
      %v5951 = vsub.s32 4294967266, %v5946
      %v5952 = vadd.s32 %v5951, 127
      %v5953 = vshll.u32 %v5952, 23
      %v5954 = vor.u32 4788187, %v5953
      %v5955 = vand.u32 2147483647, %v5954
      %v5957 = vcvt.s32.f32 %v5950
      %v5958 = vmul.f32 %v5957, %v5955
      %v5959 = vxor.u32 %v5958, 2147483648
      %v5960 = vsel %vm5877, %v5959, %v5958
      %v5961 = vsub.s32 4, %v5937
      %v5962 = vsel %vm5877, %v5961, %v5937
      %v5963 = vsel %vm5876, %v2720, %v5960
      %v5964 = vsel %vm5876, 0, %v5962
      %v5965 = vcosq.f32.pop %v5963
      %v5966 = vsinq.f32.pop %v5963
      %vm5967 = vweird.f32 %v2720
      %v5968 = vand.u32 %v5964, 3
      %vm5969 = vcmp.lt.s32.totalorder %v5968, 2
      %vm5970 = vcmp.eq.s32.totalorder %v5968, 0
      %v5971 = vxor.u32 %v5966, 2147483648
      %v5972 = vsel %vm5970, %v5965, %v5971
      %vm5973 = vcmp.eq.s32.totalorder %v5968, 2
      %v5974 = vxor.u32 %v5965, 2147483648
      %v5975 = vsel %vm5973, %v5974, %v5966
      %v5976 = vsel %vm5969, %v5972, %v5975
      %v5977 = vsel %vm5967, nan, %v5976
      %v5978 = vand.u32 2147483647, %v2721
      %vm5979 = vcmp.le.f32.partialorder %v5978, 0.7853982
      %vm5980 = vcmp.lt.s32.totalorder %v2721, 0
      %v5981 = vand.u32 %v2721, 2139095040
      %v5982 = vshrl.u32 %v5981, 23
      %v5983 = vsub.s32 %v5982, 127
      %v5984 = vand.u32 2147483647, %v2721
      %v5985 = vand.u32 %v5984, 8388607
      %v5986 = vor.u32 %v5985, 8388608
      %v5987 = vsub.s32 0, %v5986
      %v5988 = vadd.s32 %v5983, 1
      %vm5989 = vcmp.gt.s32.totalorder %v5988, 0
      %v5990 = vsel %vm5989, %v5988, 0
      %v5991 = vshrl.u32 %v5990, 5
      %v5992 = vand.u32 %v5990, 31
      %v5993 = vsub.s32 32, %v5992
      %v5994 = vshrl.u32 683565275, %v5993
      %v5995 = vshll.u32 683565275, %v5992
      %v5996 = vshrl.u32 2475754826, %v5993
      %v5997 = vor.u32 %v5995, %v5996
      %v5998 = vshll.u32 2475754826, %v5992
      %v5999 = vshrl.u32 2131351028, %v5993
      %v6000 = vor.u32 %v5998, %v5999
      %v6001 = vshll.u32 2131351028, %v5992
      %v6002 = vshrl.u32 2102212464, %v5993
      %v6003 = vor.u32 %v6001, %v6002
      %v6004 = vshll.u32 2102212464, %v5992
      %v6005 = vshrl.u32 920167782, %v5993
      %v6006 = vor.u32 %v6004, %v6005
      %v6007 = vshll.u32 920167782, %v5992
      %v6008 = vshrl.u32 1326507024, %v5993
      %v6009 = vor.u32 %v6007, %v6008
      %vm6010 = vcmp.lt.s32.totalorder %v5991, 1
      %vm6011 = vcmp.lt.s32.totalorder %v5991, 2
      %vm6012 = vcmp.lt.s32.totalorder %v5991, 3
      %vm6013 = vcmp.lt.s32.totalorder %v5991, 4
      %v6014 = vsel %vm6010, %v5994, %v5997
      %v6015 = vsel %vm6013, %v6003, 2102212464
      %v6016 = vsel %vm6012, %v6000, %v6015
      %v6017 = vsel %vm6011, %v6014, %v6016
      %v6018 = vsel %vm6010, %v5997, %v6000
      %v6019 = vsel %vm6013, %v6006, 920167782
      %v6020 = vsel %vm6012, %v6003, %v6019
      %v6021 = vsel %vm6011, %v6018, %v6020
      %v6022 = vsel %vm6010, %v6000, %v6003
      %v6023 = vsel %vm6013, %v6009, 1326507024
      %v6024 = vsel %vm6012, %v6006, %v6023
      %v6025 = vsel %vm6011, %v6022, %v6024
      %v6026 = vshll.u32 %v5986, 8
      %v6027 = vmul.u32.u64.compose %v6026, %v6025
      %v6028 = vextract.low.u32 %v6027
      %v6029 = vextract.high.u32 %v6027
      %v6030 = vmul.u32.u64.compose %v6026, %v6021
      %v6031 = vextract.low.u32 %v6030
      %v6032 = vextract.high.u32 %v6030
      %v6033 = vmul.u32 %v6026, %v6017
      %v6034 = vadd.s32 %v6029, %v6031
      %vm6035 = vc.u32 %v6029, %v6031
      %v6036 = vadd.s32 %v6032, 1
      %v6037 = vsel %vm6035, %v6036, %v6032
      %v6038 = vadd.s32 %v6033, %v6037
      %v6039 = vadd.s32 %v6038, 536870912
      %v6040 = vshrl.u32 %v6039, 30
      %v6041 = vshll.u32 %v6040, 30
      %v6042 = vsub.s32 %v6038, %v6041
      %vm6043 = vcmp.lt.s32.totalorder %v6042, 0
      %v6044 = vsub.s32 0, %v6042
      %v6045 = vsel %vm6043, %v6044, %v6042
      %v6046 = vclz %v6045
      %v6047 = vsub.s32 %v6046, 2
      %vm6048 = vcmp.gt.s32.totalorder 0, %v6047
      %v6049 = vsel %vm6048, 0, %v6047
      %v6050 = vsub.s32 32, %v6049
      %v6051 = vshll.u32 %v6042, %v6049
      %v6052 = vshrl.u32 %v6034, %v6050
      %v6053 = vor.u32 %v6051, %v6052
      %v6054 = vsub.s32 4294967266, %v6049
      %v6055 = vadd.s32 %v6054, 127
      %v6056 = vshll.u32 %v6055, 23
      %v6057 = vor.u32 4788187, %v6056
      %v6058 = vand.u32 2147483647, %v6057
      %v6060 = vcvt.s32.f32 %v6053
      %v6061 = vmul.f32 %v6060, %v6058
      %v6062 = vxor.u32 %v6061, 2147483648
      %v6063 = vsel %vm5980, %v6062, %v6061
      %v6064 = vsub.s32 4, %v6040
      %v6065 = vsel %vm5980, %v6064, %v6040
      %v6066 = vsel %vm5979, %v2721, %v6063
      %v6067 = vsel %vm5979, 0, %v6065
      %v6068 = vcosq.f32.pop %v6066
      %v6069 = vsinq.f32.pop %v6066
      %vm6070 = vweird.f32 %v2721
      %v6071 = vand.u32 %v6067, 3
      %vm6072 = vcmp.lt.s32.totalorder %v6071, 2
      %vm6073 = vcmp.eq.s32.totalorder %v6071, 0
      %v6074 = vxor.u32 %v6069, 2147483648
      %v6075 = vsel %vm6073, %v6068, %v6074
      %vm6076 = vcmp.eq.s32.totalorder %v6071, 2
      %v6077 = vxor.u32 %v6068, 2147483648
      %v6078 = vsel %vm6076, %v6077, %v6069
      %v6079 = vsel %vm6072, %v6075, %v6078
      %v6080 = vsel %vm6070, nan, %v6079
      %v6081 = vand.u32 2147483647, %v2722
      %vm6082 = vcmp.le.f32.partialorder %v6081, 0.7853982
      %vm6083 = vcmp.lt.s32.totalorder %v2722, 0
      %v6084 = vand.u32 %v2722, 2139095040
      %v6085 = vshrl.u32 %v6084, 23
      %v6086 = vsub.s32 %v6085, 127
      %v6087 = vand.u32 2147483647, %v2722
      %v6088 = vand.u32 %v6087, 8388607
      %v6089 = vor.u32 %v6088, 8388608
      %v6090 = vsub.s32 0, %v6089
      %v6091 = vadd.s32 %v6086, 1
      %vm6092 = vcmp.gt.s32.totalorder %v6091, 0
      %v6093 = vsel %vm6092, %v6091, 0
      %v6094 = vshrl.u32 %v6093, 5
      %v6095 = vand.u32 %v6093, 31
      %v6096 = vsub.s32 32, %v6095
      %v6097 = vshrl.u32 683565275, %v6096
      %v6098 = vshll.u32 683565275, %v6095
      %v6099 = vshrl.u32 2475754826, %v6096
      %v6100 = vor.u32 %v6098, %v6099
      %v6101 = vshll.u32 2475754826, %v6095
      %v6102 = vshrl.u32 2131351028, %v6096
      %v6103 = vor.u32 %v6101, %v6102
      %v6104 = vshll.u32 2131351028, %v6095
      %v6105 = vshrl.u32 2102212464, %v6096
      %v6106 = vor.u32 %v6104, %v6105
      %v6107 = vshll.u32 2102212464, %v6095
      %v6108 = vshrl.u32 920167782, %v6096
      %v6109 = vor.u32 %v6107, %v6108
      %v6110 = vshll.u32 920167782, %v6095
      %v6111 = vshrl.u32 1326507024, %v6096
      %v6112 = vor.u32 %v6110, %v6111
      %vm6113 = vcmp.lt.s32.totalorder %v6094, 1
      %vm6114 = vcmp.lt.s32.totalorder %v6094, 2
      %vm6115 = vcmp.lt.s32.totalorder %v6094, 3
      %vm6116 = vcmp.lt.s32.totalorder %v6094, 4
      %v6117 = vsel %vm6113, %v6097, %v6100
      %v6118 = vsel %vm6116, %v6106, 2102212464
      %v6119 = vsel %vm6115, %v6103, %v6118
      %v6120 = vsel %vm6114, %v6117, %v6119
      %v6121 = vsel %vm6113, %v6100, %v6103
      %v6122 = vsel %vm6116, %v6109, 920167782
      %v6123 = vsel %vm6115, %v6106, %v6122
      %v6124 = vsel %vm6114, %v6121, %v6123
      %v6125 = vsel %vm6113, %v6103, %v6106
      %v6126 = vsel %vm6116, %v6112, 1326507024
      %v6127 = vsel %vm6115, %v6109, %v6126
      %v6128 = vsel %vm6114, %v6125, %v6127
      %v6129 = vshll.u32 %v6089, 8
      %v6130 = vmul.u32.u64.compose %v6129, %v6128
      %v6131 = vextract.low.u32 %v6130
      %v6132 = vextract.high.u32 %v6130
      %v6133 = vmul.u32.u64.compose %v6129, %v6124
      %v6134 = vextract.low.u32 %v6133
      %v6135 = vextract.high.u32 %v6133
      %v6136 = vmul.u32 %v6129, %v6120
      %v6137 = vadd.s32 %v6132, %v6134
      %vm6138 = vc.u32 %v6132, %v6134
      %v6139 = vadd.s32 %v6135, 1
      %v6140 = vsel %vm6138, %v6139, %v6135
      %v6141 = vadd.s32 %v6136, %v6140
      %v6142 = vadd.s32 %v6141, 536870912
      %v6143 = vshrl.u32 %v6142, 30
      %v6144 = vshll.u32 %v6143, 30
      %v6145 = vsub.s32 %v6141, %v6144
      %vm6146 = vcmp.lt.s32.totalorder %v6145, 0
      %v6147 = vsub.s32 0, %v6145
      %v6148 = vsel %vm6146, %v6147, %v6145
      %v6149 = vclz %v6148
      %v6150 = vsub.s32 %v6149, 2
      %vm6151 = vcmp.gt.s32.totalorder 0, %v6150
      %v6152 = vsel %vm6151, 0, %v6150
      %v6153 = vsub.s32 32, %v6152
      %v6154 = vshll.u32 %v6145, %v6152
      %v6155 = vshrl.u32 %v6137, %v6153
      %v6156 = vor.u32 %v6154, %v6155
      %v6157 = vsub.s32 4294967266, %v6152
      %v6158 = vadd.s32 %v6157, 127
      %v6159 = vshll.u32 %v6158, 23
      %v6160 = vor.u32 4788187, %v6159
      %v6161 = vand.u32 2147483647, %v6160
      %v6163 = vcvt.s32.f32 %v6156
      %v6164 = vmul.f32 %v6163, %v6161
      %v6165 = vxor.u32 %v6164, 2147483648
      %v6166 = vsel %vm6083, %v6165, %v6164
      %v6167 = vsub.s32 4, %v6143
      %v6168 = vsel %vm6083, %v6167, %v6143
      %v6169 = vsel %vm6082, %v2722, %v6166
      %v6170 = vsel %vm6082, 0, %v6168
      %v6171 = vcosq.f32.pop %v6169
      %v6172 = vsinq.f32.pop %v6169
      %vm6173 = vweird.f32 %v2722
      %v6174 = vand.u32 %v6170, 3
      %vm6175 = vcmp.lt.s32.totalorder %v6174, 2
      %vm6176 = vcmp.eq.s32.totalorder %v6174, 0
      %v6177 = vxor.u32 %v6172, 2147483648
      %v6178 = vsel %vm6176, %v6171, %v6177
      %vm6179 = vcmp.eq.s32.totalorder %v6174, 2
      %v6180 = vxor.u32 %v6171, 2147483648
      %v6181 = vsel %vm6179, %v6180, %v6172
      %v6182 = vsel %vm6175, %v6178, %v6181
      %v6183 = vsel %vm6173, nan, %v6182
      %v6184 = vand.u32 2147483647, %v2723
      %vm6185 = vcmp.le.f32.partialorder %v6184, 0.7853982
      %vm6186 = vcmp.lt.s32.totalorder %v2723, 0
      %v6187 = vand.u32 %v2723, 2139095040
      %v6188 = vshrl.u32 %v6187, 23
      %v6189 = vsub.s32 %v6188, 127
      %v6190 = vand.u32 2147483647, %v2723
      %v6191 = vand.u32 %v6190, 8388607
      %v6192 = vor.u32 %v6191, 8388608
      %v6193 = vsub.s32 0, %v6192
      %v6194 = vadd.s32 %v6189, 1
      %vm6195 = vcmp.gt.s32.totalorder %v6194, 0
      %v6196 = vsel %vm6195, %v6194, 0
      %v6197 = vshrl.u32 %v6196, 5
      %v6198 = vand.u32 %v6196, 31
      %v6199 = vsub.s32 32, %v6198
      %v6200 = vshrl.u32 683565275, %v6199
      %v6201 = vshll.u32 683565275, %v6198
      %v6202 = vshrl.u32 2475754826, %v6199
      %v6203 = vor.u32 %v6201, %v6202
      %v6204 = vshll.u32 2475754826, %v6198
      %v6205 = vshrl.u32 2131351028, %v6199
      %v6206 = vor.u32 %v6204, %v6205
      %v6207 = vshll.u32 2131351028, %v6198
      %v6208 = vshrl.u32 2102212464, %v6199
      %v6209 = vor.u32 %v6207, %v6208
      %v6210 = vshll.u32 2102212464, %v6198
      %v6211 = vshrl.u32 920167782, %v6199
      %v6212 = vor.u32 %v6210, %v6211
      %v6213 = vshll.u32 920167782, %v6198
      %v6214 = vshrl.u32 1326507024, %v6199
      %v6215 = vor.u32 %v6213, %v6214
      %vm6216 = vcmp.lt.s32.totalorder %v6197, 1
      %vm6217 = vcmp.lt.s32.totalorder %v6197, 2
      %vm6218 = vcmp.lt.s32.totalorder %v6197, 3
      %vm6219 = vcmp.lt.s32.totalorder %v6197, 4
      %v6220 = vsel %vm6216, %v6200, %v6203
      %v6221 = vsel %vm6219, %v6209, 2102212464
      %v6222 = vsel %vm6218, %v6206, %v6221
      %v6223 = vsel %vm6217, %v6220, %v6222
      %v6224 = vsel %vm6216, %v6203, %v6206
      %v6225 = vsel %vm6219, %v6212, 920167782
      %v6226 = vsel %vm6218, %v6209, %v6225
      %v6227 = vsel %vm6217, %v6224, %v6226
      %v6228 = vsel %vm6216, %v6206, %v6209
      %v6229 = vsel %vm6219, %v6215, 1326507024
      %v6230 = vsel %vm6218, %v6212, %v6229
      %v6231 = vsel %vm6217, %v6228, %v6230
      %v6232 = vshll.u32 %v6192, 8
      %v6233 = vmul.u32.u64.compose %v6232, %v6231
      %v6234 = vextract.low.u32 %v6233
      %v6235 = vextract.high.u32 %v6233
      %v6236 = vmul.u32.u64.compose %v6232, %v6227
      %v6237 = vextract.low.u32 %v6236
      %v6238 = vextract.high.u32 %v6236
      %v6239 = vmul.u32 %v6232, %v6223
      %v6240 = vadd.s32 %v6235, %v6237
      %vm6241 = vc.u32 %v6235, %v6237
      %v6242 = vadd.s32 %v6238, 1
      %v6243 = vsel %vm6241, %v6242, %v6238
      %v6244 = vadd.s32 %v6239, %v6243
      %v6245 = vadd.s32 %v6244, 536870912
      %v6246 = vshrl.u32 %v6245, 30
      %v6247 = vshll.u32 %v6246, 30
      %v6248 = vsub.s32 %v6244, %v6247
      %vm6249 = vcmp.lt.s32.totalorder %v6248, 0
      %v6250 = vsub.s32 0, %v6248
      %v6251 = vsel %vm6249, %v6250, %v6248
      %v6252 = vclz %v6251
      %v6253 = vsub.s32 %v6252, 2
      %vm6254 = vcmp.gt.s32.totalorder 0, %v6253
      %v6255 = vsel %vm6254, 0, %v6253
      %v6256 = vsub.s32 32, %v6255
      %v6257 = vshll.u32 %v6248, %v6255
      %v6258 = vshrl.u32 %v6240, %v6256
      %v6259 = vor.u32 %v6257, %v6258
      %v6260 = vsub.s32 4294967266, %v6255
      %v6261 = vadd.s32 %v6260, 127
      %v6262 = vshll.u32 %v6261, 23
      %v6263 = vor.u32 4788187, %v6262
      %v6264 = vand.u32 2147483647, %v6263
      %v6266 = vcvt.s32.f32 %v6259
      %v6267 = vmul.f32 %v6266, %v6264
      %v6268 = vxor.u32 %v6267, 2147483648
      %v6269 = vsel %vm6186, %v6268, %v6267
      %v6270 = vsub.s32 4, %v6246
      %v6271 = vsel %vm6186, %v6270, %v6246
      %v6272 = vsel %vm6185, %v2723, %v6269
      %v6273 = vsel %vm6185, 0, %v6271
      %v6274 = vcosq.f32.pop %v6272
      %v6275 = vsinq.f32.pop %v6272
      %vm6276 = vweird.f32 %v2723
      %v6277 = vand.u32 %v6273, 3
      %vm6278 = vcmp.lt.s32.totalorder %v6277, 2
      %vm6279 = vcmp.eq.s32.totalorder %v6277, 0
      %v6280 = vxor.u32 %v6275, 2147483648
      %v6281 = vsel %vm6279, %v6274, %v6280
      %vm6282 = vcmp.eq.s32.totalorder %v6277, 2
      %v6283 = vxor.u32 %v6274, 2147483648
      %v6284 = vsel %vm6282, %v6283, %v6275
      %v6285 = vsel %vm6278, %v6281, %v6284
      %v6286 = vsel %vm6276, nan, %v6285
      %v6287 = vand.u32 2147483647, %v2724
      %vm6288 = vcmp.le.f32.partialorder %v6287, 0.7853982
      %vm6289 = vcmp.lt.s32.totalorder %v2724, 0
      %v6290 = vand.u32 %v2724, 2139095040
      %v6291 = vshrl.u32 %v6290, 23
      %v6292 = vsub.s32 %v6291, 127
      %v6293 = vand.u32 2147483647, %v2724
      %v6294 = vand.u32 %v6293, 8388607
      %v6295 = vor.u32 %v6294, 8388608
      %v6296 = vsub.s32 0, %v6295
      %v6297 = vadd.s32 %v6292, 1
      %vm6298 = vcmp.gt.s32.totalorder %v6297, 0
      %v6299 = vsel %vm6298, %v6297, 0
      %v6300 = vshrl.u32 %v6299, 5
      %v6301 = vand.u32 %v6299, 31
      %v6302 = vsub.s32 32, %v6301
      %v6303 = vshrl.u32 683565275, %v6302
      %v6304 = vshll.u32 683565275, %v6301
      %v6305 = vshrl.u32 2475754826, %v6302
      %v6306 = vor.u32 %v6304, %v6305
      %v6307 = vshll.u32 2475754826, %v6301
      %v6308 = vshrl.u32 2131351028, %v6302
      %v6309 = vor.u32 %v6307, %v6308
      %v6310 = vshll.u32 2131351028, %v6301
      %v6311 = vshrl.u32 2102212464, %v6302
      %v6312 = vor.u32 %v6310, %v6311
      %v6313 = vshll.u32 2102212464, %v6301
      %v6314 = vshrl.u32 920167782, %v6302
      %v6315 = vor.u32 %v6313, %v6314
      %v6316 = vshll.u32 920167782, %v6301
      %v6317 = vshrl.u32 1326507024, %v6302
      %v6318 = vor.u32 %v6316, %v6317
      %vm6319 = vcmp.lt.s32.totalorder %v6300, 1
      %vm6320 = vcmp.lt.s32.totalorder %v6300, 2
      %vm6321 = vcmp.lt.s32.totalorder %v6300, 3
      %vm6322 = vcmp.lt.s32.totalorder %v6300, 4
      %v6323 = vsel %vm6319, %v6303, %v6306
      %v6324 = vsel %vm6322, %v6312, 2102212464
      %v6325 = vsel %vm6321, %v6309, %v6324
      %v6326 = vsel %vm6320, %v6323, %v6325
      %v6327 = vsel %vm6319, %v6306, %v6309
      %v6328 = vsel %vm6322, %v6315, 920167782
      %v6329 = vsel %vm6321, %v6312, %v6328
      %v6330 = vsel %vm6320, %v6327, %v6329
      %v6331 = vsel %vm6319, %v6309, %v6312
      %v6332 = vsel %vm6322, %v6318, 1326507024
      %v6333 = vsel %vm6321, %v6315, %v6332
      %v6334 = vsel %vm6320, %v6331, %v6333
      %v6335 = vshll.u32 %v6295, 8
      %v6336 = vmul.u32.u64.compose %v6335, %v6334
      %v6337 = vextract.low.u32 %v6336
      %v6338 = vextract.high.u32 %v6336
      %v6339 = vmul.u32.u64.compose %v6335, %v6330
      %v6340 = vextract.low.u32 %v6339
      %v6341 = vextract.high.u32 %v6339
      %v6342 = vmul.u32 %v6335, %v6326
      %v6343 = vadd.s32 %v6338, %v6340
      %vm6344 = vc.u32 %v6338, %v6340
      %v6345 = vadd.s32 %v6341, 1
      %v6346 = vsel %vm6344, %v6345, %v6341
      %v6347 = vadd.s32 %v6342, %v6346
      %v6348 = vadd.s32 %v6347, 536870912
      %v6349 = vshrl.u32 %v6348, 30
      %v6350 = vshll.u32 %v6349, 30
      %v6351 = vsub.s32 %v6347, %v6350
      %vm6352 = vcmp.lt.s32.totalorder %v6351, 0
      %v6353 = vsub.s32 0, %v6351
      %v6354 = vsel %vm6352, %v6353, %v6351
      %v6355 = vclz %v6354
      %v6356 = vsub.s32 %v6355, 2
      %vm6357 = vcmp.gt.s32.totalorder 0, %v6356
      %v6358 = vsel %vm6357, 0, %v6356
      %v6359 = vsub.s32 32, %v6358
      %v6360 = vshll.u32 %v6351, %v6358
      %v6361 = vshrl.u32 %v6343, %v6359
      %v6362 = vor.u32 %v6360, %v6361
      %v6363 = vsub.s32 4294967266, %v6358
      %v6364 = vadd.s32 %v6363, 127
      %v6365 = vshll.u32 %v6364, 23
      %v6366 = vor.u32 4788187, %v6365
      %v6367 = vand.u32 2147483647, %v6366
      %v6369 = vcvt.s32.f32 %v6362
      %v6370 = vmul.f32 %v6369, %v6367
      %v6371 = vxor.u32 %v6370, 2147483648
      %v6372 = vsel %vm6289, %v6371, %v6370
      %v6373 = vsub.s32 4, %v6349
      %v6374 = vsel %vm6289, %v6373, %v6349
      %v6375 = vsel %vm6288, %v2724, %v6372
      %v6376 = vsel %vm6288, 0, %v6374
      %v6377 = vcosq.f32.pop %v6375
      %v6378 = vsinq.f32.pop %v6375
      %vm6379 = vweird.f32 %v2724
      %v6380 = vand.u32 %v6376, 3
      %vm6381 = vcmp.lt.s32.totalorder %v6380, 2
      %vm6382 = vcmp.eq.s32.totalorder %v6380, 0
      %v6383 = vxor.u32 %v6378, 2147483648
      %v6384 = vsel %vm6382, %v6377, %v6383
      %vm6385 = vcmp.eq.s32.totalorder %v6380, 2
      %v6386 = vxor.u32 %v6377, 2147483648
      %v6387 = vsel %vm6385, %v6386, %v6378
      %v6388 = vsel %vm6381, %v6384, %v6387
      %v6389 = vsel %vm6379, nan, %v6388
      %v6390 = vand.u32 2147483647, %v2725
      %vm6391 = vcmp.le.f32.partialorder %v6390, 0.7853982
      %vm6392 = vcmp.lt.s32.totalorder %v2725, 0
      %v6393 = vand.u32 %v2725, 2139095040
      %v6394 = vshrl.u32 %v6393, 23
      %v6395 = vsub.s32 %v6394, 127
      %v6396 = vand.u32 2147483647, %v2725
      %v6397 = vand.u32 %v6396, 8388607
      %v6398 = vor.u32 %v6397, 8388608
      %v6399 = vsub.s32 0, %v6398
      %v6400 = vadd.s32 %v6395, 1
      %vm6401 = vcmp.gt.s32.totalorder %v6400, 0
      %v6402 = vsel %vm6401, %v6400, 0
      %v6403 = vshrl.u32 %v6402, 5
      %v6404 = vand.u32 %v6402, 31
      %v6405 = vsub.s32 32, %v6404
      %v6406 = vshrl.u32 683565275, %v6405
      %v6407 = vshll.u32 683565275, %v6404
      %v6408 = vshrl.u32 2475754826, %v6405
      %v6409 = vor.u32 %v6407, %v6408
      %v6410 = vshll.u32 2475754826, %v6404
      %v6411 = vshrl.u32 2131351028, %v6405
      %v6412 = vor.u32 %v6410, %v6411
      %v6413 = vshll.u32 2131351028, %v6404
      %v6414 = vshrl.u32 2102212464, %v6405
      %v6415 = vor.u32 %v6413, %v6414
      %v6416 = vshll.u32 2102212464, %v6404
      %v6417 = vshrl.u32 920167782, %v6405
      %v6418 = vor.u32 %v6416, %v6417
      %v6419 = vshll.u32 920167782, %v6404
      %v6420 = vshrl.u32 1326507024, %v6405
      %v6421 = vor.u32 %v6419, %v6420
      %vm6422 = vcmp.lt.s32.totalorder %v6403, 1
      %vm6423 = vcmp.lt.s32.totalorder %v6403, 2
      %vm6424 = vcmp.lt.s32.totalorder %v6403, 3
      %vm6425 = vcmp.lt.s32.totalorder %v6403, 4
      %v6426 = vsel %vm6422, %v6406, %v6409
      %v6427 = vsel %vm6425, %v6415, 2102212464
      %v6428 = vsel %vm6424, %v6412, %v6427
      %v6429 = vsel %vm6423, %v6426, %v6428
      %v6430 = vsel %vm6422, %v6409, %v6412
      %v6431 = vsel %vm6425, %v6418, 920167782
      %v6432 = vsel %vm6424, %v6415, %v6431
      %v6433 = vsel %vm6423, %v6430, %v6432
      %v6434 = vsel %vm6422, %v6412, %v6415
      %v6435 = vsel %vm6425, %v6421, 1326507024
      %v6436 = vsel %vm6424, %v6418, %v6435
      %v6437 = vsel %vm6423, %v6434, %v6436
      %v6438 = vshll.u32 %v6398, 8
      %v6439 = vmul.u32.u64.compose %v6438, %v6437
      %v6440 = vextract.low.u32 %v6439
      %v6441 = vextract.high.u32 %v6439
      %v6442 = vmul.u32.u64.compose %v6438, %v6433
      %v6443 = vextract.low.u32 %v6442
      %v6444 = vextract.high.u32 %v6442
      %v6445 = vmul.u32 %v6438, %v6429
      %v6446 = vadd.s32 %v6441, %v6443
      %vm6447 = vc.u32 %v6441, %v6443
      %v6448 = vadd.s32 %v6444, 1
      %v6449 = vsel %vm6447, %v6448, %v6444
      %v6450 = vadd.s32 %v6445, %v6449
      %v6451 = vadd.s32 %v6450, 536870912
      %v6452 = vshrl.u32 %v6451, 30
      %v6453 = vshll.u32 %v6452, 30
      %v6454 = vsub.s32 %v6450, %v6453
      %vm6455 = vcmp.lt.s32.totalorder %v6454, 0
      %v6456 = vsub.s32 0, %v6454
      %v6457 = vsel %vm6455, %v6456, %v6454
      %v6458 = vclz %v6457
      %v6459 = vsub.s32 %v6458, 2
      %vm6460 = vcmp.gt.s32.totalorder 0, %v6459
      %v6461 = vsel %vm6460, 0, %v6459
      %v6462 = vsub.s32 32, %v6461
      %v6463 = vshll.u32 %v6454, %v6461
      %v6464 = vshrl.u32 %v6446, %v6462
      %v6465 = vor.u32 %v6463, %v6464
      %v6466 = vsub.s32 4294967266, %v6461
      %v6467 = vadd.s32 %v6466, 127
      %v6468 = vshll.u32 %v6467, 23
      %v6469 = vor.u32 4788187, %v6468
      %v6470 = vand.u32 2147483647, %v6469
      %v6472 = vcvt.s32.f32 %v6465
      %v6473 = vmul.f32 %v6472, %v6470
      %v6474 = vxor.u32 %v6473, 2147483648
      %v6475 = vsel %vm6392, %v6474, %v6473
      %v6476 = vsub.s32 4, %v6452
      %v6477 = vsel %vm6392, %v6476, %v6452
      %v6478 = vsel %vm6391, %v2725, %v6475
      %v6479 = vsel %vm6391, 0, %v6477
      %v6480 = vcosq.f32.pop %v6478
      %v6481 = vsinq.f32.pop %v6478
      %vm6482 = vweird.f32 %v2725
      %v6483 = vand.u32 %v6479, 3
      %vm6484 = vcmp.lt.s32.totalorder %v6483, 2
      %vm6485 = vcmp.eq.s32.totalorder %v6483, 0
      %v6486 = vxor.u32 %v6481, 2147483648
      %v6487 = vsel %vm6485, %v6480, %v6486
      %vm6488 = vcmp.eq.s32.totalorder %v6483, 2
      %v6489 = vxor.u32 %v6480, 2147483648
      %v6490 = vsel %vm6488, %v6489, %v6481
      %v6491 = vsel %vm6484, %v6487, %v6490
      %v6492 = vsel %vm6482, nan, %v6491
      %v6493 = vpack.c.bf16 %v5050, %v4947
      %v6494 = vpack.c.bf16 %v5256, %v5153
      %v6495 = vpack.c.bf16 %v5462, %v5359
      %v6496 = vpack.c.bf16 %v5668, %v5565
      %v6497 = vpack.c.bf16 %v5874, %v5771
      %v6498 = vpack.c.bf16 %v6080, %v5977
      %v6499 = vpack.c.bf16 %v6286, %v6183
      %v6500 = vpack.c.bf16 %v6492, %v6389
      %v6501 = vld [vmem:[%s11] sm:$0xf]
      %v6502 = vld [vmem:[%s11 + $0x4] sm:$0xf]
      %v6503 = vld [vmem:[%s11 + $0x8] sm:$0xf]
      %v6504 = vld [vmem:[%s11 + $0xc] sm:$0xf]
      %v6509 = vunpack.c.l.b16 %v6501
      %v6510 = vunpack.c.l.b16 %v6502
      %v6511 = vunpack.c.l.b16 %v6503
      %v6512 = vunpack.c.l.b16 %v6504
      %v6513 = vpack.c.b16 %v6510, %v6509
      %v6514 = vpack.c.b16 %v6512, %v6511
      %v6518 = vsel %vm4707, %v6493, 0
      %v6521 = vsel %vm4707, %v6494, 0
      %v6524 = vsel %vm4707, %v6495, 0
      %v6527 = vsel %vm4707, %v6496, 0
      %v6530 = vsel %vm4707, %v6497, 0
      %v6533 = vsel %vm4707, %v6498, 0
      %v6536 = vsel %vm4707, %v6499, 0
      %v6539 = vsel %vm4707, %v6500, 0
      %6541 = vmatprep.subr.bf16.mxu0 0
      %6542 = vmatpush1.bf16.msra.mxu0 %v6513
      %6543 = vmatprep.subr.bf16.mxu0 0
      %6544 = vmatpush1.bf16.msra.mxu0 %v6514
      %6545 = vmatprep.subr.bf16.mxu0 0
      %6546 = vmatpush1.bf16.msra.mxu0 0
      %6547 = vmatprep.subr.bf16.mxu0 0
      %6548 = vmatpush1.bf16.msra.mxu0 0
      %6549 = vmatprep.subr.bf16.mxu0 0
      %6550 = vmatpush1.bf16.msra.mxu0 0
      %6551 = vmatprep.subr.bf16.mxu0 0
      %6552 = vmatpush1.bf16.msra.mxu0 0
      %6553 = vmatprep.subr.bf16.mxu0 0
      %6554 = vmatpush1.bf16.msra.mxu0 0
      %6555 = vmatprep.subr.bf16.mxu0 0
      %6556 = vmatpush1.bf16.msra.mxu0 0
      %6557 = vmatprep.subr.bf16.mxu0 0
      %6558 = vmatpush1.bf16.msra.mxu0 0
      %6559 = vmatprep.subr.bf16.mxu0 0
      %6560 = vmatpush1.bf16.msra.mxu0 0
      %6561 = vmatprep.subr.bf16.mxu0 0
      %6562 = vmatpush1.bf16.msra.mxu0 0
      %6563 = vmatprep.subr.bf16.mxu0 0
      %6564 = vmatpush1.bf16.msra.mxu0 0
      %6565 = vmatprep.subr.bf16.mxu0 0
      %6566 = vmatpush1.bf16.msra.mxu0 0
      %6567 = vmatprep.subr.bf16.mxu0 0
      %6568 = vmatpush1.bf16.msra.mxu0 0
      %6569 = vmatprep.subr.bf16.mxu0 0
      %6570 = vmatpush1.bf16.msra.mxu0 0
      %6571 = vmatprep.subr.bf16.mxu0 0
      %6572 = vmatpush1.bf16.msra.mxu0 0
      %6573 = vmatprep.mubr.bf16.mxu0 0
      %6574 = vmatmul.mubr.bf16.gmra.mrb[0].mxu0 %v6518
      %v6575 = vpop.f32.mrb[0].mxu0
      %v6576 = vadd.f32 0.0, %v6575
      %v6577 = vpop.f32.mrb[0].mxu0
      %v6578 = vpop.f32.mrb[0].mxu0
      %v6579 = vadd.f32 0.0, %v6578
      %v6580 = vpop.f32.mrb[0].mxu0
      %6581 = vmatprep.mubr.bf16.mxu0 0
      %6582 = vmatmul.mubr.bf16.gmra.mrb[0].mxu0 %v6521
      %v6583 = vpop.f32.mrb[0].mxu0
      %v6584 = vadd.f32 0.0, %v6583
      %v6585 = vpop.f32.mrb[0].mxu0
      %v6586 = vpop.f32.mrb[0].mxu0
      %v6587 = vadd.f32 0.0, %v6586
      %v6588 = vpop.f32.mrb[0].mxu0
      %6589 = vmatprep.mubr.bf16.mxu0 0
      %6590 = vmatmul.mubr.bf16.gmra.mrb[0].mxu0 %v6524
      %v6591 = vpop.f32.mrb[0].mxu0
      %v6592 = vadd.f32 0.0, %v6591
      %v6593 = vpop.f32.mrb[0].mxu0
      %v6594 = vpop.f32.mrb[0].mxu0
      %v6595 = vadd.f32 0.0, %v6594
      %v6596 = vpop.f32.mrb[0].mxu0
      %6597 = vmatprep.mubr.bf16.mxu0 0
      %6598 = vmatmul.mubr.bf16.gmra.mrb[0].mxu0 %v6527
      %v6599 = vpop.f32.mrb[0].mxu0
      %v6600 = vadd.f32 0.0, %v6599
      %v6601 = vpop.f32.mrb[0].mxu0
      %v6602 = vpop.f32.mrb[0].mxu0
      %v6603 = vadd.f32 0.0, %v6602
      %v6604 = vpop.f32.mrb[0].mxu0
      %6605 = vmatprep.mubr.bf16.mxu0 0
      %6606 = vmatmul.mubr.bf16.gmra.mrb[0].mxu0 %v6530
      %v6607 = vpop.f32.mrb[0].mxu0
      %v6608 = vadd.f32 0.0, %v6607
      %v6609 = vpop.f32.mrb[0].mxu0
      %v6610 = vpop.f32.mrb[0].mxu0
      %v6611 = vadd.f32 0.0, %v6610
      %v6612 = vpop.f32.mrb[0].mxu0
      %6613 = vmatprep.mubr.bf16.mxu0 0
      %6614 = vmatmul.mubr.bf16.gmra.mrb[0].mxu0 %v6533
      %v6615 = vpop.f32.mrb[0].mxu0
      %v6616 = vadd.f32 0.0, %v6615
      %v6617 = vpop.f32.mrb[0].mxu0
      %v6618 = vpop.f32.mrb[0].mxu0
      %v6619 = vadd.f32 0.0, %v6618
      %v6620 = vpop.f32.mrb[0].mxu0
      %6621 = vmatprep.mubr.bf16.mxu0 0
      %6622 = vmatmul.mubr.bf16.gmra.mrb[0].mxu0 %v6536
      %v6623 = vpop.f32.mrb[0].mxu0
      %v6624 = vadd.f32 0.0, %v6623
      %v6625 = vpop.f32.mrb[0].mxu0
      %v6626 = vpop.f32.mrb[0].mxu0
      %v6627 = vadd.f32 0.0, %v6626
      %v6628 = vpop.f32.mrb[0].mxu0
      %6629 = vmatprep.mubr.bf16.mxu0 0
      %6630 = vmatmul.mubr.bf16.gmra.mrb[0].mxu0 %v6539
      %v6631 = vpop.f32.mrb[0].mxu0
      %v6632 = vadd.f32 0.0, %v6631
      %v6633 = vpop.f32.mrb[0].mxu0
      %v6634 = vpop.f32.mrb[0].mxu0
      %v6635 = vadd.f32 0.0, %v6634
      %v6636 = vpop.f32.mrb[0].mxu0
      %6637 = vdwg.mxu0
      %v6638 = vadd.f32 %v4829, %v6576
      %v6639 = vadd.f32 %v4830, %v6579
      %v6640 = vadd.f32 %v4831, %v6584
      %v6641 = vadd.f32 %v4832, %v6587
      %v6642 = vadd.f32 %v4833, %v6592
      %v6643 = vadd.f32 %v4834, %v6595
      %v6644 = vadd.f32 %v4835, %v6600
      %v6645 = vadd.f32 %v4836, %v6603
      %v6646 = vadd.f32 %v4837, %v6608
      %v6647 = vadd.f32 %v4838, %v6611
      %v6648 = vadd.f32 %v4839, %v6616
      %v6649 = vadd.f32 %v4840, %v6619
      %v6650 = vadd.f32 %v4841, %v6624
      %v6651 = vadd.f32 %v4842, %v6627
      %v6652 = vadd.f32 %v4843, %v6632
      %v6653 = vadd.f32 %v4844, %v6635
      %v6654 = vmax.f32 %v6638, 0.0
      %v6655 = vmax.f32 %v6639, 0.0
      %v6656 = vmax.f32 %v6640, 0.0
      %v6657 = vmax.f32 %v6641, 0.0
      %v6658 = vmax.f32 %v6642, 0.0
      %v6659 = vmax.f32 %v6643, 0.0
      %v6660 = vmax.f32 %v6644, 0.0
      %v6661 = vmax.f32 %v6645, 0.0
      %v6662 = vmax.f32 %v6646, 0.0
      %v6663 = vmax.f32 %v6647, 0.0
      %v6664 = vmax.f32 %v6648, 0.0
      %v6665 = vmax.f32 %v6649, 0.0
      %v6666 = vmax.f32 %v6650, 0.0
      %v6667 = vmax.f32 %v6651, 0.0
      %v6668 = vmax.f32 %v6652, 0.0
      %v6669 = vmax.f32 %v6653, 0.0
      %v6670 = vpack.c.bf16 %v6655, %v6654
      %v6671 = vpack.c.bf16 %v6657, %v6656
      %v6672 = vpack.c.bf16 %v6659, %v6658
      %v6673 = vpack.c.bf16 %v6661, %v6660
      %v6674 = vpack.c.bf16 %v6663, %v6662
      %v6675 = vpack.c.bf16 %v6665, %v6664
      %v6676 = vpack.c.bf16 %v6667, %v6666
      %v6677 = vpack.c.bf16 %v6669, %v6668
      %v6678 = vld [vmem:[%s13] sm:$0xf]
      %v6679 = vld [vmem:[%s13 + $0x4] sm:$0xf]
      %v6680 = vld [vmem:[%s13 + $0x8] sm:$0xf]
      %v6681 = vld [vmem:[%s13 + $0xc] sm:$0xf]
      %v6682 = vld [vmem:[%s13 + $0x10] sm:$0xf]
      %v6683 = vld [vmem:[%s13 + $0x14] sm:$0xf]
      %v6684 = vld [vmem:[%s13 + $0x18] sm:$0xf]
      %v6685 = vld [vmem:[%s13 + $0x1c] sm:$0xf]
      %v6686 = vld [vmem:[%s14] sm:$0x1]
      %v6688 = vlaneseq
      %v6689 = vshrl.u32 %v6688, 7
      %v6690 = vsub.s32 0, %v6689
      %v6691 = vrot.slane %v6686, %v6690
      %v6701 = vunpack.c.l.b16 %v6678
      %v6702 = vunpack.c.l.b16 %v6679
      %v6703 = vunpack.c.l.b16 %v6680
      %v6704 = vunpack.c.l.b16 %v6681
      %v6705 = vunpack.c.l.b16 %v6682
      %v6706 = vunpack.c.l.b16 %v6683
      %v6707 = vunpack.c.l.b16 %v6684
      %v6708 = vunpack.c.l.b16 %v6685
      %v6709 = vpack.c.b16 %v6702, %v6701
      %v6710 = vpack.c.b16 %v6704, %v6703
      %v6711 = vpack.c.b16 %v6706, %v6705
      %v6712 = vpack.c.b16 %v6708, %v6707
      %v6718 = vsel %vm2387, %v6670, 0
      %v6721 = vsel %vm2387, %v6671, 0
      %v6724 = vsel %vm2387, %v6672, 0
      %v6727 = vsel %vm2387, %v6673, 0
      %v6730 = vsel %vm2387, %v6674, 0
      %v6733 = vsel %vm2387, %v6675, 0
      %v6736 = vsel %vm2387, %v6676, 0
      %v6739 = vsel %vm2387, %v6677, 0
      %6741 = vmatprep.subr.bf16.mxu0 0
      %6742 = vmatpush1.bf16.msra.mxu0 %v6709
      %6743 = vmatprep.subr.bf16.mxu0 0
      %6744 = vmatpush1.bf16.msra.mxu0 %v6710
      %6745 = vmatprep.subr.bf16.mxu0 0
      %6746 = vmatpush1.bf16.msra.mxu0 %v6711
      %6747 = vmatprep.subr.bf16.mxu0 0
      %6748 = vmatpush1.bf16.msra.mxu0 %v6712
      %6749 = vmatprep.subr.bf16.mxu0 0
      %6750 = vmatpush1.bf16.msra.mxu0 0
      %6751 = vmatprep.subr.bf16.mxu0 0
      %6752 = vmatpush1.bf16.msra.mxu0 0
      %6753 = vmatprep.subr.bf16.mxu0 0
      %6754 = vmatpush1.bf16.msra.mxu0 0
      %6755 = vmatprep.subr.bf16.mxu0 0
      %6756 = vmatpush1.bf16.msra.mxu0 0
      %6757 = vmatprep.subr.bf16.mxu0 0
      %6758 = vmatpush1.bf16.msra.mxu0 0
      %6759 = vmatprep.subr.bf16.mxu0 0
      %6760 = vmatpush1.bf16.msra.mxu0 0
      %6761 = vmatprep.subr.bf16.mxu0 0
      %6762 = vmatpush1.bf16.msra.mxu0 0
      %6763 = vmatprep.subr.bf16.mxu0 0
      %6764 = vmatpush1.bf16.msra.mxu0 0
      %6765 = vmatprep.subr.bf16.mxu0 0
      %6766 = vmatpush1.bf16.msra.mxu0 0
      %6767 = vmatprep.subr.bf16.mxu0 0
      %6768 = vmatpush1.bf16.msra.mxu0 0
      %6769 = vmatprep.subr.bf16.mxu0 0
      %6770 = vmatpush1.bf16.msra.mxu0 0
      %6771 = vmatprep.subr.bf16.mxu0 0
      %6772 = vmatpush1.bf16.msra.mxu0 0
      %6773 = vmatprep.mubr.bf16.mxu0 0
      %6774 = vmatmul.mubr.bf16.gmra.mrb[0].mxu0 %v6718
      %v6775 = vpop.f32.mrb[0].mxu0
      %v6776 = vadd.f32 %v6691, %v6775
      %v6777 = vpop.f32.mrb[0].mxu0
      %v6778 = vpop.f32.mrb[0].mxu0
      %v6779 = vadd.f32 %v6691, %v6778
      %v6780 = vpop.f32.mrb[0].mxu0
      %6781 = vmatprep.mubr.bf16.mxu0 0
      %6782 = vmatmul.mubr.bf16.gmra.mrb[0].mxu0 %v6721
      %v6783 = vpop.f32.mrb[0].mxu0
      %v6784 = vadd.f32 %v6691, %v6783
      %v6785 = vpop.f32.mrb[0].mxu0
      %v6786 = vpop.f32.mrb[0].mxu0
      %v6787 = vadd.f32 %v6691, %v6786
      %v6788 = vpop.f32.mrb[0].mxu0
      %6789 = vmatprep.mubr.bf16.mxu0 0
      %6790 = vmatmul.mubr.bf16.gmra.mrb[0].mxu0 %v6724
      %v6791 = vpop.f32.mrb[0].mxu0
      %v6792 = vadd.f32 %v6691, %v6791
      %v6793 = vpop.f32.mrb[0].mxu0
      %v6794 = vpop.f32.mrb[0].mxu0
      %v6795 = vadd.f32 %v6691, %v6794
      %v6796 = vpop.f32.mrb[0].mxu0
      %6797 = vmatprep.mubr.bf16.mxu0 0
      %6798 = vmatmul.mubr.bf16.gmra.mrb[0].mxu0 %v6727
      %v6799 = vpop.f32.mrb[0].mxu0
      %v6800 = vadd.f32 %v6691, %v6799
      %v6801 = vpop.f32.mrb[0].mxu0
      %v6802 = vpop.f32.mrb[0].mxu0
      %v6803 = vadd.f32 %v6691, %v6802
      %v6804 = vpop.f32.mrb[0].mxu0
      %6805 = vmatprep.mubr.bf16.mxu0 0
      %6806 = vmatmul.mubr.bf16.gmra.mrb[0].mxu0 %v6730
      %v6807 = vpop.f32.mrb[0].mxu0
      %v6808 = vadd.f32 %v6691, %v6807
      %v6809 = vpop.f32.mrb[0].mxu0
      %v6810 = vpop.f32.mrb[0].mxu0
      %v6811 = vadd.f32 %v6691, %v6810
      %v6812 = vpop.f32.mrb[0].mxu0
      %6813 = vmatprep.mubr.bf16.mxu0 0
      %6814 = vmatmul.mubr.bf16.gmra.mrb[0].mxu0 %v6733
      %v6815 = vpop.f32.mrb[0].mxu0
      %v6816 = vadd.f32 %v6691, %v6815
      %v6817 = vpop.f32.mrb[0].mxu0
      %v6818 = vpop.f32.mrb[0].mxu0
      %v6819 = vadd.f32 %v6691, %v6818
      %v6820 = vpop.f32.mrb[0].mxu0
      %6821 = vmatprep.mubr.bf16.mxu0 0
      %6822 = vmatmul.mubr.bf16.gmra.mrb[0].mxu0 %v6736
      %v6823 = vpop.f32.mrb[0].mxu0
      %v6824 = vadd.f32 %v6691, %v6823
      %v6825 = vpop.f32.mrb[0].mxu0
      %v6826 = vpop.f32.mrb[0].mxu0
      %v6827 = vadd.f32 %v6691, %v6826
      %v6828 = vpop.f32.mrb[0].mxu0
      %6829 = vmatprep.mubr.bf16.mxu0 0
      %6830 = vmatmul.mubr.bf16.gmra.mrb[0].mxu0 %v6739
      %v6831 = vpop.f32.mrb[0].mxu0
      %v6832 = vadd.f32 %v6691, %v6831
      %v6833 = vpop.f32.mrb[0].mxu0
      %v6834 = vpop.f32.mrb[0].mxu0
      %v6835 = vadd.f32 %v6691, %v6834
      %v6836 = vpop.f32.mrb[0].mxu0
      %6837 = vdwg.mxu0
      %v6838 = vmax.f32 %v6776, 0.0
      %v6839 = vmax.f32 %v6779, 0.0
      %v6840 = vmax.f32 %v6784, 0.0
      %v6841 = vmax.f32 %v6787, 0.0
      %v6842 = vmax.f32 %v6792, 0.0
      %v6843 = vmax.f32 %v6795, 0.0
      %v6844 = vmax.f32 %v6800, 0.0
      %v6845 = vmax.f32 %v6803, 0.0
      %v6846 = vmax.f32 %v6808, 0.0
      %v6847 = vmax.f32 %v6811, 0.0
      %v6848 = vmax.f32 %v6816, 0.0
      %v6849 = vmax.f32 %v6819, 0.0
      %v6850 = vmax.f32 %v6824, 0.0
      %v6851 = vmax.f32 %v6827, 0.0
      %v6852 = vmax.f32 %v6832, 0.0
      %v6853 = vmax.f32 %v6835, 0.0
      %v6854 = vpack.c.bf16 %v6839, %v6838
      %v6855 = vpack.c.bf16 %v6841, %v6840
      %v6856 = vpack.c.bf16 %v6843, %v6842
      %v6857 = vpack.c.bf16 %v6845, %v6844
      %v6858 = vpack.c.bf16 %v6847, %v6846
      %v6859 = vpack.c.bf16 %v6849, %v6848
      %v6860 = vpack.c.bf16 %v6851, %v6850
      %v6861 = vpack.c.bf16 %v6853, %v6852
      %v6862 = vld [vmem:[%s15] sm:$0xf]
      %v6863 = vld [vmem:[%s15 + $0x4] sm:$0xf]
      %v6864 = vld [vmem:[%s15 + $0x8] sm:$0xf]
      %v6865 = vld [vmem:[%s15 + $0xc] sm:$0xf]
      %v6866 = vld [vmem:[%s15 + $0x10] sm:$0xf]
      %v6867 = vld [vmem:[%s15 + $0x14] sm:$0xf]
      %v6868 = vld [vmem:[%s15 + $0x18] sm:$0xf]
      %v6869 = vld [vmem:[%s15 + $0x1c] sm:$0xf]
      %v6870 = vld [vmem:[%s16] sm:$0x1]
      %v6872 = vlaneseq
      %v6873 = vshrl.u32 %v6872, 7
      %v6874 = vsub.s32 0, %v6873
      %v6875 = vrot.slane %v6870, %v6874
      %v6885 = vunpack.c.l.b16 %v6862
      %v6886 = vunpack.c.l.b16 %v6863
      %v6887 = vunpack.c.l.b16 %v6864
      %v6888 = vunpack.c.l.b16 %v6865
      %v6889 = vunpack.c.l.b16 %v6866
      %v6890 = vunpack.c.l.b16 %v6867
      %v6891 = vunpack.c.l.b16 %v6868
      %v6892 = vunpack.c.l.b16 %v6869
      %v6893 = vpack.c.b16 %v6886, %v6885
      %v6894 = vpack.c.b16 %v6888, %v6887
      %v6895 = vpack.c.b16 %v6890, %v6889
      %v6896 = vpack.c.b16 %v6892, %v6891
      %v6902 = vsel %vm2387, %v6854, 0
      %v6905 = vsel %vm2387, %v6855, 0
      %v6908 = vsel %vm2387, %v6856, 0
      %v6911 = vsel %vm2387, %v6857, 0
      %v6914 = vsel %vm2387, %v6858, 0
      %v6917 = vsel %vm2387, %v6859, 0
      %v6920 = vsel %vm2387, %v6860, 0
      %v6923 = vsel %vm2387, %v6861, 0
      %6925 = vmatprep.subr.bf16.mxu0 0
      %6926 = vmatpush1.bf16.msra.mxu0 %v6893
      %6927 = vmatprep.subr.bf16.mxu0 0
      %6928 = vmatpush1.bf16.msra.mxu0 %v6894
      %6929 = vmatprep.subr.bf16.mxu0 0
      %6930 = vmatpush1.bf16.msra.mxu0 %v6895
      %6931 = vmatprep.subr.bf16.mxu0 0
      %6932 = vmatpush1.bf16.msra.mxu0 %v6896
      %6933 = vmatprep.subr.bf16.mxu0 0
      %6934 = vmatpush1.bf16.msra.mxu0 0
      %6935 = vmatprep.subr.bf16.mxu0 0
      %6936 = vmatpush1.bf16.msra.mxu0 0
      %6937 = vmatprep.subr.bf16.mxu0 0
      %6938 = vmatpush1.bf16.msra.mxu0 0
      %6939 = vmatprep.subr.bf16.mxu0 0
      %6940 = vmatpush1.bf16.msra.mxu0 0
      %6941 = vmatprep.subr.bf16.mxu0 0
      %6942 = vmatpush1.bf16.msra.mxu0 0
      %6943 = vmatprep.subr.bf16.mxu0 0
      %6944 = vmatpush1.bf16.msra.mxu0 0
      %6945 = vmatprep.subr.bf16.mxu0 0
      %6946 = vmatpush1.bf16.msra.mxu0 0
      %6947 = vmatprep.subr.bf16.mxu0 0
      %6948 = vmatpush1.bf16.msra.mxu0 0
      %6949 = vmatprep.subr.bf16.mxu0 0
      %6950 = vmatpush1.bf16.msra.mxu0 0
      %6951 = vmatprep.subr.bf16.mxu0 0
      %6952 = vmatpush1.bf16.msra.mxu0 0
      %6953 = vmatprep.subr.bf16.mxu0 0
      %6954 = vmatpush1.bf16.msra.mxu0 0
      %6955 = vmatprep.subr.bf16.mxu0 0
      %6956 = vmatpush1.bf16.msra.mxu0 0
      %6957 = vmatprep.mubr.bf16.mxu0 0
      %6958 = vmatmul.mubr.bf16.gmra.mrb[0].mxu0 %v6902
      %v6959 = vpop.f32.mrb[0].mxu0
      %v6960 = vadd.f32 %v6875, %v6959
      %v6961 = vpop.f32.mrb[0].mxu0
      %v6962 = vpop.f32.mrb[0].mxu0
      %v6963 = vadd.f32 %v6875, %v6962
      %v6964 = vpop.f32.mrb[0].mxu0
      %6965 = vmatprep.mubr.bf16.mxu0 0
      %6966 = vmatmul.mubr.bf16.gmra.mrb[0].mxu0 %v6905
      %v6967 = vpop.f32.mrb[0].mxu0
      %v6968 = vadd.f32 %v6875, %v6967
      %v6969 = vpop.f32.mrb[0].mxu0
      %v6970 = vpop.f32.mrb[0].mxu0
      %v6971 = vadd.f32 %v6875, %v6970
      %v6972 = vpop.f32.mrb[0].mxu0
      %6973 = vmatprep.mubr.bf16.mxu0 0
      %6974 = vmatmul.mubr.bf16.gmra.mrb[0].mxu0 %v6908
      %v6975 = vpop.f32.mrb[0].mxu0
      %v6976 = vadd.f32 %v6875, %v6975
      %v6977 = vpop.f32.mrb[0].mxu0
      %v6978 = vpop.f32.mrb[0].mxu0
      %v6979 = vadd.f32 %v6875, %v6978
      %v6980 = vpop.f32.mrb[0].mxu0
      %6981 = vmatprep.mubr.bf16.mxu0 0
      %6982 = vmatmul.mubr.bf16.gmra.mrb[0].mxu0 %v6911
      %v6983 = vpop.f32.mrb[0].mxu0
      %v6984 = vadd.f32 %v6875, %v6983
      %v6985 = vpop.f32.mrb[0].mxu0
      %v6986 = vpop.f32.mrb[0].mxu0
      %v6987 = vadd.f32 %v6875, %v6986
      %v6988 = vpop.f32.mrb[0].mxu0
      %6989 = vmatprep.mubr.bf16.mxu0 0
      %6990 = vmatmul.mubr.bf16.gmra.mrb[0].mxu0 %v6914
      %v6991 = vpop.f32.mrb[0].mxu0
      %v6992 = vadd.f32 %v6875, %v6991
      %v6993 = vpop.f32.mrb[0].mxu0
      %v6994 = vpop.f32.mrb[0].mxu0
      %v6995 = vadd.f32 %v6875, %v6994
      %v6996 = vpop.f32.mrb[0].mxu0
      %6997 = vmatprep.mubr.bf16.mxu0 0
      %6998 = vmatmul.mubr.bf16.gmra.mrb[0].mxu0 %v6917
      %v6999 = vpop.f32.mrb[0].mxu0
      %v7000 = vadd.f32 %v6875, %v6999
      %v7001 = vpop.f32.mrb[0].mxu0
      %v7002 = vpop.f32.mrb[0].mxu0
      %v7003 = vadd.f32 %v6875, %v7002
      %v7004 = vpop.f32.mrb[0].mxu0
      %7005 = vmatprep.mubr.bf16.mxu0 0
      %7006 = vmatmul.mubr.bf16.gmra.mrb[0].mxu0 %v6920
      %v7007 = vpop.f32.mrb[0].mxu0
      %v7008 = vadd.f32 %v6875, %v7007
      %v7009 = vpop.f32.mrb[0].mxu0
      %v7010 = vpop.f32.mrb[0].mxu0
      %v7011 = vadd.f32 %v6875, %v7010
      %v7012 = vpop.f32.mrb[0].mxu0
      %7013 = vmatprep.mubr.bf16.mxu0 0
      %7014 = vmatmul.mubr.bf16.gmra.mrb[0].mxu0 %v6923
      %v7015 = vpop.f32.mrb[0].mxu0
      %v7016 = vadd.f32 %v6875, %v7015
      %v7017 = vpop.f32.mrb[0].mxu0
      %v7018 = vpop.f32.mrb[0].mxu0
      %v7019 = vadd.f32 %v6875, %v7018
      %v7020 = vpop.f32.mrb[0].mxu0
      %7021 = vdwg.mxu0
      %vm7022 = vcmp.gt.f32.partialorder %v575, 0.5
      %vm7023 = vcmp.gt.f32.partialorder %v576, 0.5
      %vm7024 = vcmp.gt.f32.partialorder %v577, 0.5
      %vm7025 = vcmp.gt.f32.partialorder %v578, 0.5
      %vm7026 = vcmp.gt.f32.partialorder %v579, 0.5
      %vm7027 = vcmp.gt.f32.partialorder %v580, 0.5
      %vm7028 = vcmp.gt.f32.partialorder %v581, 0.5
      %vm7029 = vcmp.gt.f32.partialorder %v582, 0.5
      %vm7030 = vcmp.gt.f32.partialorder %v583, 0.5
      %vm7031 = vcmp.gt.f32.partialorder %v584, 0.5
      %vm7032 = vcmp.gt.f32.partialorder %v585, 0.5
      %vm7033 = vcmp.gt.f32.partialorder %v586, 0.5
      %vm7034 = vcmp.gt.f32.partialorder %v587, 0.5
      %vm7035 = vcmp.gt.f32.partialorder %v588, 0.5
      %vm7036 = vcmp.gt.f32.partialorder %v589, 0.5
      %vm7037 = vcmp.gt.f32.partialorder %v590, 0.5
      %v7038 = vxor.u32 %v6960, 2147483648
      %v7039 = vxor.u32 %v6963, 2147483648
      %v7040 = vxor.u32 %v6968, 2147483648
      %v7041 = vxor.u32 %v6971, 2147483648
      %v7042 = vxor.u32 %v6976, 2147483648
      %v7043 = vxor.u32 %v6979, 2147483648
      %v7044 = vxor.u32 %v6984, 2147483648
      %v7045 = vxor.u32 %v6987, 2147483648
      %v7046 = vxor.u32 %v6992, 2147483648
      %v7047 = vxor.u32 %v6995, 2147483648
      %v7048 = vxor.u32 %v7000, 2147483648
      %v7049 = vxor.u32 %v7003, 2147483648
      %v7050 = vxor.u32 %v7008, 2147483648
      %v7051 = vxor.u32 %v7011, 2147483648
      %v7052 = vxor.u32 %v7016, 2147483648
      %v7053 = vxor.u32 %v7019, 2147483648
      %v7054 = vmul.f32 %v7038, 1.442695
      %v7055 = vpow.pop %v7054
      %v7056 = vmul.f32 %v7039, 1.442695
      %v7057 = vpow.pop %v7056
      %v7058 = vmul.f32 %v7040, 1.442695
      %v7059 = vpow.pop %v7058
      %v7060 = vmul.f32 %v7041, 1.442695
      %v7061 = vpow.pop %v7060
      %v7062 = vmul.f32 %v7042, 1.442695
      %v7063 = vpow.pop %v7062
      %v7064 = vmul.f32 %v7043, 1.442695
      %v7065 = vpow.pop %v7064
      %v7066 = vmul.f32 %v7044, 1.442695
      %v7067 = vpow.pop %v7066
      %v7068 = vmul.f32 %v7045, 1.442695
      %v7069 = vpow.pop %v7068
      %v7070 = vmul.f32 %v7046, 1.442695
      %v7071 = vpow.pop %v7070
      %v7072 = vmul.f32 %v7047, 1.442695
      %v7073 = vpow.pop %v7072
      %v7074 = vmul.f32 %v7048, 1.442695
      %v7075 = vpow.pop %v7074
      %v7076 = vmul.f32 %v7049, 1.442695
      %v7077 = vpow.pop %v7076
      %v7078 = vmul.f32 %v7050, 1.442695
      %v7079 = vpow.pop %v7078
      %v7080 = vmul.f32 %v7051, 1.442695
      %v7081 = vpow.pop %v7080
      %v7082 = vmul.f32 %v7052, 1.442695
      %v7083 = vpow.pop %v7082
      %v7084 = vmul.f32 %v7053, 1.442695
      %v7085 = vpow.pop %v7084
      %v7086 = vadd.f32 %v7055, 1.0
      %v7087 = vadd.f32 %v7057, 1.0
      %v7088 = vadd.f32 %v7059, 1.0
      %v7089 = vadd.f32 %v7061, 1.0
      %v7090 = vadd.f32 %v7063, 1.0
      %v7091 = vadd.f32 %v7065, 1.0
      %v7092 = vadd.f32 %v7067, 1.0
      %v7093 = vadd.f32 %v7069, 1.0
      %v7094 = vadd.f32 %v7071, 1.0
      %v7095 = vadd.f32 %v7073, 1.0
      %v7096 = vadd.f32 %v7075, 1.0
      %v7097 = vadd.f32 %v7077, 1.0
      %v7098 = vadd.f32 %v7079, 1.0
      %v7099 = vadd.f32 %v7081, 1.0
      %v7100 = vadd.f32 %v7083, 1.0
      %v7101 = vadd.f32 %v7085, 1.0
      %v7102 = vrcp.pop %v7086
      %v7103 = vmul.f32 1.0, %v7102
      %v7104 = vrcp.pop %v7087
      %v7105 = vmul.f32 1.0, %v7104
      %v7106 = vrcp.pop %v7088
      %v7107 = vmul.f32 1.0, %v7106
      %v7108 = vrcp.pop %v7089
      %v7109 = vmul.f32 1.0, %v7108
      %v7110 = vrcp.pop %v7090
      %v7111 = vmul.f32 1.0, %v7110
      %v7112 = vrcp.pop %v7091
      %v7113 = vmul.f32 1.0, %v7112
      %v7114 = vrcp.pop %v7092
      %v7115 = vmul.f32 1.0, %v7114
      %v7116 = vrcp.pop %v7093
      %v7117 = vmul.f32 1.0, %v7116
      %v7118 = vrcp.pop %v7094
      %v7119 = vmul.f32 1.0, %v7118
      %v7120 = vrcp.pop %v7095
      %v7121 = vmul.f32 1.0, %v7120
      %v7122 = vrcp.pop %v7096
      %v7123 = vmul.f32 1.0, %v7122
      %v7124 = vrcp.pop %v7097
      %v7125 = vmul.f32 1.0, %v7124
      %v7126 = vrcp.pop %v7098
      %v7127 = vmul.f32 1.0, %v7126
      %v7128 = vrcp.pop %v7099
      %v7129 = vmul.f32 1.0, %v7128
      %v7130 = vrcp.pop %v7100
      %v7131 = vmul.f32 1.0, %v7130
      %v7132 = vrcp.pop %v7101
      %v7133 = vmul.f32 1.0, %v7132
      %v7134 = vsel %vm7022, 1, 0
      %v7135 = vsel %vm7023, 1, 0
      %v7136 = vsel %vm7024, 1, 0
      %v7137 = vsel %vm7025, 1, 0
      %v7138 = vsel %vm7026, 1, 0
      %v7139 = vsel %vm7027, 1, 0
      %v7140 = vsel %vm7028, 1, 0
      %v7141 = vsel %vm7029, 1, 0
      %v7142 = vsel %vm7030, 1, 0
      %v7143 = vsel %vm7031, 1, 0
      %v7144 = vsel %vm7032, 1, 0
      %v7145 = vsel %vm7033, 1, 0
      %v7146 = vsel %vm7034, 1, 0
      %v7147 = vsel %vm7035, 1, 0
      %v7148 = vsel %vm7036, 1, 0
      %v7149 = vsel %vm7037, 1, 0
      %7150 = vset.pattern.permute.xlu0 6
      %7151 = vperm.xlu0 %7150, %v7134
      %v7152 = vpop.permute.xlu0 %7151
      %7153 = vset.pattern.permute.xlu0 6
      %7154 = vperm.xlu0 %7153, %v7135
      %v7155 = vpop.permute.xlu0 %7154
      %7156 = vset.pattern.permute.xlu0 6
      %7157 = vperm.xlu0 %7156, %v7136
      %v7158 = vpop.permute.xlu0 %7157
      %7159 = vset.pattern.permute.xlu0 6
      %7160 = vperm.xlu0 %7159, %v7137
      %v7161 = vpop.permute.xlu0 %7160
      %7162 = vset.pattern.permute.xlu0 6
      %7163 = vperm.xlu0 %7162, %v7138
      %v7164 = vpop.permute.xlu0 %7163
      %7165 = vset.pattern.permute.xlu0 6
      %7166 = vperm.xlu0 %7165, %v7139
      %v7167 = vpop.permute.xlu0 %7166
      %7168 = vset.pattern.permute.xlu0 6
      %7169 = vperm.xlu0 %7168, %v7140
      %v7170 = vpop.permute.xlu0 %7169
      %7171 = vset.pattern.permute.xlu0 6
      %7172 = vperm.xlu0 %7171, %v7141
      %v7173 = vpop.permute.xlu0 %7172
      %7174 = vset.pattern.permute.xlu0 6
      %7175 = vperm.xlu0 %7174, %v7142
      %v7176 = vpop.permute.xlu0 %7175
      %7177 = vset.pattern.permute.xlu0 6
      %7178 = vperm.xlu0 %7177, %v7143
      %v7179 = vpop.permute.xlu0 %7178
      %7180 = vset.pattern.permute.xlu0 6
      %7181 = vperm.xlu0 %7180, %v7144
      %v7182 = vpop.permute.xlu0 %7181
      %7183 = vset.pattern.permute.xlu0 6
      %7184 = vperm.xlu0 %7183, %v7145
      %v7185 = vpop.permute.xlu0 %7184
      %7186 = vset.pattern.permute.xlu0 6
      %7187 = vperm.xlu0 %7186, %v7146
      %v7188 = vpop.permute.xlu0 %7187
      %7189 = vset.pattern.permute.xlu0 6
      %7190 = vperm.xlu0 %7189, %v7147
      %v7191 = vpop.permute.xlu0 %7190
      %7192 = vset.pattern.permute.xlu0 6
      %7193 = vperm.xlu0 %7192, %v7148
      %v7194 = vpop.permute.xlu0 %7193
      %7195 = vset.pattern.permute.xlu0 6
      %7196 = vperm.xlu0 %7195, %v7149
      %v7197 = vpop.permute.xlu0 %7196
      %vm7198 = vcmp.eq.s32.totalorder %v7152, 1
      %vm7199 = vcmp.eq.s32.totalorder %v7155, 1
      %vm7200 = vcmp.eq.s32.totalorder %v7158, 1
      %vm7201 = vcmp.eq.s32.totalorder %v7161, 1
      %vm7202 = vcmp.eq.s32.totalorder %v7164, 1
      %vm7203 = vcmp.eq.s32.totalorder %v7167, 1
      %vm7204 = vcmp.eq.s32.totalorder %v7170, 1
      %vm7205 = vcmp.eq.s32.totalorder %v7173, 1
      %vm7206 = vcmp.eq.s32.totalorder %v7176, 1
      %vm7207 = vcmp.eq.s32.totalorder %v7179, 1
      %vm7208 = vcmp.eq.s32.totalorder %v7182, 1
      %vm7209 = vcmp.eq.s32.totalorder %v7185, 1
      %vm7210 = vcmp.eq.s32.totalorder %v7188, 1
      %vm7211 = vcmp.eq.s32.totalorder %v7191, 1
      %vm7212 = vcmp.eq.s32.totalorder %v7194, 1
      %vm7213 = vcmp.eq.s32.totalorder %v7197, 1
      %v7214 = vsel %vm7198, %v7103, 0.0
      %v7215 = vsel %vm7199, %v7105, 0.0
      %v7216 = vsel %vm7200, %v7107, 0.0
      %v7217 = vsel %vm7201, %v7109, 0.0
      %v7218 = vsel %vm7202, %v7111, 0.0
      %v7219 = vsel %vm7203, %v7113, 0.0
      %v7220 = vsel %vm7204, %v7115, 0.0
      %v7221 = vsel %vm7205, %v7117, 0.0
      %v7222 = vsel %vm7206, %v7119, 0.0
      %v7223 = vsel %vm7207, %v7121, 0.0
      %v7224 = vsel %vm7208, %v7123, 0.0
      %v7225 = vsel %vm7209, %v7125, 0.0
      %v7226 = vsel %vm7210, %v7127, 0.0
      %v7227 = vsel %vm7211, %v7129, 0.0
      %v7228 = vsel %vm7212, %v7131, 0.0
      %v7229 = vsel %vm7213, %v7133, 0.0
      %7246 = vrot.lane.b32.xlu0 %v2447, 6
      %v7247 = vpop.permute.xlu0 %7246
      %7248 = vrot.lane.b32.xlu0 %v2450, 6
      %v7249 = vpop.permute.xlu0 %7248
      %7250 = vrot.lane.b32.xlu0 %v2455, 6
      %v7251 = vpop.permute.xlu0 %7250
      %7252 = vrot.lane.b32.xlu0 %v2458, 6
      %v7253 = vpop.permute.xlu0 %7252
      %7254 = vrot.lane.b32.xlu0 %v2463, 6
      %v7255 = vpop.permute.xlu0 %7254
      %7256 = vrot.lane.b32.xlu0 %v2466, 6
      %v7257 = vpop.permute.xlu0 %7256
      %7258 = vrot.lane.b32.xlu0 %v2471, 6
      %v7259 = vpop.permute.xlu0 %7258
      %7260 = vrot.lane.b32.xlu0 %v2474, 6
      %v7261 = vpop.permute.xlu0 %7260
      %7262 = vrot.lane.b32.xlu0 %v2479, 6
      %v7263 = vpop.permute.xlu0 %7262
      %7264 = vrot.lane.b32.xlu0 %v2482, 6
      %v7265 = vpop.permute.xlu0 %7264
      %7266 = vrot.lane.b32.xlu0 %v2487, 6
      %v7267 = vpop.permute.xlu0 %7266
      %7268 = vrot.lane.b32.xlu0 %v2490, 6
      %v7269 = vpop.permute.xlu0 %7268
      %7270 = vrot.lane.b32.xlu0 %v2495, 6
      %v7271 = vpop.permute.xlu0 %7270
      %7272 = vrot.lane.b32.xlu0 %v2498, 6
      %v7273 = vpop.permute.xlu0 %7272
      %7274 = vrot.lane.b32.xlu0 %v2503, 6
      %v7275 = vpop.permute.xlu0 %7274
      %7276 = vrot.lane.b32.xlu0 %v2506, 6
      %v7277 = vpop.permute.xlu0 %7276
      %v7294 = vsel %vm7022, %v7247, -10000.0
      %v7295 = vsel %vm7023, %v7249, -10000.0
      %v7296 = vsel %vm7024, %v7251, -10000.0
      %v7297 = vsel %vm7025, %v7253, -10000.0
      %v7298 = vsel %vm7026, %v7255, -10000.0
      %v7299 = vsel %vm7027, %v7257, -10000.0
      %v7300 = vsel %vm7028, %v7259, -10000.0
      %v7301 = vsel %vm7029, %v7261, -10000.0
      %v7302 = vsel %vm7030, %v7263, -10000.0
      %v7303 = vsel %vm7031, %v7265, -10000.0
      %v7304 = vsel %vm7032, %v7267, -10000.0
      %v7305 = vsel %vm7033, %v7269, -10000.0
      %v7306 = vsel %vm7034, %v7271, -10000.0
      %v7307 = vsel %vm7035, %v7273, -10000.0
      %v7308 = vsel %vm7036, %v7275, -10000.0
      %v7309 = vsel %vm7037, %v7277, -10000.0
      %v7310 = vmul.f32 %v7294, 1.442695
      %v7311 = vpow.pop %v7310
      %v7312 = vmul.f32 %v7295, 1.442695
      %v7313 = vpow.pop %v7312
      %v7314 = vmul.f32 %v7296, 1.442695
      %v7315 = vpow.pop %v7314
      %v7316 = vmul.f32 %v7297, 1.442695
      %v7317 = vpow.pop %v7316
      %v7318 = vmul.f32 %v7298, 1.442695
      %v7319 = vpow.pop %v7318
      %v7320 = vmul.f32 %v7299, 1.442695
      %v7321 = vpow.pop %v7320
      %v7322 = vmul.f32 %v7300, 1.442695
      %v7323 = vpow.pop %v7322
      %v7324 = vmul.f32 %v7301, 1.442695
      %v7325 = vpow.pop %v7324
      %v7326 = vmul.f32 %v7302, 1.442695
      %v7327 = vpow.pop %v7326
      %v7328 = vmul.f32 %v7303, 1.442695
      %v7329 = vpow.pop %v7328
      %v7330 = vmul.f32 %v7304, 1.442695
      %v7331 = vpow.pop %v7330
      %v7332 = vmul.f32 %v7305, 1.442695
      %v7333 = vpow.pop %v7332
      %v7334 = vmul.f32 %v7306, 1.442695
      %v7335 = vpow.pop %v7334
      %v7336 = vmul.f32 %v7307, 1.442695
      %v7337 = vpow.pop %v7336
      %v7338 = vmul.f32 %v7308, 1.442695
      %v7339 = vpow.pop %v7338
      %v7340 = vmul.f32 %v7309, 1.442695
      %v7341 = vpow.pop %v7340
      %v7342 = vlaneseq
      %v7343 = vand.u32 %v7342, 127
      %vm7344 = vcmp.eq.s32.totalorder %v7343, 3
      %7346 = vset.pattern.permute.xlu0 6
      %7347 = vperm.xlu0 %7346, %v7311
      %v7348 = vpop.permute.xlu0 %7347
      %7351 = vset.pattern.permute.xlu0 6
      %7352 = vperm.xlu0 %7351, %v7313
      %v7353 = vpop.permute.xlu0 %7352
      %7356 = vset.pattern.permute.xlu0 6
      %7357 = vperm.xlu0 %7356, %v7315
      %v7358 = vpop.permute.xlu0 %7357
      %7361 = vset.pattern.permute.xlu0 6
      %7362 = vperm.xlu0 %7361, %v7317
      %v7363 = vpop.permute.xlu0 %7362
      %7366 = vset.pattern.permute.xlu0 6
      %7367 = vperm.xlu0 %7366, %v7319
      %v7368 = vpop.permute.xlu0 %7367
      %7371 = vset.pattern.permute.xlu0 6
      %7372 = vperm.xlu0 %7371, %v7321
      %v7373 = vpop.permute.xlu0 %7372
      %7376 = vset.pattern.permute.xlu0 6
      %7377 = vperm.xlu0 %7376, %v7323
      %v7378 = vpop.permute.xlu0 %7377
      %7381 = vset.pattern.permute.xlu0 6
      %7382 = vperm.xlu0 %7381, %v7325
      %v7383 = vpop.permute.xlu0 %7382
      %7386 = vset.pattern.permute.xlu0 6
      %7387 = vperm.xlu0 %7386, %v7327
      %v7388 = vpop.permute.xlu0 %7387
      %7391 = vset.pattern.permute.xlu0 6
      %7392 = vperm.xlu0 %7391, %v7329
      %v7393 = vpop.permute.xlu0 %7392
      %7396 = vset.pattern.permute.xlu0 6
      %7397 = vperm.xlu0 %7396, %v7331
      %v7398 = vpop.permute.xlu0 %7397
      %7401 = vset.pattern.permute.xlu0 6
      %7402 = vperm.xlu0 %7401, %v7333
      %v7403 = vpop.permute.xlu0 %7402
      %7406 = vset.pattern.permute.xlu0 6
      %7407 = vperm.xlu0 %7406, %v7335
      %v7408 = vpop.permute.xlu0 %7407
      %7411 = vset.pattern.permute.xlu0 6
      %7412 = vperm.xlu0 %7411, %v7337
      %v7413 = vpop.permute.xlu0 %7412
      %7416 = vset.pattern.permute.xlu0 6
      %7417 = vperm.xlu0 %7416, %v7339
      %v7418 = vpop.permute.xlu0 %7417
      %7421 = vset.pattern.permute.xlu0 6
      %7422 = vperm.xlu0 %7421, %v7341
      %v7423 = vpop.permute.xlu0 %7422
      %v7425 = vsel %vm7344, %v7348, %v7214
      %v7426 = vsel %vm7344, %v7353, %v7215
      %v7427 = vsel %vm7344, %v7358, %v7216
      %v7428 = vsel %vm7344, %v7363, %v7217
      %v7429 = vsel %vm7344, %v7368, %v7218
      %v7430 = vsel %vm7344, %v7373, %v7219
      %v7431 = vsel %vm7344, %v7378, %v7220
      %v7432 = vsel %vm7344, %v7383, %v7221
      %v7433 = vsel %vm7344, %v7388, %v7222
      %v7434 = vsel %vm7344, %v7393, %v7223
      %v7435 = vsel %vm7344, %v7398, %v7224
      %v7436 = vsel %vm7344, %v7403, %v7225
      %v7437 = vsel %vm7344, %v7408, %v7226
      %v7438 = vsel %vm7344, %v7413, %v7227
      %v7439 = vsel %vm7344, %v7418, %v7228
      %v7440 = vsel %vm7344, %v7423, %v7229
      %vm7441 = vcmask 31744
      %7442 = vst.msk [vmem:[%s572] sm:$0xff] %vm7441, %v7425
      %7443 = vst.msk [vmem:[%s572 + $0x8] sm:$0xff] %vm7441, %v7426
      %7444 = vst.msk [vmem:[%s572 + $0x10] sm:$0xff] %vm7441, %v7427
      %7445 = vst.msk [vmem:[%s572 + $0x18] sm:$0xff] %vm7441, %v7428
      %7446 = vst.msk [vmem:[%s572 + $0x20] sm:$0xff] %vm7441, %v7429
      %7447 = vst.msk [vmem:[%s572 + $0x28] sm:$0xff] %vm7441, %v7430
      %7448 = vst.msk [vmem:[%s572 + $0x30] sm:$0xff] %vm7441, %v7431
      %7449 = vst.msk [vmem:[%s572 + $0x38] sm:$0xff] %vm7441, %v7432
      %7450 = vst.msk [vmem:[%s572 + $0x40] sm:$0xff] %vm7441, %v7433
      %7451 = vst.msk [vmem:[%s572 + $0x48] sm:$0xff] %vm7441, %v7434
      %7452 = vst.msk [vmem:[%s572 + $0x50] sm:$0xff] %vm7441, %v7435
      %7453 = vst.msk [vmem:[%s572 + $0x58] sm:$0xff] %vm7441, %v7436
      %7454 = vst.msk [vmem:[%s572 + $0x60] sm:$0xff] %vm7441, %v7437
      %7455 = vst.msk [vmem:[%s572 + $0x68] sm:$0xff] %vm7441, %v7438
      %7456 = vst.msk [vmem:[%s572 + $0x70] sm:$0xff] %vm7441, %v7439
      %7457 = vst.msk [vmem:[%s572 + $0x78] sm:$0xff] %vm7441, %v7440
      %s7458 = smul.u32 16, %s28
      %p7459 = scmp.lt.s32.totalorder %s7458, 31
      %s7460 = scalar_select %p7459, %s7458, 31
      %s7461 = smul.addr %s7460, 8
      %s7462 = scalar_lea.vmem %s17, %s7461
      // Predicated region
      $region89: #{tpu_custom_call.1} parent=87 // pred_check
        %p7463 = pneg %p413
      $region90: #{tpu_custom_call.1} parent=87 // pred_check_branch
        %7465 = sbr.rel (%p7463) target = $region92
      $region91: #{tpu_custom_call.1} parent=87 // pred_region
        %s7466 = smul.u32 16, %s28
      $region92: #{tpu_custom_call.1} parent=87 // pred_fallthru
        _
    $region88: #{tpu_custom_call.1} parent=5 // pred_fallthru
      _
    %p7467 = scmp.le.s32.totalorder 2, %s23
    // Predicated region
    $region93: #{tpu_custom_call.1} parent=5 // pred_check
      %p7468 = pneg %p7467
    $region94: #{tpu_custom_call.1} parent=5 // pred_check_branch
      %7470 = sbr.rel (%p7468) target = $region96
    $region95: #{tpu_custom_call.1} parent=5 // pred_region
      %s7471 = ssub.s32 %s23, 2
      // Predicated region
      $region97: #{tpu_custom_call.1} parent=95 // pred_check
        %p7472 = pneg %p419
      $region98: #{tpu_custom_call.1} parent=95 // pred_check_branch
        %7474 = sbr.rel (%p7472) target = $region100
      $region99: #{tpu_custom_call.1} parent=95 // pred_region
        %s7475 = smul.u32 16, %s29
        %p7476 = scmp.lt.s32.totalorder %s7475, 31
        %s7477 = scalar_select %p7476, %s7475, 31
        %s7478 = smul.addr %s7477, 8
        %s7479 = scalar_lea.vmem %s17, %s7478
      $region100: #{tpu_custom_call.1} parent=95 // pred_fallthru
        _
    $region96: #{tpu_custom_call.1} parent=5 // pred_fallthru
      _
  $region6: #{tpu_custom_call.1} parent=0 // loop_footer
    %s27 = sadd.s32 1, %s23
  $region7: #{tpu_custom_call.1} parent=0 // loop_footer_branch
    %22 = sbr.rel target = $region3
  $region8: #{tpu_custom_call.1} parent=0 // loop_exit
    _

</llo_original>
